<compile_context>
chip_gen: v7x
topology: tpu7x:2x2x1
jax: 0.10.0
libtpu: 0.0.40
codegen_flags: <defaults>
</compile_context>

<pallas_src>
import jax
import jax.numpy as jnp
from jax.experimental import pallas as pl
from jax.experimental.pallas import tpu as pltpu


def chord_lstm_kernel(
    emb_ref,                 # (T*Bp, D)   bf16  time-major rows [t*Bp + b]
    wih0_ref,                # (D, 4Hp)    bf16  layer-0 input weights  [i,f,o,g], gate-padded
    whh0_ref,                # (Hp, 4Hp)   bf16  layer-0 recurrent weights
    b0_ref,                  # (1, 4Hp)    f32   layer-0 combined bias (padded cols = 0)
    wih1_ref, whh1_ref, b1_ref,   # layer-1 (Hp,4Hp) bf16 x2, (1,4Hp) f32
    wih2_ref, whh2_ref, b2_ref,   # layer-2
    wc1_ref, bc1_ref,        # chord fc1: (Hp, D) bf16, (1, D) f32
    wh_c_ref,                # (D, OUTW)   bf16  chord fc2 padded into fused head
    wh_d_ref,                # (Hp, OUTW)  bf16  duration head padded into fused head
    bh_ref,                  # (1, OUTW)   f32   fused head bias
    out_ref,                 # (Bp, OUTW)  f32   lanes [0,V)=chord, [V,V+8)=duration
):
    Bp = out_ref.shape[0]
    TB = emb_ref.shape[0]
    T = TB // Bp
    Hp4 = whh0_ref.shape[1]
    Hp = Hp4 // 4
    bf16 = jnp.bfloat16
    f32 = jnp.float32

    # ---- Hoisted layer-0 input projection for all timesteps at once -------
    # One big MXU matmul (M = T*Bp) instead of T small dependent ones on the
    # serial critical path; bias folded in.  Kept value-resident (no scratch).
    g0x = (
        jnp.dot(emb_ref[...], wih0_ref[...], preferred_element_type=f32)
        + b0_ref[...]
    )                                                   # (T*Bp, 4Hp) f32

    # ---- Weights / biases loaded & broadcast once, outside the loop -------
    whh0 = whh0_ref[...]
    wih1 = wih1_ref[...]
    whh1 = whh1_ref[...]
    wih2 = wih2_ref[...]
    whh2 = whh2_ref[...]
    b1 = jnp.broadcast_to(b1_ref[...], (Bp, Hp4))
    b2 = jnp.broadcast_to(b2_ref[...], (Bp, Hp4))

    def cell(gates, c):
        # Gate blocks ordered [i, f, o, g], each exactly Hp=128 lanes, so all
        # slices fall on vreg boundaries (no lane rolls on the serial chain).
        # Sigmoid as one tanh push: sigmoid(x) = 0.5*(tanh(0.5x)+1).
        s = 0.5 * jnp.tanh(0.5 * gates[:, : 3 * Hp]) + 0.5
        g = jnp.tanh(gates[:, 3 * Hp:])
        i = s[:, :Hp]
        f = s[:, Hp:2 * Hp]
        o = s[:, 2 * Hp:3 * Hp]
        c_new = f * c + i * g
        h_new = o * jnp.tanh(c_new)
        return h_new, c_new

    zeros = jnp.zeros((Bp, Hp), f32)
    h0 = c0 = h1 = c1 = h2 = c2 = zeros

    # ---- Recurrence: fully unrolled at trace time (T static & small) ------
    for t in range(T):
        # layer 0: only the recurrent matmul; input projection precomputed.
        # Slice start t*Bp is a multiple of 8 -> sublane-aligned chunk.
        gates0 = (
            jnp.dot(h0.astype(bf16), whh0, preferred_element_type=f32)
            + g0x[t * Bp:(t + 1) * Bp, :]
        )
        h0, c0 = cell(gates0, c0)

        # inter-layer dropout (p=0.1) is identity at inference time.
        # layers 1/2: two independent dots (no per-step lane concat).
        gates1 = (
            jnp.dot(h0.astype(bf16), wih1, preferred_element_type=f32)
            + jnp.dot(h1.astype(bf16), whh1, preferred_element_type=f32)
            + b1
        )
        h1, c1 = cell(gates1, c1)

        gates2 = (
            jnp.dot(h1.astype(bf16), wih2, preferred_element_type=f32)
            + jnp.dot(h2.astype(bf16), whh2, preferred_element_type=f32)
            + b2
        )
        h2, c2 = cell(gates2, c2)

    last_hidden = h2                                     # (Bp, Hp), pad lanes = 0

    # ---- Heads: fc1 + ReLU, then both heads into one lane-dense store -----
    hid = jnp.maximum(
        jnp.dot(last_hidden.astype(bf16), wc1_ref[...], preferred_element_type=f32)
        + bc1_ref[...],
        0.0,
    )
    out_ref[...] = (
        jnp.dot(hid.astype(bf16), wh_c_ref[...], preferred_element_type=f32)
        + jnp.dot(last_hidden.astype(bf16), wh_d_ref[...], preferred_element_type=f32)
        + bh_ref[...]
    )


def _pack_gates(w, H, Hp):
    """Reorder last-axis gate blocks from PyTorch's [i, f, g, o] to [i, f, o, g]
    and zero-pad each block from H to Hp lanes (vreg-aligned gate blocks)."""
    i = w[..., 0 * H:1 * H]
    f = w[..., 1 * H:2 * H]
    g = w[..., 2 * H:3 * H]
    o = w[..., 3 * H:4 * H]
    pad = [(0, 0)] * (w.ndim - 1) + [(0, Hp - H)]
    return jnp.concatenate([jnp.pad(b, pad) for b in (i, f, o, g)], axis=-1)


def _pad_rows(w, rows):
    """Zero-pad the leading (contraction) dimension up to `rows`."""
    return jnp.pad(w, ((0, rows - w.shape[0]), (0, 0)))


def init_params(key, vocab_size, hidden_dim):
    """Deterministic synthetic parameters matching the PyTorch module's shapes."""
    D = hidden_dim
    H = 2 * hidden_dim
    keys = jax.random.split(key, 32)
    k = iter(keys)

    def unif(key, shape, scale):
        return jax.random.uniform(key, shape, jnp.float32, -scale, scale)

    params = {}
    # nn.Embedding(vocab, D): N(0, 1)
    params["embedding"] = jax.random.normal(next(k), (vocab_size, D), jnp.float32)

    # nn.LSTM(D, H, num_layers=3): uniform(-1/sqrt(H), 1/sqrt(H))
    s = 1.0 / jnp.sqrt(H)
    lstm = []
    for layer in range(3):
        in_dim = D if layer == 0 else H
        w_ih = unif(next(k), (4 * H, in_dim), s)      # PyTorch shape (4H, in)
        w_hh = unif(next(k), (4 * H, H), s)           # PyTorch shape (4H, H)
        b_ih = unif(next(k), (4 * H,), s)
        b_hh = unif(next(k), (4 * H,), s)
        lstm.append((w_ih, w_hh, b_ih, b_hh))
    params["lstm"] = lstm

    # chord_head: Linear(H, D) -> ReLU -> Linear(D, vocab)
    s1 = 1.0 / jnp.sqrt(H)
    params["wc1"] = unif(next(k), (D, H), s1)
    params["bc1"] = unif(next(k), (D,), s1)
    s2 = 1.0 / jnp.sqrt(D)
    params["wc2"] = unif(next(k), (vocab_size, D), s2)
    params["bc2"] = unif(next(k), (vocab_size,), s2)

    # duration_head: Linear(H, 8)
    params["wd"] = unif(next(k), (8, H), s1)
    params["bd"] = unif(next(k), (8,), s1)
    return params


def chord_lstm_forward(x_tokens, params, vocab_size, hidden_dim):
    """Wrapper: embedding gather + weight layout in JAX; recurrence/matmuls in Pallas."""
    B, T = x_tokens.shape
    D = hidden_dim
    H = 2 * hidden_dim
    V = vocab_size

    Bp = max(8, ((B + 7) // 8) * 8)                   # sublane-tile-padded batch
    Hp = ((H + 127) // 128) * 128                     # lane-padded gate / hidden width
    OUTW = ((V + 8 + 127) // 128) * 128               # lane-dense fused-head width
    bf16 = jnp.bfloat16

    # Embedding gathered time-major, batch padded to Bp with zero rows
    # (padded rows produce finite garbage that is sliced off at the end);
    # nn.Dropout is identity at inference.
    emb_tm = params["embedding"][x_tokens.T]                       # (T, B, D)
    emb_tm = jnp.pad(emb_tm, ((0, 0), (0, Bp - B), (0, 0)))        # (T, Bp, D)
    emb2d = emb_tm.reshape(T * Bp, D).astype(bf16)                 # rows t*Bp + b

    (wih0, whh0, bih0, bhh0), l1, l2 = params["lstm"]
    wih1, whh1, bih1, bhh1 = l1
    wih2, whh2, bih2, bhh2 = l2

    # Pre-transpose to (in, out), reorder gates to [i,f,o,g], pad each gate
    # block to Hp lanes, pad recurrent-input rows to Hp, fold biases, cast to
    # bf16 (states/elementwise stay f32; biases stay f32).
    wih0_t = _pack_gates(wih0.T, H, Hp).astype(bf16)                        # (D,  4Hp)
    whh0_t = _pad_rows(_pack_gates(whh0.T, H, Hp), Hp).astype(bf16)         # (Hp, 4Hp)
    b0 = _pack_gates((bih0 + bhh0).reshape(1, 4 * H), H, Hp)                # (1,  4Hp) f32

    wih1_t = _pad_rows(_pack_gates(wih1.T, H, Hp), Hp).astype(bf16)
    whh1_t = _pad_rows(_pack_gates(whh1.T, H, Hp), Hp).astype(bf16)
    b1 = _pack_gates((bih1 + bhh1).reshape(1, 4 * H), H, Hp)

    wih2_t = _pad_rows(_pack_gates(wih2.T, H, Hp), Hp).astype(bf16)
    whh2_t = _pad_rows(_pack_gates(whh2.T, H, Hp), Hp).astype(bf16)
    b2 = _pack_gates((bih2 + bhh2).reshape(1, 4 * H), H, Hp)

    wc1 = _pad_rows(params["wc1"].T, Hp).astype(bf16)                        # (Hp, D)
    bc1 = params["bc1"].reshape(1, D)                                        # f32

    # Fused lane-dense head: out[:, :V] = chord logits, out[:, V:V+8] = duration.
    wh_c = jnp.zeros((D, OUTW), jnp.float32).at[:, :V].set(params["wc2"].T).astype(bf16)
    wh_d = jnp.zeros((Hp, OUTW), jnp.float32).at[:H, V:V + 8].set(params["wd"].T).astype(bf16)
    bh = jnp.zeros((1, OUTW), jnp.float32)
    bh = bh.at[0, :V].set(params["bc2"]).at[0, V:V + 8].set(params["bd"])

    # TODO(synk): for non-toy batch sizes add a leading grid axis over batch
    # tiles with dimension_semantics=("parallel",) so v7x's two TensorCores
    # split the recurrence (never split T — serial dependence), and re-derive
    # tiles against v7x's 64 MiB VMEM; at these sizes everything fits easily.
    vmem = pl.BlockSpec(memory_space=pltpu.MemorySpace.VMEM)
    inputs = [emb2d, wih0_t, whh0_t, b0,
              wih1_t, whh1_t, b1,
              wih2_t, whh2_t, b2,
              wc1, bc1, wh_c, wh_d, bh]

    out = pl.pallas_call(
        chord_lstm_kernel,
        out_shape=jax.ShapeDtypeStruct((Bp, OUTW), jnp.float32),
        in_specs=[vmem] * len(inputs),
        out_specs=vmem,
    )(*inputs)

    chord_logits = out[:B, :V]
    duration_logits = out[:B, V:V + 8]
    return chord_logits, duration_logits


def chord_lstm_reference(x_tokens, params, vocab_size, hidden_dim):
    """Pure-JAX f32 reference for correctness checking."""
    H = 2 * hidden_dim
    emb = params["embedding"][x_tokens]                  # (B, T, D)
    B, T, _ = emb.shape

    seq = emb
    for (w_ih, w_hh, b_ih, b_hh) in params["lstm"]:
        h = jnp.zeros((B, H), jnp.float32)
        c = jnp.zeros((B, H), jnp.float32)
        outs = []
        for t in range(T):
            g = seq[:, t, :] @ w_ih.T + b_ih + h @ w_hh.T + b_hh
            i = jax.nn.sigmoid(g[:, 0 * H:1 * H])
            f = jax.nn.sigmoid(g[:, 1 * H:2 * H])
            gg = jnp.tanh(g[:, 2 * H:3 * H])
            o = jax.nn.sigmoid(g[:, 3 * H:4 * H])
            c = f * c + i * gg
            h = o * jnp.tanh(c)
            outs.append(h)
        seq = jnp.stack(outs, axis=1)
    last = seq[:, -1, :]
    hid = jnp.maximum(last @ params["wc1"].T + params["bc1"], 0.0)
    chord = hid @ params["wc2"].T + params["bc2"]
    dur = last @ params["wd"].T + params["bd"]
    return chord, dur


if __name__ == "__main__":
    vocab_size = 64
    hidden_dim = 32
    B, T = 2, 8

    key = jax.random.PRNGKey(0)
    k_params, k_tokens = jax.random.split(key)
    params = init_params(k_params, vocab_size, hidden_dim)
    x_tokens = jax.random.randint(k_tokens, (B, T), 0, vocab_size, dtype=jnp.int32)

    chord_logits, duration_logits = chord_lstm_forward(
        x_tokens, params, vocab_size, hidden_dim)
    jax.block_until_ready((chord_logits, duration_logits))

    ref_chord, ref_dur = chord_lstm_reference(x_tokens, params, vocab_size, hidden_dim)
    assert chord_logits.shape == (B, vocab_size)
    assert duration_logits.shape == (B, 8)
    # bf16 matmul operands (states/weights) vs f32 reference: looser tolerance.
    assert jnp.allclose(chord_logits, ref_chord, atol=5e-2, rtol=5e-2)
    assert jnp.allclose(duration_logits, ref_dur, atol=5e-2, rtol=5e-2)

    print("KERNEL_OK")
</pallas_src>

<mosaic_0001>
module attributes {stable_mosaic.version = 11 : i64} {
  func.func @chord_lstm_kernel(%arg0: memref<64x32xbf16, #tpu.memory_space<vmem>>, %arg1: memref<32x512xbf16, #tpu.memory_space<vmem>>, %arg2: memref<128x512xbf16, #tpu.memory_space<vmem>>, %arg3: memref<1x512xf32, #tpu.memory_space<vmem>>, %arg4: memref<128x512xbf16, #tpu.memory_space<vmem>>, %arg5: memref<128x512xbf16, #tpu.memory_space<vmem>>, %arg6: memref<1x512xf32, #tpu.memory_space<vmem>>, %arg7: memref<128x512xbf16, #tpu.memory_space<vmem>>, %arg8: memref<128x512xbf16, #tpu.memory_space<vmem>>, %arg9: memref<1x512xf32, #tpu.memory_space<vmem>>, %arg10: memref<128x32xbf16, #tpu.memory_space<vmem>>, %arg11: memref<1x32xf32, #tpu.memory_space<vmem>>, %arg12: memref<32x128xbf16, #tpu.memory_space<vmem>>, %arg13: memref<128x128xbf16, #tpu.memory_space<vmem>>, %arg14: memref<1x128xf32, #tpu.memory_space<vmem>>, %arg15: memref<8x128xf32, #tpu.memory_space<vmem>>) attributes {dimension_semantics = [], scalar_prefetch = 0 : i64, scratch_operands = 0 : i64, tpu.core_type = #tpu.core_type<tc>} {
    %c0 = arith.constant 0 : index
    %c0_0 = arith.constant 0 : index
    %0 = vector.load %arg0[%c0, %c0_0] : memref<64x32xbf16, #tpu.memory_space<vmem>>, vector<64x32xbf16>
    %c0_1 = arith.constant 0 : index
    %c0_2 = arith.constant 0 : index
    %1 = vector.load %arg1[%c0_1, %c0_2] : memref<32x512xbf16, #tpu.memory_space<vmem>>, vector<32x512xbf16>
    %cst = arith.constant dense<0.000000e+00> : vector<64x512xf32>
    %2 = tpu.matmul %0, %1, %cst {dimension_numbers = #tpu.dot_dimension_numbers<[1], [0], [0], [1], [0, 0, 1, 1], [], []>} : vector<64x32xbf16>, vector<32x512xbf16>, vector<64x512xf32> -> vector<64x512xf32>
    %c0_3 = arith.constant 0 : index
    %c0_4 = arith.constant 0 : index
    %3 = vector.load %arg3[%c0_3, %c0_4] : memref<1x512xf32, #tpu.memory_space<vmem>>, vector<1x512xf32>
    %4 = vector.broadcast %3 : vector<1x512xf32> to vector<64x512xf32>
    %5 = arith.addf %2, %4 : vector<64x512xf32>
    %c0_5 = arith.constant 0 : index
    %c0_6 = arith.constant 0 : index
    %6 = vector.load %arg2[%c0_5, %c0_6] : memref<128x512xbf16, #tpu.memory_space<vmem>>, vector<128x512xbf16>
    %c0_7 = arith.constant 0 : index
    %c0_8 = arith.constant 0 : index
    %7 = vector.load %arg4[%c0_7, %c0_8] : memref<128x512xbf16, #tpu.memory_space<vmem>>, vector<128x512xbf16>
    %c0_9 = arith.constant 0 : index
    %c0_10 = arith.constant 0 : index
    %8 = vector.load %arg5[%c0_9, %c0_10] : memref<128x512xbf16, #tpu.memory_space<vmem>>, vector<128x512xbf16>
    %c0_11 = arith.constant 0 : index
    %c0_12 = arith.constant 0 : index
    %9 = vector.load %arg7[%c0_11, %c0_12] : memref<128x512xbf16, #tpu.memory_space<vmem>>, vector<128x512xbf16>
    %c0_13 = arith.constant 0 : index
    %c0_14 = arith.constant 0 : index
    %10 = vector.load %arg8[%c0_13, %c0_14] : memref<128x512xbf16, #tpu.memory_space<vmem>>, vector<128x512xbf16>
    %c0_15 = arith.constant 0 : index
    %c0_16 = arith.constant 0 : index
    %11 = vector.load %arg6[%c0_15, %c0_16] : memref<1x512xf32, #tpu.memory_space<vmem>>, vector<1x512xf32>
    %12 = vector.shape_cast %11 : vector<1x512xf32> to vector<1x512xf32>
    %13 = vector.broadcast %12 : vector<1x512xf32> to vector<8x512xf32>
    %c0_17 = arith.constant 0 : index
    %c0_18 = arith.constant 0 : index
    %14 = vector.load %arg9[%c0_17, %c0_18] : memref<1x512xf32, #tpu.memory_space<vmem>>, vector<1x512xf32>
    %15 = vector.shape_cast %14 : vector<1x512xf32> to vector<1x512xf32>
    %16 = vector.broadcast %15 : vector<1x512xf32> to vector<8x512xf32>
    %cst_19 = arith.constant 0.000000e+00 : f32
    %17 = vector.broadcast %cst_19 : f32 to vector<8x128xf32>
    %18 = arith.truncf %17 : vector<8x128xf32> to vector<8x128xbf16>
    %cst_20 = arith.constant dense<0.000000e+00> : vector<8x512xf32>
    %19 = tpu.matmul %18, %6, %cst_20 {dimension_numbers = #tpu.dot_dimension_numbers<[1], [0], [0], [1], [0, 0, 1, 1], [], []>} : vector<8x128xbf16>, vector<128x512xbf16>, vector<8x512xf32> -> vector<8x512xf32>
    %20 = vector.extract_strided_slice %5 {offsets = [0, 0], sizes = [8, 512], strides = [1, 1]} : vector<64x512xf32> to vector<8x512xf32>
    %21 = arith.addf %19, %20 : vector<8x512xf32>
    %22 = vector.extract_strided_slice %21 {offsets = [0, 0], sizes = [8, 384], strides = [1, 1]} : vector<8x512xf32> to vector<8x384xf32>
    %cst_21 = arith.constant 5.000000e-01 : f32
    %23 = vector.broadcast %cst_21 : f32 to vector<8x384xf32>
    %24 = arith.mulf %23, %22 : vector<8x384xf32>
    %25 = math.tanh %24 : vector<8x384xf32>
    %cst_22 = arith.constant 5.000000e-01 : f32
    %26 = vector.broadcast %cst_22 : f32 to vector<8x384xf32>
    %27 = arith.mulf %26, %25 : vector<8x384xf32>
    %cst_23 = arith.constant 5.000000e-01 : f32
    %28 = vector.broadcast %cst_23 : f32 to vector<8x384xf32>
    %29 = arith.addf %27, %28 : vector<8x384xf32>
    %30 = vector.extract_strided_slice %21 {offsets = [0, 384], sizes = [8, 128], strides = [1, 1]} : vector<8x512xf32> to vector<8x128xf32>
    %31 = math.tanh %30 : vector<8x128xf32>
    %32 = vector.extract_strided_slice %29 {offsets = [0, 0], sizes = [8, 128], strides = [1, 1]} : vector<8x384xf32> to vector<8x128xf32>
    %33 = vector.extract_strided_slice %29 {offsets = [0, 128], sizes = [8, 128], strides = [1, 1]} : vector<8x384xf32> to vector<8x128xf32>
    %34 = vector.extract_strided_slice %29 {offsets = [0, 256], sizes = [8, 128], strides = [1, 1]} : vector<8x384xf32> to vector<8x128xf32>
    %35 = arith.mulf %33, %17 : vector<8x128xf32>
    %36 = arith.mulf %32, %31 : vector<8x128xf32>
    %37 = arith.addf %35, %36 : vector<8x128xf32>
    %38 = math.tanh %37 : vector<8x128xf32>
    %39 = arith.mulf %34, %38 : vector<8x128xf32>
    %40 = arith.truncf %39 : vector<8x128xf32> to vector<8x128xbf16>
    %cst_24 = arith.constant dense<0.000000e+00> : vector<8x512xf32>
    %41 = tpu.matmul %40, %7, %cst_24 {dimension_numbers = #tpu.dot_dimension_numbers<[1], [0], [0], [1], [0, 0, 1, 1], [], []>} : vector<8x128xbf16>, vector<128x512xbf16>, vector<8x512xf32> -> vector<8x512xf32>
    %42 = arith.truncf %17 : vector<8x128xf32> to vector<8x128xbf16>
    %cst_25 = arith.constant dense<0.000000e+00> : vector<8x512xf32>
    %43 = tpu.matmul %42, %8, %cst_25 {dimension_numbers = #tpu.dot_dimension_numbers<[1], [0], [0], [1], [0, 0, 1, 1], [], []>} : vector<8x128xbf16>, vector<128x512xbf16>, vector<8x512xf32> -> vector<8x512xf32>
    %44 = arith.addf %41, %43 : vector<8x512xf32>
    %45 = arith.addf %44, %13 : vector<8x512xf32>
    %46 = vector.extract_strided_slice %45 {offsets = [0, 0], sizes = [8, 384], strides = [1, 1]} : vector<8x512xf32> to vector<8x384xf32>
    %cst_26 = arith.constant 5.000000e-01 : f32
    %47 = vector.broadcast %cst_26 : f32 to vector<8x384xf32>
    %48 = arith.mulf %47, %46 : vector<8x384xf32>
    %49 = math.tanh %48 : vector<8x384xf32>
    %cst_27 = arith.constant 5.000000e-01 : f32
    %50 = vector.broadcast %cst_27 : f32 to vector<8x384xf32>
    %51 = arith.mulf %50, %49 : vector<8x384xf32>
    %cst_28 = arith.constant 5.000000e-01 : f32
    %52 = vector.broadcast %cst_28 : f32 to vector<8x384xf32>
    %53 = arith.addf %51, %52 : vector<8x384xf32>
    %54 = vector.extract_strided_slice %45 {offsets = [0, 384], sizes = [8, 128], strides = [1, 1]} : vector<8x512xf32> to vector<8x128xf32>
    %55 = math.tanh %54 : vector<8x128xf32>
    %56 = vector.extract_strided_slice %53 {offsets = [0, 0], sizes = [8, 128], strides = [1, 1]} : vector<8x384xf32> to vector<8x128xf32>
    %57 = vector.extract_strided_slice %53 {offsets = [0, 128], sizes = [8, 128], strides = [1, 1]} : vector<8x384xf32> to vector<8x128xf32>
    %58 = vector.extract_strided_slice %53 {offsets = [0, 256], sizes = [8, 128], strides = [1, 1]} : vector<8x384xf32> to vector<8x128xf32>
    %59 = arith.mulf %57, %17 : vector<8x128xf32>
    %60 = arith.mulf %56, %55 : vector<8x128xf32>
    %61 = arith.addf %59, %60 : vector<8x128xf32>
    %62 = math.tanh %61 : vector<8x128xf32>
    %63 = arith.mulf %58, %62 : vector<8x128xf32>
    %64 = arith.truncf %63 : vector<8x128xf32> to vector<8x128xbf16>
    %cst_29 = arith.constant dense<0.000000e+00> : vector<8x512xf32>
    %65 = tpu.matmul %64, %9, %cst_29 {dimension_numbers = #tpu.dot_dimension_numbers<[1], [0], [0], [1], [0, 0, 1, 1], [], []>} : vector<8x128xbf16>, vector<128x512xbf16>, vector<8x512xf32> -> vector<8x512xf32>
    %66 = arith.truncf %17 : vector<8x128xf32> to vector<8x128xbf16>
    %cst_30 = arith.constant dense<0.000000e+00> : vector<8x512xf32>
    %67 = tpu.matmul %66, %10, %cst_30 {dimension_numbers = #tpu.dot_dimension_numbers<[1], [0], [0], [1], [0, 0, 1, 1], [], []>} : vector<8x128xbf16>, vector<128x512xbf16>, vector<8x512xf32> -> vector<8x512xf32>
    %68 = arith.addf %65, %67 : vector<8x512xf32>
    %69 = arith.addf %68, %16 : vector<8x512xf32>
    %70 = vector.extract_strided_slice %69 {offsets = [0, 0], sizes = [8, 384], strides = [1, 1]} : vector<8x512xf32> to vector<8x384xf32>
    %cst_31 = arith.constant 5.000000e-01 : f32
    %71 = vector.broadcast %cst_31 : f32 to vector<8x384xf32>
    %72 = arith.mulf %71, %70 : vector<8x384xf32>
    %73 = math.tanh %72 : vector<8x384xf32>
    %cst_32 = arith.constant 5.000000e-01 : f32
    %74 = vector.broadcast %cst_32 : f32 to vector<8x384xf32>
    %75 = arith.mulf %74, %73 : vector<8x384xf32>
    %cst_33 = arith.constant 5.000000e-01 : f32
    %76 = vector.broadcast %cst_33 : f32 to vector<8x384xf32>
    %77 = arith.addf %75, %76 : vector<8x384xf32>
    %78 = vector.extract_strided_slice %69 {offsets = [0, 384], sizes = [8, 128], strides = [1, 1]} : vector<8x512xf32> to vector<8x128xf32>
    %79 = math.tanh %78 : vector<8x128xf32>
    %80 = vector.extract_strided_slice %77 {offsets = [0, 0], sizes = [8, 128], strides = [1, 1]} : vector<8x384xf32> to vector<8x128xf32>
    %81 = vector.extract_strided_slice %77 {offsets = [0, 128], sizes = [8, 128], strides = [1, 1]} : vector<8x384xf32> to vector<8x128xf32>
    %82 = vector.extract_strided_slice %77 {offsets = [0, 256], sizes = [8, 128], strides = [1, 1]} : vector<8x384xf32> to vector<8x128xf32>
    %83 = arith.mulf %81, %17 : vector<8x128xf32>
    %84 = arith.mulf %80, %79 : vector<8x128xf32>
    %85 = arith.addf %83, %84 : vector<8x128xf32>
    %86 = math.tanh %85 : vector<8x128xf32>
    %87 = arith.mulf %82, %86 : vector<8x128xf32>
    %88 = arith.truncf %39 : vector<8x128xf32> to vector<8x128xbf16>
    %cst_34 = arith.constant dense<0.000000e+00> : vector<8x512xf32>
    %89 = tpu.matmul %88, %6, %cst_34 {dimension_numbers = #tpu.dot_dimension_numbers<[1], [0], [0], [1], [0, 0, 1, 1], [], []>} : vector<8x128xbf16>, vector<128x512xbf16>, vector<8x512xf32> -> vector<8x512xf32>
    %90 = vector.extract_strided_slice %5 {offsets = [8, 0], sizes = [8, 512], strides = [1, 1]} : vector<64x512xf32> to vector<8x512xf32>
    %91 = arith.addf %89, %90 : vector<8x512xf32>
    %92 = vector.extract_strided_slice %91 {offsets = [0, 0], sizes = [8, 384], strides = [1, 1]} : vector<8x512xf32> to vector<8x384xf32>
    %cst_35 = arith.constant 5.000000e-01 : f32
    %93 = vector.broadcast %cst_35 : f32 to vector<8x384xf32>
    %94 = arith.mulf %93, %92 : vector<8x384xf32>
    %95 = math.tanh %94 : vector<8x384xf32>
    %cst_36 = arith.constant 5.000000e-01 : f32
    %96 = vector.broadcast %cst_36 : f32 to vector<8x384xf32>
    %97 = arith.mulf %96, %95 : vector<8x384xf32>
    %cst_37 = arith.constant 5.000000e-01 : f32
    %98 = vector.broadcast %cst_37 : f32 to vector<8x384xf32>
    %99 = arith.addf %97, %98 : vector<8x384xf32>
    %100 = vector.extract_strided_slice %91 {offsets = [0, 384], sizes = [8, 128], strides = [1, 1]} : vector<8x512xf32> to vector<8x128xf32>
    %101 = math.tanh %100 : vector<8x128xf32>
    %102 = vector.extract_strided_slice %99 {offsets = [0, 0], sizes = [8, 128], strides = [1, 1]} : vector<8x384xf32> to vector<8x128xf32>
    %103 = vector.extract_strided_slice %99 {offsets = [0, 128], sizes = [8, 128], strides = [1, 1]} : vector<8x384xf32> to vector<8x128xf32>
    %104 = vector.extract_strided_slice %99 {offsets = [0, 256], sizes = [8, 128], strides = [1, 1]} : vector<8x384xf32> to vector<8x128xf32>
    %105 = arith.mulf %103, %37 : vector<8x128xf32>
    %106 = arith.mulf %102, %101 : vector<8x128xf32>
    %107 = arith.addf %105, %106 : vector<8x128xf32>
    %108 = math.tanh %107 : vector<8x128xf32>
    %109 = arith.mulf %104, %108 : vector<8x128xf32>
    %110 = arith.truncf %109 : vector<8x128xf32> to vector<8x128xbf16>
    %cst_38 = arith.constant dense<0.000000e+00> : vector<8x512xf32>
    %111 = tpu.matmul %110, %7, %cst_38 {dimension_numbers = #tpu.dot_dimension_numbers<[1], [0], [0], [1], [0, 0, 1, 1], [], []>} : vector<8x128xbf16>, vector<128x512xbf16>, vector<8x512xf32> -> vector<8x512xf32>
    %112 = arith.truncf %63 : vector<8x128xf32> to vector<8x128xbf16>
    %cst_39 = arith.constant dense<0.000000e+00> : vector<8x512xf32>
    %113 = tpu.matmul %112, %8, %cst_39 {dimension_numbers = #tpu.dot_dimension_numbers<[1], [0], [0], [1], [0, 0, 1, 1], [], []>} : vector<8x128xbf16>, vector<128x512xbf16>, vector<8x512xf32> -> vector<8x512xf32>
    %114 = arith.addf %111, %113 : vector<8x512xf32>
    %115 = arith.addf %114, %13 : vector<8x512xf32>
    %116 = vector.extract_strided_slice %115 {offsets = [0, 0], sizes = [8, 384], strides = [1, 1]} : vector<8x512xf32> to vector<8x384xf32>
    %cst_40 = arith.constant 5.000000e-01 : f32
    %117 = vector.broadcast %cst_40 : f32 to vector<8x384xf32>
    %118 = arith.mulf %117, %116 : vector<8x384xf32>
    %119 = math.tanh %118 : vector<8x384xf32>
    %cst_41 = arith.constant 5.000000e-01 : f32
    %120 = vector.broadcast %cst_41 : f32 to vector<8x384xf32>
    %121 = arith.mulf %120, %119 : vector<8x384xf32>
    %cst_42 = arith.constant 5.000000e-01 : f32
    %122 = vector.broadcast %cst_42 : f32 to vector<8x384xf32>
    %123 = arith.addf %121, %122 : vector<8x384xf32>
    %124 = vector.extract_strided_slice %115 {offsets = [0, 384], sizes = [8, 128], strides = [1, 1]} : vector<8x512xf32> to vector<8x128xf32>
    %125 = math.tanh %124 : vector<8x128xf32>
    %126 = vector.extract_strided_slice %123 {offsets = [0, 0], sizes = [8, 128], strides = [1, 1]} : vector<8x384xf32> to vector<8x128xf32>
    %127 = vector.extract_strided_slice %123 {offsets = [0, 128], sizes = [8, 128], strides = [1, 1]} : vector<8x384xf32> to vector<8x128xf32>
    %128 = vector.extract_strided_slice %123 {offsets = [0, 256], sizes = [8, 128], strides = [1, 1]} : vector<8x384xf32> to vector<8x128xf32>
    %129 = arith.mulf %127, %61 : vector<8x128xf32>
    %130 = arith.mulf %126, %125 : vector<8x128xf32>
    %131 = arith.addf %129, %130 : vector<8x128xf32>
    %132 = math.tanh %131 : vector<8x128xf32>
    %133 = arith.mulf %128, %132 : vector<8x128xf32>
    %134 = arith.truncf %133 : vector<8x128xf32> to vector<8x128xbf16>
    %cst_43 = arith.constant dense<0.000000e+00> : vector<8x512xf32>
    %135 = tpu.matmul %134, %9, %cst_43 {dimension_numbers = #tpu.dot_dimension_numbers<[1], [0], [0], [1], [0, 0, 1, 1], [], []>} : vector<8x128xbf16>, vector<128x512xbf16>, vector<8x512xf32> -> vector<8x512xf32>
    %136 = arith.truncf %87 : vector<8x128xf32> to vector<8x128xbf16>
    %cst_44 = arith.constant dense<0.000000e+00> : vector<8x512xf32>
    %137 = tpu.matmul %136, %10, %cst_44 {dimension_numbers = #tpu.dot_dimension_numbers<[1], [0], [0], [1], [0, 0, 1, 1], [], []>} : vector<8x128xbf16>, vector<128x512xbf16>, vector<8x512xf32> -> vector<8x512xf32>
    %138 = arith.addf %135, %137 : vector<8x512xf32>
    %139 = arith.addf %138, %16 : vector<8x512xf32>
    %140 = vector.extract_strided_slice %139 {offsets = [0, 0], sizes = [8, 384], strides = [1, 1]} : vector<8x512xf32> to vector<8x384xf32>
    %cst_45 = arith.constant 5.000000e-01 : f32
    %141 = vector.broadcast %cst_45 : f32 to vector<8x384xf32>
    %142 = arith.mulf %141, %140 : vector<8x384xf32>
    %143 = math.tanh %142 : vector<8x384xf32>
    %cst_46 = arith.constant 5.000000e-01 : f32
    %144 = vector.broadcast %cst_46 : f32 to vector<8x384xf32>
    %145 = arith.mulf %144, %143 : vector<8x384xf32>
    %cst_47 = arith.constant 5.000000e-01 : f32
    %146 = vector.broadcast %cst_47 : f32 to vector<8x384xf32>
    %147 = arith.addf %145, %146 : vector<8x384xf32>
    %148 = vector.extract_strided_slice %139 {offsets = [0, 384], sizes = [8, 128], strides = [1, 1]} : vector<8x512xf32> to vector<8x128xf32>
    %149 = math.tanh %148 : vector<8x128xf32>
    %150 = vector.extract_strided_slice %147 {offsets = [0, 0], sizes = [8, 128], strides = [1, 1]} : vector<8x384xf32> to vector<8x128xf32>
    %151 = vector.extract_strided_slice %147 {offsets = [0, 128], sizes = [8, 128], strides = [1, 1]} : vector<8x384xf32> to vector<8x128xf32>
    %152 = vector.extract_strided_slice %147 {offsets = [0, 256], sizes = [8, 128], strides = [1, 1]} : vector<8x384xf32> to vector<8x128xf32>
    %153 = arith.mulf %151, %85 : vector<8x128xf32>
    %154 = arith.mulf %150, %149 : vector<8x128xf32>
    %155 = arith.addf %153, %154 : vector<8x128xf32>
    %156 = math.tanh %155 : vector<8x128xf32>
    %157 = arith.mulf %152, %156 : vector<8x128xf32>
    %158 = arith.truncf %109 : vector<8x128xf32> to vector<8x128xbf16>
    %cst_48 = arith.constant dense<0.000000e+00> : vector<8x512xf32>
    %159 = tpu.matmul %158, %6, %cst_48 {dimension_numbers = #tpu.dot_dimension_numbers<[1], [0], [0], [1], [0, 0, 1, 1], [], []>} : vector<8x128xbf16>, vector<128x512xbf16>, vector<8x512xf32> -> vector<8x512xf32>
    %160 = vector.extract_strided_slice %5 {offsets = [16, 0], sizes = [8, 512], strides = [1, 1]} : vector<64x512xf32> to vector<8x512xf32>
    %161 = arith.addf %159, %160 : vector<8x512xf32>
    %162 = vector.extract_strided_slice %161 {offsets = [0, 0], sizes = [8, 384], strides = [1, 1]} : vector<8x512xf32> to vector<8x384xf32>
    %cst_49 = arith.constant 5.000000e-01 : f32
    %163 = vector.broadcast %cst_49 : f32 to vector<8x384xf32>
    %164 = arith.mulf %163, %162 : vector<8x384xf32>
    %165 = math.tanh %164 : vector<8x384xf32>
    %cst_50 = arith.constant 5.000000e-01 : f32
    %166 = vector.broadcast %cst_50 : f32 to vector<8x384xf32>
    %167 = arith.mulf %166, %165 : vector<8x384xf32>
    %cst_51 = arith.constant 5.000000e-01 : f32
    %168 = vector.broadcast %cst_51 : f32 to vector<8x384xf32>
    %169 = arith.addf %167, %168 : vector<8x384xf32>
    %170 = vector.extract_strided_slice %161 {offsets = [0, 384], sizes = [8, 128], strides = [1, 1]} : vector<8x512xf32> to vector<8x128xf32>
    %171 = math.tanh %170 : vector<8x128xf32>
    %172 = vector.extract_strided_slice %169 {offsets = [0, 0], sizes = [8, 128], strides = [1, 1]} : vector<8x384xf32> to vector<8x128xf32>
    %173 = vector.extract_strided_slice %169 {offsets = [0, 128], sizes = [8, 128], strides = [1, 1]} : vector<8x384xf32> to vector<8x128xf32>
    %174 = vector.extract_strided_slice %169 {offsets = [0, 256], sizes = [8, 128], strides = [1, 1]} : vector<8x384xf32> to vector<8x128xf32>
    %175 = arith.mulf %173, %107 : vector<8x128xf32>
    %176 = arith.mulf %172, %171 : vector<8x128xf32>
    %177 = arith.addf %175, %176 : vector<8x128xf32>
    %178 = math.tanh %177 : vector<8x128xf32>
    %179 = arith.mulf %174, %178 : vector<8x128xf32>
    %180 = arith.truncf %179 : vector<8x128xf32> to vector<8x128xbf16>
    %cst_52 = arith.constant dense<0.000000e+00> : vector<8x512xf32>
    %181 = tpu.matmul %180, %7, %cst_52 {dimension_numbers = #tpu.dot_dimension_numbers<[1], [0], [0], [1], [0, 0, 1, 1], [], []>} : vector<8x128xbf16>, vector<128x512xbf16>, vector<8x512xf32> -> vector<8x512xf32>
    %182 = arith.truncf %133 : vector<8x128xf32> to vector<8x128xbf16>
    %cst_53 = arith.constant dense<0.000000e+00> : vector<8x512xf32>
    %183 = tpu.matmul %182, %8, %cst_53 {dimension_numbers = #tpu.dot_dimension_numbers<[1], [0], [0], [1], [0, 0, 1, 1], [], []>} : vector<8x128xbf16>, vector<128x512xbf16>, vector<8x512xf32> -> vector<8x512xf32>
    %184 = arith.addf %181, %183 : vector<8x512xf32>
    %185 = arith.addf %184, %13 : vector<8x512xf32>
    %186 = vector.extract_strided_slice %185 {offsets = [0, 0], sizes = [8, 384], strides = [1, 1]} : vector<8x512xf32> to vector<8x384xf32>
    %cst_54 = arith.constant 5.000000e-01 : f32
    %187 = vector.broadcast %cst_54 : f32 to vector<8x384xf32>
    %188 = arith.mulf %187, %186 : vector<8x384xf32>
    %189 = math.tanh %188 : vector<8x384xf32>
    %cst_55 = arith.constant 5.000000e-01 : f32
    %190 = vector.broadcast %cst_55 : f32 to vector<8x384xf32>
    %191 = arith.mulf %190, %189 : vector<8x384xf32>
    %cst_56 = arith.constant 5.000000e-01 : f32
    %192 = vector.broadcast %cst_56 : f32 to vector<8x384xf32>
    %193 = arith.addf %191, %192 : vector<8x384xf32>
    %194 = vector.extract_strided_slice %185 {offsets = [0, 384], sizes = [8, 128], strides = [1, 1]} : vector<8x512xf32> to vector<8x128xf32>
    %195 = math.tanh %194 : vector<8x128xf32>
    %196 = vector.extract_strided_slice %193 {offsets = [0, 0], sizes = [8, 128], strides = [1, 1]} : vector<8x384xf32> to vector<8x128xf32>
    %197 = vector.extract_strided_slice %193 {offsets = [0, 128], sizes = [8, 128], strides = [1, 1]} : vector<8x384xf32> to vector<8x128xf32>
    %198 = vector.extract_strided_slice %193 {offsets = [0, 256], sizes = [8, 128], strides = [1, 1]} : vector<8x384xf32> to vector<8x128xf32>
    %199 = arith.mulf %197, %131 : vector<8x128xf32>
    %200 = arith.mulf %196, %195 : vector<8x128xf32>
    %201 = arith.addf %199, %200 : vector<8x128xf32>
    %202 = math.tanh %201 : vector<8x128xf32>
    %203 = arith.mulf %198, %202 : vector<8x128xf32>
    %204 = arith.truncf %203 : vector<8x128xf32> to vector<8x128xbf16>
    %cst_57 = arith.constant dense<0.000000e+00> : vector<8x512xf32>
    %205 = tpu.matmul %204, %9, %cst_57 {dimension_numbers = #tpu.dot_dimension_numbers<[1], [0], [0], [1], [0, 0, 1, 1], [], []>} : vector<8x128xbf16>, vector<128x512xbf16>, vector<8x512xf32> -> vector<8x512xf32>
    %206 = arith.truncf %157 : vector<8x128xf32> to vector<8x128xbf16>
    %cst_58 = arith.constant dense<0.000000e+00> : vector<8x512xf32>
    %207 = tpu.matmul %206, %10, %cst_58 {dimension_numbers = #tpu.dot_dimension_numbers<[1], [0], [0], [1], [0, 0, 1, 1], [], []>} : vector<8x128xbf16>, vector<128x512xbf16>, vector<8x512xf32> -> vector<8x512xf32>
    %208 = arith.addf %205, %207 : vector<8x512xf32>
    %209 = arith.addf %208, %16 : vector<8x512xf32>
    %210 = vector.extract_strided_slice %209 {offsets = [0, 0], sizes = [8, 384], strides = [1, 1]} : vector<8x512xf32> to vector<8x384xf32>
    %cst_59 = arith.constant 5.000000e-01 : f32
    %211 = vector.broadcast %cst_59 : f32 to vector<8x384xf32>
    %212 = arith.mulf %211, %210 : vector<8x384xf32>
    %213 = math.tanh %212 : vector<8x384xf32>
    %cst_60 = arith.constant 5.000000e-01 : f32
    %214 = vector.broadcast %cst_60 : f32 to vector<8x384xf32>
    %215 = arith.mulf %214, %213 : vector<8x384xf32>
    %cst_61 = arith.constant 5.000000e-01 : f32
    %216 = vector.broadcast %cst_61 : f32 to vector<8x384xf32>
    %217 = arith.addf %215, %216 : vector<8x384xf32>
    %218 = vector.extract_strided_slice %209 {offsets = [0, 384], sizes = [8, 128], strides = [1, 1]} : vector<8x512xf32> to vector<8x128xf32>
    %219 = math.tanh %218 : vector<8x128xf32>
    %220 = vector.extract_strided_slice %217 {offsets = [0, 0], sizes = [8, 128], strides = [1, 1]} : vector<8x384xf32> to vector<8x128xf32>
    %221 = vector.extract_strided_slice %217 {offsets = [0, 128], sizes = [8, 128], strides = [1, 1]} : vector<8x384xf32> to vector<8x128xf32>
    %222 = vector.extract_strided_slice %217 {offsets = [0, 256], sizes = [8, 128], strides = [1, 1]} : vector<8x384xf32> to vector<8x128xf32>
    %223 = arith.mulf %221, %155 : vector<8x128xf32>
    %224 = arith.mulf %220, %219 : vector<8x128xf32>
    %225 = arith.addf %223, %224 : vector<8x128xf32>
    %226 = math.tanh %225 : vector<8x128xf32>
    %227 = arith.mulf %222, %226 : vector<8x128xf32>
    %228 = arith.truncf %179 : vector<8x128xf32> to vector<8x128xbf16>
    %cst_62 = arith.constant dense<0.000000e+00> : vector<8x512xf32>
    %229 = tpu.matmul %228, %6, %cst_62 {dimension_numbers = #tpu.dot_dimension_numbers<[1], [0], [0], [1], [0, 0, 1, 1], [], []>} : vector<8x128xbf16>, vector<128x512xbf16>, vector<8x512xf32> -> vector<8x512xf32>
    %230 = vector.extract_strided_slice %5 {offsets = [24, 0], sizes = [8, 512], strides = [1, 1]} : vector<64x512xf32> to vector<8x512xf32>
    %231 = arith.addf %229, %230 : vector<8x512xf32>
    %232 = vector.extract_strided_slice %231 {offsets = [0, 0], sizes = [8, 384], strides = [1, 1]} : vector<8x512xf32> to vector<8x384xf32>
    %cst_63 = arith.constant 5.000000e-01 : f32
    %233 = vector.broadcast %cst_63 : f32 to vector<8x384xf32>
    %234 = arith.mulf %233, %232 : vector<8x384xf32>
    %235 = math.tanh %234 : vector<8x384xf32>
    %cst_64 = arith.constant 5.000000e-01 : f32
    %236 = vector.broadcast %cst_64 : f32 to vector<8x384xf32>
    %237 = arith.mulf %236, %235 : vector<8x384xf32>
    %cst_65 = arith.constant 5.000000e-01 : f32
    %238 = vector.broadcast %cst_65 : f32 to vector<8x384xf32>
    %239 = arith.addf %237, %238 : vector<8x384xf32>
    %240 = vector.extract_strided_slice %231 {offsets = [0, 384], sizes = [8, 128], strides = [1, 1]} : vector<8x512xf32> to vector<8x128xf32>
    %241 = math.tanh %240 : vector<8x128xf32>
    %242 = vector.extract_strided_slice %239 {offsets = [0, 0], sizes = [8, 128], strides = [1, 1]} : vector<8x384xf32> to vector<8x128xf32>
    %243 = vector.extract_strided_slice %239 {offsets = [0, 128], sizes = [8, 128], strides = [1, 1]} : vector<8x384xf32> to vector<8x128xf32>
    %244 = vector.extract_strided_slice %239 {offsets = [0, 256], sizes = [8, 128], strides = [1, 1]} : vector<8x384xf32> to vector<8x128xf32>
    %245 = arith.mulf %243, %177 : vector<8x128xf32>
    %246 = arith.mulf %242, %241 : vector<8x128xf32>
    %247 = arith.addf %245, %246 : vector<8x128xf32>
    %248 = math.tanh %247 : vector<8x128xf32>
    %249 = arith.mulf %244, %248 : vector<8x128xf32>
    %250 = arith.truncf %249 : vector<8x128xf32> to vector<8x128xbf16>
    %cst_66 = arith.constant dense<0.000000e+00> : vector<8x512xf32>
    %251 = tpu.matmul %250, %7, %cst_66 {dimension_numbers = #tpu.dot_dimension_numbers<[1], [0], [0], [1], [0, 0, 1, 1], [], []>} : vector<8x128xbf16>, vector<128x512xbf16>, vector<8x512xf32> -> vector<8x512xf32>
    %252 = arith.truncf %203 : vector<8x128xf32> to vector<8x128xbf16>
    %cst_67 = arith.constant dense<0.000000e+00> : vector<8x512xf32>
    %253 = tpu.matmul %252, %8, %cst_67 {dimension_numbers = #tpu.dot_dimension_numbers<[1], [0], [0], [1], [0, 0, 1, 1], [], []>} : vector<8x128xbf16>, vector<128x512xbf16>, vector<8x512xf32> -> vector<8x512xf32>
    %254 = arith.addf %251, %253 : vector<8x512xf32>
    %255 = arith.addf %254, %13 : vector<8x512xf32>
    %256 = vector.extract_strided_slice %255 {offsets = [0, 0], sizes = [8, 384], strides = [1, 1]} : vector<8x512xf32> to vector<8x384xf32>
    %cst_68 = arith.constant 5.000000e-01 : f32
    %257 = vector.broadcast %cst_68 : f32 to vector<8x384xf32>
    %258 = arith.mulf %257, %256 : vector<8x384xf32>
    %259 = math.tanh %258 : vector<8x384xf32>
    %cst_69 = arith.constant 5.000000e-01 : f32
    %260 = vector.broadcast %cst_69 : f32 to vector<8x384xf32>
    %261 = arith.mulf %260, %259 : vector<8x384xf32>
    %cst_70 = arith.constant 5.000000e-01 : f32
    %262 = vector.broadcast %cst_70 : f32 to vector<8x384xf32>
    %263 = arith.addf %261, %262 : vector<8x384xf32>
    %264 = vector.extract_strided_slice %255 {offsets = [0, 384], sizes = [8, 128], strides = [1, 1]} : vector<8x512xf32> to vector<8x128xf32>
    %265 = math.tanh %264 : vector<8x128xf32>
    %266 = vector.extract_strided_slice %263 {offsets = [0, 0], sizes = [8, 128], strides = [1, 1]} : vector<8x384xf32> to vector<8x128xf32>
    %267 = vector.extract_strided_slice %263 {offsets = [0, 128], sizes = [8, 128], strides = [1, 1]} : vector<8x384xf32> to vector<8x128xf32>
    %268 = vector.extract_strided_slice %263 {offsets = [0, 256], sizes = [8, 128], strides = [1, 1]} : vector<8x384xf32> to vector<8x128xf32>
    %269 = arith.mulf %267, %201 : vector<8x128xf32>
    %270 = arith.mulf %266, %265 : vector<8x128xf32>
    %271 = arith.addf %269, %270 : vector<8x128xf32>
    %272 = math.tanh %271 : vector<8x128xf32>
    %273 = arith.mulf %268, %272 : vector<8x128xf32>
    %274 = arith.truncf %273 : vector<8x128xf32> to vector<8x128xbf16>
    %cst_71 = arith.constant dense<0.000000e+00> : vector<8x512xf32>
    %275 = tpu.matmul %274, %9, %cst_71 {dimension_numbers = #tpu.dot_dimension_numbers<[1], [0], [0], [1], [0, 0, 1, 1], [], []>} : vector<8x128xbf16>, vector<128x512xbf16>, vector<8x512xf32> -> vector<8x512xf32>
    %276 = arith.truncf %227 : vector<8x128xf32> to vector<8x128xbf16>
    %cst_72 = arith.constant dense<0.000000e+00> : vector<8x512xf32>
    %277 = tpu.matmul %276, %10, %cst_72 {dimension_numbers = #tpu.dot_dimension_numbers<[1], [0], [0], [1], [0, 0, 1, 1], [], []>} : vector<8x128xbf16>, vector<128x512xbf16>, vector<8x512xf32> -> vector<8x512xf32>
    %278 = arith.addf %275, %277 : vector<8x512xf32>
    %279 = arith.addf %278, %16 : vector<8x512xf32>
    %280 = vector.extract_strided_slice %279 {offsets = [0, 0], sizes = [8, 384], strides = [1, 1]} : vector<8x512xf32> to vector<8x384xf32>
    %cst_73 = arith.constant 5.000000e-01 : f32
    %281 = vector.broadcast %cst_73 : f32 to vector<8x384xf32>
    %282 = arith.mulf %281, %280 : vector<8x384xf32>
    %283 = math.tanh %282 : vector<8x384xf32>
    %cst_74 = arith.constant 5.000000e-01 : f32
    %284 = vector.broadcast %cst_74 : f32 to vector<8x384xf32>
    %285 = arith.mulf %284, %283 : vector<8x384xf32>
    %cst_75 = arith.constant 5.000000e-01 : f32
    %286 = vector.broadcast %cst_75 : f32 to vector<8x384xf32>
    %287 = arith.addf %285, %286 : vector<8x384xf32>
    %288 = vector.extract_strided_slice %279 {offsets = [0, 384], sizes = [8, 128], strides = [1, 1]} : vector<8x512xf32> to vector<8x128xf32>
    %289 = math.tanh %288 : vector<8x128xf32>
    %290 = vector.extract_strided_slice %287 {offsets = [0, 0], sizes = [8, 128], strides = [1, 1]} : vector<8x384xf32> to vector<8x128xf32>
    %291 = vector.extract_strided_slice %287 {offsets = [0, 128], sizes = [8, 128], strides = [1, 1]} : vector<8x384xf32> to vector<8x128xf32>
    %292 = vector.extract_strided_slice %287 {offsets = [0, 256], sizes = [8, 128], strides = [1, 1]} : vector<8x384xf32> to vector<8x128xf32>
    %293 = arith.mulf %291, %225 : vector<8x128xf32>
    %294 = arith.mulf %290, %289 : vector<8x128xf32>
    %295 = arith.addf %293, %294 : vector<8x128xf32>
    %296 = math.tanh %295 : vector<8x128xf32>
    %297 = arith.mulf %292, %296 : vector<8x128xf32>
    %298 = arith.truncf %249 : vector<8x128xf32> to vector<8x128xbf16>
    %cst_76 = arith.constant dense<0.000000e+00> : vector<8x512xf32>
    %299 = tpu.matmul %298, %6, %cst_76 {dimension_numbers = #tpu.dot_dimension_numbers<[1], [0], [0], [1], [0, 0, 1, 1], [], []>} : vector<8x128xbf16>, vector<128x512xbf16>, vector<8x512xf32> -> vector<8x512xf32>
    %300 = vector.extract_strided_slice %5 {offsets = [32, 0], sizes = [8, 512], strides = [1, 1]} : vector<64x512xf32> to vector<8x512xf32>
    %301 = arith.addf %299, %300 : vector<8x512xf32>
    %302 = vector.extract_strided_slice %301 {offsets = [0, 0], sizes = [8, 384], strides = [1, 1]} : vector<8x512xf32> to vector<8x384xf32>
    %cst_77 = arith.constant 5.000000e-01 : f32
    %303 = vector.broadcast %cst_77 : f32 to vector<8x384xf32>
    %304 = arith.mulf %303, %302 : vector<8x384xf32>
    %305 = math.tanh %304 : vector<8x384xf32>
    %cst_78 = arith.constant 5.000000e-01 : f32
    %306 = vector.broadcast %cst_78 : f32 to vector<8x384xf32>
    %307 = arith.mulf %306, %305 : vector<8x384xf32>
    %cst_79 = arith.constant 5.000000e-01 : f32
    %308 = vector.broadcast %cst_79 : f32 to vector<8x384xf32>
    %309 = arith.addf %307, %308 : vector<8x384xf32>
    %310 = vector.extract_strided_slice %301 {offsets = [0, 384], sizes = [8, 128], strides = [1, 1]} : vector<8x512xf32> to vector<8x128xf32>
    %311 = math.tanh %310 : vector<8x128xf32>
    %312 = vector.extract_strided_slice %309 {offsets = [0, 0], sizes = [8, 128], strides = [1, 1]} : vector<8x384xf32> to vector<8x128xf32>
    %313 = vector.extract_strided_slice %309 {offsets = [0, 128], sizes = [8, 128], strides = [1, 1]} : vector<8x384xf32> to vector<8x128xf32>
    %314 = vector.extract_strided_slice %309 {offsets = [0, 256], sizes = [8, 128], strides = [1, 1]} : vector<8x384xf32> to vector<8x128xf32>
    %315 = arith.mulf %313, %247 : vector<8x128xf32>
    %316 = arith.mulf %312, %311 : vector<8x128xf32>
    %317 = arith.addf %315, %316 : vector<8x128xf32>
    %318 = math.tanh %317 : vector<8x128xf32>
    %319 = arith.mulf %314, %318 : vector<8x128xf32>
    %320 = arith.truncf %319 : vector<8x128xf32> to vector<8x128xbf16>
    %cst_80 = arith.constant dense<0.000000e+00> : vector<8x512xf32>
    %321 = tpu.matmul %320, %7, %cst_80 {dimension_numbers = #tpu.dot_dimension_numbers<[1], [0], [0], [1], [0, 0, 1, 1], [], []>} : vector<8x128xbf16>, vector<128x512xbf16>, vector<8x512xf32> -> vector<8x512xf32>
    %322 = arith.truncf %273 : vector<8x128xf32> to vector<8x128xbf16>
    %cst_81 = arith.constant dense<0.000000e+00> : vector<8x512xf32>
    %323 = tpu.matmul %322, %8, %cst_81 {dimension_numbers = #tpu.dot_dimension_numbers<[1], [0], [0], [1], [0, 0, 1, 1], [], []>} : vector<8x128xbf16>, vector<128x512xbf16>, vector<8x512xf32> -> vector<8x512xf32>
    %324 = arith.addf %321, %323 : vector<8x512xf32>
    %325 = arith.addf %324, %13 : vector<8x512xf32>
    %326 = vector.extract_strided_slice %325 {offsets = [0, 0], sizes = [8, 384], strides = [1, 1]} : vector<8x512xf32> to vector<8x384xf32>
    %cst_82 = arith.constant 5.000000e-01 : f32
    %327 = vector.broadcast %cst_82 : f32 to vector<8x384xf32>
    %328 = arith.mulf %327, %326 : vector<8x384xf32>
    %329 = math.tanh %328 : vector<8x384xf32>
    %cst_83 = arith.constant 5.000000e-01 : f32
    %330 = vector.broadcast %cst_83 : f32 to vector<8x384xf32>
    %331 = arith.mulf %330, %329 : vector<8x384xf32>
    %cst_84 = arith.constant 5.000000e-01 : f32
    %332 = vector.broadcast %cst_84 : f32 to vector<8x384xf32>
    %333 = arith.addf %331, %332 : vector<8x384xf32>
    %334 = vector.extract_strided_slice %325 {offsets = [0, 384], sizes = [8, 128], strides = [1, 1]} : vector<8x512xf32> to vector<8x128xf32>
    %335 = math.tanh %334 : vector<8x128xf32>
    %336 = vector.extract_strided_slice %333 {offsets = [0, 0], sizes = [8, 128], strides = [1, 1]} : vector<8x384xf32> to vector<8x128xf32>
    %337 = vector.extract_strided_slice %333 {offsets = [0, 128], sizes = [8, 128], strides = [1, 1]} : vector<8x384xf32> to vector<8x128xf32>
    %338 = vector.extract_strided_slice %333 {offsets = [0, 256], sizes = [8, 128], strides = [1, 1]} : vector<8x384xf32> to vector<8x128xf32>
    %339 = arith.mulf %337, %271 : vector<8x128xf32>
    %340 = arith.mulf %336, %335 : vector<8x128xf32>
    %341 = arith.addf %339, %340 : vector<8x128xf32>
    %342 = math.tanh %341 : vector<8x128xf32>
    %343 = arith.mulf %338, %342 : vector<8x128xf32>
    %344 = arith.truncf %343 : vector<8x128xf32> to vector<8x128xbf16>
    %cst_85 = arith.constant dense<0.000000e+00> : vector<8x512xf32>
    %345 = tpu.matmul %344, %9, %cst_85 {dimension_numbers = #tpu.dot_dimension_numbers<[1], [0], [0], [1], [0, 0, 1, 1], [], []>} : vector<8x128xbf16>, vector<128x512xbf16>, vector<8x512xf32> -> vector<8x512xf32>
    %346 = arith.truncf %297 : vector<8x128xf32> to vector<8x128xbf16>
    %cst_86 = arith.constant dense<0.000000e+00> : vector<8x512xf32>
    %347 = tpu.matmul %346, %10, %cst_86 {dimension_numbers = #tpu.dot_dimension_numbers<[1], [0], [0], [1], [0, 0, 1, 1], [], []>} : vector<8x128xbf16>, vector<128x512xbf16>, vector<8x512xf32> -> vector<8x512xf32>
    %348 = arith.addf %345, %347 : vector<8x512xf32>
    %349 = arith.addf %348, %16 : vector<8x512xf32>
    %350 = vector.extract_strided_slice %349 {offsets = [0, 0], sizes = [8, 384], strides = [1, 1]} : vector<8x512xf32> to vector<8x384xf32>
    %cst_87 = arith.constant 5.000000e-01 : f32
    %351 = vector.broadcast %cst_87 : f32 to vector<8x384xf32>
    %352 = arith.mulf %351, %350 : vector<8x384xf32>
    %353 = math.tanh %352 : vector<8x384xf32>
    %cst_88 = arith.constant 5.000000e-01 : f32
    %354 = vector.broadcast %cst_88 : f32 to vector<8x384xf32>
    %355 = arith.mulf %354, %353 : vector<8x384xf32>
    %cst_89 = arith.constant 5.000000e-01 : f32
    %356 = vector.broadcast %cst_89 : f32 to vector<8x384xf32>
    %357 = arith.addf %355, %356 : vector<8x384xf32>
    %358 = vector.extract_strided_slice %349 {offsets = [0, 384], sizes = [8, 128], strides = [1, 1]} : vector<8x512xf32> to vector<8x128xf32>
    %359 = math.tanh %358 : vector<8x128xf32>
    %360 = vector.extract_strided_slice %357 {offsets = [0, 0], sizes = [8, 128], strides = [1, 1]} : vector<8x384xf32> to vector<8x128xf32>
    %361 = vector.extract_strided_slice %357 {offsets = [0, 128], sizes = [8, 128], strides = [1, 1]} : vector<8x384xf32> to vector<8x128xf32>
    %362 = vector.extract_strided_slice %357 {offsets = [0, 256], sizes = [8, 128], strides = [1, 1]} : vector<8x384xf32> to vector<8x128xf32>
    %363 = arith.mulf %361, %295 : vector<8x128xf32>
    %364 = arith.mulf %360, %359 : vector<8x128xf32>
    %365 = arith.addf %363, %364 : vector<8x128xf32>
    %366 = math.tanh %365 : vector<8x128xf32>
    %367 = arith.mulf %362, %366 : vector<8x128xf32>
    %368 = arith.truncf %319 : vector<8x128xf32> to vector<8x128xbf16>
    %cst_90 = arith.constant dense<0.000000e+00> : vector<8x512xf32>
    %369 = tpu.matmul %368, %6, %cst_90 {dimension_numbers = #tpu.dot_dimension_numbers<[1], [0], [0], [1], [0, 0, 1, 1], [], []>} : vector<8x128xbf16>, vector<128x512xbf16>, vector<8x512xf32> -> vector<8x512xf32>
    %370 = vector.extract_strided_slice %5 {offsets = [40, 0], sizes = [8, 512], strides = [1, 1]} : vector<64x512xf32> to vector<8x512xf32>
    %371 = arith.addf %369, %370 : vector<8x512xf32>
    %372 = vector.extract_strided_slice %371 {offsets = [0, 0], sizes = [8, 384], strides = [1, 1]} : vector<8x512xf32> to vector<8x384xf32>
    %cst_91 = arith.constant 5.000000e-01 : f32
    %373 = vector.broadcast %cst_91 : f32 to vector<8x384xf32>
    %374 = arith.mulf %373, %372 : vector<8x384xf32>
    %375 = math.tanh %374 : vector<8x384xf32>
    %cst_92 = arith.constant 5.000000e-01 : f32
    %376 = vector.broadcast %cst_92 : f32 to vector<8x384xf32>
    %377 = arith.mulf %376, %375 : vector<8x384xf32>
    %cst_93 = arith.constant 5.000000e-01 : f32
    %378 = vector.broadcast %cst_93 : f32 to vector<8x384xf32>
    %379 = arith.addf %377, %378 : vector<8x384xf32>
    %380 = vector.extract_strided_slice %371 {offsets = [0, 384], sizes = [8, 128], strides = [1, 1]} : vector<8x512xf32> to vector<8x128xf32>
    %381 = math.tanh %380 : vector<8x128xf32>
    %382 = vector.extract_strided_slice %379 {offsets = [0, 0], sizes = [8, 128], strides = [1, 1]} : vector<8x384xf32> to vector<8x128xf32>
    %383 = vector.extract_strided_slice %379 {offsets = [0, 128], sizes = [8, 128], strides = [1, 1]} : vector<8x384xf32> to vector<8x128xf32>
    %384 = vector.extract_strided_slice %379 {offsets = [0, 256], sizes = [8, 128], strides = [1, 1]} : vector<8x384xf32> to vector<8x128xf32>
    %385 = arith.mulf %383, %317 : vector<8x128xf32>
    %386 = arith.mulf %382, %381 : vector<8x128xf32>
    %387 = arith.addf %385, %386 : vector<8x128xf32>
    %388 = math.tanh %387 : vector<8x128xf32>
    %389 = arith.mulf %384, %388 : vector<8x128xf32>
    %390 = arith.truncf %389 : vector<8x128xf32> to vector<8x128xbf16>
    %cst_94 = arith.constant dense<0.000000e+00> : vector<8x512xf32>
    %391 = tpu.matmul %390, %7, %cst_94 {dimension_numbers = #tpu.dot_dimension_numbers<[1], [0], [0], [1], [0, 0, 1, 1], [], []>} : vector<8x128xbf16>, vector<128x512xbf16>, vector<8x512xf32> -> vector<8x512xf32>
    %392 = arith.truncf %343 : vector<8x128xf32> to vector<8x128xbf16>
    %cst_95 = arith.constant dense<0.000000e+00> : vector<8x512xf32>
    %393 = tpu.matmul %392, %8, %cst_95 {dimension_numbers = #tpu.dot_dimension_numbers<[1], [0], [0], [1], [0, 0, 1, 1], [], []>} : vector<8x128xbf16>, vector<128x512xbf16>, vector<8x512xf32> -> vector<8x512xf32>
    %394 = arith.addf %391, %393 : vector<8x512xf32>
    %395 = arith.addf %394, %13 : vector<8x512xf32>
    %396 = vector.extract_strided_slice %395 {offsets = [0, 0], sizes = [8, 384], strides = [1, 1]} : vector<8x512xf32> to vector<8x384xf32>
    %cst_96 = arith.constant 5.000000e-01 : f32
    %397 = vector.broadcast %cst_96 : f32 to vector<8x384xf32>
    %398 = arith.mulf %397, %396 : vector<8x384xf32>
    %399 = math.tanh %398 : vector<8x384xf32>
    %cst_97 = arith.constant 5.000000e-01 : f32
    %400 = vector.broadcast %cst_97 : f32 to vector<8x384xf32>
    %401 = arith.mulf %400, %399 : vector<8x384xf32>
    %cst_98 = arith.constant 5.000000e-01 : f32
    %402 = vector.broadcast %cst_98 : f32 to vector<8x384xf32>
    %403 = arith.addf %401, %402 : vector<8x384xf32>
    %404 = vector.extract_strided_slice %395 {offsets = [0, 384], sizes = [8, 128], strides = [1, 1]} : vector<8x512xf32> to vector<8x128xf32>
    %405 = math.tanh %404 : vector<8x128xf32>
    %406 = vector.extract_strided_slice %403 {offsets = [0, 0], sizes = [8, 128], strides = [1, 1]} : vector<8x384xf32> to vector<8x128xf32>
    %407 = vector.extract_strided_slice %403 {offsets = [0, 128], sizes = [8, 128], strides = [1, 1]} : vector<8x384xf32> to vector<8x128xf32>
    %408 = vector.extract_strided_slice %403 {offsets = [0, 256], sizes = [8, 128], strides = [1, 1]} : vector<8x384xf32> to vector<8x128xf32>
    %409 = arith.mulf %407, %341 : vector<8x128xf32>
    %410 = arith.mulf %406, %405 : vector<8x128xf32>
    %411 = arith.addf %409, %410 : vector<8x128xf32>
    %412 = math.tanh %411 : vector<8x128xf32>
    %413 = arith.mulf %408, %412 : vector<8x128xf32>
    %414 = arith.truncf %413 : vector<8x128xf32> to vector<8x128xbf16>
    %cst_99 = arith.constant dense<0.000000e+00> : vector<8x512xf32>
    %415 = tpu.matmul %414, %9, %cst_99 {dimension_numbers = #tpu.dot_dimension_numbers<[1], [0], [0], [1], [0, 0, 1, 1], [], []>} : vector<8x128xbf16>, vector<128x512xbf16>, vector<8x512xf32> -> vector<8x512xf32>
    %416 = arith.truncf %367 : vector<8x128xf32> to vector<8x128xbf16>
    %cst_100 = arith.constant dense<0.000000e+00> : vector<8x512xf32>
    %417 = tpu.matmul %416, %10, %cst_100 {dimension_numbers = #tpu.dot_dimension_numbers<[1], [0], [0], [1], [0, 0, 1, 1], [], []>} : vector<8x128xbf16>, vector<128x512xbf16>, vector<8x512xf32> -> vector<8x512xf32>
    %418 = arith.addf %415, %417 : vector<8x512xf32>
    %419 = arith.addf %418, %16 : vector<8x512xf32>
    %420 = vector.extract_strided_slice %419 {offsets = [0, 0], sizes = [8, 384], strides = [1, 1]} : vector<8x512xf32> to vector<8x384xf32>
    %cst_101 = arith.constant 5.000000e-01 : f32
    %421 = vector.broadcast %cst_101 : f32 to vector<8x384xf32>
    %422 = arith.mulf %421, %420 : vector<8x384xf32>
    %423 = math.tanh %422 : vector<8x384xf32>
    %cst_102 = arith.constant 5.000000e-01 : f32
    %424 = vector.broadcast %cst_102 : f32 to vector<8x384xf32>
    %425 = arith.mulf %424, %423 : vector<8x384xf32>
    %cst_103 = arith.constant 5.000000e-01 : f32
    %426 = vector.broadcast %cst_103 : f32 to vector<8x384xf32>
    %427 = arith.addf %425, %426 : vector<8x384xf32>
    %428 = vector.extract_strided_slice %419 {offsets = [0, 384], sizes = [8, 128], strides = [1, 1]} : vector<8x512xf32> to vector<8x128xf32>
    %429 = math.tanh %428 : vector<8x128xf32>
    %430 = vector.extract_strided_slice %427 {offsets = [0, 0], sizes = [8, 128], strides = [1, 1]} : vector<8x384xf32> to vector<8x128xf32>
    %431 = vector.extract_strided_slice %427 {offsets = [0, 128], sizes = [8, 128], strides = [1, 1]} : vector<8x384xf32> to vector<8x128xf32>
    %432 = vector.extract_strided_slice %427 {offsets = [0, 256], sizes = [8, 128], strides = [1, 1]} : vector<8x384xf32> to vector<8x128xf32>
    %433 = arith.mulf %431, %365 : vector<8x128xf32>
    %434 = arith.mulf %430, %429 : vector<8x128xf32>
    %435 = arith.addf %433, %434 : vector<8x128xf32>
    %436 = math.tanh %435 : vector<8x128xf32>
    %437 = arith.mulf %432, %436 : vector<8x128xf32>
    %438 = arith.truncf %389 : vector<8x128xf32> to vector<8x128xbf16>
    %cst_104 = arith.constant dense<0.000000e+00> : vector<8x512xf32>
    %439 = tpu.matmul %438, %6, %cst_104 {dimension_numbers = #tpu.dot_dimension_numbers<[1], [0], [0], [1], [0, 0, 1, 1], [], []>} : vector<8x128xbf16>, vector<128x512xbf16>, vector<8x512xf32> -> vector<8x512xf32>
    %440 = vector.extract_strided_slice %5 {offsets = [48, 0], sizes = [8, 512], strides = [1, 1]} : vector<64x512xf32> to vector<8x512xf32>
    %441 = arith.addf %439, %440 : vector<8x512xf32>
    %442 = vector.extract_strided_slice %441 {offsets = [0, 0], sizes = [8, 384], strides = [1, 1]} : vector<8x512xf32> to vector<8x384xf32>
    %cst_105 = arith.constant 5.000000e-01 : f32
    %443 = vector.broadcast %cst_105 : f32 to vector<8x384xf32>
    %444 = arith.mulf %443, %442 : vector<8x384xf32>
    %445 = math.tanh %444 : vector<8x384xf32>
    %cst_106 = arith.constant 5.000000e-01 : f32
    %446 = vector.broadcast %cst_106 : f32 to vector<8x384xf32>
    %447 = arith.mulf %446, %445 : vector<8x384xf32>
    %cst_107 = arith.constant 5.000000e-01 : f32
    %448 = vector.broadcast %cst_107 : f32 to vector<8x384xf32>
    %449 = arith.addf %447, %448 : vector<8x384xf32>
    %450 = vector.extract_strided_slice %441 {offsets = [0, 384], sizes = [8, 128], strides = [1, 1]} : vector<8x512xf32> to vector<8x128xf32>
    %451 = math.tanh %450 : vector<8x128xf32>
    %452 = vector.extract_strided_slice %449 {offsets = [0, 0], sizes = [8, 128], strides = [1, 1]} : vector<8x384xf32> to vector<8x128xf32>
    %453 = vector.extract_strided_slice %449 {offsets = [0, 128], sizes = [8, 128], strides = [1, 1]} : vector<8x384xf32> to vector<8x128xf32>
    %454 = vector.extract_strided_slice %449 {offsets = [0, 256], sizes = [8, 128], strides = [1, 1]} : vector<8x384xf32> to vector<8x128xf32>
    %455 = arith.mulf %453, %387 : vector<8x128xf32>
    %456 = arith.mulf %452, %451 : vector<8x128xf32>
    %457 = arith.addf %455, %456 : vector<8x128xf32>
    %458 = math.tanh %457 : vector<8x128xf32>
    %459 = arith.mulf %454, %458 : vector<8x128xf32>
    %460 = arith.truncf %459 : vector<8x128xf32> to vector<8x128xbf16>
    %cst_108 = arith.constant dense<0.000000e+00> : vector<8x512xf32>
    %461 = tpu.matmul %460, %7, %cst_108 {dimension_numbers = #tpu.dot_dimension_numbers<[1], [0], [0], [1], [0, 0, 1, 1], [], []>} : vector<8x128xbf16>, vector<128x512xbf16>, vector<8x512xf32> -> vector<8x512xf32>
    %462 = arith.truncf %413 : vector<8x128xf32> to vector<8x128xbf16>
    %cst_109 = arith.constant dense<0.000000e+00> : vector<8x512xf32>
    %463 = tpu.matmul %462, %8, %cst_109 {dimension_numbers = #tpu.dot_dimension_numbers<[1], [0], [0], [1], [0, 0, 1, 1], [], []>} : vector<8x128xbf16>, vector<128x512xbf16>, vector<8x512xf32> -> vector<8x512xf32>
    %464 = arith.addf %461, %463 : vector<8x512xf32>
    %465 = arith.addf %464, %13 : vector<8x512xf32>
    %466 = vector.extract_strided_slice %465 {offsets = [0, 0], sizes = [8, 384], strides = [1, 1]} : vector<8x512xf32> to vector<8x384xf32>
    %cst_110 = arith.constant 5.000000e-01 : f32
    %467 = vector.broadcast %cst_110 : f32 to vector<8x384xf32>
    %468 = arith.mulf %467, %466 : vector<8x384xf32>
    %469 = math.tanh %468 : vector<8x384xf32>
    %cst_111 = arith.constant 5.000000e-01 : f32
    %470 = vector.broadcast %cst_111 : f32 to vector<8x384xf32>
    %471 = arith.mulf %470, %469 : vector<8x384xf32>
    %cst_112 = arith.constant 5.000000e-01 : f32
    %472 = vector.broadcast %cst_112 : f32 to vector<8x384xf32>
    %473 = arith.addf %471, %472 : vector<8x384xf32>
    %474 = vector.extract_strided_slice %465 {offsets = [0, 384], sizes = [8, 128], strides = [1, 1]} : vector<8x512xf32> to vector<8x128xf32>
    %475 = math.tanh %474 : vector<8x128xf32>
    %476 = vector.extract_strided_slice %473 {offsets = [0, 0], sizes = [8, 128], strides = [1, 1]} : vector<8x384xf32> to vector<8x128xf32>
    %477 = vector.extract_strided_slice %473 {offsets = [0, 128], sizes = [8, 128], strides = [1, 1]} : vector<8x384xf32> to vector<8x128xf32>
    %478 = vector.extract_strided_slice %473 {offsets = [0, 256], sizes = [8, 128], strides = [1, 1]} : vector<8x384xf32> to vector<8x128xf32>
    %479 = arith.mulf %477, %411 : vector<8x128xf32>
    %480 = arith.mulf %476, %475 : vector<8x128xf32>
    %481 = arith.addf %479, %480 : vector<8x128xf32>
    %482 = math.tanh %481 : vector<8x128xf32>
    %483 = arith.mulf %478, %482 : vector<8x128xf32>
    %484 = arith.truncf %483 : vector<8x128xf32> to vector<8x128xbf16>
    %cst_113 = arith.constant dense<0.000000e+00> : vector<8x512xf32>
    %485 = tpu.matmul %484, %9, %cst_113 {dimension_numbers = #tpu.dot_dimension_numbers<[1], [0], [0], [1], [0, 0, 1, 1], [], []>} : vector<8x128xbf16>, vector<128x512xbf16>, vector<8x512xf32> -> vector<8x512xf32>
    %486 = arith.truncf %437 : vector<8x128xf32> to vector<8x128xbf16>
    %cst_114 = arith.constant dense<0.000000e+00> : vector<8x512xf32>
    %487 = tpu.matmul %486, %10, %cst_114 {dimension_numbers = #tpu.dot_dimension_numbers<[1], [0], [0], [1], [0, 0, 1, 1], [], []>} : vector<8x128xbf16>, vector<128x512xbf16>, vector<8x512xf32> -> vector<8x512xf32>
    %488 = arith.addf %485, %487 : vector<8x512xf32>
    %489 = arith.addf %488, %16 : vector<8x512xf32>
    %490 = vector.extract_strided_slice %489 {offsets = [0, 0], sizes = [8, 384], strides = [1, 1]} : vector<8x512xf32> to vector<8x384xf32>
    %cst_115 = arith.constant 5.000000e-01 : f32
    %491 = vector.broadcast %cst_115 : f32 to vector<8x384xf32>
    %492 = arith.mulf %491, %490 : vector<8x384xf32>
    %493 = math.tanh %492 : vector<8x384xf32>
    %cst_116 = arith.constant 5.000000e-01 : f32
    %494 = vector.broadcast %cst_116 : f32 to vector<8x384xf32>
    %495 = arith.mulf %494, %493 : vector<8x384xf32>
    %cst_117 = arith.constant 5.000000e-01 : f32
    %496 = vector.broadcast %cst_117 : f32 to vector<8x384xf32>
    %497 = arith.addf %495, %496 : vector<8x384xf32>
    %498 = vector.extract_strided_slice %489 {offsets = [0, 384], sizes = [8, 128], strides = [1, 1]} : vector<8x512xf32> to vector<8x128xf32>
    %499 = math.tanh %498 : vector<8x128xf32>
    %500 = vector.extract_strided_slice %497 {offsets = [0, 0], sizes = [8, 128], strides = [1, 1]} : vector<8x384xf32> to vector<8x128xf32>
    %501 = vector.extract_strided_slice %497 {offsets = [0, 128], sizes = [8, 128], strides = [1, 1]} : vector<8x384xf32> to vector<8x128xf32>
    %502 = vector.extract_strided_slice %497 {offsets = [0, 256], sizes = [8, 128], strides = [1, 1]} : vector<8x384xf32> to vector<8x128xf32>
    %503 = arith.mulf %501, %435 : vector<8x128xf32>
    %504 = arith.mulf %500, %499 : vector<8x128xf32>
    %505 = arith.addf %503, %504 : vector<8x128xf32>
    %506 = math.tanh %505 : vector<8x128xf32>
    %507 = arith.mulf %502, %506 : vector<8x128xf32>
    %508 = arith.truncf %459 : vector<8x128xf32> to vector<8x128xbf16>
    %cst_118 = arith.constant dense<0.000000e+00> : vector<8x512xf32>
    %509 = tpu.matmul %508, %6, %cst_118 {dimension_numbers = #tpu.dot_dimension_numbers<[1], [0], [0], [1], [0, 0, 1, 1], [], []>} : vector<8x128xbf16>, vector<128x512xbf16>, vector<8x512xf32> -> vector<8x512xf32>
    %510 = vector.extract_strided_slice %5 {offsets = [56, 0], sizes = [8, 512], strides = [1, 1]} : vector<64x512xf32> to vector<8x512xf32>
    %511 = arith.addf %509, %510 : vector<8x512xf32>
    %512 = vector.extract_strided_slice %511 {offsets = [0, 0], sizes = [8, 384], strides = [1, 1]} : vector<8x512xf32> to vector<8x384xf32>
    %cst_119 = arith.constant 5.000000e-01 : f32
    %513 = vector.broadcast %cst_119 : f32 to vector<8x384xf32>
    %514 = arith.mulf %513, %512 : vector<8x384xf32>
    %515 = math.tanh %514 : vector<8x384xf32>
    %cst_120 = arith.constant 5.000000e-01 : f32
    %516 = vector.broadcast %cst_120 : f32 to vector<8x384xf32>
    %517 = arith.mulf %516, %515 : vector<8x384xf32>
    %cst_121 = arith.constant 5.000000e-01 : f32
    %518 = vector.broadcast %cst_121 : f32 to vector<8x384xf32>
    %519 = arith.addf %517, %518 : vector<8x384xf32>
    %520 = vector.extract_strided_slice %511 {offsets = [0, 384], sizes = [8, 128], strides = [1, 1]} : vector<8x512xf32> to vector<8x128xf32>
    %521 = math.tanh %520 : vector<8x128xf32>
    %522 = vector.extract_strided_slice %519 {offsets = [0, 0], sizes = [8, 128], strides = [1, 1]} : vector<8x384xf32> to vector<8x128xf32>
    %523 = vector.extract_strided_slice %519 {offsets = [0, 128], sizes = [8, 128], strides = [1, 1]} : vector<8x384xf32> to vector<8x128xf32>
    %524 = vector.extract_strided_slice %519 {offsets = [0, 256], sizes = [8, 128], strides = [1, 1]} : vector<8x384xf32> to vector<8x128xf32>
    %525 = arith.mulf %523, %457 : vector<8x128xf32>
    %526 = arith.mulf %522, %521 : vector<8x128xf32>
    %527 = arith.addf %525, %526 : vector<8x128xf32>
    %528 = math.tanh %527 : vector<8x128xf32>
    %529 = arith.mulf %524, %528 : vector<8x128xf32>
    %530 = arith.truncf %529 : vector<8x128xf32> to vector<8x128xbf16>
    %cst_122 = arith.constant dense<0.000000e+00> : vector<8x512xf32>
    %531 = tpu.matmul %530, %7, %cst_122 {dimension_numbers = #tpu.dot_dimension_numbers<[1], [0], [0], [1], [0, 0, 1, 1], [], []>} : vector<8x128xbf16>, vector<128x512xbf16>, vector<8x512xf32> -> vector<8x512xf32>
    %532 = arith.truncf %483 : vector<8x128xf32> to vector<8x128xbf16>
    %cst_123 = arith.constant dense<0.000000e+00> : vector<8x512xf32>
    %533 = tpu.matmul %532, %8, %cst_123 {dimension_numbers = #tpu.dot_dimension_numbers<[1], [0], [0], [1], [0, 0, 1, 1], [], []>} : vector<8x128xbf16>, vector<128x512xbf16>, vector<8x512xf32> -> vector<8x512xf32>
    %534 = arith.addf %531, %533 : vector<8x512xf32>
    %535 = arith.addf %534, %13 : vector<8x512xf32>
    %536 = vector.extract_strided_slice %535 {offsets = [0, 0], sizes = [8, 384], strides = [1, 1]} : vector<8x512xf32> to vector<8x384xf32>
    %cst_124 = arith.constant 5.000000e-01 : f32
    %537 = vector.broadcast %cst_124 : f32 to vector<8x384xf32>
    %538 = arith.mulf %537, %536 : vector<8x384xf32>
    %539 = math.tanh %538 : vector<8x384xf32>
    %cst_125 = arith.constant 5.000000e-01 : f32
    %540 = vector.broadcast %cst_125 : f32 to vector<8x384xf32>
    %541 = arith.mulf %540, %539 : vector<8x384xf32>
    %cst_126 = arith.constant 5.000000e-01 : f32
    %542 = vector.broadcast %cst_126 : f32 to vector<8x384xf32>
    %543 = arith.addf %541, %542 : vector<8x384xf32>
    %544 = vector.extract_strided_slice %535 {offsets = [0, 384], sizes = [8, 128], strides = [1, 1]} : vector<8x512xf32> to vector<8x128xf32>
    %545 = math.tanh %544 : vector<8x128xf32>
    %546 = vector.extract_strided_slice %543 {offsets = [0, 0], sizes = [8, 128], strides = [1, 1]} : vector<8x384xf32> to vector<8x128xf32>
    %547 = vector.extract_strided_slice %543 {offsets = [0, 128], sizes = [8, 128], strides = [1, 1]} : vector<8x384xf32> to vector<8x128xf32>
    %548 = vector.extract_strided_slice %543 {offsets = [0, 256], sizes = [8, 128], strides = [1, 1]} : vector<8x384xf32> to vector<8x128xf32>
    %549 = arith.mulf %547, %481 : vector<8x128xf32>
    %550 = arith.mulf %546, %545 : vector<8x128xf32>
    %551 = arith.addf %549, %550 : vector<8x128xf32>
    %552 = math.tanh %551 : vector<8x128xf32>
    %553 = arith.mulf %548, %552 : vector<8x128xf32>
    %554 = arith.truncf %553 : vector<8x128xf32> to vector<8x128xbf16>
    %cst_127 = arith.constant dense<0.000000e+00> : vector<8x512xf32>
    %555 = tpu.matmul %554, %9, %cst_127 {dimension_numbers = #tpu.dot_dimension_numbers<[1], [0], [0], [1], [0, 0, 1, 1], [], []>} : vector<8x128xbf16>, vector<128x512xbf16>, vector<8x512xf32> -> vector<8x512xf32>
    %556 = arith.truncf %507 : vector<8x128xf32> to vector<8x128xbf16>
    %cst_128 = arith.constant dense<0.000000e+00> : vector<8x512xf32>
    %557 = tpu.matmul %556, %10, %cst_128 {dimension_numbers = #tpu.dot_dimension_numbers<[1], [0], [0], [1], [0, 0, 1, 1], [], []>} : vector<8x128xbf16>, vector<128x512xbf16>, vector<8x512xf32> -> vector<8x512xf32>
    %558 = arith.addf %555, %557 : vector<8x512xf32>
    %559 = arith.addf %558, %16 : vector<8x512xf32>
    %560 = vector.extract_strided_slice %559 {offsets = [0, 0], sizes = [8, 384], strides = [1, 1]} : vector<8x512xf32> to vector<8x384xf32>
    %cst_129 = arith.constant 5.000000e-01 : f32
    %561 = vector.broadcast %cst_129 : f32 to vector<8x384xf32>
    %562 = arith.mulf %561, %560 : vector<8x384xf32>
    %563 = math.tanh %562 : vector<8x384xf32>
    %cst_130 = arith.constant 5.000000e-01 : f32
    %564 = vector.broadcast %cst_130 : f32 to vector<8x384xf32>
    %565 = arith.mulf %564, %563 : vector<8x384xf32>
    %cst_131 = arith.constant 5.000000e-01 : f32
    %566 = vector.broadcast %cst_131 : f32 to vector<8x384xf32>
    %567 = arith.addf %565, %566 : vector<8x384xf32>
    %568 = vector.extract_strided_slice %559 {offsets = [0, 384], sizes = [8, 128], strides = [1, 1]} : vector<8x512xf32> to vector<8x128xf32>
    %569 = math.tanh %568 : vector<8x128xf32>
    %570 = vector.extract_strided_slice %567 {offsets = [0, 0], sizes = [8, 128], strides = [1, 1]} : vector<8x384xf32> to vector<8x128xf32>
    %571 = vector.extract_strided_slice %567 {offsets = [0, 128], sizes = [8, 128], strides = [1, 1]} : vector<8x384xf32> to vector<8x128xf32>
    %572 = vector.extract_strided_slice %567 {offsets = [0, 256], sizes = [8, 128], strides = [1, 1]} : vector<8x384xf32> to vector<8x128xf32>
    %573 = arith.mulf %571, %505 : vector<8x128xf32>
    %574 = arith.mulf %570, %569 : vector<8x128xf32>
    %575 = arith.addf %573, %574 : vector<8x128xf32>
    %576 = math.tanh %575 : vector<8x128xf32>
    %577 = arith.mulf %572, %576 : vector<8x128xf32>
    %578 = arith.truncf %577 : vector<8x128xf32> to vector<8x128xbf16>
    %c0_132 = arith.constant 0 : index
    %c0_133 = arith.constant 0 : index
    %579 = vector.load %arg10[%c0_132, %c0_133] : memref<128x32xbf16, #tpu.memory_space<vmem>>, vector<128x32xbf16>
    %cst_134 = arith.constant dense<0.000000e+00> : vector<8x32xf32>
    %580 = tpu.matmul %578, %579, %cst_134 {dimension_numbers = #tpu.dot_dimension_numbers<[1], [0], [0], [1], [0, 0, 1, 1], [], []>} : vector<8x128xbf16>, vector<128x32xbf16>, vector<8x32xf32> -> vector<8x32xf32>
    %c0_135 = arith.constant 0 : index
    %c0_136 = arith.constant 0 : index
    %581 = vector.load %arg11[%c0_135, %c0_136] : memref<1x32xf32, #tpu.memory_space<vmem>>, vector<1x32xf32>
    %582 = vector.broadcast %581 : vector<1x32xf32> to vector<8x32xf32>
    %583 = arith.addf %580, %582 : vector<8x32xf32>
    %cst_137 = arith.constant 0.000000e+00 : f32
    %584 = vector.broadcast %cst_137 : f32 to vector<8x32xf32>
    %585 = arith.maximumf %583, %584 : vector<8x32xf32>
    %586 = arith.truncf %585 : vector<8x32xf32> to vector<8x32xbf16>
    %c0_138 = arith.constant 0 : index
    %c0_139 = arith.constant 0 : index
    %587 = vector.load %arg12[%c0_138, %c0_139] : memref<32x128xbf16, #tpu.memory_space<vmem>>, vector<32x128xbf16>
    %cst_140 = arith.constant dense<0.000000e+00> : vector<8x128xf32>
    %588 = tpu.matmul %586, %587, %cst_140 {dimension_numbers = #tpu.dot_dimension_numbers<[1], [0], [0], [1], [0, 0, 1, 1], [], []>} : vector<8x32xbf16>, vector<32x128xbf16>, vector<8x128xf32> -> vector<8x128xf32>
    %589 = arith.truncf %577 : vector<8x128xf32> to vector<8x128xbf16>
    %c0_141 = arith.constant 0 : index
    %c0_142 = arith.constant 0 : index
    %590 = vector.load %arg13[%c0_141, %c0_142] : memref<128x128xbf16, #tpu.memory_space<vmem>>, vector<128x128xbf16>
    %cst_143 = arith.constant dense<0.000000e+00> : vector<8x128xf32>
    %591 = tpu.matmul %589, %590, %cst_143 {dimension_numbers = #tpu.dot_dimension_numbers<[1], [0], [0], [1], [0, 0, 1, 1], [], []>} : vector<8x128xbf16>, vector<128x128xbf16>, vector<8x128xf32> -> vector<8x128xf32>
    %592 = arith.addf %588, %591 : vector<8x128xf32>
    %c0_144 = arith.constant 0 : index
    %c0_145 = arith.constant 0 : index
    %593 = vector.load %arg14[%c0_144, %c0_145] : memref<1x128xf32, #tpu.memory_space<vmem>>, vector<1x128xf32>
    %594 = vector.broadcast %593 : vector<1x128xf32> to vector<8x128xf32>
    %595 = arith.addf %592, %594 : vector<8x128xf32>
    %c0_146 = arith.constant 0 : index
    %c0_147 = arith.constant 0 : index
    %596 = vector.load %arg15[%c0_146, %c0_147] : memref<8x128xf32, #tpu.memory_space<vmem>>, vector<8x128xf32>
    tpu.vector_store %arg15[%c0_146, %c0_147], %595 {strides = array<i32>} : memref<8x128xf32, #tpu.memory_space<vmem>>, vector<8x128xf32>,
    return
  }
}

</mosaic_0001>

<llo_original>
// kernel: tpu_custom_call.1
$region0: #{tpu_custom_call.1}
  #allocation0 [shape = 'u32[]', space=smem, size = 0x4, offset = 0x4, fixed_abs, tag = 'smem constant byte address 0x4 - core index']
  #allocation1 [shape = 'u32[144,128]{1,0:T(1,128)}', space=vmem, size = 0x12000, scoped, tag = 'internal scratch']
  %s0 = inlined_call_operand.vmem [shape: bf16[64,32], index: 0, kind: input, shape index: {}]
  %s1 = inlined_call_operand.vmem [shape: bf16[32,512], index: 1, kind: input, shape index: {}]
  %s2 = inlined_call_operand.hbm [shape: bf16[128,512], index: 2, kind: input, shape index: {}]
  %s3 = inlined_call_operand.hbm [shape: f32[1,512], index: 3, kind: input, shape index: {}]
  %s4 = inlined_call_operand.hbm [shape: bf16[128,512], index: 4, kind: input, shape index: {}]
  %s5 = inlined_call_operand.hbm [shape: bf16[128,512], index: 5, kind: input, shape index: {}]
  %s6 = inlined_call_operand.hbm [shape: f32[1,512], index: 6, kind: input, shape index: {}]
  %s7 = inlined_call_operand.hbm [shape: bf16[128,512], index: 7, kind: input, shape index: {}]
  %s8 = inlined_call_operand.hbm [shape: bf16[128,512], index: 8, kind: input, shape index: {}]
  %s9 = inlined_call_operand.hbm [shape: f32[1,512], index: 9, kind: input, shape index: {}]
  %s10 = inlined_call_operand.vmem [shape: bf16[128,32], index: 10, kind: input, shape index: {}]
  %s11 = inlined_call_operand.vmem [shape: f32[1,32], index: 11, kind: input, shape index: {}]
  %s12 = inlined_call_operand.vmem [shape: bf16[32,128], index: 12, kind: input, shape index: {}]
  %s13 = inlined_call_operand.vmem [shape: bf16[128,128], index: 13, kind: input, shape index: {}]
  %s14 = inlined_call_operand.vmem [shape: f32[1,128], index: 14, kind: input, shape index: {}]
  %s15 = inlined_call_operand.hbm [shape: f32[8,128], index: 15, kind: output, shape index: {}]
  %s16 = sld [smem:[#allocation0]]
  $region102: #{tpu_custom_call.1} parent=0
    _
  %s18 = ssub.s32 1, %s16
  %s19 = scalar_select 0, %s18, %s16
  $region1: #{tpu_custom_call.1} parent=0
    #allocation2 [shape = 'u8[131072]{0}', space=vmem, size = 0x20000, scoped, tag = 'input window, operand 2, single buffered']
    #allocation3 [shape = 's32[1]{0}', space=sflag, size = 0x4, scoped, tag = 'scoped memory for tpu_custom_call.1']
    #allocation4 [shape = 's32[1]{0}', space=sflag, size = 0x4, scoped, tag = 'scoped memory for tpu_custom_call.1']
    #allocation5 [shape = 'u8[2048]{0}', space=vmem, size = 0x800, scoped, tag = 'input window, operand 3, single buffered']
    #allocation6 [shape = 's32[1]{0}', space=sflag, size = 0x4, scoped, tag = 'scoped memory for tpu_custom_call.1']
    #allocation7 [shape = 'u8[131072]{0}', space=vmem, size = 0x20000, scoped, tag = 'input window, operand 4, single buffered']
    #allocation8 [shape = 'u8[131072]{0}', space=vmem, size = 0x20000, scoped, tag = 'input window, operand 5, single buffered']
    #allocation9 [shape = 's32[1]{0}', space=sflag, size = 0x4, scoped, tag = 'scoped memory for tpu_custom_call.1']
    #allocation10 [shape = 'u8[2048]{0}', space=vmem, size = 0x800, scoped, tag = 'input window, operand 6, single buffered']
    #allocation11 [shape = 'u8[131072]{0}', space=vmem, size = 0x20000, scoped, tag = 'input window, operand 7, single buffered']
    #allocation12 [shape = 's32[1]{0}', space=sflag, size = 0x4, scoped, tag = 'scoped memory for tpu_custom_call.1']
    #allocation13 [shape = 'u8[131072]{0}', space=vmem, size = 0x20000, scoped, tag = 'input window, operand 8, single buffered']
    #allocation14 [shape = 'u8[2048]{0}', space=vmem, size = 0x800, scoped, tag = 'input window, operand 9, single buffered']
    #allocation15 [shape = 's32[1]{0}', space=sflag, size = 0x4, scoped, tag = 'scoped memory for tpu_custom_call.1']
    #allocation16 [shape = 'u8[4096]{0}', space=vmem, size = 0x1000, scoped, tag = 'output window, operand 0, single buffered']
    %20 = vsyncpa [#allocation3], 0
    %21 = vsyncpa [#allocation6], 0
    %22 = vsyncpa [#allocation9], 0
    %23 = vsyncpa [#allocation12], 0
    %24 = vsyncpa [#allocation15], 0
    %25 = vsyncpa [#allocation4], 0
    // Predicated region
    $region2: #{tpu_custom_call.1} parent=1 // pred_check
      _
    $region3: #{tpu_custom_call.1} parent=1 // pred_check_branch
      %27 = sbr.rel (0) target = $region5
    $region4: #{tpu_custom_call.1} parent=1 // pred_region
      _
    $region5: #{tpu_custom_call.1} parent=1 // pred_fallthru
      _
    // Predicated region
    $region6: #{tpu_custom_call.1} parent=1 // pred_check
      _
    $region7: #{tpu_custom_call.1} parent=1 // pred_check_branch
      %29 = sbr.rel (0) target = $region9
    $region8: #{tpu_custom_call.1} parent=1 // pred_region
      _
    $region9: #{tpu_custom_call.1} parent=1 // pred_fallthru
      _
    // Predicated region
    $region10: #{tpu_custom_call.1} parent=1 // pred_check
      _
    $region11: #{tpu_custom_call.1} parent=1 // pred_check_branch
      %31 = sbr.rel (0) target = $region13
    $region12: #{tpu_custom_call.1} parent=1 // pred_region
      %s33 = ssub.s32 4096, 4096
      %34 = vsyncadd [#allocation3], %s33
      %s35 = sshll.u32 [#allocation2], 4
      %s36 = int_to_ptr.vmem [resolvable:$true] %s35
      %41 = dma.hbm_to_vmem [thread:$0]  %s2, 4096, %s36, [#allocation3], 256, 256, 16
    $region13: #{tpu_custom_call.1} parent=1 // pred_fallthru
      _
    // Predicated region
    $region14: #{tpu_custom_call.1} parent=1 // pred_check
      _
    $region15: #{tpu_custom_call.1} parent=1 // pred_check_branch
      %43 = sbr.rel (0) target = $region17
    $region16: #{tpu_custom_call.1} parent=1 // pred_region
      %s45 = ssub.s32 64, 64
      %46 = vsyncadd [#allocation6], %s45
      %s48 = sshll.u32 [#allocation5], 4
      %s49 = int_to_ptr.vmem [resolvable:$true] %s48
      %51 = dma.hbm_to_vmem [thread:$0]  %s3, 64, %s49, [#allocation6]
    $region17: #{tpu_custom_call.1} parent=1 // pred_fallthru
      _
    // Predicated region
    $region18: #{tpu_custom_call.1} parent=1 // pred_check
      _
    $region19: #{tpu_custom_call.1} parent=1 // pred_check_branch
      %53 = sbr.rel (0) target = $region21
    $region20: #{tpu_custom_call.1} parent=1 // pred_region
      %s55 = ssub.s32 4096, 4096
      %56 = vsyncadd [#allocation6], %s55
      %s57 = sshll.u32 [#allocation7], 4
      %s58 = int_to_ptr.vmem [resolvable:$true] %s57
      %63 = dma.hbm_to_vmem [thread:$0]  %s4, 4096, %s58, [#allocation6], 256, 256, 16
    $region21: #{tpu_custom_call.1} parent=1 // pred_fallthru
      _
    // Predicated region
    $region22: #{tpu_custom_call.1} parent=1 // pred_check
      _
    $region23: #{tpu_custom_call.1} parent=1 // pred_check_branch
      %65 = sbr.rel (0) target = $region25
    $region24: #{tpu_custom_call.1} parent=1 // pred_region
      %s67 = ssub.s32 4096, 4096
      %68 = vsyncadd [#allocation9], %s67
      %s69 = sshll.u32 [#allocation8], 4
      %s70 = int_to_ptr.vmem [resolvable:$true] %s69
      %75 = dma.hbm_to_vmem [thread:$0]  %s5, 4096, %s70, [#allocation9], 256, 256, 16
    $region25: #{tpu_custom_call.1} parent=1 // pred_fallthru
      _
    // Predicated region
    $region26: #{tpu_custom_call.1} parent=1 // pred_check
      _
    $region27: #{tpu_custom_call.1} parent=1 // pred_check_branch
      %77 = sbr.rel (0) target = $region29
    $region28: #{tpu_custom_call.1} parent=1 // pred_region
      %s79 = ssub.s32 64, 64
      %80 = vsyncadd [#allocation9], %s79
      %s82 = sshll.u32 [#allocation10], 4
      %s83 = int_to_ptr.vmem [resolvable:$true] %s82
      %85 = dma.hbm_to_vmem [thread:$0]  %s6, 64, %s83, [#allocation9]
    $region29: #{tpu_custom_call.1} parent=1 // pred_fallthru
      _
    // Predicated region
    $region30: #{tpu_custom_call.1} parent=1 // pred_check
      _
    $region31: #{tpu_custom_call.1} parent=1 // pred_check_branch
      %87 = sbr.rel (0) target = $region33
    $region32: #{tpu_custom_call.1} parent=1 // pred_region
      %s89 = ssub.s32 4096, 4096
      %90 = vsyncadd [#allocation12], %s89
      %s91 = sshll.u32 [#allocation11], 4
      %s92 = int_to_ptr.vmem [resolvable:$true] %s91
      %97 = dma.hbm_to_vmem [thread:$0]  %s7, 4096, %s92, [#allocation12], 256, 256, 16
    $region33: #{tpu_custom_call.1} parent=1 // pred_fallthru
      _
    // Predicated region
    $region34: #{tpu_custom_call.1} parent=1 // pred_check
      _
    $region35: #{tpu_custom_call.1} parent=1 // pred_check_branch
      %99 = sbr.rel (0) target = $region37
    $region36: #{tpu_custom_call.1} parent=1 // pred_region
      %s101 = ssub.s32 4096, 4096
      %102 = vsyncadd [#allocation12], %s101
      %s103 = sshll.u32 [#allocation13], 4
      %s104 = int_to_ptr.vmem [resolvable:$true] %s103
      %109 = dma.hbm_to_vmem [thread:$0]  %s8, 4096, %s104, [#allocation12], 256, 256, 16
    $region37: #{tpu_custom_call.1} parent=1 // pred_fallthru
      _
    // Predicated region
    $region38: #{tpu_custom_call.1} parent=1 // pred_check
      _
    $region39: #{tpu_custom_call.1} parent=1 // pred_check_branch
      %111 = sbr.rel (0) target = $region41
    $region40: #{tpu_custom_call.1} parent=1 // pred_region
      %s113 = ssub.s32 64, 64
      %114 = vsyncadd [#allocation15], %s113
      %s116 = sshll.u32 [#allocation14], 4
      %s117 = int_to_ptr.vmem [resolvable:$true] %s116
      %119 = dma.hbm_to_vmem [thread:$0]  %s9, 64, %s117, [#allocation15]
    $region41: #{tpu_custom_call.1} parent=1 // pred_fallthru
      _
    // Predicated region
    $region42: #{tpu_custom_call.1} parent=1 // pred_check
      _
    $region43: #{tpu_custom_call.1} parent=1 // pred_check_branch
      %121 = sbr.rel (0) target = $region45
    $region44: #{tpu_custom_call.1} parent=1 // pred_region
      _
    $region45: #{tpu_custom_call.1} parent=1 // pred_fallthru
      _
    // Predicated region
    $region46: #{tpu_custom_call.1} parent=1 // pred_check
      _
    $region47: #{tpu_custom_call.1} parent=1 // pred_check_branch
      %123 = sbr.rel (0) target = $region49
    $region48: #{tpu_custom_call.1} parent=1 // pred_region
      _
    $region49: #{tpu_custom_call.1} parent=1 // pred_fallthru
      _
    // Predicated region
    $region50: #{tpu_custom_call.1} parent=1 // pred_check
      _
    $region51: #{tpu_custom_call.1} parent=1 // pred_check_branch
      %125 = sbr.rel (0) target = $region53
    $region52: #{tpu_custom_call.1} parent=1 // pred_region
      _
    $region53: #{tpu_custom_call.1} parent=1 // pred_fallthru
      _
    // Predicated region
    $region54: #{tpu_custom_call.1} parent=1 // pred_check
      _
    $region55: #{tpu_custom_call.1} parent=1 // pred_check_branch
      %127 = sbr.rel (0) target = $region57
    $region56: #{tpu_custom_call.1} parent=1 // pred_region
      _
    $region57: #{tpu_custom_call.1} parent=1 // pred_fallthru
      _
    // Predicated region
    $region58: #{tpu_custom_call.1} parent=1 // pred_check
      _
    $region59: #{tpu_custom_call.1} parent=1 // pred_check_branch
      %129 = sbr.rel (0) target = $region61
    $region60: #{tpu_custom_call.1} parent=1 // pred_region
      _
    $region61: #{tpu_custom_call.1} parent=1 // pred_fallthru
      _
    // Predicated region
    $region62: #{tpu_custom_call.1} parent=1 // pred_check
      _
    $region63: #{tpu_custom_call.1} parent=1 // pred_check_branch
      %131 = sbr.rel (0) target = $region65
    $region64: #{tpu_custom_call.1} parent=1 // pred_region
      %132 = dma.done [#allocation3], 4096
    $region65: #{tpu_custom_call.1} parent=1 // pred_fallthru
      _
    // Predicated region
    $region66: #{tpu_custom_call.1} parent=1 // pred_check
      _
    $region67: #{tpu_custom_call.1} parent=1 // pred_check_branch
      %134 = sbr.rel (0) target = $region69
    $region68: #{tpu_custom_call.1} parent=1 // pred_region
      %135 = dma.done [#allocation6], 64
    $region69: #{tpu_custom_call.1} parent=1 // pred_fallthru
      _
    // Predicated region
    $region70: #{tpu_custom_call.1} parent=1 // pred_check
      _
    $region71: #{tpu_custom_call.1} parent=1 // pred_check_branch
      %137 = sbr.rel (0) target = $region73
    $region72: #{tpu_custom_call.1} parent=1 // pred_region
      %138 = dma.done [#allocation6], 4096
    $region73: #{tpu_custom_call.1} parent=1 // pred_fallthru
      _
    // Predicated region
    $region74: #{tpu_custom_call.1} parent=1 // pred_check
      _
    $region75: #{tpu_custom_call.1} parent=1 // pred_check_branch
      %140 = sbr.rel (0) target = $region77
    $region76: #{tpu_custom_call.1} parent=1 // pred_region
      %141 = dma.done [#allocation9], 4096
    $region77: #{tpu_custom_call.1} parent=1 // pred_fallthru
      _
    // Predicated region
    $region78: #{tpu_custom_call.1} parent=1 // pred_check
      _
    $region79: #{tpu_custom_call.1} parent=1 // pred_check_branch
      %143 = sbr.rel (0) target = $region81
    $region80: #{tpu_custom_call.1} parent=1 // pred_region
      %144 = dma.done [#allocation9], 64
    $region81: #{tpu_custom_call.1} parent=1 // pred_fallthru
      _
    // Predicated region
    $region82: #{tpu_custom_call.1} parent=1 // pred_check
      _
    $region83: #{tpu_custom_call.1} parent=1 // pred_check_branch
      %146 = sbr.rel (0) target = $region85
    $region84: #{tpu_custom_call.1} parent=1 // pred_region
      %147 = dma.done [#allocation12], 4096
    $region85: #{tpu_custom_call.1} parent=1 // pred_fallthru
      _
    // Predicated region
    $region86: #{tpu_custom_call.1} parent=1 // pred_check
      _
    $region87: #{tpu_custom_call.1} parent=1 // pred_check_branch
      %149 = sbr.rel (0) target = $region89
    $region88: #{tpu_custom_call.1} parent=1 // pred_region
      %150 = dma.done [#allocation12], 4096
    $region89: #{tpu_custom_call.1} parent=1 // pred_fallthru
      _
    // Predicated region
    $region90: #{tpu_custom_call.1} parent=1 // pred_check
      _
    $region91: #{tpu_custom_call.1} parent=1 // pred_check_branch
      %152 = sbr.rel (0) target = $region93
    $region92: #{tpu_custom_call.1} parent=1 // pred_region
      %153 = dma.done [#allocation15], 64
    $region93: #{tpu_custom_call.1} parent=1 // pred_fallthru
      _
    %v155 = vld [vmem:[%s0] sm:$0xf]
    %v156 = vld [vmem:[%s0 + $0x4] sm:$0xf]
    %v157 = vld [vmem:[%s0 + $0x8] sm:$0xf]
    %v158 = vld [vmem:[%s0 + $0xc] sm:$0xf]
    %v159 = vld [vmem:[%s0 + $0x10] sm:$0xf]
    %v160 = vld [vmem:[%s0 + $0x14] sm:$0xf]
    %v161 = vld [vmem:[%s0 + $0x18] sm:$0xf]
    %v162 = vld [vmem:[%s0 + $0x1c] sm:$0xf]
    %v163 = vld [vmem:[%s1] sm:$0xff]
    %v164 = vld [vmem:[%s1 + $0x8] sm:$0xff]
    %v165 = vld [vmem:[%s1 + $0x10] sm:$0xff]
    %v166 = vld [vmem:[%s1 + $0x18] sm:$0xff]
    %v167 = vld [vmem:[%s1 + $0x20] sm:$0xff]
    %v168 = vld [vmem:[%s1 + $0x28] sm:$0xff]
    %v169 = vld [vmem:[%s1 + $0x30] sm:$0xff]
    %v170 = vld [vmem:[%s1 + $0x38] sm:$0xff]
    %v171 = vld [vmem:[#allocation5] sm:$0xf]
    %v173 = vlaneseq
    %v174 = vshrl.u32 %v173, 7
    %v175 = vsub.s32 0, %v174
    %v176 = vrot.slane %v171, %v175
    %v177 = vlaneseq
    %v178 = vshrl.u32 %v177, 7
    %v179 = vsub.s32 1, %v178
    %v180 = vrot.slane %v171, %v179
    %v181 = vlaneseq
    %v182 = vshrl.u32 %v181, 7
    %v183 = vsub.s32 2, %v182
    %v184 = vrot.slane %v171, %v183
    %v185 = vlaneseq
    %v186 = vshrl.u32 %v185, 7
    %v187 = vsub.s32 3, %v186
    %v188 = vrot.slane %v171, %v187
    %v201 = vunpack.c.l.b16 %v155
    %v202 = vunpack.c.l.b16 %v156
    %v203 = vunpack.c.l.b16 %v157
    %v204 = vunpack.c.l.b16 %v158
    %v205 = vunpack.c.l.b16 %v159
    %v206 = vunpack.c.l.b16 %v160
    %v207 = vunpack.c.l.b16 %v161
    %v208 = vunpack.c.l.b16 %v162
    %v209 = vpack.c.b16 %v202, %v201
    %v210 = vpack.c.b16 %v204, %v203
    %v211 = vpack.c.b16 %v206, %v205
    %v212 = vpack.c.b16 %v208, %v207
    %v221 = vunpack.c.l.b16 %v163
    %v222 = vunpack.c.h.b16 %v163
    %v223 = vunpack.c.l.b16 %v164
    %v224 = vunpack.c.h.b16 %v164
    %v225 = vunpack.c.l.b16 %v165
    %v226 = vunpack.c.h.b16 %v165
    %v227 = vunpack.c.l.b16 %v166
    %v228 = vunpack.c.h.b16 %v166
    %v229 = vunpack.c.l.b16 %v167
    %v230 = vunpack.c.h.b16 %v167
    %v231 = vunpack.c.l.b16 %v168
    %v232 = vunpack.c.h.b16 %v168
    %v233 = vunpack.c.l.b16 %v169
    %v234 = vunpack.c.h.b16 %v169
    %v235 = vunpack.c.l.b16 %v170
    %v236 = vunpack.c.h.b16 %v170
    %v237 = vpack.c.b16 %v225, %v221
    %v238 = vpack.c.b16 %v226, %v222
    %v239 = vpack.c.b16 %v227, %v223
    %v240 = vpack.c.b16 %v228, %v224
    %v241 = vpack.c.b16 %v233, %v229
    %v242 = vpack.c.b16 %v234, %v230
    %v243 = vpack.c.b16 %v235, %v231
    %v244 = vpack.c.b16 %v236, %v232
    %vm253 = vcmask 261120
    %v255 = vsel %vm253, %v209, 0
    %v258 = vsel %vm253, %v210, 0
    %v261 = vsel %vm253, %v211, 0
    %v264 = vsel %vm253, %v212, 0
    %266 = vmatprep.subr.bf16.mxu0 %v238
    %267 = vmatpush1.bf16.msra.mxu0 %v237
    %268 = vmatprep.subr.bf16.mxu0 %v242
    %269 = vmatpush1.bf16.msra.mxu0 %v241
    %270 = vmatprep.subr.bf16.mxu0 0
    %271 = vmatpush1.bf16.msra.mxu0 0
    %272 = vmatprep.subr.bf16.mxu0 0
    %273 = vmatpush1.bf16.msra.mxu0 0
    %274 = vmatprep.subr.bf16.mxu0 0
    %275 = vmatpush1.bf16.msra.mxu0 0
    %276 = vmatprep.subr.bf16.mxu0 0
    %277 = vmatpush1.bf16.msra.mxu0 0
    %278 = vmatprep.subr.bf16.mxu0 0
    %279 = vmatpush1.bf16.msra.mxu0 0
    %280 = vmatprep.subr.bf16.mxu0 0
    %281 = vmatpush1.bf16.msra.mxu0 0
    %282 = vmatprep.subr.bf16.mxu0 0
    %283 = vmatpush1.bf16.msra.mxu0 0
    %284 = vmatprep.subr.bf16.mxu0 0
    %285 = vmatpush1.bf16.msra.mxu0 0
    %286 = vmatprep.subr.bf16.mxu0 0
    %287 = vmatpush1.bf16.msra.mxu0 0
    %288 = vmatprep.subr.bf16.mxu0 0
    %289 = vmatpush1.bf16.msra.mxu0 0
    %290 = vmatprep.subr.bf16.mxu0 0
    %291 = vmatpush1.bf16.msra.mxu0 0
    %292 = vmatprep.subr.bf16.mxu0 0
    %293 = vmatpush1.bf16.msra.mxu0 0
    %294 = vmatprep.subr.bf16.mxu0 0
    %295 = vmatpush1.bf16.msra.mxu0 0
    %296 = vmatprep.subr.bf16.mxu0 0
    %297 = vmatpush1.bf16.msra.mxu0 0
    %298 = vmatprep.mubr.bf16.mxu0 0
    %299 = vmatmul.mubr.bf16.gmra.mrb[0].mxu0 %v255
    %v300 = vpop.f32.mrb[0].mxu0
    %v301 = vadd.f32 %v176, %v300
    %v302 = vpop.f32.mrb[0].mxu0
    %v303 = vadd.f32 %v180, %v302
    %v304 = vpop.f32.mrb[0].mxu0
    %v305 = vadd.f32 %v176, %v304
    %v306 = vpop.f32.mrb[0].mxu0
    %v307 = vadd.f32 %v180, %v306
    %308 = vmatprep.mubr.bf16.mxu0 0
    %309 = vmatmul.mubr.bf16.gmra.mrb[0].mxu0 %v258
    %v310 = vpop.f32.mrb[0].mxu0
    %v311 = vadd.f32 %v176, %v310
    %v312 = vpop.f32.mrb[0].mxu0
    %v313 = vadd.f32 %v180, %v312
    %v314 = vpop.f32.mrb[0].mxu0
    %v315 = vadd.f32 %v176, %v314
    %v316 = vpop.f32.mrb[0].mxu0
    %v317 = vadd.f32 %v180, %v316
    %318 = vmatprep.mubr.bf16.mxu0 0
    %319 = vmatmul.mubr.bf16.gmra.mrb[0].mxu0 %v261
    %v320 = vpop.f32.mrb[0].mxu0
    %v321 = vadd.f32 %v176, %v320
    %v322 = vpop.f32.mrb[0].mxu0
    %v323 = vadd.f32 %v180, %v322
    %v324 = vpop.f32.mrb[0].mxu0
    %v325 = vadd.f32 %v176, %v324
    %v326 = vpop.f32.mrb[0].mxu0
    %v327 = vadd.f32 %v180, %v326
    %328 = vmatprep.mubr.bf16.mxu0 0
    %329 = vmatmul.mubr.bf16.gmra.mrb[0].mxu0 %v264
    %v330 = vpop.f32.mrb[0].mxu0
    %v331 = vadd.f32 %v176, %v330
    %v332 = vpop.f32.mrb[0].mxu0
    %v333 = vadd.f32 %v180, %v332
    %v334 = vpop.f32.mrb[0].mxu0
    %v335 = vadd.f32 %v176, %v334
    %v336 = vpop.f32.mrb[0].mxu0
    %v337 = vadd.f32 %v180, %v336
    %338 = vdwg.mxu0
    %339 = vmatprep.subr.bf16.mxu0 %v240
    %340 = vmatpush1.bf16.msra.mxu0 %v239
    %341 = vmatprep.subr.bf16.mxu0 %v244
    %342 = vmatpush1.bf16.msra.mxu0 %v243
    %343 = vmatprep.subr.bf16.mxu0 0
    %344 = vmatpush1.bf16.msra.mxu0 0
    %345 = vmatprep.subr.bf16.mxu0 0
    %346 = vmatpush1.bf16.msra.mxu0 0
    %347 = vmatprep.subr.bf16.mxu0 0
    %348 = vmatpush1.bf16.msra.mxu0 0
    %349 = vmatprep.subr.bf16.mxu0 0
    %350 = vmatpush1.bf16.msra.mxu0 0
    %351 = vmatprep.subr.bf16.mxu0 0
    %352 = vmatpush1.bf16.msra.mxu0 0
    %353 = vmatprep.subr.bf16.mxu0 0
    %354 = vmatpush1.bf16.msra.mxu0 0
    %355 = vmatprep.subr.bf16.mxu0 0
    %356 = vmatpush1.bf16.msra.mxu0 0
    %357 = vmatprep.subr.bf16.mxu0 0
    %358 = vmatpush1.bf16.msra.mxu0 0
    %359 = vmatprep.subr.bf16.mxu0 0
    %360 = vmatpush1.bf16.msra.mxu0 0
    %361 = vmatprep.subr.bf16.mxu0 0
    %362 = vmatpush1.bf16.msra.mxu0 0
    %363 = vmatprep.subr.bf16.mxu0 0
    %364 = vmatpush1.bf16.msra.mxu0 0
    %365 = vmatprep.subr.bf16.mxu0 0
    %366 = vmatpush1.bf16.msra.mxu0 0
    %367 = vmatprep.subr.bf16.mxu0 0
    %368 = vmatpush1.bf16.msra.mxu0 0
    %369 = vmatprep.subr.bf16.mxu0 0
    %370 = vmatpush1.bf16.msra.mxu0 0
    %371 = vmatprep.mubr.bf16.mxu0 0
    %372 = vmatmul.mubr.bf16.gmra.mrb[0].mxu0 %v255
    %v373 = vpop.f32.mrb[0].mxu0
    %v374 = vadd.f32 %v184, %v373
    %v375 = vpop.f32.mrb[0].mxu0
    %v376 = vadd.f32 %v188, %v375
    %v377 = vpop.f32.mrb[0].mxu0
    %v378 = vadd.f32 %v184, %v377
    %v379 = vpop.f32.mrb[0].mxu0
    %v380 = vadd.f32 %v188, %v379
    %381 = vmatprep.mubr.bf16.mxu0 0
    %382 = vmatmul.mubr.bf16.gmra.mrb[0].mxu0 %v258
    %v383 = vpop.f32.mrb[0].mxu0
    %v384 = vadd.f32 %v184, %v383
    %v385 = vpop.f32.mrb[0].mxu0
    %v386 = vadd.f32 %v188, %v385
    %v387 = vpop.f32.mrb[0].mxu0
    %v388 = vadd.f32 %v184, %v387
    %v389 = vpop.f32.mrb[0].mxu0
    %v390 = vadd.f32 %v188, %v389
    %391 = vmatprep.mubr.bf16.mxu0 0
    %392 = vmatmul.mubr.bf16.gmra.mrb[0].mxu0 %v261
    %v393 = vpop.f32.mrb[0].mxu0
    %v394 = vadd.f32 %v184, %v393
    %v395 = vpop.f32.mrb[0].mxu0
    %v396 = vadd.f32 %v188, %v395
    %v397 = vpop.f32.mrb[0].mxu0
    %v398 = vadd.f32 %v184, %v397
    %v399 = vpop.f32.mrb[0].mxu0
    %v400 = vadd.f32 %v188, %v399
    %401 = vmatprep.mubr.bf16.mxu0 0
    %402 = vmatmul.mubr.bf16.gmra.mrb[0].mxu0 %v264
    %v403 = vpop.f32.mrb[0].mxu0
    %v404 = vadd.f32 %v184, %v403
    %v405 = vpop.f32.mrb[0].mxu0
    %v406 = vadd.f32 %v188, %v405
    %v407 = vpop.f32.mrb[0].mxu0
    %v408 = vadd.f32 %v184, %v407
    %v409 = vpop.f32.mrb[0].mxu0
    %v410 = vadd.f32 %v188, %v409
    %411 = vdwg.mxu0
    %v412 = vld [vmem:[#allocation2] sm:$0xff]
    %v413 = vld [vmem:[#allocation2 + $0x8] sm:$0xff]
    %v414 = vld [vmem:[#allocation2 + $0x10] sm:$0xff]
    %v415 = vld [vmem:[#allocation2 + $0x18] sm:$0xff]
    %v416 = vld [vmem:[#allocation2 + $0x20] sm:$0xff]
    %v417 = vld [vmem:[#allocation2 + $0x28] sm:$0xff]
    %v418 = vld [vmem:[#allocation2 + $0x30] sm:$0xff]
    %v419 = vld [vmem:[#allocation2 + $0x38] sm:$0xff]
    %v420 = vld [vmem:[#allocation2 + $0x40] sm:$0xff]
    %v421 = vld [vmem:[#allocation2 + $0x48] sm:$0xff]
    %v422 = vld [vmem:[#allocation2 + $0x50] sm:$0xff]
    %v423 = vld [vmem:[#allocation2 + $0x58] sm:$0xff]
    %v424 = vld [vmem:[#allocation2 + $0x60] sm:$0xff]
    %v425 = vld [vmem:[#allocation2 + $0x68] sm:$0xff]
    %v426 = vld [vmem:[#allocation2 + $0x70] sm:$0xff]
    %v427 = vld [vmem:[#allocation2 + $0x78] sm:$0xff]
    %v428 = vld [vmem:[#allocation2 + $0x80] sm:$0xff]
    %v429 = vld [vmem:[#allocation2 + $0x88] sm:$0xff]
    %v430 = vld [vmem:[#allocation2 + $0x90] sm:$0xff]
    %v431 = vld [vmem:[#allocation2 + $0x98] sm:$0xff]
    %v432 = vld [vmem:[#allocation2 + $0xa0] sm:$0xff]
    %v433 = vld [vmem:[#allocation2 + $0xa8] sm:$0xff]
    %v434 = vld [vmem:[#allocation2 + $0xb0] sm:$0xff]
    %v435 = vld [vmem:[#allocation2 + $0xb8] sm:$0xff]
    %v436 = vld [vmem:[#allocation2 + $0xc0] sm:$0xff]
    %v437 = vld [vmem:[#allocation2 + $0xc8] sm:$0xff]
    %v438 = vld [vmem:[#allocation2 + $0xd0] sm:$0xff]
    %v439 = vld [vmem:[#allocation2 + $0xd8] sm:$0xff]
    %v440 = vld [vmem:[#allocation2 + $0xe0] sm:$0xff]
    %v441 = vld [vmem:[#allocation2 + $0xe8] sm:$0xff]
    %v442 = vld [vmem:[#allocation2 + $0xf0] sm:$0xff]
    %v443 = vld [vmem:[#allocation2 + $0xf8] sm:$0xff]
    %v444 = vld [vmem:[#allocation7] sm:$0xff]
    %v445 = vld [vmem:[#allocation7 + $0x8] sm:$0xff]
    %v446 = vld [vmem:[#allocation7 + $0x10] sm:$0xff]
    %v447 = vld [vmem:[#allocation7 + $0x18] sm:$0xff]
    %v448 = vld [vmem:[#allocation7 + $0x20] sm:$0xff]
    %v449 = vld [vmem:[#allocation7 + $0x28] sm:$0xff]
    %v450 = vld [vmem:[#allocation7 + $0x30] sm:$0xff]
    %v451 = vld [vmem:[#allocation7 + $0x38] sm:$0xff]
    %v452 = vld [vmem:[#allocation7 + $0x40] sm:$0xff]
    %v453 = vld [vmem:[#allocation7 + $0x48] sm:$0xff]
    %v454 = vld [vmem:[#allocation7 + $0x50] sm:$0xff]
    %v455 = vld [vmem:[#allocation7 + $0x58] sm:$0xff]
    %v456 = vld [vmem:[#allocation7 + $0x60] sm:$0xff]
    %v457 = vld [vmem:[#allocation7 + $0x68] sm:$0xff]
    %v458 = vld [vmem:[#allocation7 + $0x70] sm:$0xff]
    %v459 = vld [vmem:[#allocation7 + $0x78] sm:$0xff]
    %v460 = vld [vmem:[#allocation7 + $0x80] sm:$0xff]
    %v461 = vld [vmem:[#allocation7 + $0x88] sm:$0xff]
    %v462 = vld [vmem:[#allocation7 + $0x90] sm:$0xff]
    %v463 = vld [vmem:[#allocation7 + $0x98] sm:$0xff]
    %v464 = vld [vmem:[#allocation7 + $0xa0] sm:$0xff]
    %v465 = vld [vmem:[#allocation7 + $0xa8] sm:$0xff]
    %v466 = vld [vmem:[#allocation7 + $0xb0] sm:$0xff]
    %v467 = vld [vmem:[#allocation7 + $0xb8] sm:$0xff]
    %v468 = vld [vmem:[#allocation7 + $0xc0] sm:$0xff]
    %v469 = vld [vmem:[#allocation7 + $0xc8] sm:$0xff]
    %v470 = vld [vmem:[#allocation7 + $0xd0] sm:$0xff]
    %v471 = vld [vmem:[#allocation7 + $0xd8] sm:$0xff]
    %v472 = vld [vmem:[#allocation7 + $0xe0] sm:$0xff]
    %v473 = vld [vmem:[#allocation7 + $0xe8] sm:$0xff]
    %v474 = vld [vmem:[#allocation7 + $0xf0] sm:$0xff]
    %v475 = vld [vmem:[#allocation7 + $0xf8] sm:$0xff]
    %v476 = vld [vmem:[#allocation8] sm:$0xff]
    %v477 = vld [vmem:[#allocation8 + $0x8] sm:$0xff]
    %v478 = vld [vmem:[#allocation8 + $0x10] sm:$0xff]
    %v479 = vld [vmem:[#allocation8 + $0x18] sm:$0xff]
    %v480 = vld [vmem:[#allocation8 + $0x20] sm:$0xff]
    %v481 = vld [vmem:[#allocation8 + $0x28] sm:$0xff]
    %v482 = vld [vmem:[#allocation8 + $0x30] sm:$0xff]
    %v483 = vld [vmem:[#allocation8 + $0x38] sm:$0xff]
    %v484 = vld [vmem:[#allocation8 + $0x40] sm:$0xff]
    %v485 = vld [vmem:[#allocation8 + $0x48] sm:$0xff]
    %v486 = vld [vmem:[#allocation8 + $0x50] sm:$0xff]
    %v487 = vld [vmem:[#allocation8 + $0x58] sm:$0xff]
    %v488 = vld [vmem:[#allocation8 + $0x60] sm:$0xff]
    %v489 = vld [vmem:[#allocation8 + $0x68] sm:$0xff]
    %v490 = vld [vmem:[#allocation8 + $0x70] sm:$0xff]
    %v491 = vld [vmem:[#allocation8 + $0x78] sm:$0xff]
    %v492 = vld [vmem:[#allocation8 + $0x80] sm:$0xff]
    %v493 = vld [vmem:[#allocation8 + $0x88] sm:$0xff]
    %v494 = vld [vmem:[#allocation8 + $0x90] sm:$0xff]
    %v495 = vld [vmem:[#allocation8 + $0x98] sm:$0xff]
    %v496 = vld [vmem:[#allocation8 + $0xa0] sm:$0xff]
    %v497 = vld [vmem:[#allocation8 + $0xa8] sm:$0xff]
    %v498 = vld [vmem:[#allocation8 + $0xb0] sm:$0xff]
    %v499 = vld [vmem:[#allocation8 + $0xb8] sm:$0xff]
    %v500 = vld [vmem:[#allocation8 + $0xc0] sm:$0xff]
    %v501 = vld [vmem:[#allocation8 + $0xc8] sm:$0xff]
    %v502 = vld [vmem:[#allocation8 + $0xd0] sm:$0xff]
    %v503 = vld [vmem:[#allocation8 + $0xd8] sm:$0xff]
    %v504 = vld [vmem:[#allocation8 + $0xe0] sm:$0xff]
    %v505 = vld [vmem:[#allocation8 + $0xe8] sm:$0xff]
    %v506 = vld [vmem:[#allocation8 + $0xf0] sm:$0xff]
    %v507 = vld [vmem:[#allocation8 + $0xf8] sm:$0xff]
    %v508 = vld [vmem:[#allocation11] sm:$0xff]
    %v509 = vld [vmem:[#allocation11 + $0x8] sm:$0xff]
    %v510 = vld [vmem:[#allocation11 + $0x10] sm:$0xff]
    %v511 = vld [vmem:[#allocation11 + $0x18] sm:$0xff]
    %v512 = vld [vmem:[#allocation11 + $0x20] sm:$0xff]
    %v513 = vld [vmem:[#allocation11 + $0x28] sm:$0xff]
    %v514 = vld [vmem:[#allocation11 + $0x30] sm:$0xff]
    %v515 = vld [vmem:[#allocation11 + $0x38] sm:$0xff]
    %v516 = vld [vmem:[#allocation11 + $0x40] sm:$0xff]
    %v517 = vld [vmem:[#allocation11 + $0x48] sm:$0xff]
    %v518 = vld [vmem:[#allocation11 + $0x50] sm:$0xff]
    %v519 = vld [vmem:[#allocation11 + $0x58] sm:$0xff]
    %v520 = vld [vmem:[#allocation11 + $0x60] sm:$0xff]
    %v521 = vld [vmem:[#allocation11 + $0x68] sm:$0xff]
    %v522 = vld [vmem:[#allocation11 + $0x70] sm:$0xff]
    %v523 = vld [vmem:[#allocation11 + $0x78] sm:$0xff]
    %v524 = vld [vmem:[#allocation11 + $0x80] sm:$0xff]
    %v525 = vld [vmem:[#allocation11 + $0x88] sm:$0xff]
    %v526 = vld [vmem:[#allocation11 + $0x90] sm:$0xff]
    %v527 = vld [vmem:[#allocation11 + $0x98] sm:$0xff]
    %v528 = vld [vmem:[#allocation11 + $0xa0] sm:$0xff]
    %v529 = vld [vmem:[#allocation11 + $0xa8] sm:$0xff]
    %v530 = vld [vmem:[#allocation11 + $0xb0] sm:$0xff]
    %v531 = vld [vmem:[#allocation11 + $0xb8] sm:$0xff]
    %v532 = vld [vmem:[#allocation11 + $0xc0] sm:$0xff]
    %v533 = vld [vmem:[#allocation11 + $0xc8] sm:$0xff]
    %v534 = vld [vmem:[#allocation11 + $0xd0] sm:$0xff]
    %v535 = vld [vmem:[#allocation11 + $0xd8] sm:$0xff]
    %v536 = vld [vmem:[#allocation11 + $0xe0] sm:$0xff]
    %v537 = vld [vmem:[#allocation11 + $0xe8] sm:$0xff]
    %v538 = vld [vmem:[#allocation11 + $0xf0] sm:$0xff]
    %v539 = vld [vmem:[#allocation11 + $0xf8] sm:$0xff]
    %v540 = vld [vmem:[#allocation13] sm:$0xff]
    %v541 = vld [vmem:[#allocation13 + $0x8] sm:$0xff]
    %v542 = vld [vmem:[#allocation13 + $0x10] sm:$0xff]
    %v543 = vld [vmem:[#allocation13 + $0x18] sm:$0xff]
    %v544 = vld [vmem:[#allocation13 + $0x20] sm:$0xff]
    %v545 = vld [vmem:[#allocation13 + $0x28] sm:$0xff]
    %v546 = vld [vmem:[#allocation13 + $0x30] sm:$0xff]
    %v547 = vld [vmem:[#allocation13 + $0x38] sm:$0xff]
    %v548 = vld [vmem:[#allocation13 + $0x40] sm:$0xff]
    %v549 = vld [vmem:[#allocation13 + $0x48] sm:$0xff]
    %v550 = vld [vmem:[#allocation13 + $0x50] sm:$0xff]
    %v551 = vld [vmem:[#allocation13 + $0x58] sm:$0xff]
    %v552 = vld [vmem:[#allocation13 + $0x60] sm:$0xff]
    %v553 = vld [vmem:[#allocation13 + $0x68] sm:$0xff]
    %v554 = vld [vmem:[#allocation13 + $0x70] sm:$0xff]
    %v555 = vld [vmem:[#allocation13 + $0x78] sm:$0xff]
    %v556 = vld [vmem:[#allocation13 + $0x80] sm:$0xff]
    %v557 = vld [vmem:[#allocation13 + $0x88] sm:$0xff]
    %v558 = vld [vmem:[#allocation13 + $0x90] sm:$0xff]
    %v559 = vld [vmem:[#allocation13 + $0x98] sm:$0xff]
    %v560 = vld [vmem:[#allocation13 + $0xa0] sm:$0xff]
    %v561 = vld [vmem:[#allocation13 + $0xa8] sm:$0xff]
    %v562 = vld [vmem:[#allocation13 + $0xb0] sm:$0xff]
    %v563 = vld [vmem:[#allocation13 + $0xb8] sm:$0xff]
    %v564 = vld [vmem:[#allocation13 + $0xc0] sm:$0xff]
    %v565 = vld [vmem:[#allocation13 + $0xc8] sm:$0xff]
    %v566 = vld [vmem:[#allocation13 + $0xd0] sm:$0xff]
    %v567 = vld [vmem:[#allocation13 + $0xd8] sm:$0xff]
    %v568 = vld [vmem:[#allocation13 + $0xe0] sm:$0xff]
    %v569 = vld [vmem:[#allocation13 + $0xe8] sm:$0xff]
    %v570 = vld [vmem:[#allocation13 + $0xf0] sm:$0xff]
    %v571 = vld [vmem:[#allocation13 + $0xf8] sm:$0xff]
    %v572 = vld [vmem:[#allocation10] sm:$0xf]
    %v574 = vlaneseq
    %v575 = vshrl.u32 %v574, 7
    %v576 = vsub.s32 0, %v575
    %v577 = vrot.slane %v572, %v576
    %v578 = vlaneseq
    %v579 = vshrl.u32 %v578, 7
    %v580 = vsub.s32 1, %v579
    %v581 = vrot.slane %v572, %v580
    %v582 = vlaneseq
    %v583 = vshrl.u32 %v582, 7
    %v584 = vsub.s32 2, %v583
    %v585 = vrot.slane %v572, %v584
    %v586 = vlaneseq
    %v587 = vshrl.u32 %v586, 7
    %v588 = vsub.s32 3, %v587
    %v589 = vrot.slane %v572, %v588
    %v594 = vld [vmem:[#allocation14] sm:$0xf]
    %v596 = vlaneseq
    %v597 = vshrl.u32 %v596, 7
    %v598 = vsub.s32 0, %v597
    %v599 = vrot.slane %v594, %v598
    %v600 = vlaneseq
    %v601 = vshrl.u32 %v600, 7
    %v602 = vsub.s32 1, %v601
    %v603 = vrot.slane %v594, %v602
    %v604 = vlaneseq
    %v605 = vshrl.u32 %v604, 7
    %v606 = vsub.s32 2, %v605
    %v607 = vrot.slane %v594, %v606
    %v608 = vlaneseq
    %v609 = vshrl.u32 %v608, 7
    %v610 = vsub.s32 3, %v609
    %v611 = vrot.slane %v594, %v610
    %v648 = vunpack.c.l.b16 %v412
    %v649 = vunpack.c.h.b16 %v412
    %v650 = vunpack.c.l.b16 %v413
    %v651 = vunpack.c.h.b16 %v413
    %v652 = vunpack.c.l.b16 %v414
    %v653 = vunpack.c.h.b16 %v414
    %v654 = vunpack.c.l.b16 %v415
    %v655 = vunpack.c.h.b16 %v415
    %v656 = vunpack.c.l.b16 %v416
    %v657 = vunpack.c.h.b16 %v416
    %v658 = vunpack.c.l.b16 %v417
    %v659 = vunpack.c.h.b16 %v417
    %v660 = vunpack.c.l.b16 %v418
    %v661 = vunpack.c.h.b16 %v418
    %v662 = vunpack.c.l.b16 %v419
    %v663 = vunpack.c.h.b16 %v419
    %v664 = vunpack.c.l.b16 %v420
    %v665 = vunpack.c.h.b16 %v420
    %v666 = vunpack.c.l.b16 %v421
    %v667 = vunpack.c.h.b16 %v421
    %v668 = vunpack.c.l.b16 %v422
    %v669 = vunpack.c.h.b16 %v422
    %v670 = vunpack.c.l.b16 %v423
    %v671 = vunpack.c.h.b16 %v423
    %v672 = vunpack.c.l.b16 %v424
    %v673 = vunpack.c.h.b16 %v424
    %v674 = vunpack.c.l.b16 %v425
    %v675 = vunpack.c.h.b16 %v425
    %v676 = vunpack.c.l.b16 %v426
    %v677 = vunpack.c.h.b16 %v426
    %v678 = vunpack.c.l.b16 %v427
    %v679 = vunpack.c.h.b16 %v427
    %v680 = vunpack.c.l.b16 %v428
    %v681 = vunpack.c.h.b16 %v428
    %v682 = vunpack.c.l.b16 %v429
    %v683 = vunpack.c.h.b16 %v429
    %v684 = vunpack.c.l.b16 %v430
    %v685 = vunpack.c.h.b16 %v430
    %v686 = vunpack.c.l.b16 %v431
    %v687 = vunpack.c.h.b16 %v431
    %v688 = vunpack.c.l.b16 %v432
    %v689 = vunpack.c.h.b16 %v432
    %v690 = vunpack.c.l.b16 %v433
    %v691 = vunpack.c.h.b16 %v433
    %v692 = vunpack.c.l.b16 %v434
    %v693 = vunpack.c.h.b16 %v434
    %v694 = vunpack.c.l.b16 %v435
    %v695 = vunpack.c.h.b16 %v435
    %v696 = vunpack.c.l.b16 %v436
    %v697 = vunpack.c.h.b16 %v436
    %v698 = vunpack.c.l.b16 %v437
    %v699 = vunpack.c.h.b16 %v437
    %v700 = vunpack.c.l.b16 %v438
    %v701 = vunpack.c.h.b16 %v438
    %v702 = vunpack.c.l.b16 %v439
    %v703 = vunpack.c.h.b16 %v439
    %v704 = vunpack.c.l.b16 %v440
    %v705 = vunpack.c.h.b16 %v440
    %v706 = vunpack.c.l.b16 %v441
    %v707 = vunpack.c.h.b16 %v441
    %v708 = vunpack.c.l.b16 %v442
    %v709 = vunpack.c.h.b16 %v442
    %v710 = vunpack.c.l.b16 %v443
    %v711 = vunpack.c.h.b16 %v443
    %v712 = vpack.c.b16 %v652, %v648
    %v713 = vpack.c.b16 %v653, %v649
    %v714 = vpack.c.b16 %v654, %v650
    %v715 = vpack.c.b16 %v655, %v651
    %v716 = vpack.c.b16 %v660, %v656
    %v717 = vpack.c.b16 %v661, %v657
    %v718 = vpack.c.b16 %v662, %v658
    %v719 = vpack.c.b16 %v663, %v659
    %v720 = vpack.c.b16 %v668, %v664
    %v721 = vpack.c.b16 %v669, %v665
    %v722 = vpack.c.b16 %v670, %v666
    %v723 = vpack.c.b16 %v671, %v667
    %v724 = vpack.c.b16 %v676, %v672
    %v725 = vpack.c.b16 %v677, %v673
    %v726 = vpack.c.b16 %v678, %v674
    %v727 = vpack.c.b16 %v679, %v675
    %v728 = vpack.c.b16 %v684, %v680
    %v729 = vpack.c.b16 %v685, %v681
    %v730 = vpack.c.b16 %v686, %v682
    %v731 = vpack.c.b16 %v687, %v683
    %v732 = vpack.c.b16 %v692, %v688
    %v733 = vpack.c.b16 %v693, %v689
    %v734 = vpack.c.b16 %v694, %v690
    %v735 = vpack.c.b16 %v695, %v691
    %v736 = vpack.c.b16 %v700, %v696
    %v737 = vpack.c.b16 %v701, %v697
    %v738 = vpack.c.b16 %v702, %v698
    %v739 = vpack.c.b16 %v703, %v699
    %v740 = vpack.c.b16 %v708, %v704
    %v741 = vpack.c.b16 %v709, %v705
    %v742 = vpack.c.b16 %v710, %v706
    %v743 = vpack.c.b16 %v711, %v707
    %776 = vmatprep.subr.bf16.mxu0 %v713
    %777 = vmatpush1.bf16.msra.mxu0 %v712
    %778 = vmatprep.subr.bf16.mxu0 %v717
    %779 = vmatpush1.bf16.msra.mxu0 %v716
    %780 = vmatprep.subr.bf16.mxu0 %v721
    %781 = vmatpush1.bf16.msra.mxu0 %v720
    %782 = vmatprep.subr.bf16.mxu0 %v725
    %783 = vmatpush1.bf16.msra.mxu0 %v724
    %784 = vmatprep.subr.bf16.mxu0 %v729
    %785 = vmatpush1.bf16.msra.mxu0 %v728
    %786 = vmatprep.subr.bf16.mxu0 %v733
    %787 = vmatpush1.bf16.msra.mxu0 %v732
    %788 = vmatprep.subr.bf16.mxu0 %v737
    %789 = vmatpush1.bf16.msra.mxu0 %v736
    %790 = vmatprep.subr.bf16.mxu0 %v741
    %791 = vmatpush1.bf16.msra.mxu0 %v740
    %792 = vmatprep.subr.bf16.mxu0 0
    %793 = vmatpush1.bf16.msra.mxu0 0
    %794 = vmatprep.subr.bf16.mxu0 0
    %795 = vmatpush1.bf16.msra.mxu0 0
    %796 = vmatprep.subr.bf16.mxu0 0
    %797 = vmatpush1.bf16.msra.mxu0 0
    %798 = vmatprep.subr.bf16.mxu0 0
    %799 = vmatpush1.bf16.msra.mxu0 0
    %800 = vmatprep.subr.bf16.mxu0 0
    %801 = vmatpush1.bf16.msra.mxu0 0
    %802 = vmatprep.subr.bf16.mxu0 0
    %803 = vmatpush1.bf16.msra.mxu0 0
    %804 = vmatprep.subr.bf16.mxu0 0
    %805 = vmatpush1.bf16.msra.mxu0 0
    %806 = vmatprep.subr.bf16.mxu0 0
    %807 = vmatpush1.bf16.msra.mxu0 0
    %808 = vmatprep.mubr.bf16.mxu0 0
    %809 = vmatmul.mubr.bf16.gmra.mrb[0].mxu0 0
    %v810 = vpop.f32.mrb[0].mxu0
    %v811 = vadd.f32 %v301, %v810
    %v812 = vpop.f32.mrb[0].mxu0
    %v813 = vadd.f32 %v303, %v812
    %v814 = vpop.f32.mrb[0].mxu0
    %v815 = vpop.f32.mrb[0].mxu0
    %816 = vdwg.mxu0
    %817 = vmatprep.subr.bf16.mxu0 %v715
    %818 = vmatpush1.bf16.msra.mxu0 %v714
    %819 = vmatprep.subr.bf16.mxu0 %v719
    %820 = vmatpush1.bf16.msra.mxu0 %v718
    %821 = vmatprep.subr.bf16.mxu0 %v723
    %822 = vmatpush1.bf16.msra.mxu0 %v722
    %823 = vmatprep.subr.bf16.mxu0 %v727
    %824 = vmatpush1.bf16.msra.mxu0 %v726
    %825 = vmatprep.subr.bf16.mxu0 %v731
    %826 = vmatpush1.bf16.msra.mxu0 %v730
    %827 = vmatprep.subr.bf16.mxu0 %v735
    %828 = vmatpush1.bf16.msra.mxu0 %v734
    %829 = vmatprep.subr.bf16.mxu0 %v739
    %830 = vmatpush1.bf16.msra.mxu0 %v738
    %831 = vmatprep.subr.bf16.mxu0 %v743
    %832 = vmatpush1.bf16.msra.mxu0 %v742
    %833 = vmatprep.subr.bf16.mxu0 0
    %834 = vmatpush1.bf16.msra.mxu0 0
    %835 = vmatprep.subr.bf16.mxu0 0
    %836 = vmatpush1.bf16.msra.mxu0 0
    %837 = vmatprep.subr.bf16.mxu0 0
    %838 = vmatpush1.bf16.msra.mxu0 0
    %839 = vmatprep.subr.bf16.mxu0 0
    %840 = vmatpush1.bf16.msra.mxu0 0
    %841 = vmatprep.subr.bf16.mxu0 0
    %842 = vmatpush1.bf16.msra.mxu0 0
    %843 = vmatprep.subr.bf16.mxu0 0
    %844 = vmatpush1.bf16.msra.mxu0 0
    %845 = vmatprep.subr.bf16.mxu0 0
    %846 = vmatpush1.bf16.msra.mxu0 0
    %847 = vmatprep.subr.bf16.mxu0 0
    %848 = vmatpush1.bf16.msra.mxu0 0
    %849 = vmatprep.mubr.bf16.mxu0 0
    %850 = vmatmul.mubr.bf16.gmra.mrb[0].mxu0 0
    %v851 = vpop.f32.mrb[0].mxu0
    %v852 = vadd.f32 %v374, %v851
    %v853 = vpop.f32.mrb[0].mxu0
    %v854 = vadd.f32 %v376, %v853
    %v855 = vpop.f32.mrb[0].mxu0
    %v856 = vpop.f32.mrb[0].mxu0
    %857 = vdwg.mxu0
    %v858 = vmul.f32 %v811, 0.5
    %v859 = vmul.f32 %v813, 0.5
    %v860 = vmul.f32 %v852, 0.5
    %v861 = vtanh.pop %v858
    %v862 = vtanh.pop %v859
    %v863 = vtanh.pop %v860
    %v864 = vmul.f32 %v861, 0.5
    %v865 = vmul.f32 %v862, 0.5
    %v866 = vmul.f32 %v863, 0.5
    %v867 = vadd.f32 %v864, 0.5
    %v868 = vadd.f32 %v865, 0.5
    %v869 = vadd.f32 %v866, 0.5
    %v870 = vtanh.pop %v854
    %v871 = vmul.f32 %v868, 0.0
    %v872 = vmul.f32 %v867, %v870
    %v873 = vadd.f32 %v871, %v872
    %v874 = vtanh.pop %v873
    %v875 = vmul.f32 %v869, %v874
    %v876 = vpack.c.bf16 %v875, %v875
    %v909 = vunpack.c.l.b16 %v476
    %v910 = vunpack.c.h.b16 %v476
    %v911 = vunpack.c.l.b16 %v477
    %v912 = vunpack.c.h.b16 %v477
    %v913 = vunpack.c.l.b16 %v478
    %v914 = vunpack.c.h.b16 %v478
    %v915 = vunpack.c.l.b16 %v479
    %v916 = vunpack.c.h.b16 %v479
    %v917 = vunpack.c.l.b16 %v480
    %v918 = vunpack.c.h.b16 %v480
    %v919 = vunpack.c.l.b16 %v481
    %v920 = vunpack.c.h.b16 %v481
    %v921 = vunpack.c.l.b16 %v482
    %v922 = vunpack.c.h.b16 %v482
    %v923 = vunpack.c.l.b16 %v483
    %v924 = vunpack.c.h.b16 %v483
    %v925 = vunpack.c.l.b16 %v484
    %v926 = vunpack.c.h.b16 %v484
    %v927 = vunpack.c.l.b16 %v485
    %v928 = vunpack.c.h.b16 %v485
    %v929 = vunpack.c.l.b16 %v486
    %v930 = vunpack.c.h.b16 %v486
    %v931 = vunpack.c.l.b16 %v487
    %v932 = vunpack.c.h.b16 %v487
    %v933 = vunpack.c.l.b16 %v488
    %v934 = vunpack.c.h.b16 %v488
    %v935 = vunpack.c.l.b16 %v489
    %v936 = vunpack.c.h.b16 %v489
    %v937 = vunpack.c.l.b16 %v490
    %v938 = vunpack.c.h.b16 %v490
    %v939 = vunpack.c.l.b16 %v491
    %v940 = vunpack.c.h.b16 %v491
    %v941 = vunpack.c.l.b16 %v492
    %v942 = vunpack.c.h.b16 %v492
    %v943 = vunpack.c.l.b16 %v493
    %v944 = vunpack.c.h.b16 %v493
    %v945 = vunpack.c.l.b16 %v494
    %v946 = vunpack.c.h.b16 %v494
    %v947 = vunpack.c.l.b16 %v495
    %v948 = vunpack.c.h.b16 %v495
    %v949 = vunpack.c.l.b16 %v496
    %v950 = vunpack.c.h.b16 %v496
    %v951 = vunpack.c.l.b16 %v497
    %v952 = vunpack.c.h.b16 %v497
    %v953 = vunpack.c.l.b16 %v498
    %v954 = vunpack.c.h.b16 %v498
    %v955 = vunpack.c.l.b16 %v499
    %v956 = vunpack.c.h.b16 %v499
    %v957 = vunpack.c.l.b16 %v500
    %v958 = vunpack.c.h.b16 %v500
    %v959 = vunpack.c.l.b16 %v501
    %v960 = vunpack.c.h.b16 %v501
    %v961 = vunpack.c.l.b16 %v502
    %v962 = vunpack.c.h.b16 %v502
    %v963 = vunpack.c.l.b16 %v503
    %v964 = vunpack.c.h.b16 %v503
    %v965 = vunpack.c.l.b16 %v504
    %v966 = vunpack.c.h.b16 %v504
    %v967 = vunpack.c.l.b16 %v505
    %v968 = vunpack.c.h.b16 %v505
    %v969 = vunpack.c.l.b16 %v506
    %v970 = vunpack.c.h.b16 %v506
    %v971 = vunpack.c.l.b16 %v507
    %v972 = vunpack.c.h.b16 %v507
    %v973 = vpack.c.b16 %v913, %v909
    %v974 = vpack.c.b16 %v914, %v910
    %v975 = vpack.c.b16 %v915, %v911
    %v976 = vpack.c.b16 %v916, %v912
    %v977 = vpack.c.b16 %v921, %v917
    %v978 = vpack.c.b16 %v922, %v918
    %v979 = vpack.c.b16 %v923, %v919
    %v980 = vpack.c.b16 %v924, %v920
    %v981 = vpack.c.b16 %v929, %v925
    %v982 = vpack.c.b16 %v930, %v926
    %v983 = vpack.c.b16 %v931, %v927
    %v984 = vpack.c.b16 %v932, %v928
    %v985 = vpack.c.b16 %v937, %v933
    %v986 = vpack.c.b16 %v938, %v934
    %v987 = vpack.c.b16 %v939, %v935
    %v988 = vpack.c.b16 %v940, %v936
    %v989 = vpack.c.b16 %v945, %v941
    %v990 = vpack.c.b16 %v946, %v942
    %v991 = vpack.c.b16 %v947, %v943
    %v992 = vpack.c.b16 %v948, %v944
    %v993 = vpack.c.b16 %v953, %v949
    %v994 = vpack.c.b16 %v954, %v950
    %v995 = vpack.c.b16 %v955, %v951
    %v996 = vpack.c.b16 %v956, %v952
    %v997 = vpack.c.b16 %v961, %v957
    %v998 = vpack.c.b16 %v962, %v958
    %v999 = vpack.c.b16 %v963, %v959
    %v1000 = vpack.c.b16 %v964, %v960
    %v1001 = vpack.c.b16 %v969, %v965
    %v1002 = vpack.c.b16 %v970, %v966
    %v1003 = vpack.c.b16 %v971, %v967
    %v1004 = vpack.c.b16 %v972, %v968
    %1037 = vmatprep.subr.bf16.mxu0 %v974
    %1038 = vmatpush1.bf16.msra.mxu0 %v973
    %1039 = vmatprep.subr.bf16.mxu0 %v978
    %1040 = vmatpush1.bf16.msra.mxu0 %v977
    %1041 = vmatprep.subr.bf16.mxu0 %v982
    %1042 = vmatpush1.bf16.msra.mxu0 %v981
    %1043 = vmatprep.subr.bf16.mxu0 %v986
    %1044 = vmatpush1.bf16.msra.mxu0 %v985
    %1045 = vmatprep.subr.bf16.mxu0 %v990
    %1046 = vmatpush1.bf16.msra.mxu0 %v989
    %1047 = vmatprep.subr.bf16.mxu0 %v994
    %1048 = vmatpush1.bf16.msra.mxu0 %v993
    %1049 = vmatprep.subr.bf16.mxu0 %v998
    %1050 = vmatpush1.bf16.msra.mxu0 %v997
    %1051 = vmatprep.subr.bf16.mxu0 %v1002
    %1052 = vmatpush1.bf16.msra.mxu0 %v1001
    %1053 = vmatprep.subr.bf16.mxu0 0
    %1054 = vmatpush1.bf16.msra.mxu0 0
    %1055 = vmatprep.subr.bf16.mxu0 0
    %1056 = vmatpush1.bf16.msra.mxu0 0
    %1057 = vmatprep.subr.bf16.mxu0 0
    %1058 = vmatpush1.bf16.msra.mxu0 0
    %1059 = vmatprep.subr.bf16.mxu0 0
    %1060 = vmatpush1.bf16.msra.mxu0 0
    %1061 = vmatprep.subr.bf16.mxu0 0
    %1062 = vmatpush1.bf16.msra.mxu0 0
    %1063 = vmatprep.subr.bf16.mxu0 0
    %1064 = vmatpush1.bf16.msra.mxu0 0
    %1065 = vmatprep.subr.bf16.mxu0 0
    %1066 = vmatpush1.bf16.msra.mxu0 0
    %1067 = vmatprep.subr.bf16.mxu0 0
    %1068 = vmatpush1.bf16.msra.mxu0 0
    %1069 = vmatprep.mubr.bf16.mxu0 0
    %1070 = vmatmul.mubr.bf16.gmra.mrb[0].mxu0 0
    %v1071 = vpop.f32.mrb[0].mxu0
    %v1072 = vadd.f32 0.0, %v1071
    %v1073 = vpop.f32.mrb[0].mxu0
    %v1074 = vadd.f32 0.0, %v1073
    %v1075 = vpop.f32.mrb[0].mxu0
    %v1076 = vpop.f32.mrb[0].mxu0
    %1077 = vdwg.mxu0
    %1078 = vmatprep.subr.bf16.mxu0 %v976
    %1079 = vmatpush1.bf16.msra.mxu0 %v975
    %1080 = vmatprep.subr.bf16.mxu0 %v980
    %1081 = vmatpush1.bf16.msra.mxu0 %v979
    %1082 = vmatprep.subr.bf16.mxu0 %v984
    %1083 = vmatpush1.bf16.msra.mxu0 %v983
    %1084 = vmatprep.subr.bf16.mxu0 %v988
    %1085 = vmatpush1.bf16.msra.mxu0 %v987
    %1086 = vmatprep.subr.bf16.mxu0 %v992
    %1087 = vmatpush1.bf16.msra.mxu0 %v991
    %1088 = vmatprep.subr.bf16.mxu0 %v996
    %1089 = vmatpush1.bf16.msra.mxu0 %v995
    %1090 = vmatprep.subr.bf16.mxu0 %v1000
    %1091 = vmatpush1.bf16.msra.mxu0 %v999
    %1092 = vmatprep.subr.bf16.mxu0 %v1004
    %1093 = vmatpush1.bf16.msra.mxu0 %v1003
    %1094 = vmatprep.subr.bf16.mxu0 0
    %1095 = vmatpush1.bf16.msra.mxu0 0
    %1096 = vmatprep.subr.bf16.mxu0 0
    %1097 = vmatpush1.bf16.msra.mxu0 0
    %1098 = vmatprep.subr.bf16.mxu0 0
    %1099 = vmatpush1.bf16.msra.mxu0 0
    %1100 = vmatprep.subr.bf16.mxu0 0
    %1101 = vmatpush1.bf16.msra.mxu0 0
    %1102 = vmatprep.subr.bf16.mxu0 0
    %1103 = vmatpush1.bf16.msra.mxu0 0
    %1104 = vmatprep.subr.bf16.mxu0 0
    %1105 = vmatpush1.bf16.msra.mxu0 0
    %1106 = vmatprep.subr.bf16.mxu0 0
    %1107 = vmatpush1.bf16.msra.mxu0 0
    %1108 = vmatprep.subr.bf16.mxu0 0
    %1109 = vmatpush1.bf16.msra.mxu0 0
    %1110 = vmatprep.mubr.bf16.mxu0 0
    %1111 = vmatmul.mubr.bf16.gmra.mrb[0].mxu0 0
    %v1112 = vpop.f32.mrb[0].mxu0
    %v1113 = vadd.f32 0.0, %v1112
    %v1114 = vpop.f32.mrb[0].mxu0
    %v1115 = vadd.f32 0.0, %v1114
    %v1116 = vpop.f32.mrb[0].mxu0
    %v1117 = vpop.f32.mrb[0].mxu0
    %1118 = vdwg.mxu0
    %v1151 = vunpack.c.l.b16 %v444
    %v1152 = vunpack.c.h.b16 %v444
    %v1153 = vunpack.c.l.b16 %v445
    %v1154 = vunpack.c.h.b16 %v445
    %v1155 = vunpack.c.l.b16 %v446
    %v1156 = vunpack.c.h.b16 %v446
    %v1157 = vunpack.c.l.b16 %v447
    %v1158 = vunpack.c.h.b16 %v447
    %v1159 = vunpack.c.l.b16 %v448
    %v1160 = vunpack.c.h.b16 %v448
    %v1161 = vunpack.c.l.b16 %v449
    %v1162 = vunpack.c.h.b16 %v449
    %v1163 = vunpack.c.l.b16 %v450
    %v1164 = vunpack.c.h.b16 %v450
    %v1165 = vunpack.c.l.b16 %v451
    %v1166 = vunpack.c.h.b16 %v451
    %v1167 = vunpack.c.l.b16 %v452
    %v1168 = vunpack.c.h.b16 %v452
    %v1169 = vunpack.c.l.b16 %v453
    %v1170 = vunpack.c.h.b16 %v453
    %v1171 = vunpack.c.l.b16 %v454
    %v1172 = vunpack.c.h.b16 %v454
    %v1173 = vunpack.c.l.b16 %v455
    %v1174 = vunpack.c.h.b16 %v455
    %v1175 = vunpack.c.l.b16 %v456
    %v1176 = vunpack.c.h.b16 %v456
    %v1177 = vunpack.c.l.b16 %v457
    %v1178 = vunpack.c.h.b16 %v457
    %v1179 = vunpack.c.l.b16 %v458
    %v1180 = vunpack.c.h.b16 %v458
    %v1181 = vunpack.c.l.b16 %v459
    %v1182 = vunpack.c.h.b16 %v459
    %v1183 = vunpack.c.l.b16 %v460
    %v1184 = vunpack.c.h.b16 %v460
    %v1185 = vunpack.c.l.b16 %v461
    %v1186 = vunpack.c.h.b16 %v461
    %v1187 = vunpack.c.l.b16 %v462
    %v1188 = vunpack.c.h.b16 %v462
    %v1189 = vunpack.c.l.b16 %v463
    %v1190 = vunpack.c.h.b16 %v463
    %v1191 = vunpack.c.l.b16 %v464
    %v1192 = vunpack.c.h.b16 %v464
    %v1193 = vunpack.c.l.b16 %v465
    %v1194 = vunpack.c.h.b16 %v465
    %v1195 = vunpack.c.l.b16 %v466
    %v1196 = vunpack.c.h.b16 %v466
    %v1197 = vunpack.c.l.b16 %v467
    %v1198 = vunpack.c.h.b16 %v467
    %v1199 = vunpack.c.l.b16 %v468
    %v1200 = vunpack.c.h.b16 %v468
    %v1201 = vunpack.c.l.b16 %v469
    %v1202 = vunpack.c.h.b16 %v469
    %v1203 = vunpack.c.l.b16 %v470
    %v1204 = vunpack.c.h.b16 %v470
    %v1205 = vunpack.c.l.b16 %v471
    %v1206 = vunpack.c.h.b16 %v471
    %v1207 = vunpack.c.l.b16 %v472
    %v1208 = vunpack.c.h.b16 %v472
    %v1209 = vunpack.c.l.b16 %v473
    %v1210 = vunpack.c.h.b16 %v473
    %v1211 = vunpack.c.l.b16 %v474
    %v1212 = vunpack.c.h.b16 %v474
    %v1213 = vunpack.c.l.b16 %v475
    %v1214 = vunpack.c.h.b16 %v475
    %v1215 = vpack.c.b16 %v1155, %v1151
    %v1216 = vpack.c.b16 %v1156, %v1152
    %v1217 = vpack.c.b16 %v1157, %v1153
    %v1218 = vpack.c.b16 %v1158, %v1154
    %v1219 = vpack.c.b16 %v1163, %v1159
    %v1220 = vpack.c.b16 %v1164, %v1160
    %v1221 = vpack.c.b16 %v1165, %v1161
    %v1222 = vpack.c.b16 %v1166, %v1162
    %v1223 = vpack.c.b16 %v1171, %v1167
    %v1224 = vpack.c.b16 %v1172, %v1168
    %v1225 = vpack.c.b16 %v1173, %v1169
    %v1226 = vpack.c.b16 %v1174, %v1170
    %v1227 = vpack.c.b16 %v1179, %v1175
    %v1228 = vpack.c.b16 %v1180, %v1176
    %v1229 = vpack.c.b16 %v1181, %v1177
    %v1230 = vpack.c.b16 %v1182, %v1178
    %v1231 = vpack.c.b16 %v1187, %v1183
    %v1232 = vpack.c.b16 %v1188, %v1184
    %v1233 = vpack.c.b16 %v1189, %v1185
    %v1234 = vpack.c.b16 %v1190, %v1186
    %v1235 = vpack.c.b16 %v1195, %v1191
    %v1236 = vpack.c.b16 %v1196, %v1192
    %v1237 = vpack.c.b16 %v1197, %v1193
    %v1238 = vpack.c.b16 %v1198, %v1194
    %v1239 = vpack.c.b16 %v1203, %v1199
    %v1240 = vpack.c.b16 %v1204, %v1200
    %v1241 = vpack.c.b16 %v1205, %v1201
    %v1242 = vpack.c.b16 %v1206, %v1202
    %v1243 = vpack.c.b16 %v1211, %v1207
    %v1244 = vpack.c.b16 %v1212, %v1208
    %v1245 = vpack.c.b16 %v1213, %v1209
    %v1246 = vpack.c.b16 %v1214, %v1210
    %1279 = vmatprep.subr.bf16.mxu0 %v1216
    %1280 = vmatpush1.bf16.msra.mxu0 %v1215
    %1281 = vmatprep.subr.bf16.mxu0 %v1220
    %1282 = vmatpush1.bf16.msra.mxu0 %v1219
    %1283 = vmatprep.subr.bf16.mxu0 %v1224
    %1284 = vmatpush1.bf16.msra.mxu0 %v1223
    %1285 = vmatprep.subr.bf16.mxu0 %v1228
    %1286 = vmatpush1.bf16.msra.mxu0 %v1227
    %1287 = vmatprep.subr.bf16.mxu0 %v1232
    %1288 = vmatpush1.bf16.msra.mxu0 %v1231
    %1289 = vmatprep.subr.bf16.mxu0 %v1236
    %1290 = vmatpush1.bf16.msra.mxu0 %v1235
    %1291 = vmatprep.subr.bf16.mxu0 %v1240
    %1292 = vmatpush1.bf16.msra.mxu0 %v1239
    %1293 = vmatprep.subr.bf16.mxu0 %v1244
    %1294 = vmatpush1.bf16.msra.mxu0 %v1243
    %1295 = vmatprep.subr.bf16.mxu0 0
    %1296 = vmatpush1.bf16.msra.mxu0 0
    %1297 = vmatprep.subr.bf16.mxu0 0
    %1298 = vmatpush1.bf16.msra.mxu0 0
    %1299 = vmatprep.subr.bf16.mxu0 0
    %1300 = vmatpush1.bf16.msra.mxu0 0
    %1301 = vmatprep.subr.bf16.mxu0 0
    %1302 = vmatpush1.bf16.msra.mxu0 0
    %1303 = vmatprep.subr.bf16.mxu0 0
    %1304 = vmatpush1.bf16.msra.mxu0 0
    %1305 = vmatprep.subr.bf16.mxu0 0
    %1306 = vmatpush1.bf16.msra.mxu0 0
    %1307 = vmatprep.subr.bf16.mxu0 0
    %1308 = vmatpush1.bf16.msra.mxu0 0
    %1309 = vmatprep.subr.bf16.mxu0 0
    %1310 = vmatpush1.bf16.msra.mxu0 0
    %1311 = vmatprep.mubr.bf16.mxu0 0
    %1312 = vmatmul.mubr.bf16.gmra.mrb[0].mxu0 %v876
    %v1313 = vpop.f32.mrb[0].mxu0
    %v1314 = vadd.f32 %v1072, %v1313
    %v1315 = vpop.f32.mrb[0].mxu0
    %v1316 = vadd.f32 %v1074, %v1315
    %v1317 = vpop.f32.mrb[0].mxu0
    %v1318 = vpop.f32.mrb[0].mxu0
    %1319 = vdwg.mxu0
    %1320 = vmatprep.subr.bf16.mxu0 %v1218
    %1321 = vmatpush1.bf16.msra.mxu0 %v1217
    %1322 = vmatprep.subr.bf16.mxu0 %v1222
    %1323 = vmatpush1.bf16.msra.mxu0 %v1221
    %1324 = vmatprep.subr.bf16.mxu0 %v1226
    %1325 = vmatpush1.bf16.msra.mxu0 %v1225
    %1326 = vmatprep.subr.bf16.mxu0 %v1230
    %1327 = vmatpush1.bf16.msra.mxu0 %v1229
    %1328 = vmatprep.subr.bf16.mxu0 %v1234
    %1329 = vmatpush1.bf16.msra.mxu0 %v1233
    %1330 = vmatprep.subr.bf16.mxu0 %v1238
    %1331 = vmatpush1.bf16.msra.mxu0 %v1237
    %1332 = vmatprep.subr.bf16.mxu0 %v1242
    %1333 = vmatpush1.bf16.msra.mxu0 %v1241
    %1334 = vmatprep.subr.bf16.mxu0 %v1246
    %1335 = vmatpush1.bf16.msra.mxu0 %v1245
    %1336 = vmatprep.subr.bf16.mxu0 0
    %1337 = vmatpush1.bf16.msra.mxu0 0
    %1338 = vmatprep.subr.bf16.mxu0 0
    %1339 = vmatpush1.bf16.msra.mxu0 0
    %1340 = vmatprep.subr.bf16.mxu0 0
    %1341 = vmatpush1.bf16.msra.mxu0 0
    %1342 = vmatprep.subr.bf16.mxu0 0
    %1343 = vmatpush1.bf16.msra.mxu0 0
    %1344 = vmatprep.subr.bf16.mxu0 0
    %1345 = vmatpush1.bf16.msra.mxu0 0
    %1346 = vmatprep.subr.bf16.mxu0 0
    %1347 = vmatpush1.bf16.msra.mxu0 0
    %1348 = vmatprep.subr.bf16.mxu0 0
    %1349 = vmatpush1.bf16.msra.mxu0 0
    %1350 = vmatprep.subr.bf16.mxu0 0
    %1351 = vmatpush1.bf16.msra.mxu0 0
    %1352 = vmatprep.mubr.bf16.mxu0 0
    %1353 = vmatmul.mubr.bf16.gmra.mrb[0].mxu0 %v876
    %v1354 = vpop.f32.mrb[0].mxu0
    %v1355 = vadd.f32 %v1113, %v1354
    %v1356 = vpop.f32.mrb[0].mxu0
    %v1357 = vadd.f32 %v1115, %v1356
    %v1358 = vpop.f32.mrb[0].mxu0
    %v1359 = vpop.f32.mrb[0].mxu0
    %1360 = vdwg.mxu0
    %v1361 = vadd.f32 %v1314, %v577
    %v1362 = vadd.f32 %v1316, %v581
    %v1363 = vadd.f32 %v1355, %v585
    %v1364 = vadd.f32 %v1357, %v589
    %v1365 = vmul.f32 %v1361, 0.5
    %v1366 = vmul.f32 %v1362, 0.5
    %v1367 = vmul.f32 %v1363, 0.5
    %v1368 = vtanh.pop %v1365
    %v1369 = vtanh.pop %v1366
    %v1370 = vtanh.pop %v1367
    %v1371 = vmul.f32 %v1368, 0.5
    %v1372 = vmul.f32 %v1369, 0.5
    %v1373 = vmul.f32 %v1370, 0.5
    %v1374 = vadd.f32 %v1371, 0.5
    %v1375 = vadd.f32 %v1372, 0.5
    %v1376 = vadd.f32 %v1373, 0.5
    %v1377 = vtanh.pop %v1364
    %v1378 = vmul.f32 %v1375, 0.0
    %v1379 = vmul.f32 %v1374, %v1377
    %v1380 = vadd.f32 %v1378, %v1379
    %v1381 = vtanh.pop %v1380
    %v1382 = vmul.f32 %v1376, %v1381
    %v1383 = vpack.c.bf16 %v1382, %v1382
    %v1416 = vunpack.c.l.b16 %v540
    %v1417 = vunpack.c.h.b16 %v540
    %v1418 = vunpack.c.l.b16 %v541
    %v1419 = vunpack.c.h.b16 %v541
    %v1420 = vunpack.c.l.b16 %v542
    %v1421 = vunpack.c.h.b16 %v542
    %v1422 = vunpack.c.l.b16 %v543
    %v1423 = vunpack.c.h.b16 %v543
    %v1424 = vunpack.c.l.b16 %v544
    %v1425 = vunpack.c.h.b16 %v544
    %v1426 = vunpack.c.l.b16 %v545
    %v1427 = vunpack.c.h.b16 %v545
    %v1428 = vunpack.c.l.b16 %v546
    %v1429 = vunpack.c.h.b16 %v546
    %v1430 = vunpack.c.l.b16 %v547
    %v1431 = vunpack.c.h.b16 %v547
    %v1432 = vunpack.c.l.b16 %v548
    %v1433 = vunpack.c.h.b16 %v548
    %v1434 = vunpack.c.l.b16 %v549
    %v1435 = vunpack.c.h.b16 %v549
    %v1436 = vunpack.c.l.b16 %v550
    %v1437 = vunpack.c.h.b16 %v550
    %v1438 = vunpack.c.l.b16 %v551
    %v1439 = vunpack.c.h.b16 %v551
    %v1440 = vunpack.c.l.b16 %v552
    %v1441 = vunpack.c.h.b16 %v552
    %v1442 = vunpack.c.l.b16 %v553
    %v1443 = vunpack.c.h.b16 %v553
    %v1444 = vunpack.c.l.b16 %v554
    %v1445 = vunpack.c.h.b16 %v554
    %v1446 = vunpack.c.l.b16 %v555
    %v1447 = vunpack.c.h.b16 %v555
    %v1448 = vunpack.c.l.b16 %v556
    %v1449 = vunpack.c.h.b16 %v556
    %v1450 = vunpack.c.l.b16 %v557
    %v1451 = vunpack.c.h.b16 %v557
    %v1452 = vunpack.c.l.b16 %v558
    %v1453 = vunpack.c.h.b16 %v558
    %v1454 = vunpack.c.l.b16 %v559
    %v1455 = vunpack.c.h.b16 %v559
    %v1456 = vunpack.c.l.b16 %v560
    %v1457 = vunpack.c.h.b16 %v560
    %v1458 = vunpack.c.l.b16 %v561
    %v1459 = vunpack.c.h.b16 %v561
    %v1460 = vunpack.c.l.b16 %v562
    %v1461 = vunpack.c.h.b16 %v562
    %v1462 = vunpack.c.l.b16 %v563
    %v1463 = vunpack.c.h.b16 %v563
    %v1464 = vunpack.c.l.b16 %v564
    %v1465 = vunpack.c.h.b16 %v564
    %v1466 = vunpack.c.l.b16 %v565
    %v1467 = vunpack.c.h.b16 %v565
    %v1468 = vunpack.c.l.b16 %v566
    %v1469 = vunpack.c.h.b16 %v566
    %v1470 = vunpack.c.l.b16 %v567
    %v1471 = vunpack.c.h.b16 %v567
    %v1472 = vunpack.c.l.b16 %v568
    %v1473 = vunpack.c.h.b16 %v568
    %v1474 = vunpack.c.l.b16 %v569
    %v1475 = vunpack.c.h.b16 %v569
    %v1476 = vunpack.c.l.b16 %v570
    %v1477 = vunpack.c.h.b16 %v570
    %v1478 = vunpack.c.l.b16 %v571
    %v1479 = vunpack.c.h.b16 %v571
    %v1480 = vpack.c.b16 %v1420, %v1416
    %v1481 = vpack.c.b16 %v1421, %v1417
    %v1482 = vpack.c.b16 %v1422, %v1418
    %v1483 = vpack.c.b16 %v1423, %v1419
    %v1484 = vpack.c.b16 %v1428, %v1424
    %v1485 = vpack.c.b16 %v1429, %v1425
    %v1486 = vpack.c.b16 %v1430, %v1426
    %v1487 = vpack.c.b16 %v1431, %v1427
    %v1488 = vpack.c.b16 %v1436, %v1432
    %v1489 = vpack.c.b16 %v1437, %v1433
    %v1490 = vpack.c.b16 %v1438, %v1434
    %v1491 = vpack.c.b16 %v1439, %v1435
    %v1492 = vpack.c.b16 %v1444, %v1440
    %v1493 = vpack.c.b16 %v1445, %v1441
    %v1494 = vpack.c.b16 %v1446, %v1442
    %v1495 = vpack.c.b16 %v1447, %v1443
    %v1496 = vpack.c.b16 %v1452, %v1448
    %v1497 = vpack.c.b16 %v1453, %v1449
    %v1498 = vpack.c.b16 %v1454, %v1450
    %v1499 = vpack.c.b16 %v1455, %v1451
    %v1500 = vpack.c.b16 %v1460, %v1456
    %v1501 = vpack.c.b16 %v1461, %v1457
    %v1502 = vpack.c.b16 %v1462, %v1458
    %v1503 = vpack.c.b16 %v1463, %v1459
    %v1504 = vpack.c.b16 %v1468, %v1464
    %v1505 = vpack.c.b16 %v1469, %v1465
    %v1506 = vpack.c.b16 %v1470, %v1466
    %v1507 = vpack.c.b16 %v1471, %v1467
    %v1508 = vpack.c.b16 %v1476, %v1472
    %v1509 = vpack.c.b16 %v1477, %v1473
    %v1510 = vpack.c.b16 %v1478, %v1474
    %v1511 = vpack.c.b16 %v1479, %v1475
    %1544 = vmatprep.subr.bf16.mxu0 %v1481
    %1545 = vmatpush1.bf16.msra.mxu0 %v1480
    %1546 = vmatprep.subr.bf16.mxu0 %v1485
    %1547 = vmatpush1.bf16.msra.mxu0 %v1484
    %1548 = vmatprep.subr.bf16.mxu0 %v1489
    %1549 = vmatpush1.bf16.msra.mxu0 %v1488
    %1550 = vmatprep.subr.bf16.mxu0 %v1493
    %1551 = vmatpush1.bf16.msra.mxu0 %v1492
    %1552 = vmatprep.subr.bf16.mxu0 %v1497
    %1553 = vmatpush1.bf16.msra.mxu0 %v1496
    %1554 = vmatprep.subr.bf16.mxu0 %v1501
    %1555 = vmatpush1.bf16.msra.mxu0 %v1500
    %1556 = vmatprep.subr.bf16.mxu0 %v1505
    %1557 = vmatpush1.bf16.msra.mxu0 %v1504
    %1558 = vmatprep.subr.bf16.mxu0 %v1509
    %1559 = vmatpush1.bf16.msra.mxu0 %v1508
    %1560 = vmatprep.subr.bf16.mxu0 0
    %1561 = vmatpush1.bf16.msra.mxu0 0
    %1562 = vmatprep.subr.bf16.mxu0 0
    %1563 = vmatpush1.bf16.msra.mxu0 0
    %1564 = vmatprep.subr.bf16.mxu0 0
    %1565 = vmatpush1.bf16.msra.mxu0 0
    %1566 = vmatprep.subr.bf16.mxu0 0
    %1567 = vmatpush1.bf16.msra.mxu0 0
    %1568 = vmatprep.subr.bf16.mxu0 0
    %1569 = vmatpush1.bf16.msra.mxu0 0
    %1570 = vmatprep.subr.bf16.mxu0 0
    %1571 = vmatpush1.bf16.msra.mxu0 0
    %1572 = vmatprep.subr.bf16.mxu0 0
    %1573 = vmatpush1.bf16.msra.mxu0 0
    %1574 = vmatprep.subr.bf16.mxu0 0
    %1575 = vmatpush1.bf16.msra.mxu0 0
    %1576 = vmatprep.mubr.bf16.mxu0 0
    %1577 = vmatmul.mubr.bf16.gmra.mrb[0].mxu0 0
    %v1578 = vpop.f32.mrb[0].mxu0
    %v1579 = vadd.f32 0.0, %v1578
    %v1580 = vpop.f32.mrb[0].mxu0
    %v1581 = vadd.f32 0.0, %v1580
    %v1582 = vpop.f32.mrb[0].mxu0
    %v1583 = vpop.f32.mrb[0].mxu0
    %1584 = vdwg.mxu0
    %1585 = vmatprep.subr.bf16.mxu0 %v1483
    %1586 = vmatpush1.bf16.msra.mxu0 %v1482
    %1587 = vmatprep.subr.bf16.mxu0 %v1487
    %1588 = vmatpush1.bf16.msra.mxu0 %v1486
    %1589 = vmatprep.subr.bf16.mxu0 %v1491
    %1590 = vmatpush1.bf16.msra.mxu0 %v1490
    %1591 = vmatprep.subr.bf16.mxu0 %v1495
    %1592 = vmatpush1.bf16.msra.mxu0 %v1494
    %1593 = vmatprep.subr.bf16.mxu0 %v1499
    %1594 = vmatpush1.bf16.msra.mxu0 %v1498
    %1595 = vmatprep.subr.bf16.mxu0 %v1503
    %1596 = vmatpush1.bf16.msra.mxu0 %v1502
    %1597 = vmatprep.subr.bf16.mxu0 %v1507
    %1598 = vmatpush1.bf16.msra.mxu0 %v1506
    %1599 = vmatprep.subr.bf16.mxu0 %v1511
    %1600 = vmatpush1.bf16.msra.mxu0 %v1510
    %1601 = vmatprep.subr.bf16.mxu0 0
    %1602 = vmatpush1.bf16.msra.mxu0 0
    %1603 = vmatprep.subr.bf16.mxu0 0
    %1604 = vmatpush1.bf16.msra.mxu0 0
    %1605 = vmatprep.subr.bf16.mxu0 0
    %1606 = vmatpush1.bf16.msra.mxu0 0
    %1607 = vmatprep.subr.bf16.mxu0 0
    %1608 = vmatpush1.bf16.msra.mxu0 0
    %1609 = vmatprep.subr.bf16.mxu0 0
    %1610 = vmatpush1.bf16.msra.mxu0 0
    %1611 = vmatprep.subr.bf16.mxu0 0
    %1612 = vmatpush1.bf16.msra.mxu0 0
    %1613 = vmatprep.subr.bf16.mxu0 0
    %1614 = vmatpush1.bf16.msra.mxu0 0
    %1615 = vmatprep.subr.bf16.mxu0 0
    %1616 = vmatpush1.bf16.msra.mxu0 0
    %1617 = vmatprep.mubr.bf16.mxu0 0
    %1618 = vmatmul.mubr.bf16.gmra.mrb[0].mxu0 0
    %v1619 = vpop.f32.mrb[0].mxu0
    %v1620 = vadd.f32 0.0, %v1619
    %v1621 = vpop.f32.mrb[0].mxu0
    %v1622 = vadd.f32 0.0, %v1621
    %v1623 = vpop.f32.mrb[0].mxu0
    %v1624 = vpop.f32.mrb[0].mxu0
    %1625 = vdwg.mxu0
    %v1658 = vunpack.c.l.b16 %v508
    %v1659 = vunpack.c.h.b16 %v508
    %v1660 = vunpack.c.l.b16 %v509
    %v1661 = vunpack.c.h.b16 %v509
    %v1662 = vunpack.c.l.b16 %v510
    %v1663 = vunpack.c.h.b16 %v510
    %v1664 = vunpack.c.l.b16 %v511
    %v1665 = vunpack.c.h.b16 %v511
    %v1666 = vunpack.c.l.b16 %v512
    %v1667 = vunpack.c.h.b16 %v512
    %v1668 = vunpack.c.l.b16 %v513
    %v1669 = vunpack.c.h.b16 %v513
    %v1670 = vunpack.c.l.b16 %v514
    %v1671 = vunpack.c.h.b16 %v514
    %v1672 = vunpack.c.l.b16 %v515
    %v1673 = vunpack.c.h.b16 %v515
    %v1674 = vunpack.c.l.b16 %v516
    %v1675 = vunpack.c.h.b16 %v516
    %v1676 = vunpack.c.l.b16 %v517
    %v1677 = vunpack.c.h.b16 %v517
    %v1678 = vunpack.c.l.b16 %v518
    %v1679 = vunpack.c.h.b16 %v518
    %v1680 = vunpack.c.l.b16 %v519
    %v1681 = vunpack.c.h.b16 %v519
    %v1682 = vunpack.c.l.b16 %v520
    %v1683 = vunpack.c.h.b16 %v520
    %v1684 = vunpack.c.l.b16 %v521
    %v1685 = vunpack.c.h.b16 %v521
    %v1686 = vunpack.c.l.b16 %v522
    %v1687 = vunpack.c.h.b16 %v522
    %v1688 = vunpack.c.l.b16 %v523
    %v1689 = vunpack.c.h.b16 %v523
    %v1690 = vunpack.c.l.b16 %v524
    %v1691 = vunpack.c.h.b16 %v524
    %v1692 = vunpack.c.l.b16 %v525
    %v1693 = vunpack.c.h.b16 %v525
    %v1694 = vunpack.c.l.b16 %v526
    %v1695 = vunpack.c.h.b16 %v526
    %v1696 = vunpack.c.l.b16 %v527
    %v1697 = vunpack.c.h.b16 %v527
    %v1698 = vunpack.c.l.b16 %v528
    %v1699 = vunpack.c.h.b16 %v528
    %v1700 = vunpack.c.l.b16 %v529
    %v1701 = vunpack.c.h.b16 %v529
    %v1702 = vunpack.c.l.b16 %v530
    %v1703 = vunpack.c.h.b16 %v530
    %v1704 = vunpack.c.l.b16 %v531
    %v1705 = vunpack.c.h.b16 %v531
    %v1706 = vunpack.c.l.b16 %v532
    %v1707 = vunpack.c.h.b16 %v532
    %v1708 = vunpack.c.l.b16 %v533
    %v1709 = vunpack.c.h.b16 %v533
    %v1710 = vunpack.c.l.b16 %v534
    %v1711 = vunpack.c.h.b16 %v534
    %v1712 = vunpack.c.l.b16 %v535
    %v1713 = vunpack.c.h.b16 %v535
    %v1714 = vunpack.c.l.b16 %v536
    %v1715 = vunpack.c.h.b16 %v536
    %v1716 = vunpack.c.l.b16 %v537
    %v1717 = vunpack.c.h.b16 %v537
    %v1718 = vunpack.c.l.b16 %v538
    %v1719 = vunpack.c.h.b16 %v538
    %v1720 = vunpack.c.l.b16 %v539
    %v1721 = vunpack.c.h.b16 %v539
    %v1722 = vpack.c.b16 %v1662, %v1658
    %v1723 = vpack.c.b16 %v1663, %v1659
    %v1724 = vpack.c.b16 %v1664, %v1660
    %v1725 = vpack.c.b16 %v1665, %v1661
    %v1726 = vpack.c.b16 %v1670, %v1666
    %v1727 = vpack.c.b16 %v1671, %v1667
    %v1728 = vpack.c.b16 %v1672, %v1668
    %v1729 = vpack.c.b16 %v1673, %v1669
    %v1730 = vpack.c.b16 %v1678, %v1674
    %v1731 = vpack.c.b16 %v1679, %v1675
    %v1732 = vpack.c.b16 %v1680, %v1676
    %v1733 = vpack.c.b16 %v1681, %v1677
    %v1734 = vpack.c.b16 %v1686, %v1682
    %v1735 = vpack.c.b16 %v1687, %v1683
    %v1736 = vpack.c.b16 %v1688, %v1684
    %v1737 = vpack.c.b16 %v1689, %v1685
    %v1738 = vpack.c.b16 %v1694, %v1690
    %v1739 = vpack.c.b16 %v1695, %v1691
    %v1740 = vpack.c.b16 %v1696, %v1692
    %v1741 = vpack.c.b16 %v1697, %v1693
    %v1742 = vpack.c.b16 %v1702, %v1698
    %v1743 = vpack.c.b16 %v1703, %v1699
    %v1744 = vpack.c.b16 %v1704, %v1700
    %v1745 = vpack.c.b16 %v1705, %v1701
    %v1746 = vpack.c.b16 %v1710, %v1706
    %v1747 = vpack.c.b16 %v1711, %v1707
    %v1748 = vpack.c.b16 %v1712, %v1708
    %v1749 = vpack.c.b16 %v1713, %v1709
    %v1750 = vpack.c.b16 %v1718, %v1714
    %v1751 = vpack.c.b16 %v1719, %v1715
    %v1752 = vpack.c.b16 %v1720, %v1716
    %v1753 = vpack.c.b16 %v1721, %v1717
    %1786 = vmatprep.subr.bf16.mxu0 %v1723
    %1787 = vmatpush1.bf16.msra.mxu0 %v1722
    %1788 = vmatprep.subr.bf16.mxu0 %v1727
    %1789 = vmatpush1.bf16.msra.mxu0 %v1726
    %1790 = vmatprep.subr.bf16.mxu0 %v1731
    %1791 = vmatpush1.bf16.msra.mxu0 %v1730
    %1792 = vmatprep.subr.bf16.mxu0 %v1735
    %1793 = vmatpush1.bf16.msra.mxu0 %v1734
    %1794 = vmatprep.subr.bf16.mxu0 %v1739
    %1795 = vmatpush1.bf16.msra.mxu0 %v1738
    %1796 = vmatprep.subr.bf16.mxu0 %v1743
    %1797 = vmatpush1.bf16.msra.mxu0 %v1742
    %1798 = vmatprep.subr.bf16.mxu0 %v1747
    %1799 = vmatpush1.bf16.msra.mxu0 %v1746
    %1800 = vmatprep.subr.bf16.mxu0 %v1751
    %1801 = vmatpush1.bf16.msra.mxu0 %v1750
    %1802 = vmatprep.subr.bf16.mxu0 0
    %1803 = vmatpush1.bf16.msra.mxu0 0
    %1804 = vmatprep.subr.bf16.mxu0 0
    %1805 = vmatpush1.bf16.msra.mxu0 0
    %1806 = vmatprep.subr.bf16.mxu0 0
    %1807 = vmatpush1.bf16.msra.mxu0 0
    %1808 = vmatprep.subr.bf16.mxu0 0
    %1809 = vmatpush1.bf16.msra.mxu0 0
    %1810 = vmatprep.subr.bf16.mxu0 0
    %1811 = vmatpush1.bf16.msra.mxu0 0
    %1812 = vmatprep.subr.bf16.mxu0 0
    %1813 = vmatpush1.bf16.msra.mxu0 0
    %1814 = vmatprep.subr.bf16.mxu0 0
    %1815 = vmatpush1.bf16.msra.mxu0 0
    %1816 = vmatprep.subr.bf16.mxu0 0
    %1817 = vmatpush1.bf16.msra.mxu0 0
    %1818 = vmatprep.mubr.bf16.mxu0 0
    %1819 = vmatmul.mubr.bf16.gmra.mrb[0].mxu0 %v1383
    %v1820 = vpop.f32.mrb[0].mxu0
    %v1821 = vadd.f32 %v1579, %v1820
    %v1822 = vpop.f32.mrb[0].mxu0
    %v1823 = vadd.f32 %v1581, %v1822
    %v1824 = vpop.f32.mrb[0].mxu0
    %v1825 = vpop.f32.mrb[0].mxu0
    %1826 = vdwg.mxu0
    %1827 = vmatprep.subr.bf16.mxu0 %v1725
    %1828 = vmatpush1.bf16.msra.mxu0 %v1724
    %1829 = vmatprep.subr.bf16.mxu0 %v1729
    %1830 = vmatpush1.bf16.msra.mxu0 %v1728
    %1831 = vmatprep.subr.bf16.mxu0 %v1733
    %1832 = vmatpush1.bf16.msra.mxu0 %v1732
    %1833 = vmatprep.subr.bf16.mxu0 %v1737
    %1834 = vmatpush1.bf16.msra.mxu0 %v1736
    %1835 = vmatprep.subr.bf16.mxu0 %v1741
    %1836 = vmatpush1.bf16.msra.mxu0 %v1740
    %1837 = vmatprep.subr.bf16.mxu0 %v1745
    %1838 = vmatpush1.bf16.msra.mxu0 %v1744
    %1839 = vmatprep.subr.bf16.mxu0 %v1749
    %1840 = vmatpush1.bf16.msra.mxu0 %v1748
    %1841 = vmatprep.subr.bf16.mxu0 %v1753
    %1842 = vmatpush1.bf16.msra.mxu0 %v1752
    %1843 = vmatprep.subr.bf16.mxu0 0
    %1844 = vmatpush1.bf16.msra.mxu0 0
    %1845 = vmatprep.subr.bf16.mxu0 0
    %1846 = vmatpush1.bf16.msra.mxu0 0
    %1847 = vmatprep.subr.bf16.mxu0 0
    %1848 = vmatpush1.bf16.msra.mxu0 0
    %1849 = vmatprep.subr.bf16.mxu0 0
    %1850 = vmatpush1.bf16.msra.mxu0 0
    %1851 = vmatprep.subr.bf16.mxu0 0
    %1852 = vmatpush1.bf16.msra.mxu0 0
    %1853 = vmatprep.subr.bf16.mxu0 0
    %1854 = vmatpush1.bf16.msra.mxu0 0
    %1855 = vmatprep.subr.bf16.mxu0 0
    %1856 = vmatpush1.bf16.msra.mxu0 0
    %1857 = vmatprep.subr.bf16.mxu0 0
    %1858 = vmatpush1.bf16.msra.mxu0 0
    %1859 = vmatprep.mubr.bf16.mxu0 0
    %1860 = vmatmul.mubr.bf16.gmra.mrb[0].mxu0 %v1383
    %v1861 = vpop.f32.mrb[0].mxu0
    %v1862 = vadd.f32 %v1620, %v1861
    %v1863 = vpop.f32.mrb[0].mxu0
    %v1864 = vadd.f32 %v1622, %v1863
    %v1865 = vpop.f32.mrb[0].mxu0
    %v1866 = vpop.f32.mrb[0].mxu0
    %1867 = vdwg.mxu0
    %v1868 = vadd.f32 %v1821, %v599
    %v1869 = vadd.f32 %v1823, %v603
    %v1870 = vadd.f32 %v1862, %v607
    %v1871 = vadd.f32 %v1864, %v611
    %v1872 = vmul.f32 %v1868, 0.5
    %v1873 = vmul.f32 %v1869, 0.5
    %v1874 = vmul.f32 %v1870, 0.5
    %v1875 = vtanh.pop %v1872
    %v1876 = vtanh.pop %v1873
    %v1877 = vtanh.pop %v1874
    %v1878 = vmul.f32 %v1875, 0.5
    %v1879 = vmul.f32 %v1876, 0.5
    %v1880 = vmul.f32 %v1877, 0.5
    %v1881 = vadd.f32 %v1878, 0.5
    %v1882 = vadd.f32 %v1879, 0.5
    %v1883 = vadd.f32 %v1880, 0.5
    %v1884 = vtanh.pop %v1871
    %v1885 = vmul.f32 %v1882, 0.0
    %v1886 = vmul.f32 %v1881, %v1884
    %v1887 = vadd.f32 %v1885, %v1886
    %v1888 = vtanh.pop %v1887
    %v1889 = vmul.f32 %v1883, %v1888
    %1890 = vmatprep.subr.bf16.mxu0 %v713
    %1891 = vmatpush1.bf16.msra.mxu0 %v712
    %1892 = vmatprep.subr.bf16.mxu0 %v717
    %1893 = vmatpush1.bf16.msra.mxu0 %v716
    %1894 = vmatprep.subr.bf16.mxu0 %v721
    %1895 = vmatpush1.bf16.msra.mxu0 %v720
    %1896 = vmatprep.subr.bf16.mxu0 %v725
    %1897 = vmatpush1.bf16.msra.mxu0 %v724
    %1898 = vmatprep.subr.bf16.mxu0 %v729
    %1899 = vmatpush1.bf16.msra.mxu0 %v728
    %1900 = vmatprep.subr.bf16.mxu0 %v733
    %1901 = vmatpush1.bf16.msra.mxu0 %v732
    %1902 = vmatprep.subr.bf16.mxu0 %v737
    %1903 = vmatpush1.bf16.msra.mxu0 %v736
    %1904 = vmatprep.subr.bf16.mxu0 %v741
    %1905 = vmatpush1.bf16.msra.mxu0 %v740
    %1906 = vmatprep.subr.bf16.mxu0 0
    %1907 = vmatpush1.bf16.msra.mxu0 0
    %1908 = vmatprep.subr.bf16.mxu0 0
    %1909 = vmatpush1.bf16.msra.mxu0 0
    %1910 = vmatprep.subr.bf16.mxu0 0
    %1911 = vmatpush1.bf16.msra.mxu0 0
    %1912 = vmatprep.subr.bf16.mxu0 0
    %1913 = vmatpush1.bf16.msra.mxu0 0
    %1914 = vmatprep.subr.bf16.mxu0 0
    %1915 = vmatpush1.bf16.msra.mxu0 0
    %1916 = vmatprep.subr.bf16.mxu0 0
    %1917 = vmatpush1.bf16.msra.mxu0 0
    %1918 = vmatprep.subr.bf16.mxu0 0
    %1919 = vmatpush1.bf16.msra.mxu0 0
    %1920 = vmatprep.subr.bf16.mxu0 0
    %1921 = vmatpush1.bf16.msra.mxu0 0
    %1922 = vmatprep.mubr.bf16.mxu0 0
    %1923 = vmatmul.mubr.bf16.gmra.mrb[0].mxu0 %v876
    %v1924 = vpop.f32.mrb[0].mxu0
    %v1925 = vadd.f32 %v305, %v1924
    %v1926 = vpop.f32.mrb[0].mxu0
    %v1927 = vadd.f32 %v307, %v1926
    %v1928 = vpop.f32.mrb[0].mxu0
    %v1929 = vpop.f32.mrb[0].mxu0
    %1930 = vdwg.mxu0
    %1931 = vmatprep.subr.bf16.mxu0 %v715
    %1932 = vmatpush1.bf16.msra.mxu0 %v714
    %1933 = vmatprep.subr.bf16.mxu0 %v719
    %1934 = vmatpush1.bf16.msra.mxu0 %v718
    %1935 = vmatprep.subr.bf16.mxu0 %v723
    %1936 = vmatpush1.bf16.msra.mxu0 %v722
    %1937 = vmatprep.subr.bf16.mxu0 %v727
    %1938 = vmatpush1.bf16.msra.mxu0 %v726
    %1939 = vmatprep.subr.bf16.mxu0 %v731
    %1940 = vmatpush1.bf16.msra.mxu0 %v730
    %1941 = vmatprep.subr.bf16.mxu0 %v735
    %1942 = vmatpush1.bf16.msra.mxu0 %v734
    %1943 = vmatprep.subr.bf16.mxu0 %v739
    %1944 = vmatpush1.bf16.msra.mxu0 %v738
    %1945 = vmatprep.subr.bf16.mxu0 %v743
    %1946 = vmatpush1.bf16.msra.mxu0 %v742
    %1947 = vmatprep.subr.bf16.mxu0 0
    %1948 = vmatpush1.bf16.msra.mxu0 0
    %1949 = vmatprep.subr.bf16.mxu0 0
    %1950 = vmatpush1.bf16.msra.mxu0 0
    %1951 = vmatprep.subr.bf16.mxu0 0
    %1952 = vmatpush1.bf16.msra.mxu0 0
    %1953 = vmatprep.subr.bf16.mxu0 0
    %1954 = vmatpush1.bf16.msra.mxu0 0
    %1955 = vmatprep.subr.bf16.mxu0 0
    %1956 = vmatpush1.bf16.msra.mxu0 0
    %1957 = vmatprep.subr.bf16.mxu0 0
    %1958 = vmatpush1.bf16.msra.mxu0 0
    %1959 = vmatprep.subr.bf16.mxu0 0
    %1960 = vmatpush1.bf16.msra.mxu0 0
    %1961 = vmatprep.subr.bf16.mxu0 0
    %1962 = vmatpush1.bf16.msra.mxu0 0
    %1963 = vmatprep.mubr.bf16.mxu0 0
    %1964 = vmatmul.mubr.bf16.gmra.mrb[0].mxu0 %v876
    %v1965 = vpop.f32.mrb[0].mxu0
    %v1966 = vadd.f32 %v378, %v1965
    %v1967 = vpop.f32.mrb[0].mxu0
    %v1968 = vadd.f32 %v380, %v1967
    %v1969 = vpop.f32.mrb[0].mxu0
    %v1970 = vpop.f32.mrb[0].mxu0
    %1971 = vdwg.mxu0
    %v1972 = vmul.f32 %v1925, 0.5
    %v1973 = vmul.f32 %v1927, 0.5
    %v1974 = vmul.f32 %v1966, 0.5
    %v1975 = vtanh.pop %v1972
    %v1976 = vtanh.pop %v1973
    %v1977 = vtanh.pop %v1974
    %v1978 = vmul.f32 %v1975, 0.5
    %v1979 = vmul.f32 %v1976, 0.5
    %v1980 = vmul.f32 %v1977, 0.5
    %v1981 = vadd.f32 %v1978, 0.5
    %v1982 = vadd.f32 %v1979, 0.5
    %v1983 = vadd.f32 %v1980, 0.5
    %v1984 = vtanh.pop %v1968
    %v1985 = vmul.f32 %v1982, %v873
    %v1986 = vmul.f32 %v1981, %v1984
    %v1987 = vadd.f32 %v1985, %v1986
    %v1988 = vtanh.pop %v1987
    %v1989 = vmul.f32 %v1983, %v1988
    %v1990 = vpack.c.bf16 %v1989, %v1989
    %1991 = vmatprep.subr.bf16.mxu0 %v974
    %1992 = vmatpush1.bf16.msra.mxu0 %v973
    %1993 = vmatprep.subr.bf16.mxu0 %v978
    %1994 = vmatpush1.bf16.msra.mxu0 %v977
    %1995 = vmatprep.subr.bf16.mxu0 %v982
    %1996 = vmatpush1.bf16.msra.mxu0 %v981
    %1997 = vmatprep.subr.bf16.mxu0 %v986
    %1998 = vmatpush1.bf16.msra.mxu0 %v985
    %1999 = vmatprep.subr.bf16.mxu0 %v990
    %2000 = vmatpush1.bf16.msra.mxu0 %v989
    %2001 = vmatprep.subr.bf16.mxu0 %v994
    %2002 = vmatpush1.bf16.msra.mxu0 %v993
    %2003 = vmatprep.subr.bf16.mxu0 %v998
    %2004 = vmatpush1.bf16.msra.mxu0 %v997
    %2005 = vmatprep.subr.bf16.mxu0 %v1002
    %2006 = vmatpush1.bf16.msra.mxu0 %v1001
    %2007 = vmatprep.subr.bf16.mxu0 0
    %2008 = vmatpush1.bf16.msra.mxu0 0
    %2009 = vmatprep.subr.bf16.mxu0 0
    %2010 = vmatpush1.bf16.msra.mxu0 0
    %2011 = vmatprep.subr.bf16.mxu0 0
    %2012 = vmatpush1.bf16.msra.mxu0 0
    %2013 = vmatprep.subr.bf16.mxu0 0
    %2014 = vmatpush1.bf16.msra.mxu0 0
    %2015 = vmatprep.subr.bf16.mxu0 0
    %2016 = vmatpush1.bf16.msra.mxu0 0
    %2017 = vmatprep.subr.bf16.mxu0 0
    %2018 = vmatpush1.bf16.msra.mxu0 0
    %2019 = vmatprep.subr.bf16.mxu0 0
    %2020 = vmatpush1.bf16.msra.mxu0 0
    %2021 = vmatprep.subr.bf16.mxu0 0
    %2022 = vmatpush1.bf16.msra.mxu0 0
    %2023 = vmatprep.mubr.bf16.mxu0 0
    %2024 = vmatmul.mubr.bf16.gmra.mrb[0].mxu0 %v1383
    %v2025 = vpop.f32.mrb[0].mxu0
    %v2026 = vadd.f32 0.0, %v2025
    %v2027 = vpop.f32.mrb[0].mxu0
    %v2028 = vadd.f32 0.0, %v2027
    %v2029 = vpop.f32.mrb[0].mxu0
    %v2030 = vpop.f32.mrb[0].mxu0
    %2031 = vdwg.mxu0
    %2032 = vmatprep.subr.bf16.mxu0 %v976
    %2033 = vmatpush1.bf16.msra.mxu0 %v975
    %2034 = vmatprep.subr.bf16.mxu0 %v980
    %2035 = vmatpush1.bf16.msra.mxu0 %v979
    %2036 = vmatprep.subr.bf16.mxu0 %v984
    %2037 = vmatpush1.bf16.msra.mxu0 %v983
    %2038 = vmatprep.subr.bf16.mxu0 %v988
    %2039 = vmatpush1.bf16.msra.mxu0 %v987
    %2040 = vmatprep.subr.bf16.mxu0 %v992
    %2041 = vmatpush1.bf16.msra.mxu0 %v991
    %2042 = vmatprep.subr.bf16.mxu0 %v996
    %2043 = vmatpush1.bf16.msra.mxu0 %v995
    %2044 = vmatprep.subr.bf16.mxu0 %v1000
    %2045 = vmatpush1.bf16.msra.mxu0 %v999
    %2046 = vmatprep.subr.bf16.mxu0 %v1004
    %2047 = vmatpush1.bf16.msra.mxu0 %v1003
    %2048 = vmatprep.subr.bf16.mxu0 0
    %2049 = vmatpush1.bf16.msra.mxu0 0
    %2050 = vmatprep.subr.bf16.mxu0 0
    %2051 = vmatpush1.bf16.msra.mxu0 0
    %2052 = vmatprep.subr.bf16.mxu0 0
    %2053 = vmatpush1.bf16.msra.mxu0 0
    %2054 = vmatprep.subr.bf16.mxu0 0
    %2055 = vmatpush1.bf16.msra.mxu0 0
    %2056 = vmatprep.subr.bf16.mxu0 0
    %2057 = vmatpush1.bf16.msra.mxu0 0
    %2058 = vmatprep.subr.bf16.mxu0 0
    %2059 = vmatpush1.bf16.msra.mxu0 0
    %2060 = vmatprep.subr.bf16.mxu0 0
    %2061 = vmatpush1.bf16.msra.mxu0 0
    %2062 = vmatprep.subr.bf16.mxu0 0
    %2063 = vmatpush1.bf16.msra.mxu0 0
    %2064 = vmatprep.mubr.bf16.mxu0 0
    %2065 = vmatmul.mubr.bf16.gmra.mrb[0].mxu0 %v1383
    %v2066 = vpop.f32.mrb[0].mxu0
    %v2067 = vadd.f32 0.0, %v2066
    %v2068 = vpop.f32.mrb[0].mxu0
    %v2069 = vadd.f32 0.0, %v2068
    %v2070 = vpop.f32.mrb[0].mxu0
    %v2071 = vpop.f32.mrb[0].mxu0
    %2072 = vdwg.mxu0
    %2073 = vmatprep.subr.bf16.mxu0 %v1216
    %2074 = vmatpush1.bf16.msra.mxu0 %v1215
    %2075 = vmatprep.subr.bf16.mxu0 %v1220
    %2076 = vmatpush1.bf16.msra.mxu0 %v1219
    %2077 = vmatprep.subr.bf16.mxu0 %v1224
    %2078 = vmatpush1.bf16.msra.mxu0 %v1223
    %2079 = vmatprep.subr.bf16.mxu0 %v1228
    %2080 = vmatpush1.bf16.msra.mxu0 %v1227
    %2081 = vmatprep.subr.bf16.mxu0 %v1232
    %2082 = vmatpush1.bf16.msra.mxu0 %v1231
    %2083 = vmatprep.subr.bf16.mxu0 %v1236
    %2084 = vmatpush1.bf16.msra.mxu0 %v1235
    %2085 = vmatprep.subr.bf16.mxu0 %v1240
    %2086 = vmatpush1.bf16.msra.mxu0 %v1239
    %2087 = vmatprep.subr.bf16.mxu0 %v1244
    %2088 = vmatpush1.bf16.msra.mxu0 %v1243
    %2089 = vmatprep.subr.bf16.mxu0 0
    %2090 = vmatpush1.bf16.msra.mxu0 0
    %2091 = vmatprep.subr.bf16.mxu0 0
    %2092 = vmatpush1.bf16.msra.mxu0 0
    %2093 = vmatprep.subr.bf16.mxu0 0
    %2094 = vmatpush1.bf16.msra.mxu0 0
    %2095 = vmatprep.subr.bf16.mxu0 0
    %2096 = vmatpush1.bf16.msra.mxu0 0
    %2097 = vmatprep.subr.bf16.mxu0 0
    %2098 = vmatpush1.bf16.msra.mxu0 0
    %2099 = vmatprep.subr.bf16.mxu0 0
    %2100 = vmatpush1.bf16.msra.mxu0 0
    %2101 = vmatprep.subr.bf16.mxu0 0
    %2102 = vmatpush1.bf16.msra.mxu0 0
    %2103 = vmatprep.subr.bf16.mxu0 0
    %2104 = vmatpush1.bf16.msra.mxu0 0
    %2105 = vmatprep.mubr.bf16.mxu0 0
    %2106 = vmatmul.mubr.bf16.gmra.mrb[0].mxu0 %v1990
    %v2107 = vpop.f32.mrb[0].mxu0
    %v2108 = vadd.f32 %v2026, %v2107
    %v2109 = vpop.f32.mrb[0].mxu0
    %v2110 = vadd.f32 %v2028, %v2109
    %v2111 = vpop.f32.mrb[0].mxu0
    %v2112 = vpop.f32.mrb[0].mxu0
    %2113 = vdwg.mxu0
    %2114 = vmatprep.subr.bf16.mxu0 %v1218
    %2115 = vmatpush1.bf16.msra.mxu0 %v1217
    %2116 = vmatprep.subr.bf16.mxu0 %v1222
    %2117 = vmatpush1.bf16.msra.mxu0 %v1221
    %2118 = vmatprep.subr.bf16.mxu0 %v1226
    %2119 = vmatpush1.bf16.msra.mxu0 %v1225
    %2120 = vmatprep.subr.bf16.mxu0 %v1230
    %2121 = vmatpush1.bf16.msra.mxu0 %v1229
    %2122 = vmatprep.subr.bf16.mxu0 %v1234
    %2123 = vmatpush1.bf16.msra.mxu0 %v1233
    %2124 = vmatprep.subr.bf16.mxu0 %v1238
    %2125 = vmatpush1.bf16.msra.mxu0 %v1237
    %2126 = vmatprep.subr.bf16.mxu0 %v1242
    %2127 = vmatpush1.bf16.msra.mxu0 %v1241
    %2128 = vmatprep.subr.bf16.mxu0 %v1246
    %2129 = vmatpush1.bf16.msra.mxu0 %v1245
    %2130 = vmatprep.subr.bf16.mxu0 0
    %2131 = vmatpush1.bf16.msra.mxu0 0
    %2132 = vmatprep.subr.bf16.mxu0 0
    %2133 = vmatpush1.bf16.msra.mxu0 0
    %2134 = vmatprep.subr.bf16.mxu0 0
    %2135 = vmatpush1.bf16.msra.mxu0 0
    %2136 = vmatprep.subr.bf16.mxu0 0
    %2137 = vmatpush1.bf16.msra.mxu0 0
    %2138 = vmatprep.subr.bf16.mxu0 0
    %2139 = vmatpush1.bf16.msra.mxu0 0
    %2140 = vmatprep.subr.bf16.mxu0 0
    %2141 = vmatpush1.bf16.msra.mxu0 0
    %2142 = vmatprep.subr.bf16.mxu0 0
    %2143 = vmatpush1.bf16.msra.mxu0 0
    %2144 = vmatprep.subr.bf16.mxu0 0
    %2145 = vmatpush1.bf16.msra.mxu0 0
    %2146 = vmatprep.mubr.bf16.mxu0 0
    %2147 = vmatmul.mubr.bf16.gmra.mrb[0].mxu0 %v1990
    %v2148 = vpop.f32.mrb[0].mxu0
    %v2149 = vadd.f32 %v2067, %v2148
    %v2150 = vpop.f32.mrb[0].mxu0
    %v2151 = vadd.f32 %v2069, %v2150
    %v2152 = vpop.f32.mrb[0].mxu0
    %v2153 = vpop.f32.mrb[0].mxu0
    %2154 = vdwg.mxu0
    %v2155 = vadd.f32 %v2108, %v577
    %v2156 = vadd.f32 %v2110, %v581
    %v2157 = vadd.f32 %v2149, %v585
    %v2158 = vadd.f32 %v2151, %v589
    %v2159 = vmul.f32 %v2155, 0.5
    %v2160 = vmul.f32 %v2156, 0.5
    %v2161 = vmul.f32 %v2157, 0.5
    %v2162 = vtanh.pop %v2159
    %v2163 = vtanh.pop %v2160
    %v2164 = vtanh.pop %v2161
    %v2165 = vmul.f32 %v2162, 0.5
    %v2166 = vmul.f32 %v2163, 0.5
    %v2167 = vmul.f32 %v2164, 0.5
    %v2168 = vadd.f32 %v2165, 0.5
    %v2169 = vadd.f32 %v2166, 0.5
    %v2170 = vadd.f32 %v2167, 0.5
    %v2171 = vtanh.pop %v2158
    %v2172 = vmul.f32 %v2169, %v1380
    %v2173 = vmul.f32 %v2168, %v2171
    %v2174 = vadd.f32 %v2172, %v2173
    %v2175 = vtanh.pop %v2174
    %v2176 = vmul.f32 %v2170, %v2175
    %v2177 = vpack.c.bf16 %v2176, %v2176
    %v2178 = vpack.c.bf16 %v1889, %v1889
    %2179 = vmatprep.subr.bf16.mxu0 %v1481
    %2180 = vmatpush1.bf16.msra.mxu0 %v1480
    %2181 = vmatprep.subr.bf16.mxu0 %v1485
    %2182 = vmatpush1.bf16.msra.mxu0 %v1484
    %2183 = vmatprep.subr.bf16.mxu0 %v1489
    %2184 = vmatpush1.bf16.msra.mxu0 %v1488
    %2185 = vmatprep.subr.bf16.mxu0 %v1493
    %2186 = vmatpush1.bf16.msra.mxu0 %v1492
    %2187 = vmatprep.subr.bf16.mxu0 %v1497
    %2188 = vmatpush1.bf16.msra.mxu0 %v1496
    %2189 = vmatprep.subr.bf16.mxu0 %v1501
    %2190 = vmatpush1.bf16.msra.mxu0 %v1500
    %2191 = vmatprep.subr.bf16.mxu0 %v1505
    %2192 = vmatpush1.bf16.msra.mxu0 %v1504
    %2193 = vmatprep.subr.bf16.mxu0 %v1509
    %2194 = vmatpush1.bf16.msra.mxu0 %v1508
    %2195 = vmatprep.subr.bf16.mxu0 0
    %2196 = vmatpush1.bf16.msra.mxu0 0
    %2197 = vmatprep.subr.bf16.mxu0 0
    %2198 = vmatpush1.bf16.msra.mxu0 0
    %2199 = vmatprep.subr.bf16.mxu0 0
    %2200 = vmatpush1.bf16.msra.mxu0 0
    %2201 = vmatprep.subr.bf16.mxu0 0
    %2202 = vmatpush1.bf16.msra.mxu0 0
    %2203 = vmatprep.subr.bf16.mxu0 0
    %2204 = vmatpush1.bf16.msra.mxu0 0
    %2205 = vmatprep.subr.bf16.mxu0 0
    %2206 = vmatpush1.bf16.msra.mxu0 0
    %2207 = vmatprep.subr.bf16.mxu0 0
    %2208 = vmatpush1.bf16.msra.mxu0 0
    %2209 = vmatprep.subr.bf16.mxu0 0
    %2210 = vmatpush1.bf16.msra.mxu0 0
    %2211 = vmatprep.mubr.bf16.mxu0 0
    %2212 = vmatmul.mubr.bf16.gmra.mrb[0].mxu0 %v2178
    %v2213 = vpop.f32.mrb[0].mxu0
    %v2214 = vadd.f32 0.0, %v2213
    %v2215 = vpop.f32.mrb[0].mxu0
    %v2216 = vadd.f32 0.0, %v2215
    %v2217 = vpop.f32.mrb[0].mxu0
    %v2218 = vpop.f32.mrb[0].mxu0
    %2219 = vdwg.mxu0
    %2220 = vmatprep.subr.bf16.mxu0 %v1483
    %2221 = vmatpush1.bf16.msra.mxu0 %v1482
    %2222 = vmatprep.subr.bf16.mxu0 %v1487
    %2223 = vmatpush1.bf16.msra.mxu0 %v1486
    %2224 = vmatprep.subr.bf16.mxu0 %v1491
    %2225 = vmatpush1.bf16.msra.mxu0 %v1490
    %2226 = vmatprep.subr.bf16.mxu0 %v1495
    %2227 = vmatpush1.bf16.msra.mxu0 %v1494
    %2228 = vmatprep.subr.bf16.mxu0 %v1499
    %2229 = vmatpush1.bf16.msra.mxu0 %v1498
    %2230 = vmatprep.subr.bf16.mxu0 %v1503
    %2231 = vmatpush1.bf16.msra.mxu0 %v1502
    %2232 = vmatprep.subr.bf16.mxu0 %v1507
    %2233 = vmatpush1.bf16.msra.mxu0 %v1506
    %2234 = vmatprep.subr.bf16.mxu0 %v1511
    %2235 = vmatpush1.bf16.msra.mxu0 %v1510
    %2236 = vmatprep.subr.bf16.mxu0 0
    %2237 = vmatpush1.bf16.msra.mxu0 0
    %2238 = vmatprep.subr.bf16.mxu0 0
    %2239 = vmatpush1.bf16.msra.mxu0 0
    %2240 = vmatprep.subr.bf16.mxu0 0
    %2241 = vmatpush1.bf16.msra.mxu0 0
    %2242 = vmatprep.subr.bf16.mxu0 0
    %2243 = vmatpush1.bf16.msra.mxu0 0
    %2244 = vmatprep.subr.bf16.mxu0 0
    %2245 = vmatpush1.bf16.msra.mxu0 0
    %2246 = vmatprep.subr.bf16.mxu0 0
    %2247 = vmatpush1.bf16.msra.mxu0 0
    %2248 = vmatprep.subr.bf16.mxu0 0
    %2249 = vmatpush1.bf16.msra.mxu0 0
    %2250 = vmatprep.subr.bf16.mxu0 0
    %2251 = vmatpush1.bf16.msra.mxu0 0
    %2252 = vmatprep.mubr.bf16.mxu0 0
    %2253 = vmatmul.mubr.bf16.gmra.mrb[0].mxu0 %v2178
    %v2254 = vpop.f32.mrb[0].mxu0
    %v2255 = vadd.f32 0.0, %v2254
    %v2256 = vpop.f32.mrb[0].mxu0
    %v2257 = vadd.f32 0.0, %v2256
    %v2258 = vpop.f32.mrb[0].mxu0
    %v2259 = vpop.f32.mrb[0].mxu0
    %2260 = vdwg.mxu0
    %2261 = vmatprep.subr.bf16.mxu0 %v1723
    %2262 = vmatpush1.bf16.msra.mxu0 %v1722
    %2263 = vmatprep.subr.bf16.mxu0 %v1727
    %2264 = vmatpush1.bf16.msra.mxu0 %v1726
    %2265 = vmatprep.subr.bf16.mxu0 %v1731
    %2266 = vmatpush1.bf16.msra.mxu0 %v1730
    %2267 = vmatprep.subr.bf16.mxu0 %v1735
    %2268 = vmatpush1.bf16.msra.mxu0 %v1734
    %2269 = vmatprep.subr.bf16.mxu0 %v1739
    %2270 = vmatpush1.bf16.msra.mxu0 %v1738
    %2271 = vmatprep.subr.bf16.mxu0 %v1743
    %2272 = vmatpush1.bf16.msra.mxu0 %v1742
    %2273 = vmatprep.subr.bf16.mxu0 %v1747
    %2274 = vmatpush1.bf16.msra.mxu0 %v1746
    %2275 = vmatprep.subr.bf16.mxu0 %v1751
    %2276 = vmatpush1.bf16.msra.mxu0 %v1750
    %2277 = vmatprep.subr.bf16.mxu0 0
    %2278 = vmatpush1.bf16.msra.mxu0 0
    %2279 = vmatprep.subr.bf16.mxu0 0
    %2280 = vmatpush1.bf16.msra.mxu0 0
    %2281 = vmatprep.subr.bf16.mxu0 0
    %2282 = vmatpush1.bf16.msra.mxu0 0
    %2283 = vmatprep.subr.bf16.mxu0 0
    %2284 = vmatpush1.bf16.msra.mxu0 0
    %2285 = vmatprep.subr.bf16.mxu0 0
    %2286 = vmatpush1.bf16.msra.mxu0 0
    %2287 = vmatprep.subr.bf16.mxu0 0
    %2288 = vmatpush1.bf16.msra.mxu0 0
    %2289 = vmatprep.subr.bf16.mxu0 0
    %2290 = vmatpush1.bf16.msra.mxu0 0
    %2291 = vmatprep.subr.bf16.mxu0 0
    %2292 = vmatpush1.bf16.msra.mxu0 0
    %2293 = vmatprep.mubr.bf16.mxu0 0
    %2294 = vmatmul.mubr.bf16.gmra.mrb[0].mxu0 %v2177
    %v2295 = vpop.f32.mrb[0].mxu0
    %v2296 = vadd.f32 %v2214, %v2295
    %v2297 = vpop.f32.mrb[0].mxu0
    %v2298 = vadd.f32 %v2216, %v2297
    %v2299 = vpop.f32.mrb[0].mxu0
    %v2300 = vpop.f32.mrb[0].mxu0
    %2301 = vdwg.mxu0
    %2302 = vmatprep.subr.bf16.mxu0 %v1725
    %2303 = vmatpush1.bf16.msra.mxu0 %v1724
    %2304 = vmatprep.subr.bf16.mxu0 %v1729
    %2305 = vmatpush1.bf16.msra.mxu0 %v1728
    %2306 = vmatprep.subr.bf16.mxu0 %v1733
    %2307 = vmatpush1.bf16.msra.mxu0 %v1732
    %2308 = vmatprep.subr.bf16.mxu0 %v1737
    %2309 = vmatpush1.bf16.msra.mxu0 %v1736
    %2310 = vmatprep.subr.bf16.mxu0 %v1741
    %2311 = vmatpush1.bf16.msra.mxu0 %v1740
    %2312 = vmatprep.subr.bf16.mxu0 %v1745
    %2313 = vmatpush1.bf16.msra.mxu0 %v1744
    %2314 = vmatprep.subr.bf16.mxu0 %v1749
    %2315 = vmatpush1.bf16.msra.mxu0 %v1748
    %2316 = vmatprep.subr.bf16.mxu0 %v1753
    %2317 = vmatpush1.bf16.msra.mxu0 %v1752
    %2318 = vmatprep.subr.bf16.mxu0 0
    %2319 = vmatpush1.bf16.msra.mxu0 0
    %2320 = vmatprep.subr.bf16.mxu0 0
    %2321 = vmatpush1.bf16.msra.mxu0 0
    %2322 = vmatprep.subr.bf16.mxu0 0
    %2323 = vmatpush1.bf16.msra.mxu0 0
    %2324 = vmatprep.subr.bf16.mxu0 0
    %2325 = vmatpush1.bf16.msra.mxu0 0
    %2326 = vmatprep.subr.bf16.mxu0 0
    %2327 = vmatpush1.bf16.msra.mxu0 0
    %2328 = vmatprep.subr.bf16.mxu0 0
    %2329 = vmatpush1.bf16.msra.mxu0 0
    %2330 = vmatprep.subr.bf16.mxu0 0
    %2331 = vmatpush1.bf16.msra.mxu0 0
    %2332 = vmatprep.subr.bf16.mxu0 0
    %2333 = vmatpush1.bf16.msra.mxu0 0
    %2334 = vmatprep.mubr.bf16.mxu0 0
    %2335 = vmatmul.mubr.bf16.gmra.mrb[0].mxu0 %v2177
    %v2336 = vpop.f32.mrb[0].mxu0
    %v2337 = vadd.f32 %v2255, %v2336
    %v2338 = vpop.f32.mrb[0].mxu0
    %v2339 = vadd.f32 %v2257, %v2338
    %v2340 = vpop.f32.mrb[0].mxu0
    %v2341 = vpop.f32.mrb[0].mxu0
    %2342 = vdwg.mxu0
    %v2343 = vadd.f32 %v2296, %v599
    %v2344 = vadd.f32 %v2298, %v603
    %v2345 = vadd.f32 %v2337, %v607
    %v2346 = vadd.f32 %v2339, %v611
    %v2347 = vmul.f32 %v2343, 0.5
    %v2348 = vmul.f32 %v2344, 0.5
    %v2349 = vmul.f32 %v2345, 0.5
    %v2350 = vtanh.pop %v2347
    %v2351 = vtanh.pop %v2348
    %v2352 = vtanh.pop %v2349
    %v2353 = vmul.f32 %v2350, 0.5
    %v2354 = vmul.f32 %v2351, 0.5
    %v2355 = vmul.f32 %v2352, 0.5
    %v2356 = vadd.f32 %v2353, 0.5
    %v2357 = vadd.f32 %v2354, 0.5
    %v2358 = vadd.f32 %v2355, 0.5
    %v2359 = vtanh.pop %v2346
    %v2360 = vmul.f32 %v2357, %v1887
    %v2361 = vmul.f32 %v2356, %v2359
    %v2362 = vadd.f32 %v2360, %v2361
    %v2363 = vtanh.pop %v2362
    %v2364 = vmul.f32 %v2358, %v2363
    %2365 = vmatprep.subr.bf16.mxu0 %v713
    %2366 = vmatpush1.bf16.msra.mxu0 %v712
    %2367 = vmatprep.subr.bf16.mxu0 %v717
    %2368 = vmatpush1.bf16.msra.mxu0 %v716
    %2369 = vmatprep.subr.bf16.mxu0 %v721
    %2370 = vmatpush1.bf16.msra.mxu0 %v720
    %2371 = vmatprep.subr.bf16.mxu0 %v725
    %2372 = vmatpush1.bf16.msra.mxu0 %v724
    %2373 = vmatprep.subr.bf16.mxu0 %v729
    %2374 = vmatpush1.bf16.msra.mxu0 %v728
    %2375 = vmatprep.subr.bf16.mxu0 %v733
    %2376 = vmatpush1.bf16.msra.mxu0 %v732
    %2377 = vmatprep.subr.bf16.mxu0 %v737
    %2378 = vmatpush1.bf16.msra.mxu0 %v736
    %2379 = vmatprep.subr.bf16.mxu0 %v741
    %2380 = vmatpush1.bf16.msra.mxu0 %v740
    %2381 = vmatprep.subr.bf16.mxu0 0
    %2382 = vmatpush1.bf16.msra.mxu0 0
    %2383 = vmatprep.subr.bf16.mxu0 0
    %2384 = vmatpush1.bf16.msra.mxu0 0
    %2385 = vmatprep.subr.bf16.mxu0 0
    %2386 = vmatpush1.bf16.msra.mxu0 0
    %2387 = vmatprep.subr.bf16.mxu0 0
    %2388 = vmatpush1.bf16.msra.mxu0 0
    %2389 = vmatprep.subr.bf16.mxu0 0
    %2390 = vmatpush1.bf16.msra.mxu0 0
    %2391 = vmatprep.subr.bf16.mxu0 0
    %2392 = vmatpush1.bf16.msra.mxu0 0
    %2393 = vmatprep.subr.bf16.mxu0 0
    %2394 = vmatpush1.bf16.msra.mxu0 0
    %2395 = vmatprep.subr.bf16.mxu0 0
    %2396 = vmatpush1.bf16.msra.mxu0 0
    %2397 = vmatprep.mubr.bf16.mxu0 0
    %2398 = vmatmul.mubr.bf16.gmra.mrb[0].mxu0 %v1990
    %v2399 = vpop.f32.mrb[0].mxu0
    %v2400 = vadd.f32 %v311, %v2399
    %v2401 = vpop.f32.mrb[0].mxu0
    %v2402 = vadd.f32 %v313, %v2401
    %v2403 = vpop.f32.mrb[0].mxu0
    %v2404 = vpop.f32.mrb[0].mxu0
    %2405 = vdwg.mxu0
    %2406 = vmatprep.subr.bf16.mxu0 %v715
    %2407 = vmatpush1.bf16.msra.mxu0 %v714
    %2408 = vmatprep.subr.bf16.mxu0 %v719
    %2409 = vmatpush1.bf16.msra.mxu0 %v718
    %2410 = vmatprep.subr.bf16.mxu0 %v723
    %2411 = vmatpush1.bf16.msra.mxu0 %v722
    %2412 = vmatprep.subr.bf16.mxu0 %v727
    %2413 = vmatpush1.bf16.msra.mxu0 %v726
    %2414 = vmatprep.subr.bf16.mxu0 %v731
    %2415 = vmatpush1.bf16.msra.mxu0 %v730
    %2416 = vmatprep.subr.bf16.mxu0 %v735
    %2417 = vmatpush1.bf16.msra.mxu0 %v734
    %2418 = vmatprep.subr.bf16.mxu0 %v739
    %2419 = vmatpush1.bf16.msra.mxu0 %v738
    %2420 = vmatprep.subr.bf16.mxu0 %v743
    %2421 = vmatpush1.bf16.msra.mxu0 %v742
    %2422 = vmatprep.subr.bf16.mxu0 0
    %2423 = vmatpush1.bf16.msra.mxu0 0
    %2424 = vmatprep.subr.bf16.mxu0 0
    %2425 = vmatpush1.bf16.msra.mxu0 0
    %2426 = vmatprep.subr.bf16.mxu0 0
    %2427 = vmatpush1.bf16.msra.mxu0 0
    %2428 = vmatprep.subr.bf16.mxu0 0
    %2429 = vmatpush1.bf16.msra.mxu0 0
    %2430 = vmatprep.subr.bf16.mxu0 0
    %2431 = vmatpush1.bf16.msra.mxu0 0
    %2432 = vmatprep.subr.bf16.mxu0 0
    %2433 = vmatpush1.bf16.msra.mxu0 0
    %2434 = vmatprep.subr.bf16.mxu0 0
    %2435 = vmatpush1.bf16.msra.mxu0 0
    %2436 = vmatprep.subr.bf16.mxu0 0
    %2437 = vmatpush1.bf16.msra.mxu0 0
    %2438 = vmatprep.mubr.bf16.mxu0 0
    %2439 = vmatmul.mubr.bf16.gmra.mrb[0].mxu0 %v1990
    %v2440 = vpop.f32.mrb[0].mxu0
    %v2441 = vadd.f32 %v384, %v2440
    %v2442 = vpop.f32.mrb[0].mxu0
    %v2443 = vadd.f32 %v386, %v2442
    %v2444 = vpop.f32.mrb[0].mxu0
    %v2445 = vpop.f32.mrb[0].mxu0
    %2446 = vdwg.mxu0
    %v2447 = vmul.f32 %v2400, 0.5
    %v2448 = vmul.f32 %v2402, 0.5
    %v2449 = vmul.f32 %v2441, 0.5
    %v2450 = vtanh.pop %v2447
    %v2451 = vtanh.pop %v2448
    %v2452 = vtanh.pop %v2449
    %v2453 = vmul.f32 %v2450, 0.5
    %v2454 = vmul.f32 %v2451, 0.5
    %v2455 = vmul.f32 %v2452, 0.5
    %v2456 = vadd.f32 %v2453, 0.5
    %v2457 = vadd.f32 %v2454, 0.5
    %v2458 = vadd.f32 %v2455, 0.5
    %v2459 = vtanh.pop %v2443
    %v2460 = vmul.f32 %v2457, %v1987
    %v2461 = vmul.f32 %v2456, %v2459
    %v2462 = vadd.f32 %v2460, %v2461
    %v2463 = vtanh.pop %v2462
    %v2464 = vmul.f32 %v2458, %v2463
    %v2465 = vpack.c.bf16 %v2464, %v2464
    %2466 = vmatprep.subr.bf16.mxu0 %v974
    %2467 = vmatpush1.bf16.msra.mxu0 %v973
    %2468 = vmatprep.subr.bf16.mxu0 %v978
    %2469 = vmatpush1.bf16.msra.mxu0 %v977
    %2470 = vmatprep.subr.bf16.mxu0 %v982
    %2471 = vmatpush1.bf16.msra.mxu0 %v981
    %2472 = vmatprep.subr.bf16.mxu0 %v986
    %2473 = vmatpush1.bf16.msra.mxu0 %v985
    %2474 = vmatprep.subr.bf16.mxu0 %v990
    %2475 = vmatpush1.bf16.msra.mxu0 %v989
    %2476 = vmatprep.subr.bf16.mxu0 %v994
    %2477 = vmatpush1.bf16.msra.mxu0 %v993
    %2478 = vmatprep.subr.bf16.mxu0 %v998
    %2479 = vmatpush1.bf16.msra.mxu0 %v997
    %2480 = vmatprep.subr.bf16.mxu0 %v1002
    %2481 = vmatpush1.bf16.msra.mxu0 %v1001
    %2482 = vmatprep.subr.bf16.mxu0 0
    %2483 = vmatpush1.bf16.msra.mxu0 0
    %2484 = vmatprep.subr.bf16.mxu0 0
    %2485 = vmatpush1.bf16.msra.mxu0 0
    %2486 = vmatprep.subr.bf16.mxu0 0
    %2487 = vmatpush1.bf16.msra.mxu0 0
    %2488 = vmatprep.subr.bf16.mxu0 0
    %2489 = vmatpush1.bf16.msra.mxu0 0
    %2490 = vmatprep.subr.bf16.mxu0 0
    %2491 = vmatpush1.bf16.msra.mxu0 0
    %2492 = vmatprep.subr.bf16.mxu0 0
    %2493 = vmatpush1.bf16.msra.mxu0 0
    %2494 = vmatprep.subr.bf16.mxu0 0
    %2495 = vmatpush1.bf16.msra.mxu0 0
    %2496 = vmatprep.subr.bf16.mxu0 0
    %2497 = vmatpush1.bf16.msra.mxu0 0
    %2498 = vmatprep.mubr.bf16.mxu0 0
    %2499 = vmatmul.mubr.bf16.gmra.mrb[0].mxu0 %v2177
    %v2500 = vpop.f32.mrb[0].mxu0
    %v2501 = vadd.f32 0.0, %v2500
    %v2502 = vpop.f32.mrb[0].mxu0
    %v2503 = vadd.f32 0.0, %v2502
    %v2504 = vpop.f32.mrb[0].mxu0
    %v2505 = vpop.f32.mrb[0].mxu0
    %2506 = vdwg.mxu0
    %2507 = vmatprep.subr.bf16.mxu0 %v976
    %2508 = vmatpush1.bf16.msra.mxu0 %v975
    %2509 = vmatprep.subr.bf16.mxu0 %v980
    %2510 = vmatpush1.bf16.msra.mxu0 %v979
    %2511 = vmatprep.subr.bf16.mxu0 %v984
    %2512 = vmatpush1.bf16.msra.mxu0 %v983
    %2513 = vmatprep.subr.bf16.mxu0 %v988
    %2514 = vmatpush1.bf16.msra.mxu0 %v987
    %2515 = vmatprep.subr.bf16.mxu0 %v992
    %2516 = vmatpush1.bf16.msra.mxu0 %v991
    %2517 = vmatprep.subr.bf16.mxu0 %v996
    %2518 = vmatpush1.bf16.msra.mxu0 %v995
    %2519 = vmatprep.subr.bf16.mxu0 %v1000
    %2520 = vmatpush1.bf16.msra.mxu0 %v999
    %2521 = vmatprep.subr.bf16.mxu0 %v1004
    %2522 = vmatpush1.bf16.msra.mxu0 %v1003
    %2523 = vmatprep.subr.bf16.mxu0 0
    %2524 = vmatpush1.bf16.msra.mxu0 0
    %2525 = vmatprep.subr.bf16.mxu0 0
    %2526 = vmatpush1.bf16.msra.mxu0 0
    %2527 = vmatprep.subr.bf16.mxu0 0
    %2528 = vmatpush1.bf16.msra.mxu0 0
    %2529 = vmatprep.subr.bf16.mxu0 0
    %2530 = vmatpush1.bf16.msra.mxu0 0
    %2531 = vmatprep.subr.bf16.mxu0 0
    %2532 = vmatpush1.bf16.msra.mxu0 0
    %2533 = vmatprep.subr.bf16.mxu0 0
    %2534 = vmatpush1.bf16.msra.mxu0 0
    %2535 = vmatprep.subr.bf16.mxu0 0
    %2536 = vmatpush1.bf16.msra.mxu0 0
    %2537 = vmatprep.subr.bf16.mxu0 0
    %2538 = vmatpush1.bf16.msra.mxu0 0
    %2539 = vmatprep.mubr.bf16.mxu0 0
    %2540 = vmatmul.mubr.bf16.gmra.mrb[0].mxu0 %v2177
    %v2541 = vpop.f32.mrb[0].mxu0
    %v2542 = vadd.f32 0.0, %v2541
    %v2543 = vpop.f32.mrb[0].mxu0
    %v2544 = vadd.f32 0.0, %v2543
    %v2545 = vpop.f32.mrb[0].mxu0
    %v2546 = vpop.f32.mrb[0].mxu0
    %2547 = vdwg.mxu0
    %2548 = vmatprep.subr.bf16.mxu0 %v1216
    %2549 = vmatpush1.bf16.msra.mxu0 %v1215
    %2550 = vmatprep.subr.bf16.mxu0 %v1220
    %2551 = vmatpush1.bf16.msra.mxu0 %v1219
    %2552 = vmatprep.subr.bf16.mxu0 %v1224
    %2553 = vmatpush1.bf16.msra.mxu0 %v1223
    %2554 = vmatprep.subr.bf16.mxu0 %v1228
    %2555 = vmatpush1.bf16.msra.mxu0 %v1227
    %2556 = vmatprep.subr.bf16.mxu0 %v1232
    %2557 = vmatpush1.bf16.msra.mxu0 %v1231
    %2558 = vmatprep.subr.bf16.mxu0 %v1236
    %2559 = vmatpush1.bf16.msra.mxu0 %v1235
    %2560 = vmatprep.subr.bf16.mxu0 %v1240
    %2561 = vmatpush1.bf16.msra.mxu0 %v1239
    %2562 = vmatprep.subr.bf16.mxu0 %v1244
    %2563 = vmatpush1.bf16.msra.mxu0 %v1243
    %2564 = vmatprep.subr.bf16.mxu0 0
    %2565 = vmatpush1.bf16.msra.mxu0 0
    %2566 = vmatprep.subr.bf16.mxu0 0
    %2567 = vmatpush1.bf16.msra.mxu0 0
    %2568 = vmatprep.subr.bf16.mxu0 0
    %2569 = vmatpush1.bf16.msra.mxu0 0
    %2570 = vmatprep.subr.bf16.mxu0 0
    %2571 = vmatpush1.bf16.msra.mxu0 0
    %2572 = vmatprep.subr.bf16.mxu0 0
    %2573 = vmatpush1.bf16.msra.mxu0 0
    %2574 = vmatprep.subr.bf16.mxu0 0
    %2575 = vmatpush1.bf16.msra.mxu0 0
    %2576 = vmatprep.subr.bf16.mxu0 0
    %2577 = vmatpush1.bf16.msra.mxu0 0
    %2578 = vmatprep.subr.bf16.mxu0 0
    %2579 = vmatpush1.bf16.msra.mxu0 0
    %2580 = vmatprep.mubr.bf16.mxu0 0
    %2581 = vmatmul.mubr.bf16.gmra.mrb[0].mxu0 %v2465
    %v2582 = vpop.f32.mrb[0].mxu0
    %v2583 = vadd.f32 %v2501, %v2582
    %v2584 = vpop.f32.mrb[0].mxu0
    %v2585 = vadd.f32 %v2503, %v2584
    %v2586 = vpop.f32.mrb[0].mxu0
    %v2587 = vpop.f32.mrb[0].mxu0
    %2588 = vdwg.mxu0
    %2589 = vmatprep.subr.bf16.mxu0 %v1218
    %2590 = vmatpush1.bf16.msra.mxu0 %v1217
    %2591 = vmatprep.subr.bf16.mxu0 %v1222
    %2592 = vmatpush1.bf16.msra.mxu0 %v1221
    %2593 = vmatprep.subr.bf16.mxu0 %v1226
    %2594 = vmatpush1.bf16.msra.mxu0 %v1225
    %2595 = vmatprep.subr.bf16.mxu0 %v1230
    %2596 = vmatpush1.bf16.msra.mxu0 %v1229
    %2597 = vmatprep.subr.bf16.mxu0 %v1234
    %2598 = vmatpush1.bf16.msra.mxu0 %v1233
    %2599 = vmatprep.subr.bf16.mxu0 %v1238
    %2600 = vmatpush1.bf16.msra.mxu0 %v1237
    %2601 = vmatprep.subr.bf16.mxu0 %v1242
    %2602 = vmatpush1.bf16.msra.mxu0 %v1241
    %2603 = vmatprep.subr.bf16.mxu0 %v1246
    %2604 = vmatpush1.bf16.msra.mxu0 %v1245
    %2605 = vmatprep.subr.bf16.mxu0 0
    %2606 = vmatpush1.bf16.msra.mxu0 0
    %2607 = vmatprep.subr.bf16.mxu0 0
    %2608 = vmatpush1.bf16.msra.mxu0 0
    %2609 = vmatprep.subr.bf16.mxu0 0
    %2610 = vmatpush1.bf16.msra.mxu0 0
    %2611 = vmatprep.subr.bf16.mxu0 0
    %2612 = vmatpush1.bf16.msra.mxu0 0
    %2613 = vmatprep.subr.bf16.mxu0 0
    %2614 = vmatpush1.bf16.msra.mxu0 0
    %2615 = vmatprep.subr.bf16.mxu0 0
    %2616 = vmatpush1.bf16.msra.mxu0 0
    %2617 = vmatprep.subr.bf16.mxu0 0
    %2618 = vmatpush1.bf16.msra.mxu0 0
    %2619 = vmatprep.subr.bf16.mxu0 0
    %2620 = vmatpush1.bf16.msra.mxu0 0
    %2621 = vmatprep.mubr.bf16.mxu0 0
    %2622 = vmatmul.mubr.bf16.gmra.mrb[0].mxu0 %v2465
    %v2623 = vpop.f32.mrb[0].mxu0
    %v2624 = vadd.f32 %v2542, %v2623
    %v2625 = vpop.f32.mrb[0].mxu0
    %v2626 = vadd.f32 %v2544, %v2625
    %v2627 = vpop.f32.mrb[0].mxu0
    %v2628 = vpop.f32.mrb[0].mxu0
    %2629 = vdwg.mxu0
    %v2630 = vadd.f32 %v2583, %v577
    %v2631 = vadd.f32 %v2585, %v581
    %v2632 = vadd.f32 %v2624, %v585
    %v2633 = vadd.f32 %v2626, %v589
    %v2634 = vmul.f32 %v2630, 0.5
    %v2635 = vmul.f32 %v2631, 0.5
    %v2636 = vmul.f32 %v2632, 0.5
    %v2637 = vtanh.pop %v2634
    %v2638 = vtanh.pop %v2635
    %v2639 = vtanh.pop %v2636
    %v2640 = vmul.f32 %v2637, 0.5
    %v2641 = vmul.f32 %v2638, 0.5
    %v2642 = vmul.f32 %v2639, 0.5
    %v2643 = vadd.f32 %v2640, 0.5
    %v2644 = vadd.f32 %v2641, 0.5
    %v2645 = vadd.f32 %v2642, 0.5
    %v2646 = vtanh.pop %v2633
    %v2647 = vmul.f32 %v2644, %v2174
    %v2648 = vmul.f32 %v2643, %v2646
    %v2649 = vadd.f32 %v2647, %v2648
    %v2650 = vtanh.pop %v2649
    %v2651 = vmul.f32 %v2645, %v2650
    %v2652 = vpack.c.bf16 %v2651, %v2651
    %v2653 = vpack.c.bf16 %v2364, %v2364
    %2654 = vmatprep.subr.bf16.mxu0 %v1481
    %2655 = vmatpush1.bf16.msra.mxu0 %v1480
    %2656 = vmatprep.subr.bf16.mxu0 %v1485
    %2657 = vmatpush1.bf16.msra.mxu0 %v1484
    %2658 = vmatprep.subr.bf16.mxu0 %v1489
    %2659 = vmatpush1.bf16.msra.mxu0 %v1488
    %2660 = vmatprep.subr.bf16.mxu0 %v1493
    %2661 = vmatpush1.bf16.msra.mxu0 %v1492
    %2662 = vmatprep.subr.bf16.mxu0 %v1497
    %2663 = vmatpush1.bf16.msra.mxu0 %v1496
    %2664 = vmatprep.subr.bf16.mxu0 %v1501
    %2665 = vmatpush1.bf16.msra.mxu0 %v1500
    %2666 = vmatprep.subr.bf16.mxu0 %v1505
    %2667 = vmatpush1.bf16.msra.mxu0 %v1504
    %2668 = vmatprep.subr.bf16.mxu0 %v1509
    %2669 = vmatpush1.bf16.msra.mxu0 %v1508
    %2670 = vmatprep.subr.bf16.mxu0 0
    %2671 = vmatpush1.bf16.msra.mxu0 0
    %2672 = vmatprep.subr.bf16.mxu0 0
    %2673 = vmatpush1.bf16.msra.mxu0 0
    %2674 = vmatprep.subr.bf16.mxu0 0
    %2675 = vmatpush1.bf16.msra.mxu0 0
    %2676 = vmatprep.subr.bf16.mxu0 0
    %2677 = vmatpush1.bf16.msra.mxu0 0
    %2678 = vmatprep.subr.bf16.mxu0 0
    %2679 = vmatpush1.bf16.msra.mxu0 0
    %2680 = vmatprep.subr.bf16.mxu0 0
    %2681 = vmatpush1.bf16.msra.mxu0 0
    %2682 = vmatprep.subr.bf16.mxu0 0
    %2683 = vmatpush1.bf16.msra.mxu0 0
    %2684 = vmatprep.subr.bf16.mxu0 0
    %2685 = vmatpush1.bf16.msra.mxu0 0
    %2686 = vmatprep.mubr.bf16.mxu0 0
    %2687 = vmatmul.mubr.bf16.gmra.mrb[0].mxu0 %v2653
    %v2688 = vpop.f32.mrb[0].mxu0
    %v2689 = vadd.f32 0.0, %v2688
    %v2690 = vpop.f32.mrb[0].mxu0
    %v2691 = vadd.f32 0.0, %v2690
    %v2692 = vpop.f32.mrb[0].mxu0
    %v2693 = vpop.f32.mrb[0].mxu0
    %2694 = vdwg.mxu0
    %2695 = vmatprep.subr.bf16.mxu0 %v1483
    %2696 = vmatpush1.bf16.msra.mxu0 %v1482
    %2697 = vmatprep.subr.bf16.mxu0 %v1487
    %2698 = vmatpush1.bf16.msra.mxu0 %v1486
    %2699 = vmatprep.subr.bf16.mxu0 %v1491
    %2700 = vmatpush1.bf16.msra.mxu0 %v1490
    %2701 = vmatprep.subr.bf16.mxu0 %v1495
    %2702 = vmatpush1.bf16.msra.mxu0 %v1494
    %2703 = vmatprep.subr.bf16.mxu0 %v1499
    %2704 = vmatpush1.bf16.msra.mxu0 %v1498
    %2705 = vmatprep.subr.bf16.mxu0 %v1503
    %2706 = vmatpush1.bf16.msra.mxu0 %v1502
    %2707 = vmatprep.subr.bf16.mxu0 %v1507
    %2708 = vmatpush1.bf16.msra.mxu0 %v1506
    %2709 = vmatprep.subr.bf16.mxu0 %v1511
    %2710 = vmatpush1.bf16.msra.mxu0 %v1510
    %2711 = vmatprep.subr.bf16.mxu0 0
    %2712 = vmatpush1.bf16.msra.mxu0 0
    %2713 = vmatprep.subr.bf16.mxu0 0
    %2714 = vmatpush1.bf16.msra.mxu0 0
    %2715 = vmatprep.subr.bf16.mxu0 0
    %2716 = vmatpush1.bf16.msra.mxu0 0
    %2717 = vmatprep.subr.bf16.mxu0 0
    %2718 = vmatpush1.bf16.msra.mxu0 0
    %2719 = vmatprep.subr.bf16.mxu0 0
    %2720 = vmatpush1.bf16.msra.mxu0 0
    %2721 = vmatprep.subr.bf16.mxu0 0
    %2722 = vmatpush1.bf16.msra.mxu0 0
    %2723 = vmatprep.subr.bf16.mxu0 0
    %2724 = vmatpush1.bf16.msra.mxu0 0
    %2725 = vmatprep.subr.bf16.mxu0 0
    %2726 = vmatpush1.bf16.msra.mxu0 0
    %2727 = vmatprep.mubr.bf16.mxu0 0
    %2728 = vmatmul.mubr.bf16.gmra.mrb[0].mxu0 %v2653
    %v2729 = vpop.f32.mrb[0].mxu0
    %v2730 = vadd.f32 0.0, %v2729
    %v2731 = vpop.f32.mrb[0].mxu0
    %v2732 = vadd.f32 0.0, %v2731
    %v2733 = vpop.f32.mrb[0].mxu0
    %v2734 = vpop.f32.mrb[0].mxu0
    %2735 = vdwg.mxu0
    %2736 = vmatprep.subr.bf16.mxu0 %v1723
    %2737 = vmatpush1.bf16.msra.mxu0 %v1722
    %2738 = vmatprep.subr.bf16.mxu0 %v1727
    %2739 = vmatpush1.bf16.msra.mxu0 %v1726
    %2740 = vmatprep.subr.bf16.mxu0 %v1731
    %2741 = vmatpush1.bf16.msra.mxu0 %v1730
    %2742 = vmatprep.subr.bf16.mxu0 %v1735
    %2743 = vmatpush1.bf16.msra.mxu0 %v1734
    %2744 = vmatprep.subr.bf16.mxu0 %v1739
    %2745 = vmatpush1.bf16.msra.mxu0 %v1738
    %2746 = vmatprep.subr.bf16.mxu0 %v1743
    %2747 = vmatpush1.bf16.msra.mxu0 %v1742
    %2748 = vmatprep.subr.bf16.mxu0 %v1747
    %2749 = vmatpush1.bf16.msra.mxu0 %v1746
    %2750 = vmatprep.subr.bf16.mxu0 %v1751
    %2751 = vmatpush1.bf16.msra.mxu0 %v1750
    %2752 = vmatprep.subr.bf16.mxu0 0
    %2753 = vmatpush1.bf16.msra.mxu0 0
    %2754 = vmatprep.subr.bf16.mxu0 0
    %2755 = vmatpush1.bf16.msra.mxu0 0
    %2756 = vmatprep.subr.bf16.mxu0 0
    %2757 = vmatpush1.bf16.msra.mxu0 0
    %2758 = vmatprep.subr.bf16.mxu0 0
    %2759 = vmatpush1.bf16.msra.mxu0 0
    %2760 = vmatprep.subr.bf16.mxu0 0
    %2761 = vmatpush1.bf16.msra.mxu0 0
    %2762 = vmatprep.subr.bf16.mxu0 0
    %2763 = vmatpush1.bf16.msra.mxu0 0
    %2764 = vmatprep.subr.bf16.mxu0 0
    %2765 = vmatpush1.bf16.msra.mxu0 0
    %2766 = vmatprep.subr.bf16.mxu0 0
    %2767 = vmatpush1.bf16.msra.mxu0 0
    %2768 = vmatprep.mubr.bf16.mxu0 0
    %2769 = vmatmul.mubr.bf16.gmra.mrb[0].mxu0 %v2652
    %v2770 = vpop.f32.mrb[0].mxu0
    %v2771 = vadd.f32 %v2689, %v2770
    %v2772 = vpop.f32.mrb[0].mxu0
    %v2773 = vadd.f32 %v2691, %v2772
    %v2774 = vpop.f32.mrb[0].mxu0
    %v2775 = vpop.f32.mrb[0].mxu0
    %2776 = vdwg.mxu0
    %2777 = vmatprep.subr.bf16.mxu0 %v1725
    %2778 = vmatpush1.bf16.msra.mxu0 %v1724
    %2779 = vmatprep.subr.bf16.mxu0 %v1729
    %2780 = vmatpush1.bf16.msra.mxu0 %v1728
    %2781 = vmatprep.subr.bf16.mxu0 %v1733
    %2782 = vmatpush1.bf16.msra.mxu0 %v1732
    %2783 = vmatprep.subr.bf16.mxu0 %v1737
    %2784 = vmatpush1.bf16.msra.mxu0 %v1736
    %2785 = vmatprep.subr.bf16.mxu0 %v1741
    %2786 = vmatpush1.bf16.msra.mxu0 %v1740
    %2787 = vmatprep.subr.bf16.mxu0 %v1745
    %2788 = vmatpush1.bf16.msra.mxu0 %v1744
    %2789 = vmatprep.subr.bf16.mxu0 %v1749
    %2790 = vmatpush1.bf16.msra.mxu0 %v1748
    %2791 = vmatprep.subr.bf16.mxu0 %v1753
    %2792 = vmatpush1.bf16.msra.mxu0 %v1752
    %2793 = vmatprep.subr.bf16.mxu0 0
    %2794 = vmatpush1.bf16.msra.mxu0 0
    %2795 = vmatprep.subr.bf16.mxu0 0
    %2796 = vmatpush1.bf16.msra.mxu0 0
    %2797 = vmatprep.subr.bf16.mxu0 0
    %2798 = vmatpush1.bf16.msra.mxu0 0
    %2799 = vmatprep.subr.bf16.mxu0 0
    %2800 = vmatpush1.bf16.msra.mxu0 0
    %2801 = vmatprep.subr.bf16.mxu0 0
    %2802 = vmatpush1.bf16.msra.mxu0 0
    %2803 = vmatprep.subr.bf16.mxu0 0
    %2804 = vmatpush1.bf16.msra.mxu0 0
    %2805 = vmatprep.subr.bf16.mxu0 0
    %2806 = vmatpush1.bf16.msra.mxu0 0
    %2807 = vmatprep.subr.bf16.mxu0 0
    %2808 = vmatpush1.bf16.msra.mxu0 0
    %2809 = vmatprep.mubr.bf16.mxu0 0
    %2810 = vmatmul.mubr.bf16.gmra.mrb[0].mxu0 %v2652
    %v2811 = vpop.f32.mrb[0].mxu0
    %v2812 = vadd.f32 %v2730, %v2811
    %v2813 = vpop.f32.mrb[0].mxu0
    %v2814 = vadd.f32 %v2732, %v2813
    %v2815 = vpop.f32.mrb[0].mxu0
    %v2816 = vpop.f32.mrb[0].mxu0
    %2817 = vdwg.mxu0
    %v2818 = vadd.f32 %v2771, %v599
    %v2819 = vadd.f32 %v2773, %v603
    %v2820 = vadd.f32 %v2812, %v607
    %v2821 = vadd.f32 %v2814, %v611
    %v2822 = vmul.f32 %v2818, 0.5
    %v2823 = vmul.f32 %v2819, 0.5
    %v2824 = vmul.f32 %v2820, 0.5
    %v2825 = vtanh.pop %v2822
    %v2826 = vtanh.pop %v2823
    %v2827 = vtanh.pop %v2824
    %v2828 = vmul.f32 %v2825, 0.5
    %v2829 = vmul.f32 %v2826, 0.5
    %v2830 = vmul.f32 %v2827, 0.5
    %v2831 = vadd.f32 %v2828, 0.5
    %v2832 = vadd.f32 %v2829, 0.5
    %v2833 = vadd.f32 %v2830, 0.5
    %v2834 = vtanh.pop %v2821
    %v2835 = vmul.f32 %v2832, %v2362
    %v2836 = vmul.f32 %v2831, %v2834
    %v2837 = vadd.f32 %v2835, %v2836
    %v2838 = vtanh.pop %v2837
    %v2839 = vmul.f32 %v2833, %v2838
    %2840 = vmatprep.subr.bf16.mxu0 %v713
    %2841 = vmatpush1.bf16.msra.mxu0 %v712
    %2842 = vmatprep.subr.bf16.mxu0 %v717
    %2843 = vmatpush1.bf16.msra.mxu0 %v716
    %2844 = vmatprep.subr.bf16.mxu0 %v721
    %2845 = vmatpush1.bf16.msra.mxu0 %v720
    %2846 = vmatprep.subr.bf16.mxu0 %v725
    %2847 = vmatpush1.bf16.msra.mxu0 %v724
    %2848 = vmatprep.subr.bf16.mxu0 %v729
    %2849 = vmatpush1.bf16.msra.mxu0 %v728
    %2850 = vmatprep.subr.bf16.mxu0 %v733
    %2851 = vmatpush1.bf16.msra.mxu0 %v732
    %2852 = vmatprep.subr.bf16.mxu0 %v737
    %2853 = vmatpush1.bf16.msra.mxu0 %v736
    %2854 = vmatprep.subr.bf16.mxu0 %v741
    %2855 = vmatpush1.bf16.msra.mxu0 %v740
    %2856 = vmatprep.subr.bf16.mxu0 0
    %2857 = vmatpush1.bf16.msra.mxu0 0
    %2858 = vmatprep.subr.bf16.mxu0 0
    %2859 = vmatpush1.bf16.msra.mxu0 0
    %2860 = vmatprep.subr.bf16.mxu0 0
    %2861 = vmatpush1.bf16.msra.mxu0 0
    %2862 = vmatprep.subr.bf16.mxu0 0
    %2863 = vmatpush1.bf16.msra.mxu0 0
    %2864 = vmatprep.subr.bf16.mxu0 0
    %2865 = vmatpush1.bf16.msra.mxu0 0
    %2866 = vmatprep.subr.bf16.mxu0 0
    %2867 = vmatpush1.bf16.msra.mxu0 0
    %2868 = vmatprep.subr.bf16.mxu0 0
    %2869 = vmatpush1.bf16.msra.mxu0 0
    %2870 = vmatprep.subr.bf16.mxu0 0
    %2871 = vmatpush1.bf16.msra.mxu0 0
    %2872 = vmatprep.mubr.bf16.mxu0 0
    %2873 = vmatmul.mubr.bf16.gmra.mrb[0].mxu0 %v2465
    %v2874 = vpop.f32.mrb[0].mxu0
    %v2875 = vadd.f32 %v315, %v2874
    %v2876 = vpop.f32.mrb[0].mxu0
    %v2877 = vadd.f32 %v317, %v2876
    %v2878 = vpop.f32.mrb[0].mxu0
    %v2879 = vpop.f32.mrb[0].mxu0
    %2880 = vdwg.mxu0
    %2881 = vmatprep.subr.bf16.mxu0 %v715
    %2882 = vmatpush1.bf16.msra.mxu0 %v714
    %2883 = vmatprep.subr.bf16.mxu0 %v719
    %2884 = vmatpush1.bf16.msra.mxu0 %v718
    %2885 = vmatprep.subr.bf16.mxu0 %v723
    %2886 = vmatpush1.bf16.msra.mxu0 %v722
    %2887 = vmatprep.subr.bf16.mxu0 %v727
    %2888 = vmatpush1.bf16.msra.mxu0 %v726
    %2889 = vmatprep.subr.bf16.mxu0 %v731
    %2890 = vmatpush1.bf16.msra.mxu0 %v730
    %2891 = vmatprep.subr.bf16.mxu0 %v735
    %2892 = vmatpush1.bf16.msra.mxu0 %v734
    %2893 = vmatprep.subr.bf16.mxu0 %v739
    %2894 = vmatpush1.bf16.msra.mxu0 %v738
    %2895 = vmatprep.subr.bf16.mxu0 %v743
    %2896 = vmatpush1.bf16.msra.mxu0 %v742
    %2897 = vmatprep.subr.bf16.mxu0 0
    %2898 = vmatpush1.bf16.msra.mxu0 0
    %2899 = vmatprep.subr.bf16.mxu0 0
    %2900 = vmatpush1.bf16.msra.mxu0 0
    %2901 = vmatprep.subr.bf16.mxu0 0
    %2902 = vmatpush1.bf16.msra.mxu0 0
    %2903 = vmatprep.subr.bf16.mxu0 0
    %2904 = vmatpush1.bf16.msra.mxu0 0
    %2905 = vmatprep.subr.bf16.mxu0 0
    %2906 = vmatpush1.bf16.msra.mxu0 0
    %2907 = vmatprep.subr.bf16.mxu0 0
    %2908 = vmatpush1.bf16.msra.mxu0 0
    %2909 = vmatprep.subr.bf16.mxu0 0
    %2910 = vmatpush1.bf16.msra.mxu0 0
    %2911 = vmatprep.subr.bf16.mxu0 0
    %2912 = vmatpush1.bf16.msra.mxu0 0
    %2913 = vmatprep.mubr.bf16.mxu0 0
    %2914 = vmatmul.mubr.bf16.gmra.mrb[0].mxu0 %v2465
    %v2915 = vpop.f32.mrb[0].mxu0
    %v2916 = vadd.f32 %v388, %v2915
    %v2917 = vpop.f32.mrb[0].mxu0
    %v2918 = vadd.f32 %v390, %v2917
    %v2919 = vpop.f32.mrb[0].mxu0
    %v2920 = vpop.f32.mrb[0].mxu0
    %2921 = vdwg.mxu0
    %v2922 = vmul.f32 %v2875, 0.5
    %v2923 = vmul.f32 %v2877, 0.5
    %v2924 = vmul.f32 %v2916, 0.5
    %v2925 = vtanh.pop %v2922
    %v2926 = vtanh.pop %v2923
    %v2927 = vtanh.pop %v2924
    %v2928 = vmul.f32 %v2925, 0.5
    %v2929 = vmul.f32 %v2926, 0.5
    %v2930 = vmul.f32 %v2927, 0.5
    %v2931 = vadd.f32 %v2928, 0.5
    %v2932 = vadd.f32 %v2929, 0.5
    %v2933 = vadd.f32 %v2930, 0.5
    %v2934 = vtanh.pop %v2918
    %v2935 = vmul.f32 %v2932, %v2462
    %v2936 = vmul.f32 %v2931, %v2934
    %v2937 = vadd.f32 %v2935, %v2936
    %v2938 = vtanh.pop %v2937
    %v2939 = vmul.f32 %v2933, %v2938
    %v2940 = vpack.c.bf16 %v2939, %v2939
    %2941 = vmatprep.subr.bf16.mxu0 %v974
    %2942 = vmatpush1.bf16.msra.mxu0 %v973
    %2943 = vmatprep.subr.bf16.mxu0 %v978
    %2944 = vmatpush1.bf16.msra.mxu0 %v977
    %2945 = vmatprep.subr.bf16.mxu0 %v982
    %2946 = vmatpush1.bf16.msra.mxu0 %v981
    %2947 = vmatprep.subr.bf16.mxu0 %v986
    %2948 = vmatpush1.bf16.msra.mxu0 %v985
    %2949 = vmatprep.subr.bf16.mxu0 %v990
    %2950 = vmatpush1.bf16.msra.mxu0 %v989
    %2951 = vmatprep.subr.bf16.mxu0 %v994
    %2952 = vmatpush1.bf16.msra.mxu0 %v993
    %2953 = vmatprep.subr.bf16.mxu0 %v998
    %2954 = vmatpush1.bf16.msra.mxu0 %v997
    %2955 = vmatprep.subr.bf16.mxu0 %v1002
    %2956 = vmatpush1.bf16.msra.mxu0 %v1001
    %2957 = vmatprep.subr.bf16.mxu0 0
    %2958 = vmatpush1.bf16.msra.mxu0 0
    %2959 = vmatprep.subr.bf16.mxu0 0
    %2960 = vmatpush1.bf16.msra.mxu0 0
    %2961 = vmatprep.subr.bf16.mxu0 0
    %2962 = vmatpush1.bf16.msra.mxu0 0
    %2963 = vmatprep.subr.bf16.mxu0 0
    %2964 = vmatpush1.bf16.msra.mxu0 0
    %2965 = vmatprep.subr.bf16.mxu0 0
    %2966 = vmatpush1.bf16.msra.mxu0 0
    %2967 = vmatprep.subr.bf16.mxu0 0
    %2968 = vmatpush1.bf16.msra.mxu0 0
    %2969 = vmatprep.subr.bf16.mxu0 0
    %2970 = vmatpush1.bf16.msra.mxu0 0
    %2971 = vmatprep.subr.bf16.mxu0 0
    %2972 = vmatpush1.bf16.msra.mxu0 0
    %2973 = vmatprep.mubr.bf16.mxu0 0
    %2974 = vmatmul.mubr.bf16.gmra.mrb[0].mxu0 %v2652
    %v2975 = vpop.f32.mrb[0].mxu0
    %v2976 = vadd.f32 0.0, %v2975
    %v2977 = vpop.f32.mrb[0].mxu0
    %v2978 = vadd.f32 0.0, %v2977
    %v2979 = vpop.f32.mrb[0].mxu0
    %v2980 = vpop.f32.mrb[0].mxu0
    %2981 = vdwg.mxu0
    %2982 = vmatprep.subr.bf16.mxu0 %v976
    %2983 = vmatpush1.bf16.msra.mxu0 %v975
    %2984 = vmatprep.subr.bf16.mxu0 %v980
    %2985 = vmatpush1.bf16.msra.mxu0 %v979
    %2986 = vmatprep.subr.bf16.mxu0 %v984
    %2987 = vmatpush1.bf16.msra.mxu0 %v983
    %2988 = vmatprep.subr.bf16.mxu0 %v988
    %2989 = vmatpush1.bf16.msra.mxu0 %v987
    %2990 = vmatprep.subr.bf16.mxu0 %v992
    %2991 = vmatpush1.bf16.msra.mxu0 %v991
    %2992 = vmatprep.subr.bf16.mxu0 %v996
    %2993 = vmatpush1.bf16.msra.mxu0 %v995
    %2994 = vmatprep.subr.bf16.mxu0 %v1000
    %2995 = vmatpush1.bf16.msra.mxu0 %v999
    %2996 = vmatprep.subr.bf16.mxu0 %v1004
    %2997 = vmatpush1.bf16.msra.mxu0 %v1003
    %2998 = vmatprep.subr.bf16.mxu0 0
    %2999 = vmatpush1.bf16.msra.mxu0 0
    %3000 = vmatprep.subr.bf16.mxu0 0
    %3001 = vmatpush1.bf16.msra.mxu0 0
    %3002 = vmatprep.subr.bf16.mxu0 0
    %3003 = vmatpush1.bf16.msra.mxu0 0
    %3004 = vmatprep.subr.bf16.mxu0 0
    %3005 = vmatpush1.bf16.msra.mxu0 0
    %3006 = vmatprep.subr.bf16.mxu0 0
    %3007 = vmatpush1.bf16.msra.mxu0 0
    %3008 = vmatprep.subr.bf16.mxu0 0
    %3009 = vmatpush1.bf16.msra.mxu0 0
    %3010 = vmatprep.subr.bf16.mxu0 0
    %3011 = vmatpush1.bf16.msra.mxu0 0
    %3012 = vmatprep.subr.bf16.mxu0 0
    %3013 = vmatpush1.bf16.msra.mxu0 0
    %3014 = vmatprep.mubr.bf16.mxu0 0
    %3015 = vmatmul.mubr.bf16.gmra.mrb[0].mxu0 %v2652
    %v3016 = vpop.f32.mrb[0].mxu0
    %v3017 = vadd.f32 0.0, %v3016
    %v3018 = vpop.f32.mrb[0].mxu0
    %v3019 = vadd.f32 0.0, %v3018
    %v3020 = vpop.f32.mrb[0].mxu0
    %v3021 = vpop.f32.mrb[0].mxu0
    %3022 = vdwg.mxu0
    %3023 = vmatprep.subr.bf16.mxu0 %v1216
    %3024 = vmatpush1.bf16.msra.mxu0 %v1215
    %3025 = vmatprep.subr.bf16.mxu0 %v1220
    %3026 = vmatpush1.bf16.msra.mxu0 %v1219
    %3027 = vmatprep.subr.bf16.mxu0 %v1224
    %3028 = vmatpush1.bf16.msra.mxu0 %v1223
    %3029 = vmatprep.subr.bf16.mxu0 %v1228
    %3030 = vmatpush1.bf16.msra.mxu0 %v1227
    %3031 = vmatprep.subr.bf16.mxu0 %v1232
    %3032 = vmatpush1.bf16.msra.mxu0 %v1231
    %3033 = vmatprep.subr.bf16.mxu0 %v1236
    %3034 = vmatpush1.bf16.msra.mxu0 %v1235
    %3035 = vmatprep.subr.bf16.mxu0 %v1240
    %3036 = vmatpush1.bf16.msra.mxu0 %v1239
    %3037 = vmatprep.subr.bf16.mxu0 %v1244
    %3038 = vmatpush1.bf16.msra.mxu0 %v1243
    %3039 = vmatprep.subr.bf16.mxu0 0
    %3040 = vmatpush1.bf16.msra.mxu0 0
    %3041 = vmatprep.subr.bf16.mxu0 0
    %3042 = vmatpush1.bf16.msra.mxu0 0
    %3043 = vmatprep.subr.bf16.mxu0 0
    %3044 = vmatpush1.bf16.msra.mxu0 0
    %3045 = vmatprep.subr.bf16.mxu0 0
    %3046 = vmatpush1.bf16.msra.mxu0 0
    %3047 = vmatprep.subr.bf16.mxu0 0
    %3048 = vmatpush1.bf16.msra.mxu0 0
    %3049 = vmatprep.subr.bf16.mxu0 0
    %3050 = vmatpush1.bf16.msra.mxu0 0
    %3051 = vmatprep.subr.bf16.mxu0 0
    %3052 = vmatpush1.bf16.msra.mxu0 0
    %3053 = vmatprep.subr.bf16.mxu0 0
    %3054 = vmatpush1.bf16.msra.mxu0 0
    %3055 = vmatprep.mubr.bf16.mxu0 0
    %3056 = vmatmul.mubr.bf16.gmra.mrb[0].mxu0 %v2940
    %v3057 = vpop.f32.mrb[0].mxu0
    %v3058 = vadd.f32 %v2976, %v3057
    %v3059 = vpop.f32.mrb[0].mxu0
    %v3060 = vadd.f32 %v2978, %v3059
    %v3061 = vpop.f32.mrb[0].mxu0
    %v3062 = vpop.f32.mrb[0].mxu0
    %3063 = vdwg.mxu0
    %3064 = vmatprep.subr.bf16.mxu0 %v1218
    %3065 = vmatpush1.bf16.msra.mxu0 %v1217
    %3066 = vmatprep.subr.bf16.mxu0 %v1222
    %3067 = vmatpush1.bf16.msra.mxu0 %v1221
    %3068 = vmatprep.subr.bf16.mxu0 %v1226
    %3069 = vmatpush1.bf16.msra.mxu0 %v1225
    %3070 = vmatprep.subr.bf16.mxu0 %v1230
    %3071 = vmatpush1.bf16.msra.mxu0 %v1229
    %3072 = vmatprep.subr.bf16.mxu0 %v1234
    %3073 = vmatpush1.bf16.msra.mxu0 %v1233
    %3074 = vmatprep.subr.bf16.mxu0 %v1238
    %3075 = vmatpush1.bf16.msra.mxu0 %v1237
    %3076 = vmatprep.subr.bf16.mxu0 %v1242
    %3077 = vmatpush1.bf16.msra.mxu0 %v1241
    %3078 = vmatprep.subr.bf16.mxu0 %v1246
    %3079 = vmatpush1.bf16.msra.mxu0 %v1245
    %3080 = vmatprep.subr.bf16.mxu0 0
    %3081 = vmatpush1.bf16.msra.mxu0 0
    %3082 = vmatprep.subr.bf16.mxu0 0
    %3083 = vmatpush1.bf16.msra.mxu0 0
    %3084 = vmatprep.subr.bf16.mxu0 0
    %3085 = vmatpush1.bf16.msra.mxu0 0
    %3086 = vmatprep.subr.bf16.mxu0 0
    %3087 = vmatpush1.bf16.msra.mxu0 0
    %3088 = vmatprep.subr.bf16.mxu0 0
    %3089 = vmatpush1.bf16.msra.mxu0 0
    %3090 = vmatprep.subr.bf16.mxu0 0
    %3091 = vmatpush1.bf16.msra.mxu0 0
    %3092 = vmatprep.subr.bf16.mxu0 0
    %3093 = vmatpush1.bf16.msra.mxu0 0
    %3094 = vmatprep.subr.bf16.mxu0 0
    %3095 = vmatpush1.bf16.msra.mxu0 0
    %3096 = vmatprep.mubr.bf16.mxu0 0
    %3097 = vmatmul.mubr.bf16.gmra.mrb[0].mxu0 %v2940
    %v3098 = vpop.f32.mrb[0].mxu0
    %v3099 = vadd.f32 %v3017, %v3098
    %v3100 = vpop.f32.mrb[0].mxu0
    %v3101 = vadd.f32 %v3019, %v3100
    %v3102 = vpop.f32.mrb[0].mxu0
    %v3103 = vpop.f32.mrb[0].mxu0
    %3104 = vdwg.mxu0
    %v3105 = vadd.f32 %v3058, %v577
    %v3106 = vadd.f32 %v3060, %v581
    %v3107 = vadd.f32 %v3099, %v585
    %v3108 = vadd.f32 %v3101, %v589
    %v3109 = vmul.f32 %v3105, 0.5
    %v3110 = vmul.f32 %v3106, 0.5
    %v3111 = vmul.f32 %v3107, 0.5
    %v3112 = vtanh.pop %v3109
    %v3113 = vtanh.pop %v3110
    %v3114 = vtanh.pop %v3111
    %v3115 = vmul.f32 %v3112, 0.5
    %v3116 = vmul.f32 %v3113, 0.5
    %v3117 = vmul.f32 %v3114, 0.5
    %v3118 = vadd.f32 %v3115, 0.5
    %v3119 = vadd.f32 %v3116, 0.5
    %v3120 = vadd.f32 %v3117, 0.5
    %v3121 = vtanh.pop %v3108
    %v3122 = vmul.f32 %v3119, %v2649
    %v3123 = vmul.f32 %v3118, %v3121
    %v3124 = vadd.f32 %v3122, %v3123
    %v3125 = vtanh.pop %v3124
    %v3126 = vmul.f32 %v3120, %v3125
    %v3127 = vpack.c.bf16 %v3126, %v3126
    %v3128 = vpack.c.bf16 %v2839, %v2839
    %3129 = vmatprep.subr.bf16.mxu0 %v1481
    %3130 = vmatpush1.bf16.msra.mxu0 %v1480
    %3131 = vmatprep.subr.bf16.mxu0 %v1485
    %3132 = vmatpush1.bf16.msra.mxu0 %v1484
    %3133 = vmatprep.subr.bf16.mxu0 %v1489
    %3134 = vmatpush1.bf16.msra.mxu0 %v1488
    %3135 = vmatprep.subr.bf16.mxu0 %v1493
    %3136 = vmatpush1.bf16.msra.mxu0 %v1492
    %3137 = vmatprep.subr.bf16.mxu0 %v1497
    %3138 = vmatpush1.bf16.msra.mxu0 %v1496
    %3139 = vmatprep.subr.bf16.mxu0 %v1501
    %3140 = vmatpush1.bf16.msra.mxu0 %v1500
    %3141 = vmatprep.subr.bf16.mxu0 %v1505
    %3142 = vmatpush1.bf16.msra.mxu0 %v1504
    %3143 = vmatprep.subr.bf16.mxu0 %v1509
    %3144 = vmatpush1.bf16.msra.mxu0 %v1508
    %3145 = vmatprep.subr.bf16.mxu0 0
    %3146 = vmatpush1.bf16.msra.mxu0 0
    %3147 = vmatprep.subr.bf16.mxu0 0
    %3148 = vmatpush1.bf16.msra.mxu0 0
    %3149 = vmatprep.subr.bf16.mxu0 0
    %3150 = vmatpush1.bf16.msra.mxu0 0
    %3151 = vmatprep.subr.bf16.mxu0 0
    %3152 = vmatpush1.bf16.msra.mxu0 0
    %3153 = vmatprep.subr.bf16.mxu0 0
    %3154 = vmatpush1.bf16.msra.mxu0 0
    %3155 = vmatprep.subr.bf16.mxu0 0
    %3156 = vmatpush1.bf16.msra.mxu0 0
    %3157 = vmatprep.subr.bf16.mxu0 0
    %3158 = vmatpush1.bf16.msra.mxu0 0
    %3159 = vmatprep.subr.bf16.mxu0 0
    %3160 = vmatpush1.bf16.msra.mxu0 0
    %3161 = vmatprep.mubr.bf16.mxu0 0
    %3162 = vmatmul.mubr.bf16.gmra.mrb[0].mxu0 %v3128
    %v3163 = vpop.f32.mrb[0].mxu0
    %v3164 = vadd.f32 0.0, %v3163
    %v3165 = vpop.f32.mrb[0].mxu0
    %v3166 = vadd.f32 0.0, %v3165
    %v3167 = vpop.f32.mrb[0].mxu0
    %v3168 = vpop.f32.mrb[0].mxu0
    %3169 = vdwg.mxu0
    %3170 = vmatprep.subr.bf16.mxu0 %v1483
    %3171 = vmatpush1.bf16.msra.mxu0 %v1482
    %3172 = vmatprep.subr.bf16.mxu0 %v1487
    %3173 = vmatpush1.bf16.msra.mxu0 %v1486
    %3174 = vmatprep.subr.bf16.mxu0 %v1491
    %3175 = vmatpush1.bf16.msra.mxu0 %v1490
    %3176 = vmatprep.subr.bf16.mxu0 %v1495
    %3177 = vmatpush1.bf16.msra.mxu0 %v1494
    %3178 = vmatprep.subr.bf16.mxu0 %v1499
    %3179 = vmatpush1.bf16.msra.mxu0 %v1498
    %3180 = vmatprep.subr.bf16.mxu0 %v1503
    %3181 = vmatpush1.bf16.msra.mxu0 %v1502
    %3182 = vmatprep.subr.bf16.mxu0 %v1507
    %3183 = vmatpush1.bf16.msra.mxu0 %v1506
    %3184 = vmatprep.subr.bf16.mxu0 %v1511
    %3185 = vmatpush1.bf16.msra.mxu0 %v1510
    %3186 = vmatprep.subr.bf16.mxu0 0
    %3187 = vmatpush1.bf16.msra.mxu0 0
    %3188 = vmatprep.subr.bf16.mxu0 0
    %3189 = vmatpush1.bf16.msra.mxu0 0
    %3190 = vmatprep.subr.bf16.mxu0 0
    %3191 = vmatpush1.bf16.msra.mxu0 0
    %3192 = vmatprep.subr.bf16.mxu0 0
    %3193 = vmatpush1.bf16.msra.mxu0 0
    %3194 = vmatprep.subr.bf16.mxu0 0
    %3195 = vmatpush1.bf16.msra.mxu0 0
    %3196 = vmatprep.subr.bf16.mxu0 0
    %3197 = vmatpush1.bf16.msra.mxu0 0
    %3198 = vmatprep.subr.bf16.mxu0 0
    %3199 = vmatpush1.bf16.msra.mxu0 0
    %3200 = vmatprep.subr.bf16.mxu0 0
    %3201 = vmatpush1.bf16.msra.mxu0 0
    %3202 = vmatprep.mubr.bf16.mxu0 0
    %3203 = vmatmul.mubr.bf16.gmra.mrb[0].mxu0 %v3128
    %v3204 = vpop.f32.mrb[0].mxu0
    %v3205 = vadd.f32 0.0, %v3204
    %v3206 = vpop.f32.mrb[0].mxu0
    %v3207 = vadd.f32 0.0, %v3206
    %v3208 = vpop.f32.mrb[0].mxu0
    %v3209 = vpop.f32.mrb[0].mxu0
    %3210 = vdwg.mxu0
    %3211 = vmatprep.subr.bf16.mxu0 %v1723
    %3212 = vmatpush1.bf16.msra.mxu0 %v1722
    %3213 = vmatprep.subr.bf16.mxu0 %v1727
    %3214 = vmatpush1.bf16.msra.mxu0 %v1726
    %3215 = vmatprep.subr.bf16.mxu0 %v1731
    %3216 = vmatpush1.bf16.msra.mxu0 %v1730
    %3217 = vmatprep.subr.bf16.mxu0 %v1735
    %3218 = vmatpush1.bf16.msra.mxu0 %v1734
    %3219 = vmatprep.subr.bf16.mxu0 %v1739
    %3220 = vmatpush1.bf16.msra.mxu0 %v1738
    %3221 = vmatprep.subr.bf16.mxu0 %v1743
    %3222 = vmatpush1.bf16.msra.mxu0 %v1742
    %3223 = vmatprep.subr.bf16.mxu0 %v1747
    %3224 = vmatpush1.bf16.msra.mxu0 %v1746
    %3225 = vmatprep.subr.bf16.mxu0 %v1751
    %3226 = vmatpush1.bf16.msra.mxu0 %v1750
    %3227 = vmatprep.subr.bf16.mxu0 0
    %3228 = vmatpush1.bf16.msra.mxu0 0
    %3229 = vmatprep.subr.bf16.mxu0 0
    %3230 = vmatpush1.bf16.msra.mxu0 0
    %3231 = vmatprep.subr.bf16.mxu0 0
    %3232 = vmatpush1.bf16.msra.mxu0 0
    %3233 = vmatprep.subr.bf16.mxu0 0
    %3234 = vmatpush1.bf16.msra.mxu0 0
    %3235 = vmatprep.subr.bf16.mxu0 0
    %3236 = vmatpush1.bf16.msra.mxu0 0
    %3237 = vmatprep.subr.bf16.mxu0 0
    %3238 = vmatpush1.bf16.msra.mxu0 0
    %3239 = vmatprep.subr.bf16.mxu0 0
    %3240 = vmatpush1.bf16.msra.mxu0 0
    %3241 = vmatprep.subr.bf16.mxu0 0
    %3242 = vmatpush1.bf16.msra.mxu0 0
    %3243 = vmatprep.mubr.bf16.mxu0 0
    %3244 = vmatmul.mubr.bf16.gmra.mrb[0].mxu0 %v3127
    %v3245 = vpop.f32.mrb[0].mxu0
    %v3246 = vadd.f32 %v3164, %v3245
    %v3247 = vpop.f32.mrb[0].mxu0
    %v3248 = vadd.f32 %v3166, %v3247
    %v3249 = vpop.f32.mrb[0].mxu0
    %v3250 = vpop.f32.mrb[0].mxu0
    %3251 = vdwg.mxu0
    %3252 = vmatprep.subr.bf16.mxu0 %v1725
    %3253 = vmatpush1.bf16.msra.mxu0 %v1724
    %3254 = vmatprep.subr.bf16.mxu0 %v1729
    %3255 = vmatpush1.bf16.msra.mxu0 %v1728
    %3256 = vmatprep.subr.bf16.mxu0 %v1733
    %3257 = vmatpush1.bf16.msra.mxu0 %v1732
    %3258 = vmatprep.subr.bf16.mxu0 %v1737
    %3259 = vmatpush1.bf16.msra.mxu0 %v1736
    %3260 = vmatprep.subr.bf16.mxu0 %v1741
    %3261 = vmatpush1.bf16.msra.mxu0 %v1740
    %3262 = vmatprep.subr.bf16.mxu0 %v1745
    %3263 = vmatpush1.bf16.msra.mxu0 %v1744
    %3264 = vmatprep.subr.bf16.mxu0 %v1749
    %3265 = vmatpush1.bf16.msra.mxu0 %v1748
    %3266 = vmatprep.subr.bf16.mxu0 %v1753
    %3267 = vmatpush1.bf16.msra.mxu0 %v1752
    %3268 = vmatprep.subr.bf16.mxu0 0
    %3269 = vmatpush1.bf16.msra.mxu0 0
    %3270 = vmatprep.subr.bf16.mxu0 0
    %3271 = vmatpush1.bf16.msra.mxu0 0
    %3272 = vmatprep.subr.bf16.mxu0 0
    %3273 = vmatpush1.bf16.msra.mxu0 0
    %3274 = vmatprep.subr.bf16.mxu0 0
    %3275 = vmatpush1.bf16.msra.mxu0 0
    %3276 = vmatprep.subr.bf16.mxu0 0
    %3277 = vmatpush1.bf16.msra.mxu0 0
    %3278 = vmatprep.subr.bf16.mxu0 0
    %3279 = vmatpush1.bf16.msra.mxu0 0
    %3280 = vmatprep.subr.bf16.mxu0 0
    %3281 = vmatpush1.bf16.msra.mxu0 0
    %3282 = vmatprep.subr.bf16.mxu0 0
    %3283 = vmatpush1.bf16.msra.mxu0 0
    %3284 = vmatprep.mubr.bf16.mxu0 0
    %3285 = vmatmul.mubr.bf16.gmra.mrb[0].mxu0 %v3127
    %v3286 = vpop.f32.mrb[0].mxu0
    %v3287 = vadd.f32 %v3205, %v3286
    %v3288 = vpop.f32.mrb[0].mxu0
    %v3289 = vadd.f32 %v3207, %v3288
    %v3290 = vpop.f32.mrb[0].mxu0
    %v3291 = vpop.f32.mrb[0].mxu0
    %3292 = vdwg.mxu0
    %v3293 = vadd.f32 %v3246, %v599
    %v3294 = vadd.f32 %v3248, %v603
    %v3295 = vadd.f32 %v3287, %v607
    %v3296 = vadd.f32 %v3289, %v611
    %v3297 = vmul.f32 %v3293, 0.5
    %v3298 = vmul.f32 %v3294, 0.5
    %v3299 = vmul.f32 %v3295, 0.5
    %v3300 = vtanh.pop %v3297
    %v3301 = vtanh.pop %v3298
    %v3302 = vtanh.pop %v3299
    %v3303 = vmul.f32 %v3300, 0.5
    %v3304 = vmul.f32 %v3301, 0.5
    %v3305 = vmul.f32 %v3302, 0.5
    %v3306 = vadd.f32 %v3303, 0.5
    %v3307 = vadd.f32 %v3304, 0.5
    %v3308 = vadd.f32 %v3305, 0.5
    %v3309 = vtanh.pop %v3296
    %v3310 = vmul.f32 %v3307, %v2837
    %v3311 = vmul.f32 %v3306, %v3309
    %v3312 = vadd.f32 %v3310, %v3311
    %v3313 = vtanh.pop %v3312
    %v3314 = vmul.f32 %v3308, %v3313
    %3315 = vmatprep.subr.bf16.mxu0 %v713
    %3316 = vmatpush1.bf16.msra.mxu0 %v712
    %3317 = vmatprep.subr.bf16.mxu0 %v717
    %3318 = vmatpush1.bf16.msra.mxu0 %v716
    %3319 = vmatprep.subr.bf16.mxu0 %v721
    %3320 = vmatpush1.bf16.msra.mxu0 %v720
    %3321 = vmatprep.subr.bf16.mxu0 %v725
    %3322 = vmatpush1.bf16.msra.mxu0 %v724
    %3323 = vmatprep.subr.bf16.mxu0 %v729
    %3324 = vmatpush1.bf16.msra.mxu0 %v728
    %3325 = vmatprep.subr.bf16.mxu0 %v733
    %3326 = vmatpush1.bf16.msra.mxu0 %v732
    %3327 = vmatprep.subr.bf16.mxu0 %v737
    %3328 = vmatpush1.bf16.msra.mxu0 %v736
    %3329 = vmatprep.subr.bf16.mxu0 %v741
    %3330 = vmatpush1.bf16.msra.mxu0 %v740
    %3331 = vmatprep.subr.bf16.mxu0 0
    %3332 = vmatpush1.bf16.msra.mxu0 0
    %3333 = vmatprep.subr.bf16.mxu0 0
    %3334 = vmatpush1.bf16.msra.mxu0 0
    %3335 = vmatprep.subr.bf16.mxu0 0
    %3336 = vmatpush1.bf16.msra.mxu0 0
    %3337 = vmatprep.subr.bf16.mxu0 0
    %3338 = vmatpush1.bf16.msra.mxu0 0
    %3339 = vmatprep.subr.bf16.mxu0 0
    %3340 = vmatpush1.bf16.msra.mxu0 0
    %3341 = vmatprep.subr.bf16.mxu0 0
    %3342 = vmatpush1.bf16.msra.mxu0 0
    %3343 = vmatprep.subr.bf16.mxu0 0
    %3344 = vmatpush1.bf16.msra.mxu0 0
    %3345 = vmatprep.subr.bf16.mxu0 0
    %3346 = vmatpush1.bf16.msra.mxu0 0
    %3347 = vmatprep.mubr.bf16.mxu0 0
    %3348 = vmatmul.mubr.bf16.gmra.mrb[0].mxu0 %v2940
    %v3349 = vpop.f32.mrb[0].mxu0
    %v3350 = vadd.f32 %v321, %v3349
    %v3351 = vpop.f32.mrb[0].mxu0
    %v3352 = vadd.f32 %v323, %v3351
    %v3353 = vpop.f32.mrb[0].mxu0
    %v3354 = vpop.f32.mrb[0].mxu0
    %3355 = vdwg.mxu0
    %3356 = vmatprep.subr.bf16.mxu0 %v715
    %3357 = vmatpush1.bf16.msra.mxu0 %v714
    %3358 = vmatprep.subr.bf16.mxu0 %v719
    %3359 = vmatpush1.bf16.msra.mxu0 %v718
    %3360 = vmatprep.subr.bf16.mxu0 %v723
    %3361 = vmatpush1.bf16.msra.mxu0 %v722
    %3362 = vmatprep.subr.bf16.mxu0 %v727
    %3363 = vmatpush1.bf16.msra.mxu0 %v726
    %3364 = vmatprep.subr.bf16.mxu0 %v731
    %3365 = vmatpush1.bf16.msra.mxu0 %v730
    %3366 = vmatprep.subr.bf16.mxu0 %v735
    %3367 = vmatpush1.bf16.msra.mxu0 %v734
    %3368 = vmatprep.subr.bf16.mxu0 %v739
    %3369 = vmatpush1.bf16.msra.mxu0 %v738
    %3370 = vmatprep.subr.bf16.mxu0 %v743
    %3371 = vmatpush1.bf16.msra.mxu0 %v742
    %3372 = vmatprep.subr.bf16.mxu0 0
    %3373 = vmatpush1.bf16.msra.mxu0 0
    %3374 = vmatprep.subr.bf16.mxu0 0
    %3375 = vmatpush1.bf16.msra.mxu0 0
    %3376 = vmatprep.subr.bf16.mxu0 0
    %3377 = vmatpush1.bf16.msra.mxu0 0
    %3378 = vmatprep.subr.bf16.mxu0 0
    %3379 = vmatpush1.bf16.msra.mxu0 0
    %3380 = vmatprep.subr.bf16.mxu0 0
    %3381 = vmatpush1.bf16.msra.mxu0 0
    %3382 = vmatprep.subr.bf16.mxu0 0
    %3383 = vmatpush1.bf16.msra.mxu0 0
    %3384 = vmatprep.subr.bf16.mxu0 0
    %3385 = vmatpush1.bf16.msra.mxu0 0
    %3386 = vmatprep.subr.bf16.mxu0 0
    %3387 = vmatpush1.bf16.msra.mxu0 0
    %3388 = vmatprep.mubr.bf16.mxu0 0
    %3389 = vmatmul.mubr.bf16.gmra.mrb[0].mxu0 %v2940
    %v3390 = vpop.f32.mrb[0].mxu0
    %v3391 = vadd.f32 %v394, %v3390
    %v3392 = vpop.f32.mrb[0].mxu0
    %v3393 = vadd.f32 %v396, %v3392
    %v3394 = vpop.f32.mrb[0].mxu0
    %v3395 = vpop.f32.mrb[0].mxu0
    %3396 = vdwg.mxu0
    %v3397 = vmul.f32 %v3350, 0.5
    %v3398 = vmul.f32 %v3352, 0.5
    %v3399 = vmul.f32 %v3391, 0.5
    %v3400 = vtanh.pop %v3397
    %v3401 = vtanh.pop %v3398
    %v3402 = vtanh.pop %v3399
    %v3403 = vmul.f32 %v3400, 0.5
    %v3404 = vmul.f32 %v3401, 0.5
    %v3405 = vmul.f32 %v3402, 0.5
    %v3406 = vadd.f32 %v3403, 0.5
    %v3407 = vadd.f32 %v3404, 0.5
    %v3408 = vadd.f32 %v3405, 0.5
    %v3409 = vtanh.pop %v3393
    %v3410 = vmul.f32 %v3407, %v2937
    %v3411 = vmul.f32 %v3406, %v3409
    %v3412 = vadd.f32 %v3410, %v3411
    %v3413 = vtanh.pop %v3412
    %v3414 = vmul.f32 %v3408, %v3413
    %v3415 = vpack.c.bf16 %v3414, %v3414
    %3416 = vmatprep.subr.bf16.mxu0 %v974
    %3417 = vmatpush1.bf16.msra.mxu0 %v973
    %3418 = vmatprep.subr.bf16.mxu0 %v978
    %3419 = vmatpush1.bf16.msra.mxu0 %v977
    %3420 = vmatprep.subr.bf16.mxu0 %v982
    %3421 = vmatpush1.bf16.msra.mxu0 %v981
    %3422 = vmatprep.subr.bf16.mxu0 %v986
    %3423 = vmatpush1.bf16.msra.mxu0 %v985
    %3424 = vmatprep.subr.bf16.mxu0 %v990
    %3425 = vmatpush1.bf16.msra.mxu0 %v989
    %3426 = vmatprep.subr.bf16.mxu0 %v994
    %3427 = vmatpush1.bf16.msra.mxu0 %v993
    %3428 = vmatprep.subr.bf16.mxu0 %v998
    %3429 = vmatpush1.bf16.msra.mxu0 %v997
    %3430 = vmatprep.subr.bf16.mxu0 %v1002
    %3431 = vmatpush1.bf16.msra.mxu0 %v1001
    %3432 = vmatprep.subr.bf16.mxu0 0
    %3433 = vmatpush1.bf16.msra.mxu0 0
    %3434 = vmatprep.subr.bf16.mxu0 0
    %3435 = vmatpush1.bf16.msra.mxu0 0
    %3436 = vmatprep.subr.bf16.mxu0 0
    %3437 = vmatpush1.bf16.msra.mxu0 0
    %3438 = vmatprep.subr.bf16.mxu0 0
    %3439 = vmatpush1.bf16.msra.mxu0 0
    %3440 = vmatprep.subr.bf16.mxu0 0
    %3441 = vmatpush1.bf16.msra.mxu0 0
    %3442 = vmatprep.subr.bf16.mxu0 0
    %3443 = vmatpush1.bf16.msra.mxu0 0
    %3444 = vmatprep.subr.bf16.mxu0 0
    %3445 = vmatpush1.bf16.msra.mxu0 0
    %3446 = vmatprep.subr.bf16.mxu0 0
    %3447 = vmatpush1.bf16.msra.mxu0 0
    %3448 = vmatprep.mubr.bf16.mxu0 0
    %3449 = vmatmul.mubr.bf16.gmra.mrb[0].mxu0 %v3127
    %v3450 = vpop.f32.mrb[0].mxu0
    %v3451 = vadd.f32 0.0, %v3450
    %v3452 = vpop.f32.mrb[0].mxu0
    %v3453 = vadd.f32 0.0, %v3452
    %v3454 = vpop.f32.mrb[0].mxu0
    %v3455 = vpop.f32.mrb[0].mxu0
    %3456 = vdwg.mxu0
    %3457 = vmatprep.subr.bf16.mxu0 %v976
    %3458 = vmatpush1.bf16.msra.mxu0 %v975
    %3459 = vmatprep.subr.bf16.mxu0 %v980
    %3460 = vmatpush1.bf16.msra.mxu0 %v979
    %3461 = vmatprep.subr.bf16.mxu0 %v984
    %3462 = vmatpush1.bf16.msra.mxu0 %v983
    %3463 = vmatprep.subr.bf16.mxu0 %v988
    %3464 = vmatpush1.bf16.msra.mxu0 %v987
    %3465 = vmatprep.subr.bf16.mxu0 %v992
    %3466 = vmatpush1.bf16.msra.mxu0 %v991
    %3467 = vmatprep.subr.bf16.mxu0 %v996
    %3468 = vmatpush1.bf16.msra.mxu0 %v995
    %3469 = vmatprep.subr.bf16.mxu0 %v1000
    %3470 = vmatpush1.bf16.msra.mxu0 %v999
    %3471 = vmatprep.subr.bf16.mxu0 %v1004
    %3472 = vmatpush1.bf16.msra.mxu0 %v1003
    %3473 = vmatprep.subr.bf16.mxu0 0
    %3474 = vmatpush1.bf16.msra.mxu0 0
    %3475 = vmatprep.subr.bf16.mxu0 0
    %3476 = vmatpush1.bf16.msra.mxu0 0
    %3477 = vmatprep.subr.bf16.mxu0 0
    %3478 = vmatpush1.bf16.msra.mxu0 0
    %3479 = vmatprep.subr.bf16.mxu0 0
    %3480 = vmatpush1.bf16.msra.mxu0 0
    %3481 = vmatprep.subr.bf16.mxu0 0
    %3482 = vmatpush1.bf16.msra.mxu0 0
    %3483 = vmatprep.subr.bf16.mxu0 0
    %3484 = vmatpush1.bf16.msra.mxu0 0
    %3485 = vmatprep.subr.bf16.mxu0 0
    %3486 = vmatpush1.bf16.msra.mxu0 0
    %3487 = vmatprep.subr.bf16.mxu0 0
    %3488 = vmatpush1.bf16.msra.mxu0 0
    %3489 = vmatprep.mubr.bf16.mxu0 0
    %3490 = vmatmul.mubr.bf16.gmra.mrb[0].mxu0 %v3127
    %v3491 = vpop.f32.mrb[0].mxu0
    %v3492 = vadd.f32 0.0, %v3491
    %v3493 = vpop.f32.mrb[0].mxu0
    %v3494 = vadd.f32 0.0, %v3493
    %v3495 = vpop.f32.mrb[0].mxu0
    %v3496 = vpop.f32.mrb[0].mxu0
    %3497 = vdwg.mxu0
    %3498 = vmatprep.subr.bf16.mxu0 %v1216
    %3499 = vmatpush1.bf16.msra.mxu0 %v1215
    %3500 = vmatprep.subr.bf16.mxu0 %v1220
    %3501 = vmatpush1.bf16.msra.mxu0 %v1219
    %3502 = vmatprep.subr.bf16.mxu0 %v1224
    %3503 = vmatpush1.bf16.msra.mxu0 %v1223
    %3504 = vmatprep.subr.bf16.mxu0 %v1228
    %3505 = vmatpush1.bf16.msra.mxu0 %v1227
    %3506 = vmatprep.subr.bf16.mxu0 %v1232
    %3507 = vmatpush1.bf16.msra.mxu0 %v1231
    %3508 = vmatprep.subr.bf16.mxu0 %v1236
    %3509 = vmatpush1.bf16.msra.mxu0 %v1235
    %3510 = vmatprep.subr.bf16.mxu0 %v1240
    %3511 = vmatpush1.bf16.msra.mxu0 %v1239
    %3512 = vmatprep.subr.bf16.mxu0 %v1244
    %3513 = vmatpush1.bf16.msra.mxu0 %v1243
    %3514 = vmatprep.subr.bf16.mxu0 0
    %3515 = vmatpush1.bf16.msra.mxu0 0
    %3516 = vmatprep.subr.bf16.mxu0 0
    %3517 = vmatpush1.bf16.msra.mxu0 0
    %3518 = vmatprep.subr.bf16.mxu0 0
    %3519 = vmatpush1.bf16.msra.mxu0 0
    %3520 = vmatprep.subr.bf16.mxu0 0
    %3521 = vmatpush1.bf16.msra.mxu0 0
    %3522 = vmatprep.subr.bf16.mxu0 0
    %3523 = vmatpush1.bf16.msra.mxu0 0
    %3524 = vmatprep.subr.bf16.mxu0 0
    %3525 = vmatpush1.bf16.msra.mxu0 0
    %3526 = vmatprep.subr.bf16.mxu0 0
    %3527 = vmatpush1.bf16.msra.mxu0 0
    %3528 = vmatprep.subr.bf16.mxu0 0
    %3529 = vmatpush1.bf16.msra.mxu0 0
    %3530 = vmatprep.mubr.bf16.mxu0 0
    %3531 = vmatmul.mubr.bf16.gmra.mrb[0].mxu0 %v3415
    %v3532 = vpop.f32.mrb[0].mxu0
    %v3533 = vadd.f32 %v3451, %v3532
    %v3534 = vpop.f32.mrb[0].mxu0
    %v3535 = vadd.f32 %v3453, %v3534
    %v3536 = vpop.f32.mrb[0].mxu0
    %v3537 = vpop.f32.mrb[0].mxu0
    %3538 = vdwg.mxu0
    %3539 = vmatprep.subr.bf16.mxu0 %v1218
    %3540 = vmatpush1.bf16.msra.mxu0 %v1217
    %3541 = vmatprep.subr.bf16.mxu0 %v1222
    %3542 = vmatpush1.bf16.msra.mxu0 %v1221
    %3543 = vmatprep.subr.bf16.mxu0 %v1226
    %3544 = vmatpush1.bf16.msra.mxu0 %v1225
    %3545 = vmatprep.subr.bf16.mxu0 %v1230
    %3546 = vmatpush1.bf16.msra.mxu0 %v1229
    %3547 = vmatprep.subr.bf16.mxu0 %v1234
    %3548 = vmatpush1.bf16.msra.mxu0 %v1233
    %3549 = vmatprep.subr.bf16.mxu0 %v1238
    %3550 = vmatpush1.bf16.msra.mxu0 %v1237
    %3551 = vmatprep.subr.bf16.mxu0 %v1242
    %3552 = vmatpush1.bf16.msra.mxu0 %v1241
    %3553 = vmatprep.subr.bf16.mxu0 %v1246
    %3554 = vmatpush1.bf16.msra.mxu0 %v1245
    %3555 = vmatprep.subr.bf16.mxu0 0
    %3556 = vmatpush1.bf16.msra.mxu0 0
    %3557 = vmatprep.subr.bf16.mxu0 0
    %3558 = vmatpush1.bf16.msra.mxu0 0
    %3559 = vmatprep.subr.bf16.mxu0 0
    %3560 = vmatpush1.bf16.msra.mxu0 0
    %3561 = vmatprep.subr.bf16.mxu0 0
    %3562 = vmatpush1.bf16.msra.mxu0 0
    %3563 = vmatprep.subr.bf16.mxu0 0
    %3564 = vmatpush1.bf16.msra.mxu0 0
    %3565 = vmatprep.subr.bf16.mxu0 0
    %3566 = vmatpush1.bf16.msra.mxu0 0
    %3567 = vmatprep.subr.bf16.mxu0 0
    %3568 = vmatpush1.bf16.msra.mxu0 0
    %3569 = vmatprep.subr.bf16.mxu0 0
    %3570 = vmatpush1.bf16.msra.mxu0 0
    %3571 = vmatprep.mubr.bf16.mxu0 0
    %3572 = vmatmul.mubr.bf16.gmra.mrb[0].mxu0 %v3415
    %v3573 = vpop.f32.mrb[0].mxu0
    %v3574 = vadd.f32 %v3492, %v3573
    %v3575 = vpop.f32.mrb[0].mxu0
    %v3576 = vadd.f32 %v3494, %v3575
    %v3577 = vpop.f32.mrb[0].mxu0
    %v3578 = vpop.f32.mrb[0].mxu0
    %3579 = vdwg.mxu0
    %v3580 = vadd.f32 %v3533, %v577
    %v3581 = vadd.f32 %v3535, %v581
    %v3582 = vadd.f32 %v3574, %v585
    %v3583 = vadd.f32 %v3576, %v589
    %v3584 = vmul.f32 %v3580, 0.5
    %v3585 = vmul.f32 %v3581, 0.5
    %v3586 = vmul.f32 %v3582, 0.5
    %v3587 = vtanh.pop %v3584
    %v3588 = vtanh.pop %v3585
    %v3589 = vtanh.pop %v3586
    %v3590 = vmul.f32 %v3587, 0.5
    %v3591 = vmul.f32 %v3588, 0.5
    %v3592 = vmul.f32 %v3589, 0.5
    %v3593 = vadd.f32 %v3590, 0.5
    %v3594 = vadd.f32 %v3591, 0.5
    %v3595 = vadd.f32 %v3592, 0.5
    %v3596 = vtanh.pop %v3583
    %v3597 = vmul.f32 %v3594, %v3124
    %v3598 = vmul.f32 %v3593, %v3596
    %v3599 = vadd.f32 %v3597, %v3598
    %v3600 = vtanh.pop %v3599
    %v3601 = vmul.f32 %v3595, %v3600
    %v3602 = vpack.c.bf16 %v3601, %v3601
    %v3603 = vpack.c.bf16 %v3314, %v3314
    %3604 = vmatprep.subr.bf16.mxu0 %v1481
    %3605 = vmatpush1.bf16.msra.mxu0 %v1480
    %3606 = vmatprep.subr.bf16.mxu0 %v1485
    %3607 = vmatpush1.bf16.msra.mxu0 %v1484
    %3608 = vmatprep.subr.bf16.mxu0 %v1489
    %3609 = vmatpush1.bf16.msra.mxu0 %v1488
    %3610 = vmatprep.subr.bf16.mxu0 %v1493
    %3611 = vmatpush1.bf16.msra.mxu0 %v1492
    %3612 = vmatprep.subr.bf16.mxu0 %v1497
    %3613 = vmatpush1.bf16.msra.mxu0 %v1496
    %3614 = vmatprep.subr.bf16.mxu0 %v1501
    %3615 = vmatpush1.bf16.msra.mxu0 %v1500
    %3616 = vmatprep.subr.bf16.mxu0 %v1505
    %3617 = vmatpush1.bf16.msra.mxu0 %v1504
    %3618 = vmatprep.subr.bf16.mxu0 %v1509
    %3619 = vmatpush1.bf16.msra.mxu0 %v1508
    %3620 = vmatprep.subr.bf16.mxu0 0
    %3621 = vmatpush1.bf16.msra.mxu0 0
    %3622 = vmatprep.subr.bf16.mxu0 0
    %3623 = vmatpush1.bf16.msra.mxu0 0
    %3624 = vmatprep.subr.bf16.mxu0 0
    %3625 = vmatpush1.bf16.msra.mxu0 0
    %3626 = vmatprep.subr.bf16.mxu0 0
    %3627 = vmatpush1.bf16.msra.mxu0 0
    %3628 = vmatprep.subr.bf16.mxu0 0
    %3629 = vmatpush1.bf16.msra.mxu0 0
    %3630 = vmatprep.subr.bf16.mxu0 0
    %3631 = vmatpush1.bf16.msra.mxu0 0
    %3632 = vmatprep.subr.bf16.mxu0 0
    %3633 = vmatpush1.bf16.msra.mxu0 0
    %3634 = vmatprep.subr.bf16.mxu0 0
    %3635 = vmatpush1.bf16.msra.mxu0 0
    %3636 = vmatprep.mubr.bf16.mxu0 0
    %3637 = vmatmul.mubr.bf16.gmra.mrb[0].mxu0 %v3603
    %v3638 = vpop.f32.mrb[0].mxu0
    %v3639 = vadd.f32 0.0, %v3638
    %v3640 = vpop.f32.mrb[0].mxu0
    %v3641 = vadd.f32 0.0, %v3640
    %v3642 = vpop.f32.mrb[0].mxu0
    %v3643 = vpop.f32.mrb[0].mxu0
    %3644 = vdwg.mxu0
    %3645 = vmatprep.subr.bf16.mxu0 %v1483
    %3646 = vmatpush1.bf16.msra.mxu0 %v1482
    %3647 = vmatprep.subr.bf16.mxu0 %v1487
    %3648 = vmatpush1.bf16.msra.mxu0 %v1486
    %3649 = vmatprep.subr.bf16.mxu0 %v1491
    %3650 = vmatpush1.bf16.msra.mxu0 %v1490
    %3651 = vmatprep.subr.bf16.mxu0 %v1495
    %3652 = vmatpush1.bf16.msra.mxu0 %v1494
    %3653 = vmatprep.subr.bf16.mxu0 %v1499
    %3654 = vmatpush1.bf16.msra.mxu0 %v1498
    %3655 = vmatprep.subr.bf16.mxu0 %v1503
    %3656 = vmatpush1.bf16.msra.mxu0 %v1502
    %3657 = vmatprep.subr.bf16.mxu0 %v1507
    %3658 = vmatpush1.bf16.msra.mxu0 %v1506
    %3659 = vmatprep.subr.bf16.mxu0 %v1511
    %3660 = vmatpush1.bf16.msra.mxu0 %v1510
    %3661 = vmatprep.subr.bf16.mxu0 0
    %3662 = vmatpush1.bf16.msra.mxu0 0
    %3663 = vmatprep.subr.bf16.mxu0 0
    %3664 = vmatpush1.bf16.msra.mxu0 0
    %3665 = vmatprep.subr.bf16.mxu0 0
    %3666 = vmatpush1.bf16.msra.mxu0 0
    %3667 = vmatprep.subr.bf16.mxu0 0
    %3668 = vmatpush1.bf16.msra.mxu0 0
    %3669 = vmatprep.subr.bf16.mxu0 0
    %3670 = vmatpush1.bf16.msra.mxu0 0
    %3671 = vmatprep.subr.bf16.mxu0 0
    %3672 = vmatpush1.bf16.msra.mxu0 0
    %3673 = vmatprep.subr.bf16.mxu0 0
    %3674 = vmatpush1.bf16.msra.mxu0 0
    %3675 = vmatprep.subr.bf16.mxu0 0
    %3676 = vmatpush1.bf16.msra.mxu0 0
    %3677 = vmatprep.mubr.bf16.mxu0 0
    %3678 = vmatmul.mubr.bf16.gmra.mrb[0].mxu0 %v3603
    %v3679 = vpop.f32.mrb[0].mxu0
    %v3680 = vadd.f32 0.0, %v3679
    %v3681 = vpop.f32.mrb[0].mxu0
    %v3682 = vadd.f32 0.0, %v3681
    %v3683 = vpop.f32.mrb[0].mxu0
    %v3684 = vpop.f32.mrb[0].mxu0
    %3685 = vdwg.mxu0
    %3686 = vmatprep.subr.bf16.mxu0 %v1723
    %3687 = vmatpush1.bf16.msra.mxu0 %v1722
    %3688 = vmatprep.subr.bf16.mxu0 %v1727
    %3689 = vmatpush1.bf16.msra.mxu0 %v1726
    %3690 = vmatprep.subr.bf16.mxu0 %v1731
    %3691 = vmatpush1.bf16.msra.mxu0 %v1730
    %3692 = vmatprep.subr.bf16.mxu0 %v1735
    %3693 = vmatpush1.bf16.msra.mxu0 %v1734
    %3694 = vmatprep.subr.bf16.mxu0 %v1739
    %3695 = vmatpush1.bf16.msra.mxu0 %v1738
    %3696 = vmatprep.subr.bf16.mxu0 %v1743
    %3697 = vmatpush1.bf16.msra.mxu0 %v1742
    %3698 = vmatprep.subr.bf16.mxu0 %v1747
    %3699 = vmatpush1.bf16.msra.mxu0 %v1746
    %3700 = vmatprep.subr.bf16.mxu0 %v1751
    %3701 = vmatpush1.bf16.msra.mxu0 %v1750
    %3702 = vmatprep.subr.bf16.mxu0 0
    %3703 = vmatpush1.bf16.msra.mxu0 0
    %3704 = vmatprep.subr.bf16.mxu0 0
    %3705 = vmatpush1.bf16.msra.mxu0 0
    %3706 = vmatprep.subr.bf16.mxu0 0
    %3707 = vmatpush1.bf16.msra.mxu0 0
    %3708 = vmatprep.subr.bf16.mxu0 0
    %3709 = vmatpush1.bf16.msra.mxu0 0
    %3710 = vmatprep.subr.bf16.mxu0 0
    %3711 = vmatpush1.bf16.msra.mxu0 0
    %3712 = vmatprep.subr.bf16.mxu0 0
    %3713 = vmatpush1.bf16.msra.mxu0 0
    %3714 = vmatprep.subr.bf16.mxu0 0
    %3715 = vmatpush1.bf16.msra.mxu0 0
    %3716 = vmatprep.subr.bf16.mxu0 0
    %3717 = vmatpush1.bf16.msra.mxu0 0
    %3718 = vmatprep.mubr.bf16.mxu0 0
    %3719 = vmatmul.mubr.bf16.gmra.mrb[0].mxu0 %v3602
    %v3720 = vpop.f32.mrb[0].mxu0
    %v3721 = vadd.f32 %v3639, %v3720
    %v3722 = vpop.f32.mrb[0].mxu0
    %v3723 = vadd.f32 %v3641, %v3722
    %v3724 = vpop.f32.mrb[0].mxu0
    %v3725 = vpop.f32.mrb[0].mxu0
    %3726 = vdwg.mxu0
    %3727 = vmatprep.subr.bf16.mxu0 %v1725
    %3728 = vmatpush1.bf16.msra.mxu0 %v1724
    %3729 = vmatprep.subr.bf16.mxu0 %v1729
    %3730 = vmatpush1.bf16.msra.mxu0 %v1728
    %3731 = vmatprep.subr.bf16.mxu0 %v1733
    %3732 = vmatpush1.bf16.msra.mxu0 %v1732
    %3733 = vmatprep.subr.bf16.mxu0 %v1737
    %3734 = vmatpush1.bf16.msra.mxu0 %v1736
    %3735 = vmatprep.subr.bf16.mxu0 %v1741
    %3736 = vmatpush1.bf16.msra.mxu0 %v1740
    %3737 = vmatprep.subr.bf16.mxu0 %v1745
    %3738 = vmatpush1.bf16.msra.mxu0 %v1744
    %3739 = vmatprep.subr.bf16.mxu0 %v1749
    %3740 = vmatpush1.bf16.msra.mxu0 %v1748
    %3741 = vmatprep.subr.bf16.mxu0 %v1753
    %3742 = vmatpush1.bf16.msra.mxu0 %v1752
    %3743 = vmatprep.subr.bf16.mxu0 0
    %3744 = vmatpush1.bf16.msra.mxu0 0
    %3745 = vmatprep.subr.bf16.mxu0 0
    %3746 = vmatpush1.bf16.msra.mxu0 0
    %3747 = vmatprep.subr.bf16.mxu0 0
    %3748 = vmatpush1.bf16.msra.mxu0 0
    %3749 = vmatprep.subr.bf16.mxu0 0
    %3750 = vmatpush1.bf16.msra.mxu0 0
    %3751 = vmatprep.subr.bf16.mxu0 0
    %3752 = vmatpush1.bf16.msra.mxu0 0
    %3753 = vmatprep.subr.bf16.mxu0 0
    %3754 = vmatpush1.bf16.msra.mxu0 0
    %3755 = vmatprep.subr.bf16.mxu0 0
    %3756 = vmatpush1.bf16.msra.mxu0 0
    %3757 = vmatprep.subr.bf16.mxu0 0
    %3758 = vmatpush1.bf16.msra.mxu0 0
    %3759 = vmatprep.mubr.bf16.mxu0 0
    %3760 = vmatmul.mubr.bf16.gmra.mrb[0].mxu0 %v3602
    %v3761 = vpop.f32.mrb[0].mxu0
    %v3762 = vadd.f32 %v3680, %v3761
    %v3763 = vpop.f32.mrb[0].mxu0
    %v3764 = vadd.f32 %v3682, %v3763
    %v3765 = vpop.f32.mrb[0].mxu0
    %v3766 = vpop.f32.mrb[0].mxu0
    %3767 = vdwg.mxu0
    %v3768 = vadd.f32 %v3721, %v599
    %v3769 = vadd.f32 %v3723, %v603
    %v3770 = vadd.f32 %v3762, %v607
    %v3771 = vadd.f32 %v3764, %v611
    %v3772 = vmul.f32 %v3768, 0.5
    %v3773 = vmul.f32 %v3769, 0.5
    %v3774 = vmul.f32 %v3770, 0.5
    %v3775 = vtanh.pop %v3772
    %v3776 = vtanh.pop %v3773
    %v3777 = vtanh.pop %v3774
    %v3778 = vmul.f32 %v3775, 0.5
    %v3779 = vmul.f32 %v3776, 0.5
    %v3780 = vmul.f32 %v3777, 0.5
    %v3781 = vadd.f32 %v3778, 0.5
    %v3782 = vadd.f32 %v3779, 0.5
    %v3783 = vadd.f32 %v3780, 0.5
    %v3784 = vtanh.pop %v3771
    %v3785 = vmul.f32 %v3782, %v3312
    %v3786 = vmul.f32 %v3781, %v3784
    %v3787 = vadd.f32 %v3785, %v3786
    %v3788 = vtanh.pop %v3787
    %v3789 = vmul.f32 %v3783, %v3788
    %3790 = vmatprep.subr.bf16.mxu0 %v713
    %3791 = vmatpush1.bf16.msra.mxu0 %v712
    %3792 = vmatprep.subr.bf16.mxu0 %v717
    %3793 = vmatpush1.bf16.msra.mxu0 %v716
    %3794 = vmatprep.subr.bf16.mxu0 %v721
    %3795 = vmatpush1.bf16.msra.mxu0 %v720
    %3796 = vmatprep.subr.bf16.mxu0 %v725
    %3797 = vmatpush1.bf16.msra.mxu0 %v724
    %3798 = vmatprep.subr.bf16.mxu0 %v729
    %3799 = vmatpush1.bf16.msra.mxu0 %v728
    %3800 = vmatprep.subr.bf16.mxu0 %v733
    %3801 = vmatpush1.bf16.msra.mxu0 %v732
    %3802 = vmatprep.subr.bf16.mxu0 %v737
    %3803 = vmatpush1.bf16.msra.mxu0 %v736
    %3804 = vmatprep.subr.bf16.mxu0 %v741
    %3805 = vmatpush1.bf16.msra.mxu0 %v740
    %3806 = vmatprep.subr.bf16.mxu0 0
    %3807 = vmatpush1.bf16.msra.mxu0 0
    %3808 = vmatprep.subr.bf16.mxu0 0
    %3809 = vmatpush1.bf16.msra.mxu0 0
    %3810 = vmatprep.subr.bf16.mxu0 0
    %3811 = vmatpush1.bf16.msra.mxu0 0
    %3812 = vmatprep.subr.bf16.mxu0 0
    %3813 = vmatpush1.bf16.msra.mxu0 0
    %3814 = vmatprep.subr.bf16.mxu0 0
    %3815 = vmatpush1.bf16.msra.mxu0 0
    %3816 = vmatprep.subr.bf16.mxu0 0
    %3817 = vmatpush1.bf16.msra.mxu0 0
    %3818 = vmatprep.subr.bf16.mxu0 0
    %3819 = vmatpush1.bf16.msra.mxu0 0
    %3820 = vmatprep.subr.bf16.mxu0 0
    %3821 = vmatpush1.bf16.msra.mxu0 0
    %3822 = vmatprep.mubr.bf16.mxu0 0
    %3823 = vmatmul.mubr.bf16.gmra.mrb[0].mxu0 %v3415
    %v3824 = vpop.f32.mrb[0].mxu0
    %v3825 = vadd.f32 %v325, %v3824
    %v3826 = vpop.f32.mrb[0].mxu0
    %v3827 = vadd.f32 %v327, %v3826
    %v3828 = vpop.f32.mrb[0].mxu0
    %v3829 = vpop.f32.mrb[0].mxu0
    %3830 = vdwg.mxu0
    %3831 = vmatprep.subr.bf16.mxu0 %v715
    %3832 = vmatpush1.bf16.msra.mxu0 %v714
    %3833 = vmatprep.subr.bf16.mxu0 %v719
    %3834 = vmatpush1.bf16.msra.mxu0 %v718
    %3835 = vmatprep.subr.bf16.mxu0 %v723
    %3836 = vmatpush1.bf16.msra.mxu0 %v722
    %3837 = vmatprep.subr.bf16.mxu0 %v727
    %3838 = vmatpush1.bf16.msra.mxu0 %v726
    %3839 = vmatprep.subr.bf16.mxu0 %v731
    %3840 = vmatpush1.bf16.msra.mxu0 %v730
    %3841 = vmatprep.subr.bf16.mxu0 %v735
    %3842 = vmatpush1.bf16.msra.mxu0 %v734
    %3843 = vmatprep.subr.bf16.mxu0 %v739
    %3844 = vmatpush1.bf16.msra.mxu0 %v738
    %3845 = vmatprep.subr.bf16.mxu0 %v743
    %3846 = vmatpush1.bf16.msra.mxu0 %v742
    %3847 = vmatprep.subr.bf16.mxu0 0
    %3848 = vmatpush1.bf16.msra.mxu0 0
    %3849 = vmatprep.subr.bf16.mxu0 0
    %3850 = vmatpush1.bf16.msra.mxu0 0
    %3851 = vmatprep.subr.bf16.mxu0 0
    %3852 = vmatpush1.bf16.msra.mxu0 0
    %3853 = vmatprep.subr.bf16.mxu0 0
    %3854 = vmatpush1.bf16.msra.mxu0 0
    %3855 = vmatprep.subr.bf16.mxu0 0
    %3856 = vmatpush1.bf16.msra.mxu0 0
    %3857 = vmatprep.subr.bf16.mxu0 0
    %3858 = vmatpush1.bf16.msra.mxu0 0
    %3859 = vmatprep.subr.bf16.mxu0 0
    %3860 = vmatpush1.bf16.msra.mxu0 0
    %3861 = vmatprep.subr.bf16.mxu0 0
    %3862 = vmatpush1.bf16.msra.mxu0 0
    %3863 = vmatprep.mubr.bf16.mxu0 0
    %3864 = vmatmul.mubr.bf16.gmra.mrb[0].mxu0 %v3415
    %v3865 = vpop.f32.mrb[0].mxu0
    %v3866 = vadd.f32 %v398, %v3865
    %v3867 = vpop.f32.mrb[0].mxu0
    %v3868 = vadd.f32 %v400, %v3867
    %v3869 = vpop.f32.mrb[0].mxu0
    %v3870 = vpop.f32.mrb[0].mxu0
    %3871 = vdwg.mxu0
    %v3872 = vmul.f32 %v3825, 0.5
    %v3873 = vmul.f32 %v3827, 0.5
    %v3874 = vmul.f32 %v3866, 0.5
    %v3875 = vtanh.pop %v3872
    %v3876 = vtanh.pop %v3873
    %v3877 = vtanh.pop %v3874
    %v3878 = vmul.f32 %v3875, 0.5
    %v3879 = vmul.f32 %v3876, 0.5
    %v3880 = vmul.f32 %v3877, 0.5
    %v3881 = vadd.f32 %v3878, 0.5
    %v3882 = vadd.f32 %v3879, 0.5
    %v3883 = vadd.f32 %v3880, 0.5
    %v3884 = vtanh.pop %v3868
    %v3885 = vmul.f32 %v3882, %v3412
    %v3886 = vmul.f32 %v3881, %v3884
    %v3887 = vadd.f32 %v3885, %v3886
    %v3888 = vtanh.pop %v3887
    %v3889 = vmul.f32 %v3883, %v3888
    %v3890 = vpack.c.bf16 %v3889, %v3889
    %3891 = vmatprep.subr.bf16.mxu0 %v974
    %3892 = vmatpush1.bf16.msra.mxu0 %v973
    %3893 = vmatprep.subr.bf16.mxu0 %v978
    %3894 = vmatpush1.bf16.msra.mxu0 %v977
    %3895 = vmatprep.subr.bf16.mxu0 %v982
    %3896 = vmatpush1.bf16.msra.mxu0 %v981
    %3897 = vmatprep.subr.bf16.mxu0 %v986
    %3898 = vmatpush1.bf16.msra.mxu0 %v985
    %3899 = vmatprep.subr.bf16.mxu0 %v990
    %3900 = vmatpush1.bf16.msra.mxu0 %v989
    %3901 = vmatprep.subr.bf16.mxu0 %v994
    %3902 = vmatpush1.bf16.msra.mxu0 %v993
    %3903 = vmatprep.subr.bf16.mxu0 %v998
    %3904 = vmatpush1.bf16.msra.mxu0 %v997
    %3905 = vmatprep.subr.bf16.mxu0 %v1002
    %3906 = vmatpush1.bf16.msra.mxu0 %v1001
    %3907 = vmatprep.subr.bf16.mxu0 0
    %3908 = vmatpush1.bf16.msra.mxu0 0
    %3909 = vmatprep.subr.bf16.mxu0 0
    %3910 = vmatpush1.bf16.msra.mxu0 0
    %3911 = vmatprep.subr.bf16.mxu0 0
    %3912 = vmatpush1.bf16.msra.mxu0 0
    %3913 = vmatprep.subr.bf16.mxu0 0
    %3914 = vmatpush1.bf16.msra.mxu0 0
    %3915 = vmatprep.subr.bf16.mxu0 0
    %3916 = vmatpush1.bf16.msra.mxu0 0
    %3917 = vmatprep.subr.bf16.mxu0 0
    %3918 = vmatpush1.bf16.msra.mxu0 0
    %3919 = vmatprep.subr.bf16.mxu0 0
    %3920 = vmatpush1.bf16.msra.mxu0 0
    %3921 = vmatprep.subr.bf16.mxu0 0
    %3922 = vmatpush1.bf16.msra.mxu0 0
    %3923 = vmatprep.mubr.bf16.mxu0 0
    %3924 = vmatmul.mubr.bf16.gmra.mrb[0].mxu0 %v3602
    %v3925 = vpop.f32.mrb[0].mxu0
    %v3926 = vadd.f32 0.0, %v3925
    %v3927 = vpop.f32.mrb[0].mxu0
    %v3928 = vadd.f32 0.0, %v3927
    %v3929 = vpop.f32.mrb[0].mxu0
    %v3930 = vpop.f32.mrb[0].mxu0
    %3931 = vdwg.mxu0
    %3932 = vmatprep.subr.bf16.mxu0 %v976
    %3933 = vmatpush1.bf16.msra.mxu0 %v975
    %3934 = vmatprep.subr.bf16.mxu0 %v980
    %3935 = vmatpush1.bf16.msra.mxu0 %v979
    %3936 = vmatprep.subr.bf16.mxu0 %v984
    %3937 = vmatpush1.bf16.msra.mxu0 %v983
    %3938 = vmatprep.subr.bf16.mxu0 %v988
    %3939 = vmatpush1.bf16.msra.mxu0 %v987
    %3940 = vmatprep.subr.bf16.mxu0 %v992
    %3941 = vmatpush1.bf16.msra.mxu0 %v991
    %3942 = vmatprep.subr.bf16.mxu0 %v996
    %3943 = vmatpush1.bf16.msra.mxu0 %v995
    %3944 = vmatprep.subr.bf16.mxu0 %v1000
    %3945 = vmatpush1.bf16.msra.mxu0 %v999
    %3946 = vmatprep.subr.bf16.mxu0 %v1004
    %3947 = vmatpush1.bf16.msra.mxu0 %v1003
    %3948 = vmatprep.subr.bf16.mxu0 0
    %3949 = vmatpush1.bf16.msra.mxu0 0
    %3950 = vmatprep.subr.bf16.mxu0 0
    %3951 = vmatpush1.bf16.msra.mxu0 0
    %3952 = vmatprep.subr.bf16.mxu0 0
    %3953 = vmatpush1.bf16.msra.mxu0 0
    %3954 = vmatprep.subr.bf16.mxu0 0
    %3955 = vmatpush1.bf16.msra.mxu0 0
    %3956 = vmatprep.subr.bf16.mxu0 0
    %3957 = vmatpush1.bf16.msra.mxu0 0
    %3958 = vmatprep.subr.bf16.mxu0 0
    %3959 = vmatpush1.bf16.msra.mxu0 0
    %3960 = vmatprep.subr.bf16.mxu0 0
    %3961 = vmatpush1.bf16.msra.mxu0 0
    %3962 = vmatprep.subr.bf16.mxu0 0
    %3963 = vmatpush1.bf16.msra.mxu0 0
    %3964 = vmatprep.mubr.bf16.mxu0 0
    %3965 = vmatmul.mubr.bf16.gmra.mrb[0].mxu0 %v3602
    %v3966 = vpop.f32.mrb[0].mxu0
    %v3967 = vadd.f32 0.0, %v3966
    %v3968 = vpop.f32.mrb[0].mxu0
    %v3969 = vadd.f32 0.0, %v3968
    %v3970 = vpop.f32.mrb[0].mxu0
    %v3971 = vpop.f32.mrb[0].mxu0
    %3972 = vdwg.mxu0
    %3973 = vmatprep.subr.bf16.mxu0 %v1216
    %3974 = vmatpush1.bf16.msra.mxu0 %v1215
    %3975 = vmatprep.subr.bf16.mxu0 %v1220
    %3976 = vmatpush1.bf16.msra.mxu0 %v1219
    %3977 = vmatprep.subr.bf16.mxu0 %v1224
    %3978 = vmatpush1.bf16.msra.mxu0 %v1223
    %3979 = vmatprep.subr.bf16.mxu0 %v1228
    %3980 = vmatpush1.bf16.msra.mxu0 %v1227
    %3981 = vmatprep.subr.bf16.mxu0 %v1232
    %3982 = vmatpush1.bf16.msra.mxu0 %v1231
    %3983 = vmatprep.subr.bf16.mxu0 %v1236
    %3984 = vmatpush1.bf16.msra.mxu0 %v1235
    %3985 = vmatprep.subr.bf16.mxu0 %v1240
    %3986 = vmatpush1.bf16.msra.mxu0 %v1239
    %3987 = vmatprep.subr.bf16.mxu0 %v1244
    %3988 = vmatpush1.bf16.msra.mxu0 %v1243
    %3989 = vmatprep.subr.bf16.mxu0 0
    %3990 = vmatpush1.bf16.msra.mxu0 0
    %3991 = vmatprep.subr.bf16.mxu0 0
    %3992 = vmatpush1.bf16.msra.mxu0 0
    %3993 = vmatprep.subr.bf16.mxu0 0
    %3994 = vmatpush1.bf16.msra.mxu0 0
    %3995 = vmatprep.subr.bf16.mxu0 0
    %3996 = vmatpush1.bf16.msra.mxu0 0
    %3997 = vmatprep.subr.bf16.mxu0 0
    %3998 = vmatpush1.bf16.msra.mxu0 0
    %3999 = vmatprep.subr.bf16.mxu0 0
    %4000 = vmatpush1.bf16.msra.mxu0 0
    %4001 = vmatprep.subr.bf16.mxu0 0
    %4002 = vmatpush1.bf16.msra.mxu0 0
    %4003 = vmatprep.subr.bf16.mxu0 0
    %4004 = vmatpush1.bf16.msra.mxu0 0
    %4005 = vmatprep.mubr.bf16.mxu0 0
    %4006 = vmatmul.mubr.bf16.gmra.mrb[0].mxu0 %v3890
    %v4007 = vpop.f32.mrb[0].mxu0
    %v4008 = vadd.f32 %v3926, %v4007
    %v4009 = vpop.f32.mrb[0].mxu0
    %v4010 = vadd.f32 %v3928, %v4009
    %v4011 = vpop.f32.mrb[0].mxu0
    %v4012 = vpop.f32.mrb[0].mxu0
    %4013 = vdwg.mxu0
    %4014 = vmatprep.subr.bf16.mxu0 %v1218
    %4015 = vmatpush1.bf16.msra.mxu0 %v1217
    %4016 = vmatprep.subr.bf16.mxu0 %v1222
    %4017 = vmatpush1.bf16.msra.mxu0 %v1221
    %4018 = vmatprep.subr.bf16.mxu0 %v1226
    %4019 = vmatpush1.bf16.msra.mxu0 %v1225
    %4020 = vmatprep.subr.bf16.mxu0 %v1230
    %4021 = vmatpush1.bf16.msra.mxu0 %v1229
    %4022 = vmatprep.subr.bf16.mxu0 %v1234
    %4023 = vmatpush1.bf16.msra.mxu0 %v1233
    %4024 = vmatprep.subr.bf16.mxu0 %v1238
    %4025 = vmatpush1.bf16.msra.mxu0 %v1237
    %4026 = vmatprep.subr.bf16.mxu0 %v1242
    %4027 = vmatpush1.bf16.msra.mxu0 %v1241
    %4028 = vmatprep.subr.bf16.mxu0 %v1246
    %4029 = vmatpush1.bf16.msra.mxu0 %v1245
    %4030 = vmatprep.subr.bf16.mxu0 0
    %4031 = vmatpush1.bf16.msra.mxu0 0
    %4032 = vmatprep.subr.bf16.mxu0 0
    %4033 = vmatpush1.bf16.msra.mxu0 0
    %4034 = vmatprep.subr.bf16.mxu0 0
    %4035 = vmatpush1.bf16.msra.mxu0 0
    %4036 = vmatprep.subr.bf16.mxu0 0
    %4037 = vmatpush1.bf16.msra.mxu0 0
    %4038 = vmatprep.subr.bf16.mxu0 0
    %4039 = vmatpush1.bf16.msra.mxu0 0
    %4040 = vmatprep.subr.bf16.mxu0 0
    %4041 = vmatpush1.bf16.msra.mxu0 0
    %4042 = vmatprep.subr.bf16.mxu0 0
    %4043 = vmatpush1.bf16.msra.mxu0 0
    %4044 = vmatprep.subr.bf16.mxu0 0
    %4045 = vmatpush1.bf16.msra.mxu0 0
    %4046 = vmatprep.mubr.bf16.mxu0 0
    %4047 = vmatmul.mubr.bf16.gmra.mrb[0].mxu0 %v3890
    %v4048 = vpop.f32.mrb[0].mxu0
    %v4049 = vadd.f32 %v3967, %v4048
    %v4050 = vpop.f32.mrb[0].mxu0
    %v4051 = vadd.f32 %v3969, %v4050
    %v4052 = vpop.f32.mrb[0].mxu0
    %v4053 = vpop.f32.mrb[0].mxu0
    %4054 = vdwg.mxu0
    %v4055 = vadd.f32 %v4008, %v577
    %v4056 = vadd.f32 %v4010, %v581
    %v4057 = vadd.f32 %v4049, %v585
    %v4058 = vadd.f32 %v4051, %v589
    %v4059 = vmul.f32 %v4055, 0.5
    %v4060 = vmul.f32 %v4056, 0.5
    %v4061 = vmul.f32 %v4057, 0.5
    %v4062 = vtanh.pop %v4059
    %v4063 = vtanh.pop %v4060
    %v4064 = vtanh.pop %v4061
    %v4065 = vmul.f32 %v4062, 0.5
    %v4066 = vmul.f32 %v4063, 0.5
    %v4067 = vmul.f32 %v4064, 0.5
    %v4068 = vadd.f32 %v4065, 0.5
    %v4069 = vadd.f32 %v4066, 0.5
    %v4070 = vadd.f32 %v4067, 0.5
    %v4071 = vtanh.pop %v4058
    %v4072 = vmul.f32 %v4069, %v3599
    %v4073 = vmul.f32 %v4068, %v4071
    %v4074 = vadd.f32 %v4072, %v4073
    %v4075 = vtanh.pop %v4074
    %v4076 = vmul.f32 %v4070, %v4075
    %v4077 = vpack.c.bf16 %v4076, %v4076
    %v4078 = vpack.c.bf16 %v3789, %v3789
    %4079 = vmatprep.subr.bf16.mxu0 %v1481
    %4080 = vmatpush1.bf16.msra.mxu0 %v1480
    %4081 = vmatprep.subr.bf16.mxu0 %v1485
    %4082 = vmatpush1.bf16.msra.mxu0 %v1484
    %4083 = vmatprep.subr.bf16.mxu0 %v1489
    %4084 = vmatpush1.bf16.msra.mxu0 %v1488
    %4085 = vmatprep.subr.bf16.mxu0 %v1493
    %4086 = vmatpush1.bf16.msra.mxu0 %v1492
    %4087 = vmatprep.subr.bf16.mxu0 %v1497
    %4088 = vmatpush1.bf16.msra.mxu0 %v1496
    %4089 = vmatprep.subr.bf16.mxu0 %v1501
    %4090 = vmatpush1.bf16.msra.mxu0 %v1500
    %4091 = vmatprep.subr.bf16.mxu0 %v1505
    %4092 = vmatpush1.bf16.msra.mxu0 %v1504
    %4093 = vmatprep.subr.bf16.mxu0 %v1509
    %4094 = vmatpush1.bf16.msra.mxu0 %v1508
    %4095 = vmatprep.subr.bf16.mxu0 0
    %4096 = vmatpush1.bf16.msra.mxu0 0
    %4097 = vmatprep.subr.bf16.mxu0 0
    %4098 = vmatpush1.bf16.msra.mxu0 0
    %4099 = vmatprep.subr.bf16.mxu0 0
    %4100 = vmatpush1.bf16.msra.mxu0 0
    %4101 = vmatprep.subr.bf16.mxu0 0
    %4102 = vmatpush1.bf16.msra.mxu0 0
    %4103 = vmatprep.subr.bf16.mxu0 0
    %4104 = vmatpush1.bf16.msra.mxu0 0
    %4105 = vmatprep.subr.bf16.mxu0 0
    %4106 = vmatpush1.bf16.msra.mxu0 0
    %4107 = vmatprep.subr.bf16.mxu0 0
    %4108 = vmatpush1.bf16.msra.mxu0 0
    %4109 = vmatprep.subr.bf16.mxu0 0
    %4110 = vmatpush1.bf16.msra.mxu0 0
    %4111 = vmatprep.mubr.bf16.mxu0 0
    %4112 = vmatmul.mubr.bf16.gmra.mrb[0].mxu0 %v4078
    %v4113 = vpop.f32.mrb[0].mxu0
    %v4114 = vadd.f32 0.0, %v4113
    %v4115 = vpop.f32.mrb[0].mxu0
    %v4116 = vadd.f32 0.0, %v4115
    %v4117 = vpop.f32.mrb[0].mxu0
    %v4118 = vpop.f32.mrb[0].mxu0
    %4119 = vdwg.mxu0
    %4120 = vmatprep.subr.bf16.mxu0 %v1483
    %4121 = vmatpush1.bf16.msra.mxu0 %v1482
    %4122 = vmatprep.subr.bf16.mxu0 %v1487
    %4123 = vmatpush1.bf16.msra.mxu0 %v1486
    %4124 = vmatprep.subr.bf16.mxu0 %v1491
    %4125 = vmatpush1.bf16.msra.mxu0 %v1490
    %4126 = vmatprep.subr.bf16.mxu0 %v1495
    %4127 = vmatpush1.bf16.msra.mxu0 %v1494
    %4128 = vmatprep.subr.bf16.mxu0 %v1499
    %4129 = vmatpush1.bf16.msra.mxu0 %v1498
    %4130 = vmatprep.subr.bf16.mxu0 %v1503
    %4131 = vmatpush1.bf16.msra.mxu0 %v1502
    %4132 = vmatprep.subr.bf16.mxu0 %v1507
    %4133 = vmatpush1.bf16.msra.mxu0 %v1506
    %4134 = vmatprep.subr.bf16.mxu0 %v1511
    %4135 = vmatpush1.bf16.msra.mxu0 %v1510
    %4136 = vmatprep.subr.bf16.mxu0 0
    %4137 = vmatpush1.bf16.msra.mxu0 0
    %4138 = vmatprep.subr.bf16.mxu0 0
    %4139 = vmatpush1.bf16.msra.mxu0 0
    %4140 = vmatprep.subr.bf16.mxu0 0
    %4141 = vmatpush1.bf16.msra.mxu0 0
    %4142 = vmatprep.subr.bf16.mxu0 0
    %4143 = vmatpush1.bf16.msra.mxu0 0
    %4144 = vmatprep.subr.bf16.mxu0 0
    %4145 = vmatpush1.bf16.msra.mxu0 0
    %4146 = vmatprep.subr.bf16.mxu0 0
    %4147 = vmatpush1.bf16.msra.mxu0 0
    %4148 = vmatprep.subr.bf16.mxu0 0
    %4149 = vmatpush1.bf16.msra.mxu0 0
    %4150 = vmatprep.subr.bf16.mxu0 0
    %4151 = vmatpush1.bf16.msra.mxu0 0
    %4152 = vmatprep.mubr.bf16.mxu0 0
    %4153 = vmatmul.mubr.bf16.gmra.mrb[0].mxu0 %v4078
    %v4154 = vpop.f32.mrb[0].mxu0
    %v4155 = vadd.f32 0.0, %v4154
    %v4156 = vpop.f32.mrb[0].mxu0
    %v4157 = vadd.f32 0.0, %v4156
    %v4158 = vpop.f32.mrb[0].mxu0
    %v4159 = vpop.f32.mrb[0].mxu0
    %4160 = vdwg.mxu0
    %4161 = vmatprep.subr.bf16.mxu0 %v1723
    %4162 = vmatpush1.bf16.msra.mxu0 %v1722
    %4163 = vmatprep.subr.bf16.mxu0 %v1727
    %4164 = vmatpush1.bf16.msra.mxu0 %v1726
    %4165 = vmatprep.subr.bf16.mxu0 %v1731
    %4166 = vmatpush1.bf16.msra.mxu0 %v1730
    %4167 = vmatprep.subr.bf16.mxu0 %v1735
    %4168 = vmatpush1.bf16.msra.mxu0 %v1734
    %4169 = vmatprep.subr.bf16.mxu0 %v1739
    %4170 = vmatpush1.bf16.msra.mxu0 %v1738
    %4171 = vmatprep.subr.bf16.mxu0 %v1743
    %4172 = vmatpush1.bf16.msra.mxu0 %v1742
    %4173 = vmatprep.subr.bf16.mxu0 %v1747
    %4174 = vmatpush1.bf16.msra.mxu0 %v1746
    %4175 = vmatprep.subr.bf16.mxu0 %v1751
    %4176 = vmatpush1.bf16.msra.mxu0 %v1750
    %4177 = vmatprep.subr.bf16.mxu0 0
    %4178 = vmatpush1.bf16.msra.mxu0 0
    %4179 = vmatprep.subr.bf16.mxu0 0
    %4180 = vmatpush1.bf16.msra.mxu0 0
    %4181 = vmatprep.subr.bf16.mxu0 0
    %4182 = vmatpush1.bf16.msra.mxu0 0
    %4183 = vmatprep.subr.bf16.mxu0 0
    %4184 = vmatpush1.bf16.msra.mxu0 0
    %4185 = vmatprep.subr.bf16.mxu0 0
    %4186 = vmatpush1.bf16.msra.mxu0 0
    %4187 = vmatprep.subr.bf16.mxu0 0
    %4188 = vmatpush1.bf16.msra.mxu0 0
    %4189 = vmatprep.subr.bf16.mxu0 0
    %4190 = vmatpush1.bf16.msra.mxu0 0
    %4191 = vmatprep.subr.bf16.mxu0 0
    %4192 = vmatpush1.bf16.msra.mxu0 0
    %4193 = vmatprep.mubr.bf16.mxu0 0
    %4194 = vmatmul.mubr.bf16.gmra.mrb[0].mxu0 %v4077
    %v4195 = vpop.f32.mrb[0].mxu0
    %v4196 = vadd.f32 %v4114, %v4195
    %v4197 = vpop.f32.mrb[0].mxu0
    %v4198 = vadd.f32 %v4116, %v4197
    %v4199 = vpop.f32.mrb[0].mxu0
    %v4200 = vpop.f32.mrb[0].mxu0
    %4201 = vdwg.mxu0
    %4202 = vmatprep.subr.bf16.mxu0 %v1725
    %4203 = vmatpush1.bf16.msra.mxu0 %v1724
    %4204 = vmatprep.subr.bf16.mxu0 %v1729
    %4205 = vmatpush1.bf16.msra.mxu0 %v1728
    %4206 = vmatprep.subr.bf16.mxu0 %v1733
    %4207 = vmatpush1.bf16.msra.mxu0 %v1732
    %4208 = vmatprep.subr.bf16.mxu0 %v1737
    %4209 = vmatpush1.bf16.msra.mxu0 %v1736
    %4210 = vmatprep.subr.bf16.mxu0 %v1741
    %4211 = vmatpush1.bf16.msra.mxu0 %v1740
    %4212 = vmatprep.subr.bf16.mxu0 %v1745
    %4213 = vmatpush1.bf16.msra.mxu0 %v1744
    %4214 = vmatprep.subr.bf16.mxu0 %v1749
    %4215 = vmatpush1.bf16.msra.mxu0 %v1748
    %4216 = vmatprep.subr.bf16.mxu0 %v1753
    %4217 = vmatpush1.bf16.msra.mxu0 %v1752
    %4218 = vmatprep.subr.bf16.mxu0 0
    %4219 = vmatpush1.bf16.msra.mxu0 0
    %4220 = vmatprep.subr.bf16.mxu0 0
    %4221 = vmatpush1.bf16.msra.mxu0 0
    %4222 = vmatprep.subr.bf16.mxu0 0
    %4223 = vmatpush1.bf16.msra.mxu0 0
    %4224 = vmatprep.subr.bf16.mxu0 0
    %4225 = vmatpush1.bf16.msra.mxu0 0
    %4226 = vmatprep.subr.bf16.mxu0 0
    %4227 = vmatpush1.bf16.msra.mxu0 0
    %4228 = vmatprep.subr.bf16.mxu0 0
    %4229 = vmatpush1.bf16.msra.mxu0 0
    %4230 = vmatprep.subr.bf16.mxu0 0
    %4231 = vmatpush1.bf16.msra.mxu0 0
    %4232 = vmatprep.subr.bf16.mxu0 0
    %4233 = vmatpush1.bf16.msra.mxu0 0
    %4234 = vmatprep.mubr.bf16.mxu0 0
    %4235 = vmatmul.mubr.bf16.gmra.mrb[0].mxu0 %v4077
    %v4236 = vpop.f32.mrb[0].mxu0
    %v4237 = vadd.f32 %v4155, %v4236
    %v4238 = vpop.f32.mrb[0].mxu0
    %v4239 = vadd.f32 %v4157, %v4238
    %v4240 = vpop.f32.mrb[0].mxu0
    %v4241 = vpop.f32.mrb[0].mxu0
    %4242 = vdwg.mxu0
    %v4243 = vadd.f32 %v4196, %v599
    %v4244 = vadd.f32 %v4198, %v603
    %v4245 = vadd.f32 %v4237, %v607
    %v4246 = vadd.f32 %v4239, %v611
    %v4247 = vmul.f32 %v4243, 0.5
    %v4248 = vmul.f32 %v4244, 0.5
    %v4249 = vmul.f32 %v4245, 0.5
    %v4250 = vtanh.pop %v4247
    %v4251 = vtanh.pop %v4248
    %v4252 = vtanh.pop %v4249
    %v4253 = vmul.f32 %v4250, 0.5
    %v4254 = vmul.f32 %v4251, 0.5
    %v4255 = vmul.f32 %v4252, 0.5
    %v4256 = vadd.f32 %v4253, 0.5
    %v4257 = vadd.f32 %v4254, 0.5
    %v4258 = vadd.f32 %v4255, 0.5
    %v4259 = vtanh.pop %v4246
    %v4260 = vmul.f32 %v4257, %v3787
    %v4261 = vmul.f32 %v4256, %v4259
    %v4262 = vadd.f32 %v4260, %v4261
    %v4263 = vtanh.pop %v4262
    %v4264 = vmul.f32 %v4258, %v4263
    %4265 = vmatprep.subr.bf16.mxu0 %v713
    %4266 = vmatpush1.bf16.msra.mxu0 %v712
    %4267 = vmatprep.subr.bf16.mxu0 %v717
    %4268 = vmatpush1.bf16.msra.mxu0 %v716
    %4269 = vmatprep.subr.bf16.mxu0 %v721
    %4270 = vmatpush1.bf16.msra.mxu0 %v720
    %4271 = vmatprep.subr.bf16.mxu0 %v725
    %4272 = vmatpush1.bf16.msra.mxu0 %v724
    %4273 = vmatprep.subr.bf16.mxu0 %v729
    %4274 = vmatpush1.bf16.msra.mxu0 %v728
    %4275 = vmatprep.subr.bf16.mxu0 %v733
    %4276 = vmatpush1.bf16.msra.mxu0 %v732
    %4277 = vmatprep.subr.bf16.mxu0 %v737
    %4278 = vmatpush1.bf16.msra.mxu0 %v736
    %4279 = vmatprep.subr.bf16.mxu0 %v741
    %4280 = vmatpush1.bf16.msra.mxu0 %v740
    %4281 = vmatprep.subr.bf16.mxu0 0
    %4282 = vmatpush1.bf16.msra.mxu0 0
    %4283 = vmatprep.subr.bf16.mxu0 0
    %4284 = vmatpush1.bf16.msra.mxu0 0
    %4285 = vmatprep.subr.bf16.mxu0 0
    %4286 = vmatpush1.bf16.msra.mxu0 0
    %4287 = vmatprep.subr.bf16.mxu0 0
    %4288 = vmatpush1.bf16.msra.mxu0 0
    %4289 = vmatprep.subr.bf16.mxu0 0
    %4290 = vmatpush1.bf16.msra.mxu0 0
    %4291 = vmatprep.subr.bf16.mxu0 0
    %4292 = vmatpush1.bf16.msra.mxu0 0
    %4293 = vmatprep.subr.bf16.mxu0 0
    %4294 = vmatpush1.bf16.msra.mxu0 0
    %4295 = vmatprep.subr.bf16.mxu0 0
    %4296 = vmatpush1.bf16.msra.mxu0 0
    %4297 = vmatprep.mubr.bf16.mxu0 0
    %4298 = vmatmul.mubr.bf16.gmra.mrb[0].mxu0 %v3890
    %v4299 = vpop.f32.mrb[0].mxu0
    %v4300 = vadd.f32 %v331, %v4299
    %v4301 = vpop.f32.mrb[0].mxu0
    %v4302 = vadd.f32 %v333, %v4301
    %v4303 = vpop.f32.mrb[0].mxu0
    %v4304 = vpop.f32.mrb[0].mxu0
    %4305 = vdwg.mxu0
    %4306 = vmatprep.subr.bf16.mxu0 %v715
    %4307 = vmatpush1.bf16.msra.mxu0 %v714
    %4308 = vmatprep.subr.bf16.mxu0 %v719
    %4309 = vmatpush1.bf16.msra.mxu0 %v718
    %4310 = vmatprep.subr.bf16.mxu0 %v723
    %4311 = vmatpush1.bf16.msra.mxu0 %v722
    %4312 = vmatprep.subr.bf16.mxu0 %v727
    %4313 = vmatpush1.bf16.msra.mxu0 %v726
    %4314 = vmatprep.subr.bf16.mxu0 %v731
    %4315 = vmatpush1.bf16.msra.mxu0 %v730
    %4316 = vmatprep.subr.bf16.mxu0 %v735
    %4317 = vmatpush1.bf16.msra.mxu0 %v734
    %4318 = vmatprep.subr.bf16.mxu0 %v739
    %4319 = vmatpush1.bf16.msra.mxu0 %v738
    %4320 = vmatprep.subr.bf16.mxu0 %v743
    %4321 = vmatpush1.bf16.msra.mxu0 %v742
    %4322 = vmatprep.subr.bf16.mxu0 0
    %4323 = vmatpush1.bf16.msra.mxu0 0
    %4324 = vmatprep.subr.bf16.mxu0 0
    %4325 = vmatpush1.bf16.msra.mxu0 0
    %4326 = vmatprep.subr.bf16.mxu0 0
    %4327 = vmatpush1.bf16.msra.mxu0 0
    %4328 = vmatprep.subr.bf16.mxu0 0
    %4329 = vmatpush1.bf16.msra.mxu0 0
    %4330 = vmatprep.subr.bf16.mxu0 0
    %4331 = vmatpush1.bf16.msra.mxu0 0
    %4332 = vmatprep.subr.bf16.mxu0 0
    %4333 = vmatpush1.bf16.msra.mxu0 0
    %4334 = vmatprep.subr.bf16.mxu0 0
    %4335 = vmatpush1.bf16.msra.mxu0 0
    %4336 = vmatprep.subr.bf16.mxu0 0
    %4337 = vmatpush1.bf16.msra.mxu0 0
    %4338 = vmatprep.mubr.bf16.mxu0 0
    %4339 = vmatmul.mubr.bf16.gmra.mrb[0].mxu0 %v3890
    %v4340 = vpop.f32.mrb[0].mxu0
    %v4341 = vadd.f32 %v404, %v4340
    %v4342 = vpop.f32.mrb[0].mxu0
    %v4343 = vadd.f32 %v406, %v4342
    %v4344 = vpop.f32.mrb[0].mxu0
    %v4345 = vpop.f32.mrb[0].mxu0
    %4346 = vdwg.mxu0
    %v4347 = vmul.f32 %v4300, 0.5
    %v4348 = vmul.f32 %v4302, 0.5
    %v4349 = vmul.f32 %v4341, 0.5
    %v4350 = vtanh.pop %v4347
    %v4351 = vtanh.pop %v4348
    %v4352 = vtanh.pop %v4349
    %v4353 = vmul.f32 %v4350, 0.5
    %v4354 = vmul.f32 %v4351, 0.5
    %v4355 = vmul.f32 %v4352, 0.5
    %v4356 = vadd.f32 %v4353, 0.5
    %v4357 = vadd.f32 %v4354, 0.5
    %v4358 = vadd.f32 %v4355, 0.5
    %v4359 = vtanh.pop %v4343
    %v4360 = vmul.f32 %v4357, %v3887
    %v4361 = vmul.f32 %v4356, %v4359
    %v4362 = vadd.f32 %v4360, %v4361
    %v4363 = vtanh.pop %v4362
    %v4364 = vmul.f32 %v4358, %v4363
    %v4365 = vpack.c.bf16 %v4364, %v4364
    %4366 = vmatprep.subr.bf16.mxu0 %v974
    %4367 = vmatpush1.bf16.msra.mxu0 %v973
    %4368 = vmatprep.subr.bf16.mxu0 %v978
    %4369 = vmatpush1.bf16.msra.mxu0 %v977
    %4370 = vmatprep.subr.bf16.mxu0 %v982
    %4371 = vmatpush1.bf16.msra.mxu0 %v981
    %4372 = vmatprep.subr.bf16.mxu0 %v986
    %4373 = vmatpush1.bf16.msra.mxu0 %v985
    %4374 = vmatprep.subr.bf16.mxu0 %v990
    %4375 = vmatpush1.bf16.msra.mxu0 %v989
    %4376 = vmatprep.subr.bf16.mxu0 %v994
    %4377 = vmatpush1.bf16.msra.mxu0 %v993
    %4378 = vmatprep.subr.bf16.mxu0 %v998
    %4379 = vmatpush1.bf16.msra.mxu0 %v997
    %4380 = vmatprep.subr.bf16.mxu0 %v1002
    %4381 = vmatpush1.bf16.msra.mxu0 %v1001
    %4382 = vmatprep.subr.bf16.mxu0 0
    %4383 = vmatpush1.bf16.msra.mxu0 0
    %4384 = vmatprep.subr.bf16.mxu0 0
    %4385 = vmatpush1.bf16.msra.mxu0 0
    %4386 = vmatprep.subr.bf16.mxu0 0
    %4387 = vmatpush1.bf16.msra.mxu0 0
    %4388 = vmatprep.subr.bf16.mxu0 0
    %4389 = vmatpush1.bf16.msra.mxu0 0
    %4390 = vmatprep.subr.bf16.mxu0 0
    %4391 = vmatpush1.bf16.msra.mxu0 0
    %4392 = vmatprep.subr.bf16.mxu0 0
    %4393 = vmatpush1.bf16.msra.mxu0 0
    %4394 = vmatprep.subr.bf16.mxu0 0
    %4395 = vmatpush1.bf16.msra.mxu0 0
    %4396 = vmatprep.subr.bf16.mxu0 0
    %4397 = vmatpush1.bf16.msra.mxu0 0
    %4398 = vmatprep.mubr.bf16.mxu0 0
    %4399 = vmatmul.mubr.bf16.gmra.mrb[0].mxu0 %v4077
    %v4400 = vpop.f32.mrb[0].mxu0
    %v4401 = vadd.f32 0.0, %v4400
    %v4402 = vpop.f32.mrb[0].mxu0
    %v4403 = vadd.f32 0.0, %v4402
    %v4404 = vpop.f32.mrb[0].mxu0
    %v4405 = vpop.f32.mrb[0].mxu0
    %4406 = vdwg.mxu0
    %4407 = vmatprep.subr.bf16.mxu0 %v976
    %4408 = vmatpush1.bf16.msra.mxu0 %v975
    %4409 = vmatprep.subr.bf16.mxu0 %v980
    %4410 = vmatpush1.bf16.msra.mxu0 %v979
    %4411 = vmatprep.subr.bf16.mxu0 %v984
    %4412 = vmatpush1.bf16.msra.mxu0 %v983
    %4413 = vmatprep.subr.bf16.mxu0 %v988
    %4414 = vmatpush1.bf16.msra.mxu0 %v987
    %4415 = vmatprep.subr.bf16.mxu0 %v992
    %4416 = vmatpush1.bf16.msra.mxu0 %v991
    %4417 = vmatprep.subr.bf16.mxu0 %v996
    %4418 = vmatpush1.bf16.msra.mxu0 %v995
    %4419 = vmatprep.subr.bf16.mxu0 %v1000
    %4420 = vmatpush1.bf16.msra.mxu0 %v999
    %4421 = vmatprep.subr.bf16.mxu0 %v1004
    %4422 = vmatpush1.bf16.msra.mxu0 %v1003
    %4423 = vmatprep.subr.bf16.mxu0 0
    %4424 = vmatpush1.bf16.msra.mxu0 0
    %4425 = vmatprep.subr.bf16.mxu0 0
    %4426 = vmatpush1.bf16.msra.mxu0 0
    %4427 = vmatprep.subr.bf16.mxu0 0
    %4428 = vmatpush1.bf16.msra.mxu0 0
    %4429 = vmatprep.subr.bf16.mxu0 0
    %4430 = vmatpush1.bf16.msra.mxu0 0
    %4431 = vmatprep.subr.bf16.mxu0 0
    %4432 = vmatpush1.bf16.msra.mxu0 0
    %4433 = vmatprep.subr.bf16.mxu0 0
    %4434 = vmatpush1.bf16.msra.mxu0 0
    %4435 = vmatprep.subr.bf16.mxu0 0
    %4436 = vmatpush1.bf16.msra.mxu0 0
    %4437 = vmatprep.subr.bf16.mxu0 0
    %4438 = vmatpush1.bf16.msra.mxu0 0
    %4439 = vmatprep.mubr.bf16.mxu0 0
    %4440 = vmatmul.mubr.bf16.gmra.mrb[0].mxu0 %v4077
    %v4441 = vpop.f32.mrb[0].mxu0
    %v4442 = vadd.f32 0.0, %v4441
    %v4443 = vpop.f32.mrb[0].mxu0
    %v4444 = vadd.f32 0.0, %v4443
    %v4445 = vpop.f32.mrb[0].mxu0
    %v4446 = vpop.f32.mrb[0].mxu0
    %4447 = vdwg.mxu0
    %4448 = vmatprep.subr.bf16.mxu0 %v1216
    %4449 = vmatpush1.bf16.msra.mxu0 %v1215
    %4450 = vmatprep.subr.bf16.mxu0 %v1220
    %4451 = vmatpush1.bf16.msra.mxu0 %v1219
    %4452 = vmatprep.subr.bf16.mxu0 %v1224
    %4453 = vmatpush1.bf16.msra.mxu0 %v1223
    %4454 = vmatprep.subr.bf16.mxu0 %v1228
    %4455 = vmatpush1.bf16.msra.mxu0 %v1227
    %4456 = vmatprep.subr.bf16.mxu0 %v1232
    %4457 = vmatpush1.bf16.msra.mxu0 %v1231
    %4458 = vmatprep.subr.bf16.mxu0 %v1236
    %4459 = vmatpush1.bf16.msra.mxu0 %v1235
    %4460 = vmatprep.subr.bf16.mxu0 %v1240
    %4461 = vmatpush1.bf16.msra.mxu0 %v1239
    %4462 = vmatprep.subr.bf16.mxu0 %v1244
    %4463 = vmatpush1.bf16.msra.mxu0 %v1243
    %4464 = vmatprep.subr.bf16.mxu0 0
    %4465 = vmatpush1.bf16.msra.mxu0 0
    %4466 = vmatprep.subr.bf16.mxu0 0
    %4467 = vmatpush1.bf16.msra.mxu0 0
    %4468 = vmatprep.subr.bf16.mxu0 0
    %4469 = vmatpush1.bf16.msra.mxu0 0
    %4470 = vmatprep.subr.bf16.mxu0 0
    %4471 = vmatpush1.bf16.msra.mxu0 0
    %4472 = vmatprep.subr.bf16.mxu0 0
    %4473 = vmatpush1.bf16.msra.mxu0 0
    %4474 = vmatprep.subr.bf16.mxu0 0
    %4475 = vmatpush1.bf16.msra.mxu0 0
    %4476 = vmatprep.subr.bf16.mxu0 0
    %4477 = vmatpush1.bf16.msra.mxu0 0
    %4478 = vmatprep.subr.bf16.mxu0 0
    %4479 = vmatpush1.bf16.msra.mxu0 0
    %4480 = vmatprep.mubr.bf16.mxu0 0
    %4481 = vmatmul.mubr.bf16.gmra.mrb[0].mxu0 %v4365
    %v4482 = vpop.f32.mrb[0].mxu0
    %v4483 = vadd.f32 %v4401, %v4482
    %v4484 = vpop.f32.mrb[0].mxu0
    %v4485 = vadd.f32 %v4403, %v4484
    %v4486 = vpop.f32.mrb[0].mxu0
    %v4487 = vpop.f32.mrb[0].mxu0
    %4488 = vdwg.mxu0
    %4489 = vmatprep.subr.bf16.mxu0 %v1218
    %4490 = vmatpush1.bf16.msra.mxu0 %v1217
    %4491 = vmatprep.subr.bf16.mxu0 %v1222
    %4492 = vmatpush1.bf16.msra.mxu0 %v1221
    %4493 = vmatprep.subr.bf16.mxu0 %v1226
    %4494 = vmatpush1.bf16.msra.mxu0 %v1225
    %4495 = vmatprep.subr.bf16.mxu0 %v1230
    %4496 = vmatpush1.bf16.msra.mxu0 %v1229
    %4497 = vmatprep.subr.bf16.mxu0 %v1234
    %4498 = vmatpush1.bf16.msra.mxu0 %v1233
    %4499 = vmatprep.subr.bf16.mxu0 %v1238
    %4500 = vmatpush1.bf16.msra.mxu0 %v1237
    %4501 = vmatprep.subr.bf16.mxu0 %v1242
    %4502 = vmatpush1.bf16.msra.mxu0 %v1241
    %4503 = vmatprep.subr.bf16.mxu0 %v1246
    %4504 = vmatpush1.bf16.msra.mxu0 %v1245
    %4505 = vmatprep.subr.bf16.mxu0 0
    %4506 = vmatpush1.bf16.msra.mxu0 0
    %4507 = vmatprep.subr.bf16.mxu0 0
    %4508 = vmatpush1.bf16.msra.mxu0 0
    %4509 = vmatprep.subr.bf16.mxu0 0
    %4510 = vmatpush1.bf16.msra.mxu0 0
    %4511 = vmatprep.subr.bf16.mxu0 0
    %4512 = vmatpush1.bf16.msra.mxu0 0
    %4513 = vmatprep.subr.bf16.mxu0 0
    %4514 = vmatpush1.bf16.msra.mxu0 0
    %4515 = vmatprep.subr.bf16.mxu0 0
    %4516 = vmatpush1.bf16.msra.mxu0 0
    %4517 = vmatprep.subr.bf16.mxu0 0
    %4518 = vmatpush1.bf16.msra.mxu0 0
    %4519 = vmatprep.subr.bf16.mxu0 0
    %4520 = vmatpush1.bf16.msra.mxu0 0
    %4521 = vmatprep.mubr.bf16.mxu0 0
    %4522 = vmatmul.mubr.bf16.gmra.mrb[0].mxu0 %v4365
    %v4523 = vpop.f32.mrb[0].mxu0
    %v4524 = vadd.f32 %v4442, %v4523
    %v4525 = vpop.f32.mrb[0].mxu0
    %v4526 = vadd.f32 %v4444, %v4525
    %v4527 = vpop.f32.mrb[0].mxu0
    %v4528 = vpop.f32.mrb[0].mxu0
    %4529 = vdwg.mxu0
    %v4530 = vadd.f32 %v4483, %v577
    %v4531 = vadd.f32 %v4485, %v581
    %v4532 = vadd.f32 %v4524, %v585
    %v4533 = vadd.f32 %v4526, %v589
    %v4534 = vmul.f32 %v4530, 0.5
    %v4535 = vmul.f32 %v4531, 0.5
    %v4536 = vmul.f32 %v4532, 0.5
    %v4537 = vtanh.pop %v4534
    %v4538 = vtanh.pop %v4535
    %v4539 = vtanh.pop %v4536
    %v4540 = vmul.f32 %v4537, 0.5
    %v4541 = vmul.f32 %v4538, 0.5
    %v4542 = vmul.f32 %v4539, 0.5
    %v4543 = vadd.f32 %v4540, 0.5
    %v4544 = vadd.f32 %v4541, 0.5
    %v4545 = vadd.f32 %v4542, 0.5
    %v4546 = vtanh.pop %v4533
    %v4547 = vmul.f32 %v4544, %v4074
    %v4548 = vmul.f32 %v4543, %v4546
    %v4549 = vadd.f32 %v4547, %v4548
    %v4550 = vtanh.pop %v4549
    %v4551 = vmul.f32 %v4545, %v4550
    %v4552 = vpack.c.bf16 %v4551, %v4551
    %v4553 = vpack.c.bf16 %v4264, %v4264
    %4554 = vmatprep.subr.bf16.mxu0 %v1481
    %4555 = vmatpush1.bf16.msra.mxu0 %v1480
    %4556 = vmatprep.subr.bf16.mxu0 %v1485
    %4557 = vmatpush1.bf16.msra.mxu0 %v1484
    %4558 = vmatprep.subr.bf16.mxu0 %v1489
    %4559 = vmatpush1.bf16.msra.mxu0 %v1488
    %4560 = vmatprep.subr.bf16.mxu0 %v1493
    %4561 = vmatpush1.bf16.msra.mxu0 %v1492
    %4562 = vmatprep.subr.bf16.mxu0 %v1497
    %4563 = vmatpush1.bf16.msra.mxu0 %v1496
    %4564 = vmatprep.subr.bf16.mxu0 %v1501
    %4565 = vmatpush1.bf16.msra.mxu0 %v1500
    %4566 = vmatprep.subr.bf16.mxu0 %v1505
    %4567 = vmatpush1.bf16.msra.mxu0 %v1504
    %4568 = vmatprep.subr.bf16.mxu0 %v1509
    %4569 = vmatpush1.bf16.msra.mxu0 %v1508
    %4570 = vmatprep.subr.bf16.mxu0 0
    %4571 = vmatpush1.bf16.msra.mxu0 0
    %4572 = vmatprep.subr.bf16.mxu0 0
    %4573 = vmatpush1.bf16.msra.mxu0 0
    %4574 = vmatprep.subr.bf16.mxu0 0
    %4575 = vmatpush1.bf16.msra.mxu0 0
    %4576 = vmatprep.subr.bf16.mxu0 0
    %4577 = vmatpush1.bf16.msra.mxu0 0
    %4578 = vmatprep.subr.bf16.mxu0 0
    %4579 = vmatpush1.bf16.msra.mxu0 0
    %4580 = vmatprep.subr.bf16.mxu0 0
    %4581 = vmatpush1.bf16.msra.mxu0 0
    %4582 = vmatprep.subr.bf16.mxu0 0
    %4583 = vmatpush1.bf16.msra.mxu0 0
    %4584 = vmatprep.subr.bf16.mxu0 0
    %4585 = vmatpush1.bf16.msra.mxu0 0
    %4586 = vmatprep.mubr.bf16.mxu0 0
    %4587 = vmatmul.mubr.bf16.gmra.mrb[0].mxu0 %v4553
    %v4588 = vpop.f32.mrb[0].mxu0
    %v4589 = vadd.f32 0.0, %v4588
    %v4590 = vpop.f32.mrb[0].mxu0
    %v4591 = vadd.f32 0.0, %v4590
    %v4592 = vpop.f32.mrb[0].mxu0
    %v4593 = vpop.f32.mrb[0].mxu0
    %4594 = vdwg.mxu0
    %4595 = vmatprep.subr.bf16.mxu0 %v1483
    %4596 = vmatpush1.bf16.msra.mxu0 %v1482
    %4597 = vmatprep.subr.bf16.mxu0 %v1487
    %4598 = vmatpush1.bf16.msra.mxu0 %v1486
    %4599 = vmatprep.subr.bf16.mxu0 %v1491
    %4600 = vmatpush1.bf16.msra.mxu0 %v1490
    %4601 = vmatprep.subr.bf16.mxu0 %v1495
    %4602 = vmatpush1.bf16.msra.mxu0 %v1494
    %4603 = vmatprep.subr.bf16.mxu0 %v1499
    %4604 = vmatpush1.bf16.msra.mxu0 %v1498
    %4605 = vmatprep.subr.bf16.mxu0 %v1503
    %4606 = vmatpush1.bf16.msra.mxu0 %v1502
    %4607 = vmatprep.subr.bf16.mxu0 %v1507
    %4608 = vmatpush1.bf16.msra.mxu0 %v1506
    %4609 = vmatprep.subr.bf16.mxu0 %v1511
    %4610 = vmatpush1.bf16.msra.mxu0 %v1510
    %4611 = vmatprep.subr.bf16.mxu0 0
    %4612 = vmatpush1.bf16.msra.mxu0 0
    %4613 = vmatprep.subr.bf16.mxu0 0
    %4614 = vmatpush1.bf16.msra.mxu0 0
    %4615 = vmatprep.subr.bf16.mxu0 0
    %4616 = vmatpush1.bf16.msra.mxu0 0
    %4617 = vmatprep.subr.bf16.mxu0 0
    %4618 = vmatpush1.bf16.msra.mxu0 0
    %4619 = vmatprep.subr.bf16.mxu0 0
    %4620 = vmatpush1.bf16.msra.mxu0 0
    %4621 = vmatprep.subr.bf16.mxu0 0
    %4622 = vmatpush1.bf16.msra.mxu0 0
    %4623 = vmatprep.subr.bf16.mxu0 0
    %4624 = vmatpush1.bf16.msra.mxu0 0
    %4625 = vmatprep.subr.bf16.mxu0 0
    %4626 = vmatpush1.bf16.msra.mxu0 0
    %4627 = vmatprep.mubr.bf16.mxu0 0
    %4628 = vmatmul.mubr.bf16.gmra.mrb[0].mxu0 %v4553
    %v4629 = vpop.f32.mrb[0].mxu0
    %v4630 = vadd.f32 0.0, %v4629
    %v4631 = vpop.f32.mrb[0].mxu0
    %v4632 = vadd.f32 0.0, %v4631
    %v4633 = vpop.f32.mrb[0].mxu0
    %v4634 = vpop.f32.mrb[0].mxu0
    %4635 = vdwg.mxu0
    %4636 = vmatprep.subr.bf16.mxu0 %v1723
    %4637 = vmatpush1.bf16.msra.mxu0 %v1722
    %4638 = vmatprep.subr.bf16.mxu0 %v1727
    %4639 = vmatpush1.bf16.msra.mxu0 %v1726
    %4640 = vmatprep.subr.bf16.mxu0 %v1731
    %4641 = vmatpush1.bf16.msra.mxu0 %v1730
    %4642 = vmatprep.subr.bf16.mxu0 %v1735
    %4643 = vmatpush1.bf16.msra.mxu0 %v1734
    %4644 = vmatprep.subr.bf16.mxu0 %v1739
    %4645 = vmatpush1.bf16.msra.mxu0 %v1738
    %4646 = vmatprep.subr.bf16.mxu0 %v1743
    %4647 = vmatpush1.bf16.msra.mxu0 %v1742
    %4648 = vmatprep.subr.bf16.mxu0 %v1747
    %4649 = vmatpush1.bf16.msra.mxu0 %v1746
    %4650 = vmatprep.subr.bf16.mxu0 %v1751
    %4651 = vmatpush1.bf16.msra.mxu0 %v1750
    %4652 = vmatprep.subr.bf16.mxu0 0
    %4653 = vmatpush1.bf16.msra.mxu0 0
    %4654 = vmatprep.subr.bf16.mxu0 0
    %4655 = vmatpush1.bf16.msra.mxu0 0
    %4656 = vmatprep.subr.bf16.mxu0 0
    %4657 = vmatpush1.bf16.msra.mxu0 0
    %4658 = vmatprep.subr.bf16.mxu0 0
    %4659 = vmatpush1.bf16.msra.mxu0 0
    %4660 = vmatprep.subr.bf16.mxu0 0
    %4661 = vmatpush1.bf16.msra.mxu0 0
    %4662 = vmatprep.subr.bf16.mxu0 0
    %4663 = vmatpush1.bf16.msra.mxu0 0
    %4664 = vmatprep.subr.bf16.mxu0 0
    %4665 = vmatpush1.bf16.msra.mxu0 0
    %4666 = vmatprep.subr.bf16.mxu0 0
    %4667 = vmatpush1.bf16.msra.mxu0 0
    %4668 = vmatprep.mubr.bf16.mxu0 0
    %4669 = vmatmul.mubr.bf16.gmra.mrb[0].mxu0 %v4552
    %v4670 = vpop.f32.mrb[0].mxu0
    %v4671 = vadd.f32 %v4589, %v4670
    %v4672 = vpop.f32.mrb[0].mxu0
    %v4673 = vadd.f32 %v4591, %v4672
    %v4674 = vpop.f32.mrb[0].mxu0
    %v4675 = vpop.f32.mrb[0].mxu0
    %4676 = vdwg.mxu0
    %4677 = vmatprep.subr.bf16.mxu0 %v1725
    %4678 = vmatpush1.bf16.msra.mxu0 %v1724
    %4679 = vmatprep.subr.bf16.mxu0 %v1729
    %4680 = vmatpush1.bf16.msra.mxu0 %v1728
    %4681 = vmatprep.subr.bf16.mxu0 %v1733
    %4682 = vmatpush1.bf16.msra.mxu0 %v1732
    %4683 = vmatprep.subr.bf16.mxu0 %v1737
    %4684 = vmatpush1.bf16.msra.mxu0 %v1736
    %4685 = vmatprep.subr.bf16.mxu0 %v1741
    %4686 = vmatpush1.bf16.msra.mxu0 %v1740
    %4687 = vmatprep.subr.bf16.mxu0 %v1745
    %4688 = vmatpush1.bf16.msra.mxu0 %v1744
    %4689 = vmatprep.subr.bf16.mxu0 %v1749
    %4690 = vmatpush1.bf16.msra.mxu0 %v1748
    %4691 = vmatprep.subr.bf16.mxu0 %v1753
    %4692 = vmatpush1.bf16.msra.mxu0 %v1752
    %4693 = vmatprep.subr.bf16.mxu0 0
    %4694 = vmatpush1.bf16.msra.mxu0 0
    %4695 = vmatprep.subr.bf16.mxu0 0
    %4696 = vmatpush1.bf16.msra.mxu0 0
    %4697 = vmatprep.subr.bf16.mxu0 0
    %4698 = vmatpush1.bf16.msra.mxu0 0
    %4699 = vmatprep.subr.bf16.mxu0 0
    %4700 = vmatpush1.bf16.msra.mxu0 0
    %4701 = vmatprep.subr.bf16.mxu0 0
    %4702 = vmatpush1.bf16.msra.mxu0 0
    %4703 = vmatprep.subr.bf16.mxu0 0
    %4704 = vmatpush1.bf16.msra.mxu0 0
    %4705 = vmatprep.subr.bf16.mxu0 0
    %4706 = vmatpush1.bf16.msra.mxu0 0
    %4707 = vmatprep.subr.bf16.mxu0 0
    %4708 = vmatpush1.bf16.msra.mxu0 0
    %4709 = vmatprep.mubr.bf16.mxu0 0
    %4710 = vmatmul.mubr.bf16.gmra.mrb[0].mxu0 %v4552
    %v4711 = vpop.f32.mrb[0].mxu0
    %v4712 = vadd.f32 %v4630, %v4711
    %v4713 = vpop.f32.mrb[0].mxu0
    %v4714 = vadd.f32 %v4632, %v4713
    %v4715 = vpop.f32.mrb[0].mxu0
    %v4716 = vpop.f32.mrb[0].mxu0
    %4717 = vdwg.mxu0
    %v4718 = vadd.f32 %v4671, %v599
    %v4719 = vadd.f32 %v4673, %v603
    %v4720 = vadd.f32 %v4712, %v607
    %v4721 = vadd.f32 %v4714, %v611
    %v4722 = vmul.f32 %v4718, 0.5
    %v4723 = vmul.f32 %v4719, 0.5
    %v4724 = vmul.f32 %v4720, 0.5
    %v4725 = vtanh.pop %v4722
    %v4726 = vtanh.pop %v4723
    %v4727 = vtanh.pop %v4724
    %v4728 = vmul.f32 %v4725, 0.5
    %v4729 = vmul.f32 %v4726, 0.5
    %v4730 = vmul.f32 %v4727, 0.5
    %v4731 = vadd.f32 %v4728, 0.5
    %v4732 = vadd.f32 %v4729, 0.5
    %v4733 = vadd.f32 %v4730, 0.5
    %v4734 = vtanh.pop %v4721
    %v4735 = vmul.f32 %v4732, %v4262
    %v4736 = vmul.f32 %v4731, %v4734
    %v4737 = vadd.f32 %v4735, %v4736
    %v4738 = vtanh.pop %v4737
    %v4739 = vmul.f32 %v4733, %v4738
    %4740 = vmatprep.subr.bf16.mxu0 %v713
    %4741 = vmatpush1.bf16.msra.mxu0 %v712
    %4742 = vmatprep.subr.bf16.mxu0 %v717
    %4743 = vmatpush1.bf16.msra.mxu0 %v716
    %4744 = vmatprep.subr.bf16.mxu0 %v721
    %4745 = vmatpush1.bf16.msra.mxu0 %v720
    %4746 = vmatprep.subr.bf16.mxu0 %v725
    %4747 = vmatpush1.bf16.msra.mxu0 %v724
    %4748 = vmatprep.subr.bf16.mxu0 %v729
    %4749 = vmatpush1.bf16.msra.mxu0 %v728
    %4750 = vmatprep.subr.bf16.mxu0 %v733
    %4751 = vmatpush1.bf16.msra.mxu0 %v732
    %4752 = vmatprep.subr.bf16.mxu0 %v737
    %4753 = vmatpush1.bf16.msra.mxu0 %v736
    %4754 = vmatprep.subr.bf16.mxu0 %v741
    %4755 = vmatpush1.bf16.msra.mxu0 %v740
    %4756 = vmatprep.subr.bf16.mxu0 0
    %4757 = vmatpush1.bf16.msra.mxu0 0
    %4758 = vmatprep.subr.bf16.mxu0 0
    %4759 = vmatpush1.bf16.msra.mxu0 0
    %4760 = vmatprep.subr.bf16.mxu0 0
    %4761 = vmatpush1.bf16.msra.mxu0 0
    %4762 = vmatprep.subr.bf16.mxu0 0
    %4763 = vmatpush1.bf16.msra.mxu0 0
    %4764 = vmatprep.subr.bf16.mxu0 0
    %4765 = vmatpush1.bf16.msra.mxu0 0
    %4766 = vmatprep.subr.bf16.mxu0 0
    %4767 = vmatpush1.bf16.msra.mxu0 0
    %4768 = vmatprep.subr.bf16.mxu0 0
    %4769 = vmatpush1.bf16.msra.mxu0 0
    %4770 = vmatprep.subr.bf16.mxu0 0
    %4771 = vmatpush1.bf16.msra.mxu0 0
    %4772 = vmatprep.mubr.bf16.mxu0 0
    %4773 = vmatmul.mubr.bf16.gmra.mrb[0].mxu0 %v4365
    %v4774 = vpop.f32.mrb[0].mxu0
    %v4775 = vadd.f32 %v335, %v4774
    %v4776 = vpop.f32.mrb[0].mxu0
    %v4777 = vadd.f32 %v337, %v4776
    %v4778 = vpop.f32.mrb[0].mxu0
    %v4779 = vpop.f32.mrb[0].mxu0
    %4780 = vdwg.mxu0
    %4781 = vmatprep.subr.bf16.mxu0 %v715
    %4782 = vmatpush1.bf16.msra.mxu0 %v714
    %4783 = vmatprep.subr.bf16.mxu0 %v719
    %4784 = vmatpush1.bf16.msra.mxu0 %v718
    %4785 = vmatprep.subr.bf16.mxu0 %v723
    %4786 = vmatpush1.bf16.msra.mxu0 %v722
    %4787 = vmatprep.subr.bf16.mxu0 %v727
    %4788 = vmatpush1.bf16.msra.mxu0 %v726
    %4789 = vmatprep.subr.bf16.mxu0 %v731
    %4790 = vmatpush1.bf16.msra.mxu0 %v730
    %4791 = vmatprep.subr.bf16.mxu0 %v735
    %4792 = vmatpush1.bf16.msra.mxu0 %v734
    %4793 = vmatprep.subr.bf16.mxu0 %v739
    %4794 = vmatpush1.bf16.msra.mxu0 %v738
    %4795 = vmatprep.subr.bf16.mxu0 %v743
    %4796 = vmatpush1.bf16.msra.mxu0 %v742
    %4797 = vmatprep.subr.bf16.mxu0 0
    %4798 = vmatpush1.bf16.msra.mxu0 0
    %4799 = vmatprep.subr.bf16.mxu0 0
    %4800 = vmatpush1.bf16.msra.mxu0 0
    %4801 = vmatprep.subr.bf16.mxu0 0
    %4802 = vmatpush1.bf16.msra.mxu0 0
    %4803 = vmatprep.subr.bf16.mxu0 0
    %4804 = vmatpush1.bf16.msra.mxu0 0
    %4805 = vmatprep.subr.bf16.mxu0 0
    %4806 = vmatpush1.bf16.msra.mxu0 0
    %4807 = vmatprep.subr.bf16.mxu0 0
    %4808 = vmatpush1.bf16.msra.mxu0 0
    %4809 = vmatprep.subr.bf16.mxu0 0
    %4810 = vmatpush1.bf16.msra.mxu0 0
    %4811 = vmatprep.subr.bf16.mxu0 0
    %4812 = vmatpush1.bf16.msra.mxu0 0
    %4813 = vmatprep.mubr.bf16.mxu0 0
    %4814 = vmatmul.mubr.bf16.gmra.mrb[0].mxu0 %v4365
    %v4815 = vpop.f32.mrb[0].mxu0
    %v4816 = vadd.f32 %v408, %v4815
    %v4817 = vpop.f32.mrb[0].mxu0
    %v4818 = vadd.f32 %v410, %v4817
    %v4819 = vpop.f32.mrb[0].mxu0
    %v4820 = vpop.f32.mrb[0].mxu0
    %4821 = vdwg.mxu0
    %v4822 = vmul.f32 %v4775, 0.5
    %v4823 = vmul.f32 %v4777, 0.5
    %v4824 = vmul.f32 %v4816, 0.5
    %v4825 = vtanh.pop %v4822
    %v4826 = vtanh.pop %v4823
    %v4827 = vtanh.pop %v4824
    %v4828 = vmul.f32 %v4825, 0.5
    %v4829 = vmul.f32 %v4826, 0.5
    %v4830 = vmul.f32 %v4827, 0.5
    %v4831 = vadd.f32 %v4828, 0.5
    %v4832 = vadd.f32 %v4829, 0.5
    %v4833 = vadd.f32 %v4830, 0.5
    %v4834 = vtanh.pop %v4818
    %v4835 = vmul.f32 %v4832, %v4362
    %v4836 = vmul.f32 %v4831, %v4834
    %v4837 = vadd.f32 %v4835, %v4836
    %v4838 = vtanh.pop %v4837
    %v4839 = vmul.f32 %v4833, %v4838
    %v4840 = vpack.c.bf16 %v4839, %v4839
    %4841 = vmatprep.subr.bf16.mxu0 %v974
    %4842 = vmatpush1.bf16.msra.mxu0 %v973
    %4843 = vmatprep.subr.bf16.mxu0 %v978
    %4844 = vmatpush1.bf16.msra.mxu0 %v977
    %4845 = vmatprep.subr.bf16.mxu0 %v982
    %4846 = vmatpush1.bf16.msra.mxu0 %v981
    %4847 = vmatprep.subr.bf16.mxu0 %v986
    %4848 = vmatpush1.bf16.msra.mxu0 %v985
    %4849 = vmatprep.subr.bf16.mxu0 %v990
    %4850 = vmatpush1.bf16.msra.mxu0 %v989
    %4851 = vmatprep.subr.bf16.mxu0 %v994
    %4852 = vmatpush1.bf16.msra.mxu0 %v993
    %4853 = vmatprep.subr.bf16.mxu0 %v998
    %4854 = vmatpush1.bf16.msra.mxu0 %v997
    %4855 = vmatprep.subr.bf16.mxu0 %v1002
    %4856 = vmatpush1.bf16.msra.mxu0 %v1001
    %4857 = vmatprep.subr.bf16.mxu0 0
    %4858 = vmatpush1.bf16.msra.mxu0 0
    %4859 = vmatprep.subr.bf16.mxu0 0
    %4860 = vmatpush1.bf16.msra.mxu0 0
    %4861 = vmatprep.subr.bf16.mxu0 0
    %4862 = vmatpush1.bf16.msra.mxu0 0
    %4863 = vmatprep.subr.bf16.mxu0 0
    %4864 = vmatpush1.bf16.msra.mxu0 0
    %4865 = vmatprep.subr.bf16.mxu0 0
    %4866 = vmatpush1.bf16.msra.mxu0 0
    %4867 = vmatprep.subr.bf16.mxu0 0
    %4868 = vmatpush1.bf16.msra.mxu0 0
    %4869 = vmatprep.subr.bf16.mxu0 0
    %4870 = vmatpush1.bf16.msra.mxu0 0
    %4871 = vmatprep.subr.bf16.mxu0 0
    %4872 = vmatpush1.bf16.msra.mxu0 0
    %4873 = vmatprep.mubr.bf16.mxu0 0
    %4874 = vmatmul.mubr.bf16.gmra.mrb[0].mxu0 %v4552
    %v4875 = vpop.f32.mrb[0].mxu0
    %v4876 = vadd.f32 0.0, %v4875
    %v4877 = vpop.f32.mrb[0].mxu0
    %v4878 = vadd.f32 0.0, %v4877
    %v4879 = vpop.f32.mrb[0].mxu0
    %v4880 = vpop.f32.mrb[0].mxu0
    %4881 = vdwg.mxu0
    %4882 = vmatprep.subr.bf16.mxu0 %v976
    %4883 = vmatpush1.bf16.msra.mxu0 %v975
    %4884 = vmatprep.subr.bf16.mxu0 %v980
    %4885 = vmatpush1.bf16.msra.mxu0 %v979
    %4886 = vmatprep.subr.bf16.mxu0 %v984
    %4887 = vmatpush1.bf16.msra.mxu0 %v983
    %4888 = vmatprep.subr.bf16.mxu0 %v988
    %4889 = vmatpush1.bf16.msra.mxu0 %v987
    %4890 = vmatprep.subr.bf16.mxu0 %v992
    %4891 = vmatpush1.bf16.msra.mxu0 %v991
    %4892 = vmatprep.subr.bf16.mxu0 %v996
    %4893 = vmatpush1.bf16.msra.mxu0 %v995
    %4894 = vmatprep.subr.bf16.mxu0 %v1000
    %4895 = vmatpush1.bf16.msra.mxu0 %v999
    %4896 = vmatprep.subr.bf16.mxu0 %v1004
    %4897 = vmatpush1.bf16.msra.mxu0 %v1003
    %4898 = vmatprep.subr.bf16.mxu0 0
    %4899 = vmatpush1.bf16.msra.mxu0 0
    %4900 = vmatprep.subr.bf16.mxu0 0
    %4901 = vmatpush1.bf16.msra.mxu0 0
    %4902 = vmatprep.subr.bf16.mxu0 0
    %4903 = vmatpush1.bf16.msra.mxu0 0
    %4904 = vmatprep.subr.bf16.mxu0 0
    %4905 = vmatpush1.bf16.msra.mxu0 0
    %4906 = vmatprep.subr.bf16.mxu0 0
    %4907 = vmatpush1.bf16.msra.mxu0 0
    %4908 = vmatprep.subr.bf16.mxu0 0
    %4909 = vmatpush1.bf16.msra.mxu0 0
    %4910 = vmatprep.subr.bf16.mxu0 0
    %4911 = vmatpush1.bf16.msra.mxu0 0
    %4912 = vmatprep.subr.bf16.mxu0 0
    %4913 = vmatpush1.bf16.msra.mxu0 0
    %4914 = vmatprep.mubr.bf16.mxu0 0
    %4915 = vmatmul.mubr.bf16.gmra.mrb[0].mxu0 %v4552
    %v4916 = vpop.f32.mrb[0].mxu0
    %v4917 = vadd.f32 0.0, %v4916
    %v4918 = vpop.f32.mrb[0].mxu0
    %v4919 = vadd.f32 0.0, %v4918
    %v4920 = vpop.f32.mrb[0].mxu0
    %v4921 = vpop.f32.mrb[0].mxu0
    %4922 = vdwg.mxu0
    %4923 = vmatprep.subr.bf16.mxu0 %v1216
    %4924 = vmatpush1.bf16.msra.mxu0 %v1215
    %4925 = vmatprep.subr.bf16.mxu0 %v1220
    %4926 = vmatpush1.bf16.msra.mxu0 %v1219
    %4927 = vmatprep.subr.bf16.mxu0 %v1224
    %4928 = vmatpush1.bf16.msra.mxu0 %v1223
    %4929 = vmatprep.subr.bf16.mxu0 %v1228
    %4930 = vmatpush1.bf16.msra.mxu0 %v1227
    %4931 = vmatprep.subr.bf16.mxu0 %v1232
    %4932 = vmatpush1.bf16.msra.mxu0 %v1231
    %4933 = vmatprep.subr.bf16.mxu0 %v1236
    %4934 = vmatpush1.bf16.msra.mxu0 %v1235
    %4935 = vmatprep.subr.bf16.mxu0 %v1240
    %4936 = vmatpush1.bf16.msra.mxu0 %v1239
    %4937 = vmatprep.subr.bf16.mxu0 %v1244
    %4938 = vmatpush1.bf16.msra.mxu0 %v1243
    %4939 = vmatprep.subr.bf16.mxu0 0
    %4940 = vmatpush1.bf16.msra.mxu0 0
    %4941 = vmatprep.subr.bf16.mxu0 0
    %4942 = vmatpush1.bf16.msra.mxu0 0
    %4943 = vmatprep.subr.bf16.mxu0 0
    %4944 = vmatpush1.bf16.msra.mxu0 0
    %4945 = vmatprep.subr.bf16.mxu0 0
    %4946 = vmatpush1.bf16.msra.mxu0 0
    %4947 = vmatprep.subr.bf16.mxu0 0
    %4948 = vmatpush1.bf16.msra.mxu0 0
    %4949 = vmatprep.subr.bf16.mxu0 0
    %4950 = vmatpush1.bf16.msra.mxu0 0
    %4951 = vmatprep.subr.bf16.mxu0 0
    %4952 = vmatpush1.bf16.msra.mxu0 0
    %4953 = vmatprep.subr.bf16.mxu0 0
    %4954 = vmatpush1.bf16.msra.mxu0 0
    %4955 = vmatprep.mubr.bf16.mxu0 0
    %4956 = vmatmul.mubr.bf16.gmra.mrb[0].mxu0 %v4840
    %v4957 = vpop.f32.mrb[0].mxu0
    %v4958 = vadd.f32 %v4876, %v4957
    %v4959 = vpop.f32.mrb[0].mxu0
    %v4960 = vadd.f32 %v4878, %v4959
    %v4961 = vpop.f32.mrb[0].mxu0
    %v4962 = vpop.f32.mrb[0].mxu0
    %4963 = vdwg.mxu0
    %4964 = vmatprep.subr.bf16.mxu0 %v1218
    %4965 = vmatpush1.bf16.msra.mxu0 %v1217
    %4966 = vmatprep.subr.bf16.mxu0 %v1222
    %4967 = vmatpush1.bf16.msra.mxu0 %v1221
    %4968 = vmatprep.subr.bf16.mxu0 %v1226
    %4969 = vmatpush1.bf16.msra.mxu0 %v1225
    %4970 = vmatprep.subr.bf16.mxu0 %v1230
    %4971 = vmatpush1.bf16.msra.mxu0 %v1229
    %4972 = vmatprep.subr.bf16.mxu0 %v1234
    %4973 = vmatpush1.bf16.msra.mxu0 %v1233
    %4974 = vmatprep.subr.bf16.mxu0 %v1238
    %4975 = vmatpush1.bf16.msra.mxu0 %v1237
    %4976 = vmatprep.subr.bf16.mxu0 %v1242
    %4977 = vmatpush1.bf16.msra.mxu0 %v1241
    %4978 = vmatprep.subr.bf16.mxu0 %v1246
    %4979 = vmatpush1.bf16.msra.mxu0 %v1245
    %4980 = vmatprep.subr.bf16.mxu0 0
    %4981 = vmatpush1.bf16.msra.mxu0 0
    %4982 = vmatprep.subr.bf16.mxu0 0
    %4983 = vmatpush1.bf16.msra.mxu0 0
    %4984 = vmatprep.subr.bf16.mxu0 0
    %4985 = vmatpush1.bf16.msra.mxu0 0
    %4986 = vmatprep.subr.bf16.mxu0 0
    %4987 = vmatpush1.bf16.msra.mxu0 0
    %4988 = vmatprep.subr.bf16.mxu0 0
    %4989 = vmatpush1.bf16.msra.mxu0 0
    %4990 = vmatprep.subr.bf16.mxu0 0
    %4991 = vmatpush1.bf16.msra.mxu0 0
    %4992 = vmatprep.subr.bf16.mxu0 0
    %4993 = vmatpush1.bf16.msra.mxu0 0
    %4994 = vmatprep.subr.bf16.mxu0 0
    %4995 = vmatpush1.bf16.msra.mxu0 0
    %4996 = vmatprep.mubr.bf16.mxu0 0
    %4997 = vmatmul.mubr.bf16.gmra.mrb[0].mxu0 %v4840
    %v4998 = vpop.f32.mrb[0].mxu0
    %v4999 = vadd.f32 %v4917, %v4998
    %v5000 = vpop.f32.mrb[0].mxu0
    %v5001 = vadd.f32 %v4919, %v5000
    %v5002 = vpop.f32.mrb[0].mxu0
    %v5003 = vpop.f32.mrb[0].mxu0
    %5004 = vdwg.mxu0
    %v5005 = vadd.f32 %v4958, %v577
    %v5006 = vadd.f32 %v4960, %v581
    %v5007 = vadd.f32 %v4999, %v585
    %v5008 = vadd.f32 %v5001, %v589
    %v5009 = vmul.f32 %v5005, 0.5
    %v5010 = vmul.f32 %v5006, 0.5
    %v5011 = vmul.f32 %v5007, 0.5
    %v5012 = vtanh.pop %v5009
    %v5013 = vtanh.pop %v5010
    %v5014 = vtanh.pop %v5011
    %v5015 = vmul.f32 %v5012, 0.5
    %v5016 = vmul.f32 %v5013, 0.5
    %v5017 = vmul.f32 %v5014, 0.5
    %v5018 = vadd.f32 %v5015, 0.5
    %v5019 = vadd.f32 %v5016, 0.5
    %v5020 = vadd.f32 %v5017, 0.5
    %v5021 = vtanh.pop %v5008
    %v5022 = vmul.f32 %v5019, %v4549
    %v5023 = vmul.f32 %v5018, %v5021
    %v5024 = vadd.f32 %v5022, %v5023
    %v5025 = vtanh.pop %v5024
    %v5026 = vmul.f32 %v5020, %v5025
    %v5027 = vpack.c.bf16 %v5026, %v5026
    %v5028 = vpack.c.bf16 %v4739, %v4739
    %5029 = vmatprep.subr.bf16.mxu0 %v1481
    %5030 = vmatpush1.bf16.msra.mxu0 %v1480
    %5031 = vmatprep.subr.bf16.mxu0 %v1485
    %5032 = vmatpush1.bf16.msra.mxu0 %v1484
    %5033 = vmatprep.subr.bf16.mxu0 %v1489
    %5034 = vmatpush1.bf16.msra.mxu0 %v1488
    %5035 = vmatprep.subr.bf16.mxu0 %v1493
    %5036 = vmatpush1.bf16.msra.mxu0 %v1492
    %5037 = vmatprep.subr.bf16.mxu0 %v1497
    %5038 = vmatpush1.bf16.msra.mxu0 %v1496
    %5039 = vmatprep.subr.bf16.mxu0 %v1501
    %5040 = vmatpush1.bf16.msra.mxu0 %v1500
    %5041 = vmatprep.subr.bf16.mxu0 %v1505
    %5042 = vmatpush1.bf16.msra.mxu0 %v1504
    %5043 = vmatprep.subr.bf16.mxu0 %v1509
    %5044 = vmatpush1.bf16.msra.mxu0 %v1508
    %5045 = vmatprep.subr.bf16.mxu0 0
    %5046 = vmatpush1.bf16.msra.mxu0 0
    %5047 = vmatprep.subr.bf16.mxu0 0
    %5048 = vmatpush1.bf16.msra.mxu0 0
    %5049 = vmatprep.subr.bf16.mxu0 0
    %5050 = vmatpush1.bf16.msra.mxu0 0
    %5051 = vmatprep.subr.bf16.mxu0 0
    %5052 = vmatpush1.bf16.msra.mxu0 0
    %5053 = vmatprep.subr.bf16.mxu0 0
    %5054 = vmatpush1.bf16.msra.mxu0 0
    %5055 = vmatprep.subr.bf16.mxu0 0
    %5056 = vmatpush1.bf16.msra.mxu0 0
    %5057 = vmatprep.subr.bf16.mxu0 0
    %5058 = vmatpush1.bf16.msra.mxu0 0
    %5059 = vmatprep.subr.bf16.mxu0 0
    %5060 = vmatpush1.bf16.msra.mxu0 0
    %5061 = vmatprep.mubr.bf16.mxu0 0
    %5062 = vmatmul.mubr.bf16.gmra.mrb[0].mxu0 %v5028
    %v5063 = vpop.f32.mrb[0].mxu0
    %v5064 = vadd.f32 0.0, %v5063
    %v5065 = vpop.f32.mrb[0].mxu0
    %v5066 = vadd.f32 0.0, %v5065
    %v5067 = vpop.f32.mrb[0].mxu0
    %v5068 = vpop.f32.mrb[0].mxu0
    %5069 = vdwg.mxu0
    %5070 = vmatprep.subr.bf16.mxu0 %v1483
    %5071 = vmatpush1.bf16.msra.mxu0 %v1482
    %5072 = vmatprep.subr.bf16.mxu0 %v1487
    %5073 = vmatpush1.bf16.msra.mxu0 %v1486
    %5074 = vmatprep.subr.bf16.mxu0 %v1491
    %5075 = vmatpush1.bf16.msra.mxu0 %v1490
    %5076 = vmatprep.subr.bf16.mxu0 %v1495
    %5077 = vmatpush1.bf16.msra.mxu0 %v1494
    %5078 = vmatprep.subr.bf16.mxu0 %v1499
    %5079 = vmatpush1.bf16.msra.mxu0 %v1498
    %5080 = vmatprep.subr.bf16.mxu0 %v1503
    %5081 = vmatpush1.bf16.msra.mxu0 %v1502
    %5082 = vmatprep.subr.bf16.mxu0 %v1507
    %5083 = vmatpush1.bf16.msra.mxu0 %v1506
    %5084 = vmatprep.subr.bf16.mxu0 %v1511
    %5085 = vmatpush1.bf16.msra.mxu0 %v1510
    %5086 = vmatprep.subr.bf16.mxu0 0
    %5087 = vmatpush1.bf16.msra.mxu0 0
    %5088 = vmatprep.subr.bf16.mxu0 0
    %5089 = vmatpush1.bf16.msra.mxu0 0
    %5090 = vmatprep.subr.bf16.mxu0 0
    %5091 = vmatpush1.bf16.msra.mxu0 0
    %5092 = vmatprep.subr.bf16.mxu0 0
    %5093 = vmatpush1.bf16.msra.mxu0 0
    %5094 = vmatprep.subr.bf16.mxu0 0
    %5095 = vmatpush1.bf16.msra.mxu0 0
    %5096 = vmatprep.subr.bf16.mxu0 0
    %5097 = vmatpush1.bf16.msra.mxu0 0
    %5098 = vmatprep.subr.bf16.mxu0 0
    %5099 = vmatpush1.bf16.msra.mxu0 0
    %5100 = vmatprep.subr.bf16.mxu0 0
    %5101 = vmatpush1.bf16.msra.mxu0 0
    %5102 = vmatprep.mubr.bf16.mxu0 0
    %5103 = vmatmul.mubr.bf16.gmra.mrb[0].mxu0 %v5028
    %v5104 = vpop.f32.mrb[0].mxu0
    %v5105 = vadd.f32 0.0, %v5104
    %v5106 = vpop.f32.mrb[0].mxu0
    %v5107 = vadd.f32 0.0, %v5106
    %v5108 = vpop.f32.mrb[0].mxu0
    %v5109 = vpop.f32.mrb[0].mxu0
    %5110 = vdwg.mxu0
    %5111 = vmatprep.subr.bf16.mxu0 %v1723
    %5112 = vmatpush1.bf16.msra.mxu0 %v1722
    %5113 = vmatprep.subr.bf16.mxu0 %v1727
    %5114 = vmatpush1.bf16.msra.mxu0 %v1726
    %5115 = vmatprep.subr.bf16.mxu0 %v1731
    %5116 = vmatpush1.bf16.msra.mxu0 %v1730
    %5117 = vmatprep.subr.bf16.mxu0 %v1735
    %5118 = vmatpush1.bf16.msra.mxu0 %v1734
    %5119 = vmatprep.subr.bf16.mxu0 %v1739
    %5120 = vmatpush1.bf16.msra.mxu0 %v1738
    %5121 = vmatprep.subr.bf16.mxu0 %v1743
    %5122 = vmatpush1.bf16.msra.mxu0 %v1742
    %5123 = vmatprep.subr.bf16.mxu0 %v1747
    %5124 = vmatpush1.bf16.msra.mxu0 %v1746
    %5125 = vmatprep.subr.bf16.mxu0 %v1751
    %5126 = vmatpush1.bf16.msra.mxu0 %v1750
    %5127 = vmatprep.subr.bf16.mxu0 0
    %5128 = vmatpush1.bf16.msra.mxu0 0
    %5129 = vmatprep.subr.bf16.mxu0 0
    %5130 = vmatpush1.bf16.msra.mxu0 0
    %5131 = vmatprep.subr.bf16.mxu0 0
    %5132 = vmatpush1.bf16.msra.mxu0 0
    %5133 = vmatprep.subr.bf16.mxu0 0
    %5134 = vmatpush1.bf16.msra.mxu0 0
    %5135 = vmatprep.subr.bf16.mxu0 0
    %5136 = vmatpush1.bf16.msra.mxu0 0
    %5137 = vmatprep.subr.bf16.mxu0 0
    %5138 = vmatpush1.bf16.msra.mxu0 0
    %5139 = vmatprep.subr.bf16.mxu0 0
    %5140 = vmatpush1.bf16.msra.mxu0 0
    %5141 = vmatprep.subr.bf16.mxu0 0
    %5142 = vmatpush1.bf16.msra.mxu0 0
    %5143 = vmatprep.mubr.bf16.mxu0 0
    %5144 = vmatmul.mubr.bf16.gmra.mrb[0].mxu0 %v5027
    %v5145 = vpop.f32.mrb[0].mxu0
    %v5146 = vadd.f32 %v5064, %v5145
    %v5147 = vpop.f32.mrb[0].mxu0
    %v5148 = vadd.f32 %v5066, %v5147
    %v5149 = vpop.f32.mrb[0].mxu0
    %v5150 = vpop.f32.mrb[0].mxu0
    %5151 = vdwg.mxu0
    %5152 = vmatprep.subr.bf16.mxu0 %v1725
    %5153 = vmatpush1.bf16.msra.mxu0 %v1724
    %5154 = vmatprep.subr.bf16.mxu0 %v1729
    %5155 = vmatpush1.bf16.msra.mxu0 %v1728
    %5156 = vmatprep.subr.bf16.mxu0 %v1733
    %5157 = vmatpush1.bf16.msra.mxu0 %v1732
    %5158 = vmatprep.subr.bf16.mxu0 %v1737
    %5159 = vmatpush1.bf16.msra.mxu0 %v1736
    %5160 = vmatprep.subr.bf16.mxu0 %v1741
    %5161 = vmatpush1.bf16.msra.mxu0 %v1740
    %5162 = vmatprep.subr.bf16.mxu0 %v1745
    %5163 = vmatpush1.bf16.msra.mxu0 %v1744
    %5164 = vmatprep.subr.bf16.mxu0 %v1749
    %5165 = vmatpush1.bf16.msra.mxu0 %v1748
    %5166 = vmatprep.subr.bf16.mxu0 %v1753
    %5167 = vmatpush1.bf16.msra.mxu0 %v1752
    %5168 = vmatprep.subr.bf16.mxu0 0
    %5169 = vmatpush1.bf16.msra.mxu0 0
    %5170 = vmatprep.subr.bf16.mxu0 0
    %5171 = vmatpush1.bf16.msra.mxu0 0
    %5172 = vmatprep.subr.bf16.mxu0 0
    %5173 = vmatpush1.bf16.msra.mxu0 0
    %5174 = vmatprep.subr.bf16.mxu0 0
    %5175 = vmatpush1.bf16.msra.mxu0 0
    %5176 = vmatprep.subr.bf16.mxu0 0
    %5177 = vmatpush1.bf16.msra.mxu0 0
    %5178 = vmatprep.subr.bf16.mxu0 0
    %5179 = vmatpush1.bf16.msra.mxu0 0
    %5180 = vmatprep.subr.bf16.mxu0 0
    %5181 = vmatpush1.bf16.msra.mxu0 0
    %5182 = vmatprep.subr.bf16.mxu0 0
    %5183 = vmatpush1.bf16.msra.mxu0 0
    %5184 = vmatprep.mubr.bf16.mxu0 0
    %5185 = vmatmul.mubr.bf16.gmra.mrb[0].mxu0 %v5027
    %v5186 = vpop.f32.mrb[0].mxu0
    %v5187 = vadd.f32 %v5105, %v5186
    %v5188 = vpop.f32.mrb[0].mxu0
    %v5189 = vadd.f32 %v5107, %v5188
    %v5190 = vpop.f32.mrb[0].mxu0
    %v5191 = vpop.f32.mrb[0].mxu0
    %5192 = vdwg.mxu0
    %v5193 = vadd.f32 %v5146, %v599
    %v5194 = vadd.f32 %v5148, %v603
    %v5195 = vadd.f32 %v5187, %v607
    %v5196 = vadd.f32 %v5189, %v611
    %v5197 = vmul.f32 %v5193, 0.5
    %v5198 = vmul.f32 %v5194, 0.5
    %v5199 = vmul.f32 %v5195, 0.5
    %v5200 = vtanh.pop %v5197
    %v5201 = vtanh.pop %v5198
    %v5202 = vtanh.pop %v5199
    %v5203 = vmul.f32 %v5200, 0.5
    %v5204 = vmul.f32 %v5201, 0.5
    %v5205 = vmul.f32 %v5202, 0.5
    %v5206 = vadd.f32 %v5203, 0.5
    %v5207 = vadd.f32 %v5204, 0.5
    %v5208 = vadd.f32 %v5205, 0.5
    %v5209 = vtanh.pop %v5196
    %v5210 = vmul.f32 %v5207, %v4737
    %v5211 = vmul.f32 %v5206, %v5209
    %v5212 = vadd.f32 %v5210, %v5211
    %v5213 = vtanh.pop %v5212
    %v5214 = vmul.f32 %v5208, %v5213
    %v5215 = vpack.c.bf16 %v5214, %v5214
    %v5216 = vld [vmem:[%s10] sm:$0xf]
    %v5217 = vld [vmem:[%s10 + $0x4] sm:$0xf]
    %v5218 = vld [vmem:[%s10 + $0x8] sm:$0xf]
    %v5219 = vld [vmem:[%s10 + $0xc] sm:$0xf]
    %v5220 = vld [vmem:[%s10 + $0x10] sm:$0xf]
    %v5221 = vld [vmem:[%s10 + $0x14] sm:$0xf]
    %v5222 = vld [vmem:[%s10 + $0x18] sm:$0xf]
    %v5223 = vld [vmem:[%s10 + $0x1c] sm:$0xf]
    %v5224 = vld [vmem:[%s10 + $0x20] sm:$0xf]
    %v5225 = vld [vmem:[%s10 + $0x24] sm:$0xf]
    %v5226 = vld [vmem:[%s10 + $0x28] sm:$0xf]
    %v5227 = vld [vmem:[%s10 + $0x2c] sm:$0xf]
    %v5228 = vld [vmem:[%s10 + $0x30] sm:$0xf]
    %v5229 = vld [vmem:[%s10 + $0x34] sm:$0xf]
    %v5230 = vld [vmem:[%s10 + $0x38] sm:$0xf]
    %v5231 = vld [vmem:[%s10 + $0x3c] sm:$0xf]
    %v5232 = vld [vmem:[%s11] sm:$0x1]
    %v5234 = vlaneseq
    %v5235 = vshrl.u32 %v5234, 7
    %v5236 = vsub.s32 0, %v5235
    %v5237 = vrot.slane %v5232, %v5236
    %v5255 = vunpack.c.l.b16 %v5216
    %v5256 = vunpack.c.l.b16 %v5217
    %v5257 = vunpack.c.l.b16 %v5218
    %v5258 = vunpack.c.l.b16 %v5219
    %v5259 = vunpack.c.l.b16 %v5220
    %v5260 = vunpack.c.l.b16 %v5221
    %v5261 = vunpack.c.l.b16 %v5222
    %v5262 = vunpack.c.l.b16 %v5223
    %v5263 = vunpack.c.l.b16 %v5224
    %v5264 = vunpack.c.l.b16 %v5225
    %v5265 = vunpack.c.l.b16 %v5226
    %v5266 = vunpack.c.l.b16 %v5227
    %v5267 = vunpack.c.l.b16 %v5228
    %v5268 = vunpack.c.l.b16 %v5229
    %v5269 = vunpack.c.l.b16 %v5230
    %v5270 = vunpack.c.l.b16 %v5231
    %v5271 = vpack.c.b16 %v5256, %v5255
    %v5272 = vpack.c.b16 %v5258, %v5257
    %v5273 = vpack.c.b16 %v5260, %v5259
    %v5274 = vpack.c.b16 %v5262, %v5261
    %v5275 = vpack.c.b16 %v5264, %v5263
    %v5276 = vpack.c.b16 %v5266, %v5265
    %v5277 = vpack.c.b16 %v5268, %v5267
    %v5278 = vpack.c.b16 %v5270, %v5269
    %5287 = vmatprep.subr.bf16.mxu0 0
    %5288 = vmatpush1.bf16.msra.mxu0 %v5271
    %5289 = vmatprep.subr.bf16.mxu0 0
    %5290 = vmatpush1.bf16.msra.mxu0 %v5272
    %5291 = vmatprep.subr.bf16.mxu0 0
    %5292 = vmatpush1.bf16.msra.mxu0 %v5273
    %5293 = vmatprep.subr.bf16.mxu0 0
    %5294 = vmatpush1.bf16.msra.mxu0 %v5274
    %5295 = vmatprep.subr.bf16.mxu0 0
    %5296 = vmatpush1.bf16.msra.mxu0 %v5275
    %5297 = vmatprep.subr.bf16.mxu0 0
    %5298 = vmatpush1.bf16.msra.mxu0 %v5276
    %5299 = vmatprep.subr.bf16.mxu0 0
    %5300 = vmatpush1.bf16.msra.mxu0 %v5277
    %5301 = vmatprep.subr.bf16.mxu0 0
    %5302 = vmatpush1.bf16.msra.mxu0 %v5278
    %5303 = vmatprep.subr.bf16.mxu0 0
    %5304 = vmatpush1.bf16.msra.mxu0 0
    %5305 = vmatprep.subr.bf16.mxu0 0
    %5306 = vmatpush1.bf16.msra.mxu0 0
    %5307 = vmatprep.subr.bf16.mxu0 0
    %5308 = vmatpush1.bf16.msra.mxu0 0
    %5309 = vmatprep.subr.bf16.mxu0 0
    %5310 = vmatpush1.bf16.msra.mxu0 0
    %5311 = vmatprep.subr.bf16.mxu0 0
    %5312 = vmatpush1.bf16.msra.mxu0 0
    %5313 = vmatprep.subr.bf16.mxu0 0
    %5314 = vmatpush1.bf16.msra.mxu0 0
    %5315 = vmatprep.subr.bf16.mxu0 0
    %5316 = vmatpush1.bf16.msra.mxu0 0
    %5317 = vmatprep.subr.bf16.mxu0 0
    %5318 = vmatpush1.bf16.msra.mxu0 0
    %5319 = vmatprep.mubr.bf16.mxu0 0
    %5320 = vmatmul.mubr.bf16.gmra.mrb[0].mxu0 %v5215
    %v5321 = vpop.f32.mrb[0].mxu0
    %v5322 = vadd.f32 %v5237, %v5321
    %v5323 = vpop.f32.mrb[0].mxu0
    %v5324 = vpop.f32.mrb[0].mxu0
    %v5325 = vpop.f32.mrb[0].mxu0
    %5326 = vdwg.mxu0
    %v5327 = vmax.f32 %v5322, 0.0
    %v5328 = vpack.c.bf16 %v5327, %v5327
    %v5329 = vld [vmem:[%s12] sm:$0xf]
    %v5330 = vld [vmem:[%s12 + $0x4] sm:$0xf]
    %v5331 = vld [vmem:[%s12 + $0x8] sm:$0xf]
    %v5332 = vld [vmem:[%s12 + $0xc] sm:$0xf]
    %v5333 = vld [vmem:[%s13] sm:$0xf]
    %v5334 = vld [vmem:[%s13 + $0x4] sm:$0xf]
    %v5335 = vld [vmem:[%s13 + $0x8] sm:$0xf]
    %v5336 = vld [vmem:[%s13 + $0xc] sm:$0xf]
    %v5337 = vld [vmem:[%s13 + $0x10] sm:$0xf]
    %v5338 = vld [vmem:[%s13 + $0x14] sm:$0xf]
    %v5339 = vld [vmem:[%s13 + $0x18] sm:$0xf]
    %v5340 = vld [vmem:[%s13 + $0x1c] sm:$0xf]
    %v5341 = vld [vmem:[%s13 + $0x20] sm:$0xf]
    %v5342 = vld [vmem:[%s13 + $0x24] sm:$0xf]
    %v5343 = vld [vmem:[%s13 + $0x28] sm:$0xf]
    %v5344 = vld [vmem:[%s13 + $0x2c] sm:$0xf]
    %v5345 = vld [vmem:[%s13 + $0x30] sm:$0xf]
    %v5346 = vld [vmem:[%s13 + $0x34] sm:$0xf]
    %v5347 = vld [vmem:[%s13 + $0x38] sm:$0xf]
    %v5348 = vld [vmem:[%s13 + $0x3c] sm:$0xf]
    %v5365 = vunpack.c.l.b16 %v5333
    %v5366 = vunpack.c.l.b16 %v5334
    %v5367 = vunpack.c.l.b16 %v5335
    %v5368 = vunpack.c.l.b16 %v5336
    %v5369 = vunpack.c.l.b16 %v5337
    %v5370 = vunpack.c.l.b16 %v5338
    %v5371 = vunpack.c.l.b16 %v5339
    %v5372 = vunpack.c.l.b16 %v5340
    %v5373 = vunpack.c.l.b16 %v5341
    %v5374 = vunpack.c.l.b16 %v5342
    %v5375 = vunpack.c.l.b16 %v5343
    %v5376 = vunpack.c.l.b16 %v5344
    %v5377 = vunpack.c.l.b16 %v5345
    %v5378 = vunpack.c.l.b16 %v5346
    %v5379 = vunpack.c.l.b16 %v5347
    %v5380 = vunpack.c.l.b16 %v5348
    %v5381 = vpack.c.b16 %v5366, %v5365
    %v5382 = vpack.c.b16 %v5368, %v5367
    %v5383 = vpack.c.b16 %v5370, %v5369
    %v5384 = vpack.c.b16 %v5372, %v5371
    %v5385 = vpack.c.b16 %v5374, %v5373
    %v5386 = vpack.c.b16 %v5376, %v5375
    %v5387 = vpack.c.b16 %v5378, %v5377
    %v5388 = vpack.c.b16 %v5380, %v5379
    %5397 = vmatprep.subr.bf16.mxu0 0
    %5398 = vmatpush1.bf16.msra.mxu0 %v5381
    %5399 = vmatprep.subr.bf16.mxu0 0
    %5400 = vmatpush1.bf16.msra.mxu0 %v5382
    %5401 = vmatprep.subr.bf16.mxu0 0
    %5402 = vmatpush1.bf16.msra.mxu0 %v5383
    %5403 = vmatprep.subr.bf16.mxu0 0
    %5404 = vmatpush1.bf16.msra.mxu0 %v5384
    %5405 = vmatprep.subr.bf16.mxu0 0
    %5406 = vmatpush1.bf16.msra.mxu0 %v5385
    %5407 = vmatprep.subr.bf16.mxu0 0
    %5408 = vmatpush1.bf16.msra.mxu0 %v5386
    %5409 = vmatprep.subr.bf16.mxu0 0
    %5410 = vmatpush1.bf16.msra.mxu0 %v5387
    %5411 = vmatprep.subr.bf16.mxu0 0
    %5412 = vmatpush1.bf16.msra.mxu0 %v5388
    %5413 = vmatprep.subr.bf16.mxu0 0
    %5414 = vmatpush1.bf16.msra.mxu0 0
    %5415 = vmatprep.subr.bf16.mxu0 0
    %5416 = vmatpush1.bf16.msra.mxu0 0
    %5417 = vmatprep.subr.bf16.mxu0 0
    %5418 = vmatpush1.bf16.msra.mxu0 0
    %5419 = vmatprep.subr.bf16.mxu0 0
    %5420 = vmatpush1.bf16.msra.mxu0 0
    %5421 = vmatprep.subr.bf16.mxu0 0
    %5422 = vmatpush1.bf16.msra.mxu0 0
    %5423 = vmatprep.subr.bf16.mxu0 0
    %5424 = vmatpush1.bf16.msra.mxu0 0
    %5425 = vmatprep.subr.bf16.mxu0 0
    %5426 = vmatpush1.bf16.msra.mxu0 0
    %5427 = vmatprep.subr.bf16.mxu0 0
    %5428 = vmatpush1.bf16.msra.mxu0 0
    %5429 = vmatprep.mubr.bf16.mxu0 0
    %5430 = vmatmul.mubr.bf16.gmra.mrb[0].mxu0 %v5215
    %v5431 = vpop.f32.mrb[0].mxu0
    %v5432 = vadd.f32 0.0, %v5431
    %v5433 = vpop.f32.mrb[0].mxu0
    %v5434 = vpop.f32.mrb[0].mxu0
    %v5435 = vpop.f32.mrb[0].mxu0
    %5436 = vdwg.mxu0
    %v5441 = vunpack.c.l.b16 %v5329
    %v5442 = vunpack.c.l.b16 %v5330
    %v5443 = vunpack.c.l.b16 %v5331
    %v5444 = vunpack.c.l.b16 %v5332
    %v5445 = vpack.c.b16 %v5442, %v5441
    %v5446 = vpack.c.b16 %v5444, %v5443
    %v5450 = vsel %vm253, %v5328, 0
    %5452 = vmatprep.subr.bf16.mxu0 0
    %5453 = vmatpush1.bf16.msra.mxu0 %v5445
    %5454 = vmatprep.subr.bf16.mxu0 0
    %5455 = vmatpush1.bf16.msra.mxu0 %v5446
    %5456 = vmatprep.subr.bf16.mxu0 0
    %5457 = vmatpush1.bf16.msra.mxu0 0
    %5458 = vmatprep.subr.bf16.mxu0 0
    %5459 = vmatpush1.bf16.msra.mxu0 0
    %5460 = vmatprep.subr.bf16.mxu0 0
    %5461 = vmatpush1.bf16.msra.mxu0 0
    %5462 = vmatprep.subr.bf16.mxu0 0
    %5463 = vmatpush1.bf16.msra.mxu0 0
    %5464 = vmatprep.subr.bf16.mxu0 0
    %5465 = vmatpush1.bf16.msra.mxu0 0
    %5466 = vmatprep.subr.bf16.mxu0 0
    %5467 = vmatpush1.bf16.msra.mxu0 0
    %5468 = vmatprep.subr.bf16.mxu0 0
    %5469 = vmatpush1.bf16.msra.mxu0 0
    %5470 = vmatprep.subr.bf16.mxu0 0
    %5471 = vmatpush1.bf16.msra.mxu0 0
    %5472 = vmatprep.subr.bf16.mxu0 0
    %5473 = vmatpush1.bf16.msra.mxu0 0
    %5474 = vmatprep.subr.bf16.mxu0 0
    %5475 = vmatpush1.bf16.msra.mxu0 0
    %5476 = vmatprep.subr.bf16.mxu0 0
    %5477 = vmatpush1.bf16.msra.mxu0 0
    %5478 = vmatprep.subr.bf16.mxu0 0
    %5479 = vmatpush1.bf16.msra.mxu0 0
    %5480 = vmatprep.subr.bf16.mxu0 0
    %5481 = vmatpush1.bf16.msra.mxu0 0
    %5482 = vmatprep.subr.bf16.mxu0 0
    %5483 = vmatpush1.bf16.msra.mxu0 0
    %5484 = vmatprep.mubr.bf16.mxu0 0
    %5485 = vmatmul.mubr.bf16.gmra.mrb[0].mxu0 %v5450
    %v5486 = vpop.f32.mrb[0].mxu0
    %v5487 = vadd.f32 %v5432, %v5486
    %v5488 = vpop.f32.mrb[0].mxu0
    %v5489 = vpop.f32.mrb[0].mxu0
    %v5490 = vpop.f32.mrb[0].mxu0
    %5491 = vdwg.mxu0
    %v5492 = vld [vmem:[%s14] sm:$0x1]
    %v5494 = vlaneseq
    %v5495 = vshrl.u32 %v5494, 7
    %v5496 = vsub.s32 0, %v5495
    %v5497 = vrot.slane %v5492, %v5496
    %v5499 = vadd.f32 %v5487, %v5497
    %5500 = vst [vmem:[#allocation16] sm:$0xff] %v5499
    // Predicated region
    $region94: #{tpu_custom_call.1} parent=1 // pred_check
      _
    $region95: #{tpu_custom_call.1} parent=1 // pred_check_branch
      %5502 = sbr.rel (0) target = $region97
    $region96: #{tpu_custom_call.1} parent=1 // pred_region
      %s5504 = ssub.s32 128, 128
      %5505 = vsyncadd [#allocation4], %s5504
      %s5507 = sshll.u32 [#allocation16], 4
      %s5508 = int_to_ptr.vmem [resolvable:$true] %s5507
      %5510 = dma.vmem_to_hbm [thread:$0]  %s5508, 128, %s15, [#allocation4]
    $region97: #{tpu_custom_call.1} parent=1 // pred_fallthru
      _
    // Predicated region
    $region98: #{tpu_custom_call.1} parent=1 // pred_check
      _
    $region99: #{tpu_custom_call.1} parent=1 // pred_check_branch
      %5512 = sbr.rel (0) target = $region101
    $region100: #{tpu_custom_call.1} parent=1 // pred_region
      %5513 = dma.done [#allocation4], 128
    $region101: #{tpu_custom_call.1} parent=1 // pred_fallthru
      _
    %5514 = vsyncpa [#allocation3], 1
    %5515 = vsyncpa [#allocation6], 1
    %5516 = vsyncpa [#allocation9], 1
    %5517 = vsyncpa [#allocation12], 1
    %5518 = vsyncpa [#allocation15], 1
    %5519 = vsyncpa [#allocation4], 1

</llo_original>
